<compile_context>
chip_gen: v7x
topology: tpu7x:2x2x1
jax: 0.10.0
libtpu: 0.0.40
codegen_flags: <defaults>
</compile_context>

<pallas_src>
import jax
import jax.numpy as jnp
from jax.experimental import pallas as pl
from jax.experimental.pallas import tpu as pltpu

_LPAD = 8          # tile-aligned left halo inside the VMEM scratch
_BN_EPS = 1e-5


def _conv3x3_from_scratch(pad_ref, w_ref, H, W, Cin, Cout):
    """3x3 / stride-1 conv over the zero-padded VMEM scratch.

    pad_ref: (H+2, W+2*_LPAD, Cin) f32, image stored at [1:H+1, _LPAD:_LPAD+W].
    w_ref  : (9, Cin, Cout) bf16.
    Returns (H*W, Cout) f32 accumulator.
    """
    acc = jnp.zeros((H * W, Cout), jnp.float32)
    for kh in range(3):
        for kw in range(3):
            patch = pad_ref[kh:kh + H, _LPAD - 1 + kw:_LPAD - 1 + kw + W, :]
            patch = patch.reshape(H * W, Cin).astype(jnp.bfloat16)
            acc = acc + jnp.dot(patch, w_ref[kh * 3 + kw],
                                preferred_element_type=jnp.float32)
    return acc


def _emit_raw_and_stats(acc, raw_ref, sum_ref, sq_ref, H, W, Cout):
    # Round through bf16 so the stats describe exactly the values the next
    # kernel normalizes (raw conv output is stored as bf16).
    acc = acc.astype(jnp.bfloat16).astype(jnp.float32)
    raw_ref[...] = acc.reshape(1, H, W, Cout).astype(raw_ref.dtype)
    sum_ref[...] = jnp.sum(acc, axis=0, keepdims=True).reshape(1, 1, Cout)
    sq_ref[...] = jnp.sum(acc * acc, axis=0, keepdims=True).reshape(1, 1, Cout)


def conv1_stats_kernel(x_ref, w_ref, raw_ref, sum_ref, sq_ref, pad_ref):
    """conv3x3(x) for one image + per-image partial BN statistics."""
    _, H, W, Cout = raw_ref.shape
    Cin = x_ref.shape[3]
    pad_ref[...] = jnp.zeros_like(pad_ref)
    pad_ref[1:H + 1, _LPAD:_LPAD + W, :] = x_ref[0].astype(jnp.float32)
    acc = _conv3x3_from_scratch(pad_ref, w_ref, H, W, Cin, Cout)
    _emit_raw_and_stats(acc, raw_ref, sum_ref, sq_ref, H, W, Cout)


def bn_relu_conv2_stats_kernel(raw1_ref, scale_ref, shift_ref, w_ref,
                               raw2_ref, sum_ref, sq_ref, pad_ref):
    """relu(bn1(conv1_raw)) -> conv3x3 for one image + partial BN statistics."""
    _, H, W, Cout = raw2_ref.shape
    Cmid = raw1_ref.shape[3]
    y1 = raw1_ref[0].reshape(H * W, Cmid).astype(jnp.float32)
    y1 = jnp.maximum(y1 * scale_ref[...] + shift_ref[...], 0.0)   # fused BN+ReLU
    pad_ref[...] = jnp.zeros_like(pad_ref)
    pad_ref[1:H + 1, _LPAD:_LPAD + W, :] = y1.reshape(H, W, Cmid)
    acc = _conv3x3_from_scratch(pad_ref, w_ref, H, W, Cmid, Cout)
    _emit_raw_and_stats(acc, raw2_ref, sum_ref, sq_ref, H, W, Cout)


def bn_add_relu_kernel(raw2_ref, scale_ref, shift_ref, id_ref, out_ref):
    """relu(bn2(conv2_raw) + identity) for one image (single fused pass)."""
    _, H, W, C = out_ref.shape
    y = raw2_ref[0].reshape(H * W, C).astype(jnp.float32)
    y = y * scale_ref[...] + shift_ref[...]
    y = y + id_ref[0].reshape(H * W, C).astype(jnp.float32)
    out_ref[...] = jnp.maximum(y, 0.0).reshape(1, H, W, C).astype(out_ref.dtype)


def _bn_scale_shift(sum_n1c, sq_n1c, gamma, beta, count):
    """Fold per-image partial sums into a fused training-mode BN scale/shift.
    Tiny C-sized reduction, done in plain JAX between pallas_calls."""
    s1 = jnp.sum(sum_n1c, axis=(0, 1))
    s2 = jnp.sum(sq_n1c, axis=(0, 1))
    mean = s1 / count
    var = jnp.maximum(s2 / count - mean * mean, 0.0)   # biased var; clamp guards cancellation
    scale = gamma.reshape(-1).astype(jnp.float32) * jax.lax.rsqrt(var + _BN_EPS)
    shift = beta.reshape(-1).astype(jnp.float32) - mean * scale
    C = scale.shape[0]
    return scale.reshape(1, C), shift.reshape(1, C)


@jax.jit
def basic_block_forward_nhwc(x, w1, g1, b1, w2, g2, b2):
    """BasicBlock forward on NHWC activations.
    x: (N, H, W, C); w*: (3, 3, Cin, Cout) HWIO; g*/b*: (1, C).
    stride=1, downsample=None (so Cin == Cout)."""
    # TODO(synk): stride > 1 and the downsample branch are not implemented.
    N, H, W, Cin = x.shape
    Cout = w1.shape[-1]
    assert Cin == Cout, "BasicBlock with downsample=None requires Cin == Cout"
    w1f = w1.reshape(9, Cin, Cout).astype(jnp.bfloat16)
    w2f = w2.reshape(9, Cout, Cout).astype(jnp.bfloat16)

    cparams = pltpu.CompilerParams(dimension_semantics=("parallel",),
                                   vmem_limit_bytes=32 * 1024 * 1024)
    count = N * H * W

    def img_spec(c):
        return pl.BlockSpec((1, H, W, c), lambda n: (n, 0, 0, 0))

    def full_spec(shape):
        nd = len(shape)
        return pl.BlockSpec(shape, lambda n: (0,) * nd)

    stat_spec = pl.BlockSpec((1, 1, Cout), lambda n: (n, 0, 0))
    stat_shape = jax.ShapeDtypeStruct((N, 1, Cout), jnp.float32)
    raw_shape = jax.ShapeDtypeStruct((N, H, W, Cout), jnp.bfloat16)

    # --- conv1 + per-image BN1 partial statistics -------------------------
    raw1, s1, q1 = pl.pallas_call(
        conv1_stats_kernel,
        grid=(N,),
        out_shape=(raw_shape, stat_shape, stat_shape),
        in_specs=[img_spec(Cin), full_spec((9, Cin, Cout))],
        out_specs=(img_spec(Cout), stat_spec, stat_spec),
        scratch_shapes=[pltpu.VMEM((H + 2, W + 2 * _LPAD, Cin), jnp.float32)],
        compiler_params=cparams,
    )(x, w1f)
    scale1, shift1 = _bn_scale_shift(s1, q1, g1, b1, count)

    # --- bn1 -> relu -> conv2 + per-image BN2 partial statistics ----------
    raw2, s2, q2 = pl.pallas_call(
        bn_relu_conv2_stats_kernel,
        grid=(N,),
        out_shape=(raw_shape, stat_shape, stat_shape),
        in_specs=[img_spec(Cout), full_spec((1, Cout)), full_spec((1, Cout)),
                  full_spec((9, Cout, Cout))],
        out_specs=(img_spec(Cout), stat_spec, stat_spec),
        scratch_shapes=[pltpu.VMEM((H + 2, W + 2 * _LPAD, Cout), jnp.float32)],
        compiler_params=cparams,
    )(raw1, scale1, shift1, w2f)
    scale2, shift2 = _bn_scale_shift(s2, q2, g2, b2, count)

    # --- bn2 -> (+identity) -> relu ---------------------------------------
    out = pl.pallas_call(
        bn_add_relu_kernel,
        grid=(N,),
        out_shape=jax.ShapeDtypeStruct((N, H, W, Cout), x.dtype),
        in_specs=[img_spec(Cout), full_spec((1, Cout)), full_spec((1, Cout)),
                  img_spec(Cin)],
        out_specs=img_spec(Cout),
        compiler_params=cparams,
    )(raw2, scale2, shift2, x)
    return out


def basic_block_forward(x_nchw, w1, g1, b1, w2, g2, b2):
    """PyTorch-convention entry point: (N, C, H, W) -> (N, C, H, W).
    The NCHW<->NHWC conversion happens once at the boundary; call
    basic_block_forward_nhwc directly to avoid these relayouts entirely."""
    x = jnp.transpose(x_nchw, (0, 2, 3, 1))
    y = basic_block_forward_nhwc(x, w1, g1, b1, w2, g2, b2)
    return jnp.transpose(y, (0, 3, 1, 2))


if __name__ == "__main__":
    key = jax.random.PRNGKey(0)
    k = jax.random.split(key, 8)
    N, C, H, W = 2, 4, 16, 16                         # inplanes = planes = 4

    x = jax.random.normal(k[0], (N, C, H, W), jnp.float32)
    # Deterministic synthetic parameters (shapes match nn.Conv2d/BatchNorm2d).
    w1 = jax.random.normal(k[1], (3, 3, C, C), jnp.float32) * 0.1
    w2 = jax.random.normal(k[2], (3, 3, C, C), jnp.float32) * 0.1
    g1 = 1.0 + 0.1 * jax.random.normal(k[3], (1, C), jnp.float32)
    b1 = 0.1 * jax.random.normal(k[4], (1, C), jnp.float32)
    g2 = 1.0 + 0.1 * jax.random.normal(k[5], (1, C), jnp.float32)
    b2 = 0.1 * jax.random.normal(k[6], (1, C), jnp.float32)

    out = basic_block_forward(x, w1, g1, b1, w2, g2, b2)
    out = jax.block_until_ready(out)
    assert out.shape == (N, C, H, W) and bool(jnp.all(jnp.isfinite(out)))
    print("KERNEL_OK")
</pallas_src>

<mosaic_0001>
module attributes {stable_mosaic.version = 11 : i64} {
  func.func @conv1_stats_kernel(%arg0: i32, %arg1: memref<1x16x16x4xf32, #tpu.memory_space<vmem>>, %arg2: memref<9x4x4xbf16, #tpu.memory_space<vmem>>, %arg3: memref<1x16x16x4xbf16, #tpu.memory_space<vmem>>, %arg4: memref<1x1x4xf32, #tpu.memory_space<vmem>>, %arg5: memref<1x1x4xf32, #tpu.memory_space<vmem>>, %arg6: memref<18x32x4xf32, #tpu.memory_space<vmem>>) attributes {dimension_semantics = [#tpu.dimension_semantics<parallel>], iteration_bounds = array<i64: 2>, scalar_prefetch = 0 : i64, scratch_operands = 1 : i64, tpu.core_type = #tpu.core_type<tc>, window_params = [{transform_indices = @transform_0, window_bounds = array<i64: 1, 16, 16, 4>}, {pipeline_mode = #tpu.pipeline_mode<synchronous>, transform_indices = @transform_1, window_bounds = array<i64: 9, 4, 4>}, {transform_indices = @transform_2, window_bounds = array<i64: 1, 16, 16, 4>}, {transform_indices = @transform_3, window_bounds = array<i64: 1, 1, 4>}, {transform_indices = @transform_4, window_bounds = array<i64: 1, 1, 4>}]} {
    %cst = arith.constant 0.000000e+00 : f32
    %0 = vector.broadcast %cst : f32 to vector<18x32x4xf32>
    %c0 = arith.constant 0 : index
    %c0_0 = arith.constant 0 : index
    %c0_1 = arith.constant 0 : index
    %1 = vector.load %arg6[%c0, %c0_0, %c0_1] : memref<18x32x4xf32, #tpu.memory_space<vmem>>, vector<18x32x4xf32>
    tpu.vector_store %arg6[%c0, %c0_0, %c0_1], %0 {strides = array<i32>} : memref<18x32x4xf32, #tpu.memory_space<vmem>>, vector<18x32x4xf32>,
    %c0_2 = arith.constant 0 : index
    %c0_3 = arith.constant 0 : index
    %c0_4 = arith.constant 0 : index
    %c0_5 = arith.constant 0 : index
    %2 = vector.load %arg1[%c0_2, %c0_3, %c0_4, %c0_5] : memref<1x16x16x4xf32, #tpu.memory_space<vmem>>, vector<1x16x16x4xf32>
    %3 = vector.shape_cast %2 : vector<1x16x16x4xf32> to vector<16x16x4xf32>
    %c1 = arith.constant 1 : index
    %c8 = arith.constant 8 : index
    %c0_6 = arith.constant 0 : index
    %4 = vector.load %arg6[%c1, %c8, %c0_6] : memref<18x32x4xf32, #tpu.memory_space<vmem>>, vector<16x16x4xf32>
    tpu.vector_store %arg6[%c1, %c8, %c0_6], %3 {strides = array<i32>} : memref<18x32x4xf32, #tpu.memory_space<vmem>>, vector<16x16x4xf32>,
    %cst_7 = arith.constant 0.000000e+00 : f32
    %5 = vector.broadcast %cst_7 : f32 to vector<256x4xf32>
    %c0_8 = arith.constant 0 : index
    %c7 = arith.constant 7 : index
    %c0_9 = arith.constant 0 : index
    %6 = vector.load %arg6[%c0_8, %c7, %c0_9] : memref<18x32x4xf32, #tpu.memory_space<vmem>>, vector<16x16x4xf32>
    %7 = vector.shape_cast %6 : vector<16x16x4xf32> to vector<256x4xf32>
    %8 = arith.truncf %7 : vector<256x4xf32> to vector<256x4xbf16>
    %c0_10 = arith.constant 0 : index
    %c0_11 = arith.constant 0 : index
    %c0_12 = arith.constant 0 : index
    %9 = vector.load %arg2[%c0_10, %c0_11, %c0_12] : memref<9x4x4xbf16, #tpu.memory_space<vmem>>, vector<1x4x4xbf16>
    %10 = vector.shape_cast %9 : vector<1x4x4xbf16> to vector<4x4xbf16>
    %cst_13 = arith.constant dense<0.000000e+00> : vector<256x4xf32>
    %11 = tpu.matmul %8, %10, %cst_13 {dimension_numbers = #tpu.dot_dimension_numbers<[1], [0], [0], [1], [0, 0, 1, 1], [], []>} : vector<256x4xbf16>, vector<4x4xbf16>, vector<256x4xf32> -> vector<256x4xf32>
    %12 = arith.addf %5, %11 : vector<256x4xf32>
    %c0_14 = arith.constant 0 : index
    %c8_15 = arith.constant 8 : index
    %c0_16 = arith.constant 0 : index
    %13 = vector.load %arg6[%c0_14, %c8_15, %c0_16] : memref<18x32x4xf32, #tpu.memory_space<vmem>>, vector<16x16x4xf32>
    %14 = vector.shape_cast %13 : vector<16x16x4xf32> to vector<256x4xf32>
    %15 = arith.truncf %14 : vector<256x4xf32> to vector<256x4xbf16>
    %c1_17 = arith.constant 1 : index
    %c0_18 = arith.constant 0 : index
    %c0_19 = arith.constant 0 : index
    %16 = vector.load %arg2[%c1_17, %c0_18, %c0_19] : memref<9x4x4xbf16, #tpu.memory_space<vmem>>, vector<1x4x4xbf16>
    %17 = vector.shape_cast %16 : vector<1x4x4xbf16> to vector<4x4xbf16>
    %cst_20 = arith.constant dense<0.000000e+00> : vector<256x4xf32>
    %18 = tpu.matmul %15, %17, %cst_20 {dimension_numbers = #tpu.dot_dimension_numbers<[1], [0], [0], [1], [0, 0, 1, 1], [], []>} : vector<256x4xbf16>, vector<4x4xbf16>, vector<256x4xf32> -> vector<256x4xf32>
    %19 = arith.addf %12, %18 : vector<256x4xf32>
    %c0_21 = arith.constant 0 : index
    %c9 = arith.constant 9 : index
    %c0_22 = arith.constant 0 : index
    %20 = vector.load %arg6[%c0_21, %c9, %c0_22] : memref<18x32x4xf32, #tpu.memory_space<vmem>>, vector<16x16x4xf32>
    %21 = vector.shape_cast %20 : vector<16x16x4xf32> to vector<256x4xf32>
    %22 = arith.truncf %21 : vector<256x4xf32> to vector<256x4xbf16>
    %c2 = arith.constant 2 : index
    %c0_23 = arith.constant 0 : index
    %c0_24 = arith.constant 0 : index
    %23 = vector.load %arg2[%c2, %c0_23, %c0_24] : memref<9x4x4xbf16, #tpu.memory_space<vmem>>, vector<1x4x4xbf16>
    %24 = vector.shape_cast %23 : vector<1x4x4xbf16> to vector<4x4xbf16>
    %cst_25 = arith.constant dense<0.000000e+00> : vector<256x4xf32>
    %25 = tpu.matmul %22, %24, %cst_25 {dimension_numbers = #tpu.dot_dimension_numbers<[1], [0], [0], [1], [0, 0, 1, 1], [], []>} : vector<256x4xbf16>, vector<4x4xbf16>, vector<256x4xf32> -> vector<256x4xf32>
    %26 = arith.addf %19, %25 : vector<256x4xf32>
    %c1_26 = arith.constant 1 : index
    %c7_27 = arith.constant 7 : index
    %c0_28 = arith.constant 0 : index
    %27 = vector.load %arg6[%c1_26, %c7_27, %c0_28] : memref<18x32x4xf32, #tpu.memory_space<vmem>>, vector<16x16x4xf32>
    %28 = vector.shape_cast %27 : vector<16x16x4xf32> to vector<256x4xf32>
    %29 = arith.truncf %28 : vector<256x4xf32> to vector<256x4xbf16>
    %c3 = arith.constant 3 : index
    %c0_29 = arith.constant 0 : index
    %c0_30 = arith.constant 0 : index
    %30 = vector.load %arg2[%c3, %c0_29, %c0_30] : memref<9x4x4xbf16, #tpu.memory_space<vmem>>, vector<1x4x4xbf16>
    %31 = vector.shape_cast %30 : vector<1x4x4xbf16> to vector<4x4xbf16>
    %cst_31 = arith.constant dense<0.000000e+00> : vector<256x4xf32>
    %32 = tpu.matmul %29, %31, %cst_31 {dimension_numbers = #tpu.dot_dimension_numbers<[1], [0], [0], [1], [0, 0, 1, 1], [], []>} : vector<256x4xbf16>, vector<4x4xbf16>, vector<256x4xf32> -> vector<256x4xf32>
    %33 = arith.addf %26, %32 : vector<256x4xf32>
    %c1_32 = arith.constant 1 : index
    %c8_33 = arith.constant 8 : index
    %c0_34 = arith.constant 0 : index
    %34 = vector.load %arg6[%c1_32, %c8_33, %c0_34] : memref<18x32x4xf32, #tpu.memory_space<vmem>>, vector<16x16x4xf32>
    %35 = vector.shape_cast %34 : vector<16x16x4xf32> to vector<256x4xf32>
    %36 = arith.truncf %35 : vector<256x4xf32> to vector<256x4xbf16>
    %c4 = arith.constant 4 : index
    %c0_35 = arith.constant 0 : index
    %c0_36 = arith.constant 0 : index
    %37 = vector.load %arg2[%c4, %c0_35, %c0_36] : memref<9x4x4xbf16, #tpu.memory_space<vmem>>, vector<1x4x4xbf16>
    %38 = vector.shape_cast %37 : vector<1x4x4xbf16> to vector<4x4xbf16>
    %cst_37 = arith.constant dense<0.000000e+00> : vector<256x4xf32>
    %39 = tpu.matmul %36, %38, %cst_37 {dimension_numbers = #tpu.dot_dimension_numbers<[1], [0], [0], [1], [0, 0, 1, 1], [], []>} : vector<256x4xbf16>, vector<4x4xbf16>, vector<256x4xf32> -> vector<256x4xf32>
    %40 = arith.addf %33, %39 : vector<256x4xf32>
    %c1_38 = arith.constant 1 : index
    %c9_39 = arith.constant 9 : index
    %c0_40 = arith.constant 0 : index
    %41 = vector.load %arg6[%c1_38, %c9_39, %c0_40] : memref<18x32x4xf32, #tpu.memory_space<vmem>>, vector<16x16x4xf32>
    %42 = vector.shape_cast %41 : vector<16x16x4xf32> to vector<256x4xf32>
    %43 = arith.truncf %42 : vector<256x4xf32> to vector<256x4xbf16>
    %c5 = arith.constant 5 : index
    %c0_41 = arith.constant 0 : index
    %c0_42 = arith.constant 0 : index
    %44 = vector.load %arg2[%c5, %c0_41, %c0_42] : memref<9x4x4xbf16, #tpu.memory_space<vmem>>, vector<1x4x4xbf16>
    %45 = vector.shape_cast %44 : vector<1x4x4xbf16> to vector<4x4xbf16>
    %cst_43 = arith.constant dense<0.000000e+00> : vector<256x4xf32>
    %46 = tpu.matmul %43, %45, %cst_43 {dimension_numbers = #tpu.dot_dimension_numbers<[1], [0], [0], [1], [0, 0, 1, 1], [], []>} : vector<256x4xbf16>, vector<4x4xbf16>, vector<256x4xf32> -> vector<256x4xf32>
    %47 = arith.addf %40, %46 : vector<256x4xf32>
    %c2_44 = arith.constant 2 : index
    %c7_45 = arith.constant 7 : index
    %c0_46 = arith.constant 0 : index
    %48 = vector.load %arg6[%c2_44, %c7_45, %c0_46] : memref<18x32x4xf32, #tpu.memory_space<vmem>>, vector<16x16x4xf32>
    %49 = vector.shape_cast %48 : vector<16x16x4xf32> to vector<256x4xf32>
    %50 = arith.truncf %49 : vector<256x4xf32> to vector<256x4xbf16>
    %c6 = arith.constant 6 : index
    %c0_47 = arith.constant 0 : index
    %c0_48 = arith.constant 0 : index
    %51 = vector.load %arg2[%c6, %c0_47, %c0_48] : memref<9x4x4xbf16, #tpu.memory_space<vmem>>, vector<1x4x4xbf16>
    %52 = vector.shape_cast %51 : vector<1x4x4xbf16> to vector<4x4xbf16>
    %cst_49 = arith.constant dense<0.000000e+00> : vector<256x4xf32>
    %53 = tpu.matmul %50, %52, %cst_49 {dimension_numbers = #tpu.dot_dimension_numbers<[1], [0], [0], [1], [0, 0, 1, 1], [], []>} : vector<256x4xbf16>, vector<4x4xbf16>, vector<256x4xf32> -> vector<256x4xf32>
    %54 = arith.addf %47, %53 : vector<256x4xf32>
    %c2_50 = arith.constant 2 : index
    %c8_51 = arith.constant 8 : index
    %c0_52 = arith.constant 0 : index
    %55 = vector.load %arg6[%c2_50, %c8_51, %c0_52] : memref<18x32x4xf32, #tpu.memory_space<vmem>>, vector<16x16x4xf32>
    %56 = vector.shape_cast %55 : vector<16x16x4xf32> to vector<256x4xf32>
    %57 = arith.truncf %56 : vector<256x4xf32> to vector<256x4xbf16>
    %c7_53 = arith.constant 7 : index
    %c0_54 = arith.constant 0 : index
    %c0_55 = arith.constant 0 : index
    %58 = vector.load %arg2[%c7_53, %c0_54, %c0_55] : memref<9x4x4xbf16, #tpu.memory_space<vmem>>, vector<1x4x4xbf16>
    %59 = vector.shape_cast %58 : vector<1x4x4xbf16> to vector<4x4xbf16>
    %cst_56 = arith.constant dense<0.000000e+00> : vector<256x4xf32>
    %60 = tpu.matmul %57, %59, %cst_56 {dimension_numbers = #tpu.dot_dimension_numbers<[1], [0], [0], [1], [0, 0, 1, 1], [], []>} : vector<256x4xbf16>, vector<4x4xbf16>, vector<256x4xf32> -> vector<256x4xf32>
    %61 = arith.addf %54, %60 : vector<256x4xf32>
    %c2_57 = arith.constant 2 : index
    %c9_58 = arith.constant 9 : index
    %c0_59 = arith.constant 0 : index
    %62 = vector.load %arg6[%c2_57, %c9_58, %c0_59] : memref<18x32x4xf32, #tpu.memory_space<vmem>>, vector<16x16x4xf32>
    %63 = vector.shape_cast %62 : vector<16x16x4xf32> to vector<256x4xf32>
    %64 = arith.truncf %63 : vector<256x4xf32> to vector<256x4xbf16>
    %c8_60 = arith.constant 8 : index
    %c0_61 = arith.constant 0 : index
    %c0_62 = arith.constant 0 : index
    %65 = vector.load %arg2[%c8_60, %c0_61, %c0_62] : memref<9x4x4xbf16, #tpu.memory_space<vmem>>, vector<1x4x4xbf16>
    %66 = vector.shape_cast %65 : vector<1x4x4xbf16> to vector<4x4xbf16>
    %cst_63 = arith.constant dense<0.000000e+00> : vector<256x4xf32>
    %67 = tpu.matmul %64, %66, %cst_63 {dimension_numbers = #tpu.dot_dimension_numbers<[1], [0], [0], [1], [0, 0, 1, 1], [], []>} : vector<256x4xbf16>, vector<4x4xbf16>, vector<256x4xf32> -> vector<256x4xf32>
    %68 = arith.addf %61, %67 : vector<256x4xf32>
    %69 = arith.truncf %68 : vector<256x4xf32> to vector<256x4xbf16>
    %70 = arith.extf %69 : vector<256x4xbf16> to vector<256x4xf32>
    %71 = vector.shape_cast %70 : vector<256x4xf32> to vector<1x16x16x4xf32>
    %72 = arith.truncf %71 : vector<1x16x16x4xf32> to vector<1x16x16x4xbf16>
    %c0_64 = arith.constant 0 : index
    %c0_65 = arith.constant 0 : index
    %c0_66 = arith.constant 0 : index
    %c0_67 = arith.constant 0 : index
    %73 = vector.load %arg3[%c0_64, %c0_65, %c0_66, %c0_67] : memref<1x16x16x4xbf16, #tpu.memory_space<vmem>>, vector<1x16x16x4xbf16>
    tpu.vector_store %arg3[%c0_64, %c0_65, %c0_66, %c0_67], %72 {strides = array<i32>} : memref<1x16x16x4xbf16, #tpu.memory_space<vmem>>, vector<1x16x16x4xbf16>,
    %cst_68 = arith.constant dense<0.000000e+00> : vector<4xf32>
    %74 = vector.multi_reduction <add>, %70, %cst_68 [0] : vector<256x4xf32> to vector<4xf32>
    %75 = vector.shape_cast %74 : vector<4xf32> to vector<1x4xf32>
    %76 = vector.shape_cast %75 : vector<1x4xf32> to vector<1x1x4xf32>
    %c0_69 = arith.constant 0 : index
    %c0_70 = arith.constant 0 : index
    %c0_71 = arith.constant 0 : index
    %77 = vector.load %arg4[%c0_69, %c0_70, %c0_71] : memref<1x1x4xf32, #tpu.memory_space<vmem>>, vector<1x1x4xf32>
    tpu.vector_store %arg4[%c0_69, %c0_70, %c0_71], %76 {strides = array<i32>} : memref<1x1x4xf32, #tpu.memory_space<vmem>>, vector<1x1x4xf32>,
    %78 = arith.mulf %70, %70 : vector<256x4xf32>
    %cst_72 = arith.constant dense<0.000000e+00> : vector<4xf32>
    %79 = vector.multi_reduction <add>, %78, %cst_72 [0] : vector<256x4xf32> to vector<4xf32>
    %80 = vector.shape_cast %79 : vector<4xf32> to vector<1x4xf32>
    %81 = vector.shape_cast %80 : vector<1x4xf32> to vector<1x1x4xf32>
    %c0_73 = arith.constant 0 : index
    %c0_74 = arith.constant 0 : index
    %c0_75 = arith.constant 0 : index
    %82 = vector.load %arg5[%c0_73, %c0_74, %c0_75] : memref<1x1x4xf32, #tpu.memory_space<vmem>>, vector<1x1x4xf32>
    tpu.vector_store %arg5[%c0_73, %c0_74, %c0_75], %81 {strides = array<i32>} : memref<1x1x4xf32, #tpu.memory_space<vmem>>, vector<1x1x4xf32>,
    return
  }
  func.func @transform_0(%arg0: i32) -> (i32, i32, i32, i32) {
    %c0_i32 = arith.constant 0 : i32
    %c0_i32_0 = arith.constant 0 : i32
    %c0_i32_1 = arith.constant 0 : i32
    %c0_i32_2 = arith.constant 0 : i32
    return %arg0, %c0_i32, %c0_i32_0, %c0_i32_1 : i32, i32, i32, i32
  }
  func.func @transform_1(%arg0: i32) -> (i32, i32, i32) {
    %c0_i32 = arith.constant 0 : i32
    %c0_i32_0 = arith.constant 0 : i32
    %c0_i32_1 = arith.constant 0 : i32
    %c0_i32_2 = arith.constant 0 : i32
    return %c0_i32, %c0_i32_0, %c0_i32_1 : i32, i32, i32
  }
  func.func @transform_2(%arg0: i32) -> (i32, i32, i32, i32) {
    %c0_i32 = arith.constant 0 : i32
    %c0_i32_0 = arith.constant 0 : i32
    %c0_i32_1 = arith.constant 0 : i32
    %c0_i32_2 = arith.constant 0 : i32
    return %arg0, %c0_i32, %c0_i32_0, %c0_i32_1 : i32, i32, i32, i32
  }
  func.func @transform_3(%arg0: i32) -> (i32, i32, i32) {
    %c0_i32 = arith.constant 0 : i32
    %c0_i32_0 = arith.constant 0 : i32
    %c0_i32_1 = arith.constant 0 : i32
    return %arg0, %c0_i32, %c0_i32_0 : i32, i32, i32
  }
  func.func @transform_4(%arg0: i32) -> (i32, i32, i32) {
    %c0_i32 = arith.constant 0 : i32
    %c0_i32_0 = arith.constant 0 : i32
    %c0_i32_1 = arith.constant 0 : i32
    return %arg0, %c0_i32, %c0_i32_0 : i32, i32, i32
  }
}

module attributes {stable_mosaic.version = 11 : i64} {
  func.func @bn_relu_conv2_stats_kernel(%arg0: i32, %arg1: memref<1x16x16x4xbf16, #tpu.memory_space<vmem>>, %arg2: memref<1x4xf32, #tpu.memory_space<vmem>>, %arg3: memref<1x4xf32, #tpu.memory_space<vmem>>, %arg4: memref<9x4x4xbf16, #tpu.memory_space<vmem>>, %arg5: memref<1x16x16x4xbf16, #tpu.memory_space<vmem>>, %arg6: memref<1x1x4xf32, #tpu.memory_space<vmem>>, %arg7: memref<1x1x4xf32, #tpu.memory_space<vmem>>, %arg8: memref<18x32x4xf32, #tpu.memory_space<vmem>>) attributes {dimension_semantics = [#tpu.dimension_semantics<parallel>], iteration_bounds = array<i64: 2>, scalar_prefetch = 0 : i64, scratch_operands = 1 : i64, tpu.core_type = #tpu.core_type<tc>, window_params = [{transform_indices = @transform_0, window_bounds = array<i64: 1, 16, 16, 4>}, {pipeline_mode = #tpu.pipeline_mode<synchronous>, transform_indices = @transform_1, window_bounds = array<i64: 1, 4>}, {pipeline_mode = #tpu.pipeline_mode<synchronous>, transform_indices = @transform_2, window_bounds = array<i64: 1, 4>}, {pipeline_mode = #tpu.pipeline_mode<synchronous>, transform_indices = @transform_3, window_bounds = array<i64: 9, 4, 4>}, {transform_indices = @transform_4, window_bounds = array<i64: 1, 16, 16, 4>}, {transform_indices = @transform_5, window_bounds = array<i64: 1, 1, 4>}, {transform_indices = @transform_6, window_bounds = array<i64: 1, 1, 4>}]} {
    %c0 = arith.constant 0 : index
    %c0_0 = arith.constant 0 : index
    %c0_1 = arith.constant 0 : index
    %c0_2 = arith.constant 0 : index
    %0 = vector.load %arg1[%c0, %c0_0, %c0_1, %c0_2] : memref<1x16x16x4xbf16, #tpu.memory_space<vmem>>, vector<1x16x16x4xbf16>
    %1 = vector.shape_cast %0 : vector<1x16x16x4xbf16> to vector<16x16x4xbf16>
    %2 = vector.shape_cast %1 : vector<16x16x4xbf16> to vector<256x4xbf16>
    %3 = arith.extf %2 : vector<256x4xbf16> to vector<256x4xf32>
    %c0_3 = arith.constant 0 : index
    %c0_4 = arith.constant 0 : index
    %4 = vector.load %arg2[%c0_3, %c0_4] : memref<1x4xf32, #tpu.memory_space<vmem>>, vector<1x4xf32>
    %5 = vector.broadcast %4 : vector<1x4xf32> to vector<256x4xf32>
    %6 = arith.mulf %3, %5 : vector<256x4xf32>
    %c0_5 = arith.constant 0 : index
    %c0_6 = arith.constant 0 : index
    %7 = vector.load %arg3[%c0_5, %c0_6] : memref<1x4xf32, #tpu.memory_space<vmem>>, vector<1x4xf32>
    %8 = vector.broadcast %7 : vector<1x4xf32> to vector<256x4xf32>
    %9 = arith.addf %6, %8 : vector<256x4xf32>
    %cst = arith.constant 0.000000e+00 : f32
    %10 = vector.broadcast %cst : f32 to vector<256x4xf32>
    %11 = arith.maximumf %9, %10 : vector<256x4xf32>
    %cst_7 = arith.constant 0.000000e+00 : f32
    %12 = vector.broadcast %cst_7 : f32 to vector<18x32x4xf32>
    %c0_8 = arith.constant 0 : index
    %c0_9 = arith.constant 0 : index
    %c0_10 = arith.constant 0 : index
    %13 = vector.load %arg8[%c0_8, %c0_9, %c0_10] : memref<18x32x4xf32, #tpu.memory_space<vmem>>, vector<18x32x4xf32>
    tpu.vector_store %arg8[%c0_8, %c0_9, %c0_10], %12 {strides = array<i32>} : memref<18x32x4xf32, #tpu.memory_space<vmem>>, vector<18x32x4xf32>,
    %14 = vector.shape_cast %11 : vector<256x4xf32> to vector<16x16x4xf32>
    %c1 = arith.constant 1 : index
    %c8 = arith.constant 8 : index
    %c0_11 = arith.constant 0 : index
    %15 = vector.load %arg8[%c1, %c8, %c0_11] : memref<18x32x4xf32, #tpu.memory_space<vmem>>, vector<16x16x4xf32>
    tpu.vector_store %arg8[%c1, %c8, %c0_11], %14 {strides = array<i32>} : memref<18x32x4xf32, #tpu.memory_space<vmem>>, vector<16x16x4xf32>,
    %cst_12 = arith.constant 0.000000e+00 : f32
    %16 = vector.broadcast %cst_12 : f32 to vector<256x4xf32>
    %c0_13 = arith.constant 0 : index
    %c7 = arith.constant 7 : index
    %c0_14 = arith.constant 0 : index
    %17 = vector.load %arg8[%c0_13, %c7, %c0_14] : memref<18x32x4xf32, #tpu.memory_space<vmem>>, vector<16x16x4xf32>
    %18 = vector.shape_cast %17 : vector<16x16x4xf32> to vector<256x4xf32>
    %19 = arith.truncf %18 : vector<256x4xf32> to vector<256x4xbf16>
    %c0_15 = arith.constant 0 : index
    %c0_16 = arith.constant 0 : index
    %c0_17 = arith.constant 0 : index
    %20 = vector.load %arg4[%c0_15, %c0_16, %c0_17] : memref<9x4x4xbf16, #tpu.memory_space<vmem>>, vector<1x4x4xbf16>
    %21 = vector.shape_cast %20 : vector<1x4x4xbf16> to vector<4x4xbf16>
    %cst_18 = arith.constant dense<0.000000e+00> : vector<256x4xf32>
    %22 = tpu.matmul %19, %21, %cst_18 {dimension_numbers = #tpu.dot_dimension_numbers<[1], [0], [0], [1], [0, 0, 1, 1], [], []>} : vector<256x4xbf16>, vector<4x4xbf16>, vector<256x4xf32> -> vector<256x4xf32>
    %23 = arith.addf %16, %22 : vector<256x4xf32>
    %c0_19 = arith.constant 0 : index
    %c8_20 = arith.constant 8 : index
    %c0_21 = arith.constant 0 : index
    %24 = vector.load %arg8[%c0_19, %c8_20, %c0_21] : memref<18x32x4xf32, #tpu.memory_space<vmem>>, vector<16x16x4xf32>
    %25 = vector.shape_cast %24 : vector<16x16x4xf32> to vector<256x4xf32>
    %26 = arith.truncf %25 : vector<256x4xf32> to vector<256x4xbf16>
    %c1_22 = arith.constant 1 : index
    %c0_23 = arith.constant 0 : index
    %c0_24 = arith.constant 0 : index
    %27 = vector.load %arg4[%c1_22, %c0_23, %c0_24] : memref<9x4x4xbf16, #tpu.memory_space<vmem>>, vector<1x4x4xbf16>
    %28 = vector.shape_cast %27 : vector<1x4x4xbf16> to vector<4x4xbf16>
    %cst_25 = arith.constant dense<0.000000e+00> : vector<256x4xf32>
    %29 = tpu.matmul %26, %28, %cst_25 {dimension_numbers = #tpu.dot_dimension_numbers<[1], [0], [0], [1], [0, 0, 1, 1], [], []>} : vector<256x4xbf16>, vector<4x4xbf16>, vector<256x4xf32> -> vector<256x4xf32>
    %30 = arith.addf %23, %29 : vector<256x4xf32>
    %c0_26 = arith.constant 0 : index
    %c9 = arith.constant 9 : index
    %c0_27 = arith.constant 0 : index
    %31 = vector.load %arg8[%c0_26, %c9, %c0_27] : memref<18x32x4xf32, #tpu.memory_space<vmem>>, vector<16x16x4xf32>
    %32 = vector.shape_cast %31 : vector<16x16x4xf32> to vector<256x4xf32>
    %33 = arith.truncf %32 : vector<256x4xf32> to vector<256x4xbf16>
    %c2 = arith.constant 2 : index
    %c0_28 = arith.constant 0 : index
    %c0_29 = arith.constant 0 : index
    %34 = vector.load %arg4[%c2, %c0_28, %c0_29] : memref<9x4x4xbf16, #tpu.memory_space<vmem>>, vector<1x4x4xbf16>
    %35 = vector.shape_cast %34 : vector<1x4x4xbf16> to vector<4x4xbf16>
    %cst_30 = arith.constant dense<0.000000e+00> : vector<256x4xf32>
    %36 = tpu.matmul %33, %35, %cst_30 {dimension_numbers = #tpu.dot_dimension_numbers<[1], [0], [0], [1], [0, 0, 1, 1], [], []>} : vector<256x4xbf16>, vector<4x4xbf16>, vector<256x4xf32> -> vector<256x4xf32>
    %37 = arith.addf %30, %36 : vector<256x4xf32>
    %c1_31 = arith.constant 1 : index
    %c7_32 = arith.constant 7 : index
    %c0_33 = arith.constant 0 : index
    %38 = vector.load %arg8[%c1_31, %c7_32, %c0_33] : memref<18x32x4xf32, #tpu.memory_space<vmem>>, vector<16x16x4xf32>
    %39 = vector.shape_cast %38 : vector<16x16x4xf32> to vector<256x4xf32>
    %40 = arith.truncf %39 : vector<256x4xf32> to vector<256x4xbf16>
    %c3 = arith.constant 3 : index
    %c0_34 = arith.constant 0 : index
    %c0_35 = arith.constant 0 : index
    %41 = vector.load %arg4[%c3, %c0_34, %c0_35] : memref<9x4x4xbf16, #tpu.memory_space<vmem>>, vector<1x4x4xbf16>
    %42 = vector.shape_cast %41 : vector<1x4x4xbf16> to vector<4x4xbf16>
    %cst_36 = arith.constant dense<0.000000e+00> : vector<256x4xf32>
    %43 = tpu.matmul %40, %42, %cst_36 {dimension_numbers = #tpu.dot_dimension_numbers<[1], [0], [0], [1], [0, 0, 1, 1], [], []>} : vector<256x4xbf16>, vector<4x4xbf16>, vector<256x4xf32> -> vector<256x4xf32>
    %44 = arith.addf %37, %43 : vector<256x4xf32>
    %c1_37 = arith.constant 1 : index
    %c8_38 = arith.constant 8 : index
    %c0_39 = arith.constant 0 : index
    %45 = vector.load %arg8[%c1_37, %c8_38, %c0_39] : memref<18x32x4xf32, #tpu.memory_space<vmem>>, vector<16x16x4xf32>
    %46 = vector.shape_cast %45 : vector<16x16x4xf32> to vector<256x4xf32>
    %47 = arith.truncf %46 : vector<256x4xf32> to vector<256x4xbf16>
    %c4 = arith.constant 4 : index
    %c0_40 = arith.constant 0 : index
    %c0_41 = arith.constant 0 : index
    %48 = vector.load %arg4[%c4, %c0_40, %c0_41] : memref<9x4x4xbf16, #tpu.memory_space<vmem>>, vector<1x4x4xbf16>
    %49 = vector.shape_cast %48 : vector<1x4x4xbf16> to vector<4x4xbf16>
    %cst_42 = arith.constant dense<0.000000e+00> : vector<256x4xf32>
    %50 = tpu.matmul %47, %49, %cst_42 {dimension_numbers = #tpu.dot_dimension_numbers<[1], [0], [0], [1], [0, 0, 1, 1], [], []>} : vector<256x4xbf16>, vector<4x4xbf16>, vector<256x4xf32> -> vector<256x4xf32>
    %51 = arith.addf %44, %50 : vector<256x4xf32>
    %c1_43 = arith.constant 1 : index
    %c9_44 = arith.constant 9 : index
    %c0_45 = arith.constant 0 : index
    %52 = vector.load %arg8[%c1_43, %c9_44, %c0_45] : memref<18x32x4xf32, #tpu.memory_space<vmem>>, vector<16x16x4xf32>
    %53 = vector.shape_cast %52 : vector<16x16x4xf32> to vector<256x4xf32>
    %54 = arith.truncf %53 : vector<256x4xf32> to vector<256x4xbf16>
    %c5 = arith.constant 5 : index
    %c0_46 = arith.constant 0 : index
    %c0_47 = arith.constant 0 : index
    %55 = vector.load %arg4[%c5, %c0_46, %c0_47] : memref<9x4x4xbf16, #tpu.memory_space<vmem>>, vector<1x4x4xbf16>
    %56 = vector.shape_cast %55 : vector<1x4x4xbf16> to vector<4x4xbf16>
    %cst_48 = arith.constant dense<0.000000e+00> : vector<256x4xf32>
    %57 = tpu.matmul %54, %56, %cst_48 {dimension_numbers = #tpu.dot_dimension_numbers<[1], [0], [0], [1], [0, 0, 1, 1], [], []>} : vector<256x4xbf16>, vector<4x4xbf16>, vector<256x4xf32> -> vector<256x4xf32>
    %58 = arith.addf %51, %57 : vector<256x4xf32>
    %c2_49 = arith.constant 2 : index
    %c7_50 = arith.constant 7 : index
    %c0_51 = arith.constant 0 : index
    %59 = vector.load %arg8[%c2_49, %c7_50, %c0_51] : memref<18x32x4xf32, #tpu.memory_space<vmem>>, vector<16x16x4xf32>
    %60 = vector.shape_cast %59 : vector<16x16x4xf32> to vector<256x4xf32>
    %61 = arith.truncf %60 : vector<256x4xf32> to vector<256x4xbf16>
    %c6 = arith.constant 6 : index
    %c0_52 = arith.constant 0 : index
    %c0_53 = arith.constant 0 : index
    %62 = vector.load %arg4[%c6, %c0_52, %c0_53] : memref<9x4x4xbf16, #tpu.memory_space<vmem>>, vector<1x4x4xbf16>
    %63 = vector.shape_cast %62 : vector<1x4x4xbf16> to vector<4x4xbf16>
    %cst_54 = arith.constant dense<0.000000e+00> : vector<256x4xf32>
    %64 = tpu.matmul %61, %63, %cst_54 {dimension_numbers = #tpu.dot_dimension_numbers<[1], [0], [0], [1], [0, 0, 1, 1], [], []>} : vector<256x4xbf16>, vector<4x4xbf16>, vector<256x4xf32> -> vector<256x4xf32>
    %65 = arith.addf %58, %64 : vector<256x4xf32>
    %c2_55 = arith.constant 2 : index
    %c8_56 = arith.constant 8 : index
    %c0_57 = arith.constant 0 : index
    %66 = vector.load %arg8[%c2_55, %c8_56, %c0_57] : memref<18x32x4xf32, #tpu.memory_space<vmem>>, vector<16x16x4xf32>
    %67 = vector.shape_cast %66 : vector<16x16x4xf32> to vector<256x4xf32>
    %68 = arith.truncf %67 : vector<256x4xf32> to vector<256x4xbf16>
    %c7_58 = arith.constant 7 : index
    %c0_59 = arith.constant 0 : index
    %c0_60 = arith.constant 0 : index
    %69 = vector.load %arg4[%c7_58, %c0_59, %c0_60] : memref<9x4x4xbf16, #tpu.memory_space<vmem>>, vector<1x4x4xbf16>
    %70 = vector.shape_cast %69 : vector<1x4x4xbf16> to vector<4x4xbf16>
    %cst_61 = arith.constant dense<0.000000e+00> : vector<256x4xf32>
    %71 = tpu.matmul %68, %70, %cst_61 {dimension_numbers = #tpu.dot_dimension_numbers<[1], [0], [0], [1], [0, 0, 1, 1], [], []>} : vector<256x4xbf16>, vector<4x4xbf16>, vector<256x4xf32> -> vector<256x4xf32>
    %72 = arith.addf %65, %71 : vector<256x4xf32>
    %c2_62 = arith.constant 2 : index
    %c9_63 = arith.constant 9 : index
    %c0_64 = arith.constant 0 : index
    %73 = vector.load %arg8[%c2_62, %c9_63, %c0_64] : memref<18x32x4xf32, #tpu.memory_space<vmem>>, vector<16x16x4xf32>
    %74 = vector.shape_cast %73 : vector<16x16x4xf32> to vector<256x4xf32>
    %75 = arith.truncf %74 : vector<256x4xf32> to vector<256x4xbf16>
    %c8_65 = arith.constant 8 : index
    %c0_66 = arith.constant 0 : index
    %c0_67 = arith.constant 0 : index
    %76 = vector.load %arg4[%c8_65, %c0_66, %c0_67] : memref<9x4x4xbf16, #tpu.memory_space<vmem>>, vector<1x4x4xbf16>
    %77 = vector.shape_cast %76 : vector<1x4x4xbf16> to vector<4x4xbf16>
    %cst_68 = arith.constant dense<0.000000e+00> : vector<256x4xf32>
    %78 = tpu.matmul %75, %77, %cst_68 {dimension_numbers = #tpu.dot_dimension_numbers<[1], [0], [0], [1], [0, 0, 1, 1], [], []>} : vector<256x4xbf16>, vector<4x4xbf16>, vector<256x4xf32> -> vector<256x4xf32>
    %79 = arith.addf %72, %78 : vector<256x4xf32>
    %80 = arith.truncf %79 : vector<256x4xf32> to vector<256x4xbf16>
    %81 = arith.extf %80 : vector<256x4xbf16> to vector<256x4xf32>
    %82 = vector.shape_cast %81 : vector<256x4xf32> to vector<1x16x16x4xf32>
    %83 = arith.truncf %82 : vector<1x16x16x4xf32> to vector<1x16x16x4xbf16>
    %c0_69 = arith.constant 0 : index
    %c0_70 = arith.constant 0 : index
    %c0_71 = arith.constant 0 : index
    %c0_72 = arith.constant 0 : index
    %84 = vector.load %arg5[%c0_69, %c0_70, %c0_71, %c0_72] : memref<1x16x16x4xbf16, #tpu.memory_space<vmem>>, vector<1x16x16x4xbf16>
    tpu.vector_store %arg5[%c0_69, %c0_70, %c0_71, %c0_72], %83 {strides = array<i32>} : memref<1x16x16x4xbf16, #tpu.memory_space<vmem>>, vector<1x16x16x4xbf16>,
    %cst_73 = arith.constant dense<0.000000e+00> : vector<4xf32>
    %85 = vector.multi_reduction <add>, %81, %cst_73 [0] : vector<256x4xf32> to vector<4xf32>
    %86 = vector.shape_cast %85 : vector<4xf32> to vector<1x4xf32>
    %87 = vector.shape_cast %86 : vector<1x4xf32> to vector<1x1x4xf32>
    %c0_74 = arith.constant 0 : index
    %c0_75 = arith.constant 0 : index
    %c0_76 = arith.constant 0 : index
    %88 = vector.load %arg6[%c0_74, %c0_75, %c0_76] : memref<1x1x4xf32, #tpu.memory_space<vmem>>, vector<1x1x4xf32>
    tpu.vector_store %arg6[%c0_74, %c0_75, %c0_76], %87 {strides = array<i32>} : memref<1x1x4xf32, #tpu.memory_space<vmem>>, vector<1x1x4xf32>,
    %89 = arith.mulf %81, %81 : vector<256x4xf32>
    %cst_77 = arith.constant dense<0.000000e+00> : vector<4xf32>
    %90 = vector.multi_reduction <add>, %89, %cst_77 [0] : vector<256x4xf32> to vector<4xf32>
    %91 = vector.shape_cast %90 : vector<4xf32> to vector<1x4xf32>
    %92 = vector.shape_cast %91 : vector<1x4xf32> to vector<1x1x4xf32>
    %c0_78 = arith.constant 0 : index
    %c0_79 = arith.constant 0 : index
    %c0_80 = arith.constant 0 : index
    %93 = vector.load %arg7[%c0_78, %c0_79, %c0_80] : memref<1x1x4xf32, #tpu.memory_space<vmem>>, vector<1x1x4xf32>
    tpu.vector_store %arg7[%c0_78, %c0_79, %c0_80], %92 {strides = array<i32>} : memref<1x1x4xf32, #tpu.memory_space<vmem>>, vector<1x1x4xf32>,
    return
  }
  func.func @transform_0(%arg0: i32) -> (i32, i32, i32, i32) {
    %c0_i32 = arith.constant 0 : i32
    %c0_i32_0 = arith.constant 0 : i32
    %c0_i32_1 = arith.constant 0 : i32
    %c0_i32_2 = arith.constant 0 : i32
    return %arg0, %c0_i32, %c0_i32_0, %c0_i32_1 : i32, i32, i32, i32
  }
  func.func @transform_1(%arg0: i32) -> (i32, i32) {
    %c0_i32 = arith.constant 0 : i32
    %c0_i32_0 = arith.constant 0 : i32
    %c0_i32_1 = arith.constant 0 : i32
    return %c0_i32, %c0_i32_0 : i32, i32
  }
  func.func @transform_2(%arg0: i32) -> (i32, i32) {
    %c0_i32 = arith.constant 0 : i32
    %c0_i32_0 = arith.constant 0 : i32
    %c0_i32_1 = arith.constant 0 : i32
    return %c0_i32, %c0_i32_0 : i32, i32
  }
  func.func @transform_3(%arg0: i32) -> (i32, i32, i32) {
    %c0_i32 = arith.constant 0 : i32
    %c0_i32_0 = arith.constant 0 : i32
    %c0_i32_1 = arith.constant 0 : i32
    %c0_i32_2 = arith.constant 0 : i32
    return %c0_i32, %c0_i32_0, %c0_i32_1 : i32, i32, i32
  }
  func.func @transform_4(%arg0: i32) -> (i32, i32, i32, i32) {
    %c0_i32 = arith.constant 0 : i32
    %c0_i32_0 = arith.constant 0 : i32
    %c0_i32_1 = arith.constant 0 : i32
    %c0_i32_2 = arith.constant 0 : i32
    return %arg0, %c0_i32, %c0_i32_0, %c0_i32_1 : i32, i32, i32, i32
  }
  func.func @transform_5(%arg0: i32) -> (i32, i32, i32) {
    %c0_i32 = arith.constant 0 : i32
    %c0_i32_0 = arith.constant 0 : i32
    %c0_i32_1 = arith.constant 0 : i32
    return %arg0, %c0_i32, %c0_i32_0 : i32, i32, i32
  }
  func.func @transform_6(%arg0: i32) -> (i32, i32, i32) {
    %c0_i32 = arith.constant 0 : i32
    %c0_i32_0 = arith.constant 0 : i32
    %c0_i32_1 = arith.constant 0 : i32
    return %arg0, %c0_i32, %c0_i32_0 : i32, i32, i32
  }
}

module attributes {stable_mosaic.version = 11 : i64} {
  func.func @bn_add_relu_kernel(%arg0: i32, %arg1: memref<1x16x16x4xbf16, #tpu.memory_space<vmem>>, %arg2: memref<1x4xf32, #tpu.memory_space<vmem>>, %arg3: memref<1x4xf32, #tpu.memory_space<vmem>>, %arg4: memref<1x16x16x4xf32, #tpu.memory_space<vmem>>, %arg5: memref<1x16x16x4xf32, #tpu.memory_space<vmem>>) attributes {dimension_semantics = [#tpu.dimension_semantics<parallel>], iteration_bounds = array<i64: 2>, scalar_prefetch = 0 : i64, scratch_operands = 0 : i64, tpu.core_type = #tpu.core_type<tc>, window_params = [{transform_indices = @transform_0, window_bounds = array<i64: 1, 16, 16, 4>}, {pipeline_mode = #tpu.pipeline_mode<synchronous>, transform_indices = @transform_1, window_bounds = array<i64: 1, 4>}, {pipeline_mode = #tpu.pipeline_mode<synchronous>, transform_indices = @transform_2, window_bounds = array<i64: 1, 4>}, {transform_indices = @transform_3, window_bounds = array<i64: 1, 16, 16, 4>}, {transform_indices = @transform_4, window_bounds = array<i64: 1, 16, 16, 4>}]} {
    %c0 = arith.constant 0 : index
    %c0_0 = arith.constant 0 : index
    %c0_1 = arith.constant 0 : index
    %c0_2 = arith.constant 0 : index
    %0 = vector.load %arg1[%c0, %c0_0, %c0_1, %c0_2] : memref<1x16x16x4xbf16, #tpu.memory_space<vmem>>, vector<1x16x16x4xbf16>
    %1 = vector.shape_cast %0 : vector<1x16x16x4xbf16> to vector<16x16x4xbf16>
    %2 = vector.shape_cast %1 : vector<16x16x4xbf16> to vector<256x4xbf16>
    %3 = arith.extf %2 : vector<256x4xbf16> to vector<256x4xf32>
    %c0_3 = arith.constant 0 : index
    %c0_4 = arith.constant 0 : index
    %4 = vector.load %arg2[%c0_3, %c0_4] : memref<1x4xf32, #tpu.memory_space<vmem>>, vector<1x4xf32>
    %5 = vector.broadcast %4 : vector<1x4xf32> to vector<256x4xf32>
    %6 = arith.mulf %3, %5 : vector<256x4xf32>
    %c0_5 = arith.constant 0 : index
    %c0_6 = arith.constant 0 : index
    %7 = vector.load %arg3[%c0_5, %c0_6] : memref<1x4xf32, #tpu.memory_space<vmem>>, vector<1x4xf32>
    %8 = vector.broadcast %7 : vector<1x4xf32> to vector<256x4xf32>
    %9 = arith.addf %6, %8 : vector<256x4xf32>
    %c0_7 = arith.constant 0 : index
    %c0_8 = arith.constant 0 : index
    %c0_9 = arith.constant 0 : index
    %c0_10 = arith.constant 0 : index
    %10 = vector.load %arg4[%c0_7, %c0_8, %c0_9, %c0_10] : memref<1x16x16x4xf32, #tpu.memory_space<vmem>>, vector<1x16x16x4xf32>
    %11 = vector.shape_cast %10 : vector<1x16x16x4xf32> to vector<16x16x4xf32>
    %12 = vector.shape_cast %11 : vector<16x16x4xf32> to vector<256x4xf32>
    %13 = arith.addf %9, %12 : vector<256x4xf32>
    %cst = arith.constant 0.000000e+00 : f32
    %14 = vector.broadcast %cst : f32 to vector<256x4xf32>
    %15 = arith.maximumf %13, %14 : vector<256x4xf32>
    %16 = vector.shape_cast %15 : vector<256x4xf32> to vector<1x16x16x4xf32>
    %c0_11 = arith.constant 0 : index
    %c0_12 = arith.constant 0 : index
    %c0_13 = arith.constant 0 : index
    %c0_14 = arith.constant 0 : index
    %17 = vector.load %arg5[%c0_11, %c0_12, %c0_13, %c0_14] : memref<1x16x16x4xf32, #tpu.memory_space<vmem>>, vector<1x16x16x4xf32>
    tpu.vector_store %arg5[%c0_11, %c0_12, %c0_13, %c0_14], %16 {strides = array<i32>} : memref<1x16x16x4xf32, #tpu.memory_space<vmem>>, vector<1x16x16x4xf32>,
    return
  }
  func.func @transform_0(%arg0: i32) -> (i32, i32, i32, i32) {
    %c0_i32 = arith.constant 0 : i32
    %c0_i32_0 = arith.constant 0 : i32
    %c0_i32_1 = arith.constant 0 : i32
    %c0_i32_2 = arith.constant 0 : i32
    return %arg0, %c0_i32, %c0_i32_0, %c0_i32_1 : i32, i32, i32, i32
  }
  func.func @transform_1(%arg0: i32) -> (i32, i32) {
    %c0_i32 = arith.constant 0 : i32
    %c0_i32_0 = arith.constant 0 : i32
    %c0_i32_1 = arith.constant 0 : i32
    return %c0_i32, %c0_i32_0 : i32, i32
  }
  func.func @transform_2(%arg0: i32) -> (i32, i32) {
    %c0_i32 = arith.constant 0 : i32
    %c0_i32_0 = arith.constant 0 : i32
    %c0_i32_1 = arith.constant 0 : i32
    return %c0_i32, %c0_i32_0 : i32, i32
  }
  func.func @transform_3(%arg0: i32) -> (i32, i32, i32, i32) {
    %c0_i32 = arith.constant 0 : i32
    %c0_i32_0 = arith.constant 0 : i32
    %c0_i32_1 = arith.constant 0 : i32
    %c0_i32_2 = arith.constant 0 : i32
    return %arg0, %c0_i32, %c0_i32_0, %c0_i32_1 : i32, i32, i32, i32
  }
  func.func @transform_4(%arg0: i32) -> (i32, i32, i32, i32) {
    %c0_i32 = arith.constant 0 : i32
    %c0_i32_0 = arith.constant 0 : i32
    %c0_i32_1 = arith.constant 0 : i32
    %c0_i32_2 = arith.constant 0 : i32
    return %arg0, %c0_i32, %c0_i32_0, %c0_i32_1 : i32, i32, i32, i32
  }
}

</mosaic_0001>

<llo_original>
// kernel: basic_block_forward_nhwc.5
$region0: #{basic_block_forward_nhwc.5}
  #allocation0 [shape = 'u32[]', space=smem, size = 0x4, offset = 0x4, fixed_abs, tag = 'smem constant byte address 0x4 - core index']
  #allocation1 [shape = 'u32[144,128]{1,0:T(1,128)}', space=vmem, size = 0x12000, scoped, tag = 'internal scratch']
  %s0 = inlined_call_operand.vmem [shape: bf16[2,16,16,4], index: 0, kind: input, shape index: {}]
  %s1 = inlined_call_operand.vmem [shape: f32[1,4], index: 1, kind: input, shape index: {}]
  %s2 = inlined_call_operand.vmem [shape: f32[1,4], index: 2, kind: input, shape index: {}]
  %s3 = inlined_call_operand.vmem [shape: f32[2,16,16,4], index: 3, kind: input, shape index: {}]
  %s4 = inlined_call_operand.vmem [shape: f32[2,16,16,4], index: 4, kind: output, shape index: {}]
  %s5 = sld [smem:[#allocation0]]
  $region49: #{basic_block_forward_nhwc.5} parent=0
    _
  %s7 = ssub.s32 1, %s5
  %s8 = scalar_select 0, %s7, %s5
  loop: start=0, step=1, limit=4
  $region2: #{basic_block_forward_nhwc.5} parent=0 // loop_pre_header
    _
  $region3: #{basic_block_forward_nhwc.5} parent=0 // loop_header
    %s10 = sphi 0, %s14
    %p11 = scmp.ge.s32.totalorder %s10, 4
    %s20 = sphi 0, %s22
    %s23 = sphi 0, %s20
    %s24 = sphi 0, %s23
    %s40 = sphi 0, %s24
    %s44 = sphi 0, %s44
    %s46 = sphi 0, %s44
    %s47 = sphi 0, %s46
    %s61 = sphi 0, %s47
    %s65 = sphi 0, %s65
    %s67 = sphi 0, %s65
    %s68 = sphi 0, %s67
    %s82 = sphi 0, %s68
    %s88 = sphi 0, %s90
    %s91 = sphi 0, %s88
    %s92 = sphi 0, %s91
    %s108 = sphi 0, %s92
    %s114 = sphi 0, %s116
    %s117 = sphi 0, %s114
    %s118 = sphi 0, %s117
    %s134 = sphi 0, %s118
  $region4: #{basic_block_forward_nhwc.5} parent=0 // loop_header_branch
    %13 = sbr.rel (%p11) target = $region8
  $region5: #{basic_block_forward_nhwc.5} parent=0 // loop_body
    %s15 = ssub.s32 %s10, 1
    %s16 = ssub.s32 %s10, 2
    %s17 = sadd.s32 %s10, 1
    %s18 = ssub.s32 %s10, %s17
    %p19 = scmp.eq.s32.totalorder %s18, 0
    %s21 = sadd.s32 %s20, 1
    %s22 = scalar_select %p19, %s20, %s21
    %p25 = pneg %p19
    %p26 = scmp.eq.s32.totalorder %s10, 1
    %p27 = por %p25, %p26
    %p28 = scmp.ne.s32.totalorder %s20, %s23
    %p29 = scmp.eq.s32.totalorder %s10, 0
    %p30 = por %p28, %p29
    %p31 = scmp.ne.s32.totalorder %s20, %s23
    %p32 = scmp.eq.s32.totalorder %s15, 1
    %p33 = por %p31, %p32
    %p34 = scmp.ne.s32.totalorder %s23, %s24
    %p35 = scmp.eq.s32.totalorder %s15, 0
    %p36 = por %p34, %p35
    %p37 = scmp.ne.s32.totalorder %s23, %s24
    %p38 = scmp.eq.s32.totalorder %s16, 1
    %p39 = por %p37, %p38
    %p41 = scmp.ne.s32.totalorder %s24, %s40
    %p42 = scmp.eq.s32.totalorder %s16, 0
    %p43 = por %p41, %p42
    %s45 = sadd.s32 %s44, 1
    %p48 = scmp.eq.s32.totalorder %s10, 1
    %p49 = scmp.ne.s32.totalorder %s44, %s46
    %p50 = scmp.eq.s32.totalorder %s10, 0
    %p51 = por %p49, %p50
    %p52 = scmp.ne.s32.totalorder %s44, %s46
    %p53 = scmp.eq.s32.totalorder %s15, 1
    %p54 = por %p52, %p53
    %p55 = scmp.ne.s32.totalorder %s46, %s47
    %p56 = scmp.eq.s32.totalorder %s15, 0
    %p57 = por %p55, %p56
    %p58 = scmp.ne.s32.totalorder %s46, %s47
    %p59 = scmp.eq.s32.totalorder %s16, 1
    %p60 = por %p58, %p59
    %p62 = scmp.ne.s32.totalorder %s47, %s61
    %p63 = scmp.eq.s32.totalorder %s16, 0
    %p64 = por %p62, %p63
    %s66 = sadd.s32 %s65, 1
    %p69 = scmp.eq.s32.totalorder %s10, 1
    %p70 = scmp.ne.s32.totalorder %s65, %s67
    %p71 = scmp.eq.s32.totalorder %s10, 0
    %p72 = por %p70, %p71
    %p73 = scmp.ne.s32.totalorder %s65, %s67
    %p74 = scmp.eq.s32.totalorder %s15, 1
    %p75 = por %p73, %p74
    %p76 = scmp.ne.s32.totalorder %s67, %s68
    %p77 = scmp.eq.s32.totalorder %s15, 0
    %p78 = por %p76, %p77
    %p79 = scmp.ne.s32.totalorder %s67, %s68
    %p80 = scmp.eq.s32.totalorder %s16, 1
    %p81 = por %p79, %p80
    %p83 = scmp.ne.s32.totalorder %s68, %s82
    %p84 = scmp.eq.s32.totalorder %s16, 0
    %p85 = por %p83, %p84
    %s86 = ssub.s32 %s10, %s17
    %p87 = scmp.eq.s32.totalorder %s86, 0
    %s89 = sadd.s32 %s88, 1
    %s90 = scalar_select %p87, %s88, %s89
    %p93 = pneg %p87
    %p94 = scmp.eq.s32.totalorder %s10, 1
    %p95 = por %p93, %p94
    %p96 = scmp.ne.s32.totalorder %s88, %s91
    %p97 = scmp.eq.s32.totalorder %s10, 0
    %p98 = por %p96, %p97
    %p99 = scmp.ne.s32.totalorder %s88, %s91
    %p100 = scmp.eq.s32.totalorder %s15, 1
    %p101 = por %p99, %p100
    %p102 = scmp.ne.s32.totalorder %s91, %s92
    %p103 = scmp.eq.s32.totalorder %s15, 0
    %p104 = por %p102, %p103
    %p105 = scmp.ne.s32.totalorder %s91, %s92
    %p106 = scmp.eq.s32.totalorder %s16, 1
    %p107 = por %p105, %p106
    %p109 = scmp.ne.s32.totalorder %s92, %s108
    %p110 = scmp.eq.s32.totalorder %s16, 0
    %p111 = por %p109, %p110
    %s112 = ssub.s32 %s10, %s17
    %p113 = scmp.eq.s32.totalorder %s112, 0
    %s115 = sadd.s32 %s114, 1
    %s116 = scalar_select %p113, %s114, %s115
    %p119 = pneg %p113
    %p120 = scmp.eq.s32.totalorder %s10, 1
    %p121 = por %p119, %p120
    %p122 = scmp.ne.s32.totalorder %s114, %s117
    %p123 = scmp.eq.s32.totalorder %s10, 0
    %p124 = por %p122, %p123
    %p125 = scmp.ne.s32.totalorder %s114, %s117
    %p126 = scmp.eq.s32.totalorder %s15, 1
    %p127 = por %p125, %p126
    %p128 = scmp.ne.s32.totalorder %s117, %s118
    %p129 = scmp.eq.s32.totalorder %s15, 0
    %p130 = por %p128, %p129
    %p131 = scmp.ne.s32.totalorder %s117, %s118
    %p132 = scmp.eq.s32.totalorder %s16, 1
    %p133 = por %p131, %p132
    %p135 = scmp.ne.s32.totalorder %s118, %s134
    %p136 = scmp.eq.s32.totalorder %s16, 0
    %p137 = por %p135, %p136
    %p138 = scmp.le.s32.totalorder 1, %s10
    %p139 = scmp.lt.s32.totalorder %s10, 3
    %p140 = pnand %p138, %p139
    %p141 = pneg %p140
    // Predicated region
    $region9: #{basic_block_forward_nhwc.5} parent=5 // pred_check
      _
    $region10: #{basic_block_forward_nhwc.5} parent=5 // pred_check_branch
      %143 = sbr.rel (%p140) target = $region12
    $region11: #{basic_block_forward_nhwc.5} parent=5 // pred_region
      %s144 = ssub.s32 %s10, 1
      // Predicated region
      $region13: #{basic_block_forward_nhwc.5} parent=11 // pred_check
        %p145 = pneg %p57
      $region14: #{basic_block_forward_nhwc.5} parent=11 // pred_check_branch
        %147 = sbr.rel (%p145) target = $region16
      $region15: #{basic_block_forward_nhwc.5} parent=11 // pred_region
        _
      $region16: #{basic_block_forward_nhwc.5} parent=11 // pred_fallthru
        _
      // Predicated region
      $region17: #{basic_block_forward_nhwc.5} parent=11 // pred_check
        %p148 = pneg %p78
      $region18: #{basic_block_forward_nhwc.5} parent=11 // pred_check_branch
        %150 = sbr.rel (%p148) target = $region20
      $region19: #{basic_block_forward_nhwc.5} parent=11 // pred_region
        _
      $region20: #{basic_block_forward_nhwc.5} parent=11 // pred_fallthru
        _
    $region12: #{basic_block_forward_nhwc.5} parent=5 // pred_fallthru
      _
    %p151 = scmp.lt.s32.totalorder %s10, 2
    // Predicated region
    $region21: #{basic_block_forward_nhwc.5} parent=5 // pred_check
      %p152 = pneg %p151
    $region22: #{basic_block_forward_nhwc.5} parent=5 // pred_check_branch
      %154 = sbr.rel (%p152) target = $region24
    $region23: #{basic_block_forward_nhwc.5} parent=5 // pred_region
      // Predicated region
      $region25: #{basic_block_forward_nhwc.5} parent=23 // pred_check
        %p155 = pneg %p30
      $region26: #{basic_block_forward_nhwc.5} parent=23 // pred_check_branch
        %157 = sbr.rel (%p155) target = $region28
      $region27: #{basic_block_forward_nhwc.5} parent=23 // pred_region
        %p158 = scmp.lt.s32.totalorder %s10, 1
        %s159 = scalar_select %p158, %s10, 1
        %s160 = smul.addr %s159, 32
        %s161 = smul.addr %s160, 4
        %s162 = scalar_lea.vmem %s0, %s161
      $region28: #{basic_block_forward_nhwc.5} parent=23 // pred_fallthru
        _
      // Predicated region
      $region29: #{basic_block_forward_nhwc.5} parent=23 // pred_check
        %p163 = pneg %p98
      $region30: #{basic_block_forward_nhwc.5} parent=23 // pred_check_branch
        %165 = sbr.rel (%p163) target = $region32
      $region31: #{basic_block_forward_nhwc.5} parent=23 // pred_region
        %p166 = scmp.lt.s32.totalorder %s10, 1
        %s167 = scalar_select %p166, %s10, 1
        %s168 = smul.addr %s167, 32
        %s169 = smul.addr %s168, 8
        %s170 = scalar_lea.vmem %s3, %s169
      $region32: #{basic_block_forward_nhwc.5} parent=23 // pred_fallthru
        _
    $region24: #{basic_block_forward_nhwc.5} parent=5 // pred_fallthru
      _
    %p171 = scmp.le.s32.totalorder 1, %s10
    %p172 = scmp.lt.s32.totalorder %s10, 3
    %p173 = pnand %p171, %p172
    %p174 = pneg %p173
    // Predicated region
    $region33: #{basic_block_forward_nhwc.5} parent=5 // pred_check
      _
    $region34: #{basic_block_forward_nhwc.5} parent=5 // pred_check_branch
      %176 = sbr.rel (%p173) target = $region36
    $region35: #{basic_block_forward_nhwc.5} parent=5 // pred_region
      %s177 = ssub.s32 %s10, 1
      %p178 = scmp.lt.s32.totalorder %s15, 1
      %s179 = scalar_select %p178, %s15, 1
      %s180 = smul.addr %s179, 32
      %s181 = smul.addr %s180, 4
      %s182 = scalar_lea.vmem %s0, %s181
      %p183 = pneg %p36
      %p184 = pneg %p33
      %p185 = pneg %p57
      %p186 = pneg %p54
      %p187 = pneg %p78
      %p188 = pneg %p75
      %p189 = scmp.lt.s32.totalorder %s15, 1
      %s190 = scalar_select %p189, %s15, 1
      %s191 = smul.addr %s190, 32
      %s192 = smul.addr %s191, 8
      %s193 = scalar_lea.vmem %s3, %s192
      %p194 = pneg %p104
      %p195 = pneg %p101
      %p196 = pneg %p130
      %p197 = pneg %p127
      %p198 = scmp.lt.s32.totalorder %s15, 1
      %s199 = scalar_select %p198, %s15, 1
      %s200 = smul.addr %s199, 32
      %s201 = smul.addr %s200, 8
      %s202 = scalar_lea.vmem %s4, %s201
      %p203 = scmp.lt.s32.totalorder %s15, 1
      %s204 = scalar_select %p203, %s15, 1
      %s205 = smul.addr %s204, 32
      %s206 = smul.addr %s205, 4
      %s207 = scalar_lea.vmem %s0, %s206
      %p208 = scmp.lt.s32.totalorder %s15, 1
      %s209 = scalar_select %p208, %s15, 1
      %s210 = smul.addr %s209, 32
      %s211 = smul.addr %s210, 8
      %s212 = scalar_lea.vmem %s3, %s211
      %p213 = scmp.lt.s32.totalorder %s15, 1
      %s214 = scalar_select %p213, %s15, 1
      %s215 = smul.addr %s214, 32
      %s216 = smul.addr %s215, 8
      %s217 = scalar_lea.vmem %s4, %s216
      %v218 = vld [vmem:[%s207] sm:$0xf]
      %v219 = vld [vmem:[%s207 + $0x4] sm:$0xf]
      %v220 = vld [vmem:[%s207 + $0x8] sm:$0xf]
      %v221 = vld [vmem:[%s207 + $0xc] sm:$0xf]
      %v222 = vld [vmem:[%s207 + $0x10] sm:$0xf]
      %v223 = vld [vmem:[%s207 + $0x14] sm:$0xf]
      %v224 = vld [vmem:[%s207 + $0x18] sm:$0xf]
      %v225 = vld [vmem:[%s207 + $0x1c] sm:$0xf]
      %v226 = vld [vmem:[%s207 + $0x20] sm:$0xf]
      %v227 = vld [vmem:[%s207 + $0x24] sm:$0xf]
      %v228 = vld [vmem:[%s207 + $0x28] sm:$0xf]
      %v229 = vld [vmem:[%s207 + $0x2c] sm:$0xf]
      %v230 = vld [vmem:[%s207 + $0x30] sm:$0xf]
      %v231 = vld [vmem:[%s207 + $0x34] sm:$0xf]
      %v232 = vld [vmem:[%s207 + $0x38] sm:$0xf]
      %v233 = vld [vmem:[%s207 + $0x3c] sm:$0xf]
      %v234 = vld [vmem:[%s207 + $0x40] sm:$0xf]
      %v235 = vld [vmem:[%s207 + $0x44] sm:$0xf]
      %v236 = vld [vmem:[%s207 + $0x48] sm:$0xf]
      %v237 = vld [vmem:[%s207 + $0x4c] sm:$0xf]
      %v238 = vld [vmem:[%s207 + $0x50] sm:$0xf]
      %v239 = vld [vmem:[%s207 + $0x54] sm:$0xf]
      %v240 = vld [vmem:[%s207 + $0x58] sm:$0xf]
      %v241 = vld [vmem:[%s207 + $0x5c] sm:$0xf]
      %v242 = vld [vmem:[%s207 + $0x60] sm:$0xf]
      %v243 = vld [vmem:[%s207 + $0x64] sm:$0xf]
      %v244 = vld [vmem:[%s207 + $0x68] sm:$0xf]
      %v245 = vld [vmem:[%s207 + $0x6c] sm:$0xf]
      %v246 = vld [vmem:[%s207 + $0x70] sm:$0xf]
      %v247 = vld [vmem:[%s207 + $0x74] sm:$0xf]
      %v248 = vld [vmem:[%s207 + $0x78] sm:$0xf]
      %v249 = vld [vmem:[%s207 + $0x7c] sm:$0xf]
      %v250 = vunpack.c.l.bf16 %v218
      %v251 = vunpack.c.l.bf16 %v219
      %v252 = vunpack.c.l.bf16 %v220
      %v253 = vunpack.c.l.bf16 %v221
      %v254 = vunpack.c.l.bf16 %v222
      %v255 = vunpack.c.l.bf16 %v223
      %v256 = vunpack.c.l.bf16 %v224
      %v257 = vunpack.c.l.bf16 %v225
      %v258 = vunpack.c.l.bf16 %v226
      %v259 = vunpack.c.l.bf16 %v227
      %v260 = vunpack.c.l.bf16 %v228
      %v261 = vunpack.c.l.bf16 %v229
      %v262 = vunpack.c.l.bf16 %v230
      %v263 = vunpack.c.l.bf16 %v231
      %v264 = vunpack.c.l.bf16 %v232
      %v265 = vunpack.c.l.bf16 %v233
      %v266 = vunpack.c.l.bf16 %v234
      %v267 = vunpack.c.l.bf16 %v235
      %v268 = vunpack.c.l.bf16 %v236
      %v269 = vunpack.c.l.bf16 %v237
      %v270 = vunpack.c.l.bf16 %v238
      %v271 = vunpack.c.l.bf16 %v239
      %v272 = vunpack.c.l.bf16 %v240
      %v273 = vunpack.c.l.bf16 %v241
      %v274 = vunpack.c.l.bf16 %v242
      %v275 = vunpack.c.l.bf16 %v243
      %v276 = vunpack.c.l.bf16 %v244
      %v277 = vunpack.c.l.bf16 %v245
      %v278 = vunpack.c.l.bf16 %v246
      %v279 = vunpack.c.l.bf16 %v247
      %v280 = vunpack.c.l.bf16 %v248
      %v281 = vunpack.c.l.bf16 %v249
      %v282 = vld [vmem:[%s1] sm:$0x1]
      %v284 = vlaneseq
      %v285 = vshrl.u32 %v284, 7
      %v286 = vsub.s32 0, %v285
      %v287 = vrot.slane %v282, %v286
      %v289 = vmul.f32 %v250, %v287
      %v290 = vmul.f32 %v251, %v287
      %v291 = vmul.f32 %v252, %v287
      %v292 = vmul.f32 %v253, %v287
      %v293 = vmul.f32 %v254, %v287
      %v294 = vmul.f32 %v255, %v287
      %v295 = vmul.f32 %v256, %v287
      %v296 = vmul.f32 %v257, %v287
      %v297 = vmul.f32 %v258, %v287
      %v298 = vmul.f32 %v259, %v287
      %v299 = vmul.f32 %v260, %v287
      %v300 = vmul.f32 %v261, %v287
      %v301 = vmul.f32 %v262, %v287
      %v302 = vmul.f32 %v263, %v287
      %v303 = vmul.f32 %v264, %v287
      %v304 = vmul.f32 %v265, %v287
      %v305 = vmul.f32 %v266, %v287
      %v306 = vmul.f32 %v267, %v287
      %v307 = vmul.f32 %v268, %v287
      %v308 = vmul.f32 %v269, %v287
      %v309 = vmul.f32 %v270, %v287
      %v310 = vmul.f32 %v271, %v287
      %v311 = vmul.f32 %v272, %v287
      %v312 = vmul.f32 %v273, %v287
      %v313 = vmul.f32 %v274, %v287
      %v314 = vmul.f32 %v275, %v287
      %v315 = vmul.f32 %v276, %v287
      %v316 = vmul.f32 %v277, %v287
      %v317 = vmul.f32 %v278, %v287
      %v318 = vmul.f32 %v279, %v287
      %v319 = vmul.f32 %v280, %v287
      %v320 = vmul.f32 %v281, %v287
      %v321 = vld [vmem:[%s2] sm:$0x1]
      %v323 = vlaneseq
      %v324 = vshrl.u32 %v323, 7
      %v325 = vsub.s32 0, %v324
      %v326 = vrot.slane %v321, %v325
      %v328 = vadd.f32 %v289, %v326
      %v329 = vadd.f32 %v290, %v326
      %v330 = vadd.f32 %v291, %v326
      %v331 = vadd.f32 %v292, %v326
      %v332 = vadd.f32 %v293, %v326
      %v333 = vadd.f32 %v294, %v326
      %v334 = vadd.f32 %v295, %v326
      %v335 = vadd.f32 %v296, %v326
      %v336 = vadd.f32 %v297, %v326
      %v337 = vadd.f32 %v298, %v326
      %v338 = vadd.f32 %v299, %v326
      %v339 = vadd.f32 %v300, %v326
      %v340 = vadd.f32 %v301, %v326
      %v341 = vadd.f32 %v302, %v326
      %v342 = vadd.f32 %v303, %v326
      %v343 = vadd.f32 %v304, %v326
      %v344 = vadd.f32 %v305, %v326
      %v345 = vadd.f32 %v306, %v326
      %v346 = vadd.f32 %v307, %v326
      %v347 = vadd.f32 %v308, %v326
      %v348 = vadd.f32 %v309, %v326
      %v349 = vadd.f32 %v310, %v326
      %v350 = vadd.f32 %v311, %v326
      %v351 = vadd.f32 %v312, %v326
      %v352 = vadd.f32 %v313, %v326
      %v353 = vadd.f32 %v314, %v326
      %v354 = vadd.f32 %v315, %v326
      %v355 = vadd.f32 %v316, %v326
      %v356 = vadd.f32 %v317, %v326
      %v357 = vadd.f32 %v318, %v326
      %v358 = vadd.f32 %v319, %v326
      %v359 = vadd.f32 %v320, %v326
      %v360 = vld [vmem:[%s212] sm:$0xff]
      %v361 = vld [vmem:[%s212 + $0x8] sm:$0xff]
      %v362 = vld [vmem:[%s212 + $0x10] sm:$0xff]
      %v363 = vld [vmem:[%s212 + $0x18] sm:$0xff]
      %v364 = vld [vmem:[%s212 + $0x20] sm:$0xff]
      %v365 = vld [vmem:[%s212 + $0x28] sm:$0xff]
      %v366 = vld [vmem:[%s212 + $0x30] sm:$0xff]
      %v367 = vld [vmem:[%s212 + $0x38] sm:$0xff]
      %v368 = vld [vmem:[%s212 + $0x40] sm:$0xff]
      %v369 = vld [vmem:[%s212 + $0x48] sm:$0xff]
      %v370 = vld [vmem:[%s212 + $0x50] sm:$0xff]
      %v371 = vld [vmem:[%s212 + $0x58] sm:$0xff]
      %v372 = vld [vmem:[%s212 + $0x60] sm:$0xff]
      %v373 = vld [vmem:[%s212 + $0x68] sm:$0xff]
      %v374 = vld [vmem:[%s212 + $0x70] sm:$0xff]
      %v375 = vld [vmem:[%s212 + $0x78] sm:$0xff]
      %v376 = vld [vmem:[%s212 + $0x80] sm:$0xff]
      %v377 = vld [vmem:[%s212 + $0x88] sm:$0xff]
      %v378 = vld [vmem:[%s212 + $0x90] sm:$0xff]
      %v379 = vld [vmem:[%s212 + $0x98] sm:$0xff]
      %v380 = vld [vmem:[%s212 + $0xa0] sm:$0xff]
      %v381 = vld [vmem:[%s212 + $0xa8] sm:$0xff]
      %v382 = vld [vmem:[%s212 + $0xb0] sm:$0xff]
      %v383 = vld [vmem:[%s212 + $0xb8] sm:$0xff]
      %v384 = vld [vmem:[%s212 + $0xc0] sm:$0xff]
      %v385 = vld [vmem:[%s212 + $0xc8] sm:$0xff]
      %v386 = vld [vmem:[%s212 + $0xd0] sm:$0xff]
      %v387 = vld [vmem:[%s212 + $0xd8] sm:$0xff]
      %v388 = vld [vmem:[%s212 + $0xe0] sm:$0xff]
      %v389 = vld [vmem:[%s212 + $0xe8] sm:$0xff]
      %v390 = vld [vmem:[%s212 + $0xf0] sm:$0xff]
      %v391 = vld [vmem:[%s212 + $0xf8] sm:$0xff]
      %v392 = vadd.f32 %v328, %v360
      %v393 = vadd.f32 %v329, %v361
      %v394 = vadd.f32 %v330, %v362
      %v395 = vadd.f32 %v331, %v363
      %v396 = vadd.f32 %v332, %v364
      %v397 = vadd.f32 %v333, %v365
      %v398 = vadd.f32 %v334, %v366
      %v399 = vadd.f32 %v335, %v367
      %v400 = vadd.f32 %v336, %v368
      %v401 = vadd.f32 %v337, %v369
      %v402 = vadd.f32 %v338, %v370
      %v403 = vadd.f32 %v339, %v371
      %v404 = vadd.f32 %v340, %v372
      %v405 = vadd.f32 %v341, %v373
      %v406 = vadd.f32 %v342, %v374
      %v407 = vadd.f32 %v343, %v375
      %v408 = vadd.f32 %v344, %v376
      %v409 = vadd.f32 %v345, %v377
      %v410 = vadd.f32 %v346, %v378
      %v411 = vadd.f32 %v347, %v379
      %v412 = vadd.f32 %v348, %v380
      %v413 = vadd.f32 %v349, %v381
      %v414 = vadd.f32 %v350, %v382
      %v415 = vadd.f32 %v351, %v383
      %v416 = vadd.f32 %v352, %v384
      %v417 = vadd.f32 %v353, %v385
      %v418 = vadd.f32 %v354, %v386
      %v419 = vadd.f32 %v355, %v387
      %v420 = vadd.f32 %v356, %v388
      %v421 = vadd.f32 %v357, %v389
      %v422 = vadd.f32 %v358, %v390
      %v423 = vadd.f32 %v359, %v391
      %v424 = vmax.f32 %v392, 0.0
      %v425 = vmax.f32 %v393, 0.0
      %v426 = vmax.f32 %v394, 0.0
      %v427 = vmax.f32 %v395, 0.0
      %v428 = vmax.f32 %v396, 0.0
      %v429 = vmax.f32 %v397, 0.0
      %v430 = vmax.f32 %v398, 0.0
      %v431 = vmax.f32 %v399, 0.0
      %v432 = vmax.f32 %v400, 0.0
      %v433 = vmax.f32 %v401, 0.0
      %v434 = vmax.f32 %v402, 0.0
      %v435 = vmax.f32 %v403, 0.0
      %v436 = vmax.f32 %v404, 0.0
      %v437 = vmax.f32 %v405, 0.0
      %v438 = vmax.f32 %v406, 0.0
      %v439 = vmax.f32 %v407, 0.0
      %v440 = vmax.f32 %v408, 0.0
      %v441 = vmax.f32 %v409, 0.0
      %v442 = vmax.f32 %v410, 0.0
      %v443 = vmax.f32 %v411, 0.0
      %v444 = vmax.f32 %v412, 0.0
      %v445 = vmax.f32 %v413, 0.0
      %v446 = vmax.f32 %v414, 0.0
      %v447 = vmax.f32 %v415, 0.0
      %v448 = vmax.f32 %v416, 0.0
      %v449 = vmax.f32 %v417, 0.0
      %v450 = vmax.f32 %v418, 0.0
      %v451 = vmax.f32 %v419, 0.0
      %v452 = vmax.f32 %v420, 0.0
      %v453 = vmax.f32 %v421, 0.0
      %v454 = vmax.f32 %v422, 0.0
      %v455 = vmax.f32 %v423, 0.0
      %vm456 = vcmask 31744
      %457 = vst.msk [vmem:[%s217] sm:$0xff] %vm456, %v424
      %458 = vst.msk [vmem:[%s217 + $0x8] sm:$0xff] %vm456, %v425
      %459 = vst.msk [vmem:[%s217 + $0x10] sm:$0xff] %vm456, %v426
      %460 = vst.msk [vmem:[%s217 + $0x18] sm:$0xff] %vm456, %v427
      %461 = vst.msk [vmem:[%s217 + $0x20] sm:$0xff] %vm456, %v428
      %462 = vst.msk [vmem:[%s217 + $0x28] sm:$0xff] %vm456, %v429
      %463 = vst.msk [vmem:[%s217 + $0x30] sm:$0xff] %vm456, %v430
      %464 = vst.msk [vmem:[%s217 + $0x38] sm:$0xff] %vm456, %v431
      %465 = vst.msk [vmem:[%s217 + $0x40] sm:$0xff] %vm456, %v432
      %466 = vst.msk [vmem:[%s217 + $0x48] sm:$0xff] %vm456, %v433
      %467 = vst.msk [vmem:[%s217 + $0x50] sm:$0xff] %vm456, %v434
      %468 = vst.msk [vmem:[%s217 + $0x58] sm:$0xff] %vm456, %v435
      %469 = vst.msk [vmem:[%s217 + $0x60] sm:$0xff] %vm456, %v436
      %470 = vst.msk [vmem:[%s217 + $0x68] sm:$0xff] %vm456, %v437
      %471 = vst.msk [vmem:[%s217 + $0x70] sm:$0xff] %vm456, %v438
      %472 = vst.msk [vmem:[%s217 + $0x78] sm:$0xff] %vm456, %v439
      %473 = vst.msk [vmem:[%s217 + $0x80] sm:$0xff] %vm456, %v440
      %474 = vst.msk [vmem:[%s217 + $0x88] sm:$0xff] %vm456, %v441
      %475 = vst.msk [vmem:[%s217 + $0x90] sm:$0xff] %vm456, %v442
      %476 = vst.msk [vmem:[%s217 + $0x98] sm:$0xff] %vm456, %v443
      %477 = vst.msk [vmem:[%s217 + $0xa0] sm:$0xff] %vm456, %v444
      %478 = vst.msk [vmem:[%s217 + $0xa8] sm:$0xff] %vm456, %v445
      %479 = vst.msk [vmem:[%s217 + $0xb0] sm:$0xff] %vm456, %v446
      %480 = vst.msk [vmem:[%s217 + $0xb8] sm:$0xff] %vm456, %v447
      %481 = vst.msk [vmem:[%s217 + $0xc0] sm:$0xff] %vm456, %v448
      %482 = vst.msk [vmem:[%s217 + $0xc8] sm:$0xff] %vm456, %v449
      %483 = vst.msk [vmem:[%s217 + $0xd0] sm:$0xff] %vm456, %v450
      %484 = vst.msk [vmem:[%s217 + $0xd8] sm:$0xff] %vm456, %v451
      %485 = vst.msk [vmem:[%s217 + $0xe0] sm:$0xff] %vm456, %v452
      %486 = vst.msk [vmem:[%s217 + $0xe8] sm:$0xff] %vm456, %v453
      %487 = vst.msk [vmem:[%s217 + $0xf0] sm:$0xff] %vm456, %v454
      %488 = vst.msk [vmem:[%s217 + $0xf8] sm:$0xff] %vm456, %v455
      %p489 = scmp.lt.s32.totalorder %s15, 1
      %s490 = scalar_select %p489, %s15, 1
      %s491 = smul.addr %s490, 32
      %s492 = smul.addr %s491, 8
      %s493 = scalar_lea.vmem %s4, %s492
      // Predicated region
      $region37: #{basic_block_forward_nhwc.5} parent=35 // pred_check
        %p494 = pneg %p127
      $region38: #{basic_block_forward_nhwc.5} parent=35 // pred_check_branch
        %496 = sbr.rel (%p494) target = $region40
      $region39: #{basic_block_forward_nhwc.5} parent=35 // pred_region
        _
      $region40: #{basic_block_forward_nhwc.5} parent=35 // pred_fallthru
        _
    $region36: #{basic_block_forward_nhwc.5} parent=5 // pred_fallthru
      _
    %p497 = scmp.le.s32.totalorder 2, %s10
    // Predicated region
    $region41: #{basic_block_forward_nhwc.5} parent=5 // pred_check
      %p498 = pneg %p497
    $region42: #{basic_block_forward_nhwc.5} parent=5 // pred_check_branch
      %500 = sbr.rel (%p498) target = $region44
    $region43: #{basic_block_forward_nhwc.5} parent=5 // pred_region
      %s501 = ssub.s32 %s10, 2
      // Predicated region
      $region45: #{basic_block_forward_nhwc.5} parent=43 // pred_check
        %p502 = pneg %p133
      $region46: #{basic_block_forward_nhwc.5} parent=43 // pred_check_branch
        %504 = sbr.rel (%p502) target = $region48
      $region47: #{basic_block_forward_nhwc.5} parent=43 // pred_region
        %p505 = scmp.lt.s32.totalorder %s16, 1
        %s506 = scalar_select %p505, %s16, 1
        %s507 = smul.addr %s506, 32
        %s508 = smul.addr %s507, 8
        %s509 = scalar_lea.vmem %s4, %s508
      $region48: #{basic_block_forward_nhwc.5} parent=43 // pred_fallthru
        _
    $region44: #{basic_block_forward_nhwc.5} parent=5 // pred_fallthru
      _
  $region6: #{basic_block_forward_nhwc.5} parent=0 // loop_footer
    %s14 = sadd.s32 1, %s10
  $region7: #{basic_block_forward_nhwc.5} parent=0 // loop_footer_branch
    %9 = sbr.rel target = $region3
  $region8: #{basic_block_forward_nhwc.5} parent=0 // loop_exit
    _

// kernel: basic_block_forward_nhwc.3
$region0: #{basic_block_forward_nhwc.3}
  #allocation0 [shape = 'u32[]', space=smem, size = 0x4, offset = 0x4, fixed_abs, tag = 'smem constant byte address 0x4 - core index']
  #allocation1 [shape = 'u32[144,128]{1,0:T(1,128)}', space=vmem, size = 0x12000, scoped, tag = 'internal scratch']
  #allocation2 [shape = 'f32[18,32,4]{2,1,0:T(8,128)}', space=vmem, size = 0x48000, scoped, tag = 'scratch operand']
  %s0 = inlined_call_operand.vmem [shape: f32[2,16,16,4], index: 0, kind: input, shape index: {}]
  %s1 = inlined_call_operand.vmem [shape: bf16[9,4,4], index: 1, kind: input, shape index: {}]
  %s2 = inlined_call_operand.vmem [shape: bf16[2,16,16,4], index: 2, kind: output, shape index: {0}]
  %s3 = inlined_call_operand.vmem [shape: f32[2,1,4], index: 3, kind: output, shape index: {1}]
  %s4 = inlined_call_operand.vmem [shape: f32[2,1,4], index: 4, kind: output, shape index: {2}]
  %5 = xla_tuple %s2, %s3, %s4
  %s6 = sld [smem:[#allocation0]]
  $region57: #{basic_block_forward_nhwc.3} parent=0
    _
  %s8 = ssub.s32 1, %s6
  %s9 = scalar_select 0, %s8, %s6
  loop: start=0, step=1, limit=4
  $region2: #{basic_block_forward_nhwc.3} parent=0 // loop_pre_header
    _
  $region3: #{basic_block_forward_nhwc.3} parent=0 // loop_header
    %s11 = sphi 0, %s15
    %p12 = scmp.ge.s32.totalorder %s11, 4
    %s21 = sphi 0, %s23
    %s24 = sphi 0, %s21
    %s25 = sphi 0, %s24
    %s41 = sphi 0, %s25
    %s45 = sphi 0, %s45
    %s47 = sphi 0, %s45
    %s48 = sphi 0, %s47
    %s62 = sphi 0, %s48
    %s68 = sphi 0, %s70
    %s71 = sphi 0, %s68
    %s72 = sphi 0, %s71
    %s88 = sphi 0, %s72
    %s94 = sphi 0, %s96
    %s97 = sphi 0, %s94
    %s98 = sphi 0, %s97
    %s114 = sphi 0, %s98
    %s120 = sphi 0, %s122
    %s123 = sphi 0, %s120
    %s124 = sphi 0, %s123
    %s140 = sphi 0, %s124
  $region4: #{basic_block_forward_nhwc.3} parent=0 // loop_header_branch
    %14 = sbr.rel (%p12) target = $region8
  $region5: #{basic_block_forward_nhwc.3} parent=0 // loop_body
    %s16 = ssub.s32 %s11, 1
    %s17 = ssub.s32 %s11, 2
    %s18 = sadd.s32 %s11, 1
    %s19 = ssub.s32 %s11, %s18
    %p20 = scmp.eq.s32.totalorder %s19, 0
    %s22 = sadd.s32 %s21, 1
    %s23 = scalar_select %p20, %s21, %s22
    %p26 = pneg %p20
    %p27 = scmp.eq.s32.totalorder %s11, 1
    %p28 = por %p26, %p27
    %p29 = scmp.ne.s32.totalorder %s21, %s24
    %p30 = scmp.eq.s32.totalorder %s11, 0
    %p31 = por %p29, %p30
    %p32 = scmp.ne.s32.totalorder %s21, %s24
    %p33 = scmp.eq.s32.totalorder %s16, 1
    %p34 = por %p32, %p33
    %p35 = scmp.ne.s32.totalorder %s24, %s25
    %p36 = scmp.eq.s32.totalorder %s16, 0
    %p37 = por %p35, %p36
    %p38 = scmp.ne.s32.totalorder %s24, %s25
    %p39 = scmp.eq.s32.totalorder %s17, 1
    %p40 = por %p38, %p39
    %p42 = scmp.ne.s32.totalorder %s25, %s41
    %p43 = scmp.eq.s32.totalorder %s17, 0
    %p44 = por %p42, %p43
    %s46 = sadd.s32 %s45, 1
    %p49 = scmp.eq.s32.totalorder %s11, 1
    %p50 = scmp.ne.s32.totalorder %s45, %s47
    %p51 = scmp.eq.s32.totalorder %s11, 0
    %p52 = por %p50, %p51
    %p53 = scmp.ne.s32.totalorder %s45, %s47
    %p54 = scmp.eq.s32.totalorder %s16, 1
    %p55 = por %p53, %p54
    %p56 = scmp.ne.s32.totalorder %s47, %s48
    %p57 = scmp.eq.s32.totalorder %s16, 0
    %p58 = por %p56, %p57
    %p59 = scmp.ne.s32.totalorder %s47, %s48
    %p60 = scmp.eq.s32.totalorder %s17, 1
    %p61 = por %p59, %p60
    %p63 = scmp.ne.s32.totalorder %s48, %s62
    %p64 = scmp.eq.s32.totalorder %s17, 0
    %p65 = por %p63, %p64
    %s66 = ssub.s32 %s11, %s18
    %p67 = scmp.eq.s32.totalorder %s66, 0
    %s69 = sadd.s32 %s68, 1
    %s70 = scalar_select %p67, %s68, %s69
    %p73 = pneg %p67
    %p74 = scmp.eq.s32.totalorder %s11, 1
    %p75 = por %p73, %p74
    %p76 = scmp.ne.s32.totalorder %s68, %s71
    %p77 = scmp.eq.s32.totalorder %s11, 0
    %p78 = por %p76, %p77
    %p79 = scmp.ne.s32.totalorder %s68, %s71
    %p80 = scmp.eq.s32.totalorder %s16, 1
    %p81 = por %p79, %p80
    %p82 = scmp.ne.s32.totalorder %s71, %s72
    %p83 = scmp.eq.s32.totalorder %s16, 0
    %p84 = por %p82, %p83
    %p85 = scmp.ne.s32.totalorder %s71, %s72
    %p86 = scmp.eq.s32.totalorder %s17, 1
    %p87 = por %p85, %p86
    %p89 = scmp.ne.s32.totalorder %s72, %s88
    %p90 = scmp.eq.s32.totalorder %s17, 0
    %p91 = por %p89, %p90
    %s92 = ssub.s32 %s11, %s18
    %p93 = scmp.eq.s32.totalorder %s92, 0
    %s95 = sadd.s32 %s94, 1
    %s96 = scalar_select %p93, %s94, %s95
    %p99 = pneg %p93
    %p100 = scmp.eq.s32.totalorder %s11, 1
    %p101 = por %p99, %p100
    %p102 = scmp.ne.s32.totalorder %s94, %s97
    %p103 = scmp.eq.s32.totalorder %s11, 0
    %p104 = por %p102, %p103
    %p105 = scmp.ne.s32.totalorder %s94, %s97
    %p106 = scmp.eq.s32.totalorder %s16, 1
    %p107 = por %p105, %p106
    %p108 = scmp.ne.s32.totalorder %s97, %s98
    %p109 = scmp.eq.s32.totalorder %s16, 0
    %p110 = por %p108, %p109
    %p111 = scmp.ne.s32.totalorder %s97, %s98
    %p112 = scmp.eq.s32.totalorder %s17, 1
    %p113 = por %p111, %p112
    %p115 = scmp.ne.s32.totalorder %s98, %s114
    %p116 = scmp.eq.s32.totalorder %s17, 0
    %p117 = por %p115, %p116
    %s118 = ssub.s32 %s11, %s18
    %p119 = scmp.eq.s32.totalorder %s118, 0
    %s121 = sadd.s32 %s120, 1
    %s122 = scalar_select %p119, %s120, %s121
    %p125 = pneg %p119
    %p126 = scmp.eq.s32.totalorder %s11, 1
    %p127 = por %p125, %p126
    %p128 = scmp.ne.s32.totalorder %s120, %s123
    %p129 = scmp.eq.s32.totalorder %s11, 0
    %p130 = por %p128, %p129
    %p131 = scmp.ne.s32.totalorder %s120, %s123
    %p132 = scmp.eq.s32.totalorder %s16, 1
    %p133 = por %p131, %p132
    %p134 = scmp.ne.s32.totalorder %s123, %s124
    %p135 = scmp.eq.s32.totalorder %s16, 0
    %p136 = por %p134, %p135
    %p137 = scmp.ne.s32.totalorder %s123, %s124
    %p138 = scmp.eq.s32.totalorder %s17, 1
    %p139 = por %p137, %p138
    %p141 = scmp.ne.s32.totalorder %s124, %s140
    %p142 = scmp.eq.s32.totalorder %s17, 0
    %p143 = por %p141, %p142
    %p144 = scmp.le.s32.totalorder 1, %s11
    %p145 = scmp.lt.s32.totalorder %s11, 3
    %p146 = pnand %p144, %p145
    %p147 = pneg %p146
    // Predicated region
    $region9: #{basic_block_forward_nhwc.3} parent=5 // pred_check
      _
    $region10: #{basic_block_forward_nhwc.3} parent=5 // pred_check_branch
      %149 = sbr.rel (%p146) target = $region12
    $region11: #{basic_block_forward_nhwc.3} parent=5 // pred_region
      %s150 = ssub.s32 %s11, 1
      // Predicated region
      $region13: #{basic_block_forward_nhwc.3} parent=11 // pred_check
        %p151 = pneg %p58
      $region14: #{basic_block_forward_nhwc.3} parent=11 // pred_check_branch
        %153 = sbr.rel (%p151) target = $region16
      $region15: #{basic_block_forward_nhwc.3} parent=11 // pred_region
        _
      $region16: #{basic_block_forward_nhwc.3} parent=11 // pred_fallthru
        _
    $region12: #{basic_block_forward_nhwc.3} parent=5 // pred_fallthru
      _
    %p154 = scmp.lt.s32.totalorder %s11, 2
    // Predicated region
    $region17: #{basic_block_forward_nhwc.3} parent=5 // pred_check
      %p155 = pneg %p154
    $region18: #{basic_block_forward_nhwc.3} parent=5 // pred_check_branch
      %157 = sbr.rel (%p155) target = $region20
    $region19: #{basic_block_forward_nhwc.3} parent=5 // pred_region
      // Predicated region
      $region21: #{basic_block_forward_nhwc.3} parent=19 // pred_check
        %p158 = pneg %p31
      $region22: #{basic_block_forward_nhwc.3} parent=19 // pred_check_branch
        %160 = sbr.rel (%p158) target = $region24
      $region23: #{basic_block_forward_nhwc.3} parent=19 // pred_region
        %p161 = scmp.lt.s32.totalorder %s11, 1
        %s162 = scalar_select %p161, %s11, 1
        %s163 = smul.addr %s162, 32
        %s164 = smul.addr %s163, 8
        %s165 = scalar_lea.vmem %s0, %s164
      $region24: #{basic_block_forward_nhwc.3} parent=19 // pred_fallthru
        _
    $region20: #{basic_block_forward_nhwc.3} parent=5 // pred_fallthru
      _
    %p166 = scmp.le.s32.totalorder 1, %s11
    %p167 = scmp.lt.s32.totalorder %s11, 3
    %p168 = pnand %p166, %p167
    %p169 = pneg %p168
    // Predicated region
    $region25: #{basic_block_forward_nhwc.3} parent=5 // pred_check
      _
    $region26: #{basic_block_forward_nhwc.3} parent=5 // pred_check_branch
      %171 = sbr.rel (%p168) target = $region28
    $region27: #{basic_block_forward_nhwc.3} parent=5 // pred_region
      %s172 = ssub.s32 %s11, 1
      %p173 = scmp.lt.s32.totalorder %s16, 1
      %s174 = scalar_select %p173, %s16, 1
      %s175 = smul.addr %s174, 32
      %s176 = smul.addr %s175, 8
      %s177 = scalar_lea.vmem %s0, %s176
      %p178 = pneg %p37
      %p179 = pneg %p34
      %p180 = pneg %p58
      %p181 = pneg %p55
      %p182 = pneg %p84
      %p183 = pneg %p81
      %p184 = scmp.lt.s32.totalorder %s16, 1
      %s185 = scalar_select %p184, %s16, 1
      %s186 = smul.addr %s185, 32
      %s187 = smul.addr %s186, 4
      %s188 = scalar_lea.vmem %s2, %s187
      %p189 = pneg %p110
      %p190 = pneg %p107
      %p191 = scmp.lt.s32.totalorder %s16, 1
      %s192 = scalar_select %p191, %s16, 1
      %s193 = scalar_lea.vmem %s3, %s192
      %p194 = pneg %p136
      %p195 = pneg %p133
      %p196 = scmp.lt.s32.totalorder %s16, 1
      %s197 = scalar_select %p196, %s16, 1
      %s198 = scalar_lea.vmem %s4, %s197
      %p199 = scmp.lt.s32.totalorder %s16, 1
      %s200 = scalar_select %p199, %s16, 1
      %s201 = smul.addr %s200, 32
      %s202 = smul.addr %s201, 8
      %s203 = scalar_lea.vmem %s0, %s202
      %p204 = scmp.lt.s32.totalorder %s16, 1
      %s205 = scalar_select %p204, %s16, 1
      %s206 = smul.addr %s205, 32
      %s207 = smul.addr %s206, 4
      %s208 = scalar_lea.vmem %s2, %s207
      %p209 = scmp.lt.s32.totalorder %s16, 1
      %s210 = scalar_select %p209, %s16, 1
      %s211 = scalar_lea.vmem %s3, %s210
      %p212 = scmp.lt.s32.totalorder %s16, 1
      %s213 = scalar_select %p212, %s16, 1
      %s214 = scalar_lea.vmem %s4, %s213
      %vm216 = vcmask 31744
      %217 = vst.msk [vmem:[#allocation2] sm:$0xff] %vm216, 0.0
      %218 = vst.msk [vmem:[#allocation2 + $0x8] sm:$0xff] %vm216, 0.0
      %219 = vst.msk [vmem:[#allocation2 + $0x10] sm:$0xff] %vm216, 0.0
      %220 = vst.msk [vmem:[#allocation2 + $0x18] sm:$0xff] %vm216, 0.0
      %221 = vst.msk [vmem:[#allocation2 + $0x20] sm:$0xff] %vm216, 0.0
      %222 = vst.msk [vmem:[#allocation2 + $0x28] sm:$0xff] %vm216, 0.0
      %223 = vst.msk [vmem:[#allocation2 + $0x30] sm:$0xff] %vm216, 0.0
      %224 = vst.msk [vmem:[#allocation2 + $0x38] sm:$0xff] %vm216, 0.0
      %225 = vst.msk [vmem:[#allocation2 + $0x40] sm:$0xff] %vm216, 0.0
      %226 = vst.msk [vmem:[#allocation2 + $0x48] sm:$0xff] %vm216, 0.0
      %227 = vst.msk [vmem:[#allocation2 + $0x50] sm:$0xff] %vm216, 0.0
      %228 = vst.msk [vmem:[#allocation2 + $0x58] sm:$0xff] %vm216, 0.0
      %229 = vst.msk [vmem:[#allocation2 + $0x60] sm:$0xff] %vm216, 0.0
      %230 = vst.msk [vmem:[#allocation2 + $0x68] sm:$0xff] %vm216, 0.0
      %231 = vst.msk [vmem:[#allocation2 + $0x70] sm:$0xff] %vm216, 0.0
      %232 = vst.msk [vmem:[#allocation2 + $0x78] sm:$0xff] %vm216, 0.0
      %233 = vst.msk [vmem:[#allocation2 + $0x80] sm:$0xff] %vm216, 0.0
      %234 = vst.msk [vmem:[#allocation2 + $0x88] sm:$0xff] %vm216, 0.0
      %235 = vst.msk [vmem:[#allocation2 + $0x90] sm:$0xff] %vm216, 0.0
      %236 = vst.msk [vmem:[#allocation2 + $0x98] sm:$0xff] %vm216, 0.0
      %237 = vst.msk [vmem:[#allocation2 + $0xa0] sm:$0xff] %vm216, 0.0
      %238 = vst.msk [vmem:[#allocation2 + $0xa8] sm:$0xff] %vm216, 0.0
      %239 = vst.msk [vmem:[#allocation2 + $0xb0] sm:$0xff] %vm216, 0.0
      %240 = vst.msk [vmem:[#allocation2 + $0xb8] sm:$0xff] %vm216, 0.0
      %241 = vst.msk [vmem:[#allocation2 + $0xc0] sm:$0xff] %vm216, 0.0
      %242 = vst.msk [vmem:[#allocation2 + $0xc8] sm:$0xff] %vm216, 0.0
      %243 = vst.msk [vmem:[#allocation2 + $0xd0] sm:$0xff] %vm216, 0.0
      %244 = vst.msk [vmem:[#allocation2 + $0xd8] sm:$0xff] %vm216, 0.0
      %245 = vst.msk [vmem:[#allocation2 + $0xe0] sm:$0xff] %vm216, 0.0
      %246 = vst.msk [vmem:[#allocation2 + $0xe8] sm:$0xff] %vm216, 0.0
      %247 = vst.msk [vmem:[#allocation2 + $0xf0] sm:$0xff] %vm216, 0.0
      %248 = vst.msk [vmem:[#allocation2 + $0xf8] sm:$0xff] %vm216, 0.0
      %249 = vst.msk [vmem:[#allocation2 + $0x100] sm:$0xff] %vm216, 0.0
      %250 = vst.msk [vmem:[#allocation2 + $0x108] sm:$0xff] %vm216, 0.0
      %251 = vst.msk [vmem:[#allocation2 + $0x110] sm:$0xff] %vm216, 0.0
      %252 = vst.msk [vmem:[#allocation2 + $0x118] sm:$0xff] %vm216, 0.0
      %253 = vst.msk [vmem:[#allocation2 + $0x120] sm:$0xff] %vm216, 0.0
      %254 = vst.msk [vmem:[#allocation2 + $0x128] sm:$0xff] %vm216, 0.0
      %255 = vst.msk [vmem:[#allocation2 + $0x130] sm:$0xff] %vm216, 0.0
      %256 = vst.msk [vmem:[#allocation2 + $0x138] sm:$0xff] %vm216, 0.0
      %257 = vst.msk [vmem:[#allocation2 + $0x140] sm:$0xff] %vm216, 0.0
      %258 = vst.msk [vmem:[#allocation2 + $0x148] sm:$0xff] %vm216, 0.0
      %259 = vst.msk [vmem:[#allocation2 + $0x150] sm:$0xff] %vm216, 0.0
      %260 = vst.msk [vmem:[#allocation2 + $0x158] sm:$0xff] %vm216, 0.0
      %261 = vst.msk [vmem:[#allocation2 + $0x160] sm:$0xff] %vm216, 0.0
      %262 = vst.msk [vmem:[#allocation2 + $0x168] sm:$0xff] %vm216, 0.0
      %263 = vst.msk [vmem:[#allocation2 + $0x170] sm:$0xff] %vm216, 0.0
      %264 = vst.msk [vmem:[#allocation2 + $0x178] sm:$0xff] %vm216, 0.0
      %265 = vst.msk [vmem:[#allocation2 + $0x180] sm:$0xff] %vm216, 0.0
      %266 = vst.msk [vmem:[#allocation2 + $0x188] sm:$0xff] %vm216, 0.0
      %267 = vst.msk [vmem:[#allocation2 + $0x190] sm:$0xff] %vm216, 0.0
      %268 = vst.msk [vmem:[#allocation2 + $0x198] sm:$0xff] %vm216, 0.0
      %269 = vst.msk [vmem:[#allocation2 + $0x1a0] sm:$0xff] %vm216, 0.0
      %270 = vst.msk [vmem:[#allocation2 + $0x1a8] sm:$0xff] %vm216, 0.0
      %271 = vst.msk [vmem:[#allocation2 + $0x1b0] sm:$0xff] %vm216, 0.0
      %272 = vst.msk [vmem:[#allocation2 + $0x1b8] sm:$0xff] %vm216, 0.0
      %273 = vst.msk [vmem:[#allocation2 + $0x1c0] sm:$0xff] %vm216, 0.0
      %274 = vst.msk [vmem:[#allocation2 + $0x1c8] sm:$0xff] %vm216, 0.0
      %275 = vst.msk [vmem:[#allocation2 + $0x1d0] sm:$0xff] %vm216, 0.0
      %276 = vst.msk [vmem:[#allocation2 + $0x1d8] sm:$0xff] %vm216, 0.0
      %277 = vst.msk [vmem:[#allocation2 + $0x1e0] sm:$0xff] %vm216, 0.0
      %278 = vst.msk [vmem:[#allocation2 + $0x1e8] sm:$0xff] %vm216, 0.0
      %279 = vst.msk [vmem:[#allocation2 + $0x1f0] sm:$0xff] %vm216, 0.0
      %280 = vst.msk [vmem:[#allocation2 + $0x1f8] sm:$0xff] %vm216, 0.0
      %281 = vst.msk [vmem:[#allocation2 + $0x200] sm:$0xff] %vm216, 0.0
      %282 = vst.msk [vmem:[#allocation2 + $0x208] sm:$0xff] %vm216, 0.0
      %283 = vst.msk [vmem:[#allocation2 + $0x210] sm:$0xff] %vm216, 0.0
      %284 = vst.msk [vmem:[#allocation2 + $0x218] sm:$0xff] %vm216, 0.0
      %285 = vst.msk [vmem:[#allocation2 + $0x220] sm:$0xff] %vm216, 0.0
      %286 = vst.msk [vmem:[#allocation2 + $0x228] sm:$0xff] %vm216, 0.0
      %287 = vst.msk [vmem:[#allocation2 + $0x230] sm:$0xff] %vm216, 0.0
      %288 = vst.msk [vmem:[#allocation2 + $0x238] sm:$0xff] %vm216, 0.0
      %v289 = vld [vmem:[%s203] sm:$0xff]
      %v290 = vld [vmem:[%s203 + $0x8] sm:$0xff]
      %v291 = vld [vmem:[%s203 + $0x10] sm:$0xff]
      %v292 = vld [vmem:[%s203 + $0x18] sm:$0xff]
      %v293 = vld [vmem:[%s203 + $0x20] sm:$0xff]
      %v294 = vld [vmem:[%s203 + $0x28] sm:$0xff]
      %v295 = vld [vmem:[%s203 + $0x30] sm:$0xff]
      %v296 = vld [vmem:[%s203 + $0x38] sm:$0xff]
      %v297 = vld [vmem:[%s203 + $0x40] sm:$0xff]
      %v298 = vld [vmem:[%s203 + $0x48] sm:$0xff]
      %v299 = vld [vmem:[%s203 + $0x50] sm:$0xff]
      %v300 = vld [vmem:[%s203 + $0x58] sm:$0xff]
      %v301 = vld [vmem:[%s203 + $0x60] sm:$0xff]
      %v302 = vld [vmem:[%s203 + $0x68] sm:$0xff]
      %v303 = vld [vmem:[%s203 + $0x70] sm:$0xff]
      %v304 = vld [vmem:[%s203 + $0x78] sm:$0xff]
      %v305 = vld [vmem:[%s203 + $0x80] sm:$0xff]
      %v306 = vld [vmem:[%s203 + $0x88] sm:$0xff]
      %v307 = vld [vmem:[%s203 + $0x90] sm:$0xff]
      %v308 = vld [vmem:[%s203 + $0x98] sm:$0xff]
      %v309 = vld [vmem:[%s203 + $0xa0] sm:$0xff]
      %v310 = vld [vmem:[%s203 + $0xa8] sm:$0xff]
      %v311 = vld [vmem:[%s203 + $0xb0] sm:$0xff]
      %v312 = vld [vmem:[%s203 + $0xb8] sm:$0xff]
      %v313 = vld [vmem:[%s203 + $0xc0] sm:$0xff]
      %v314 = vld [vmem:[%s203 + $0xc8] sm:$0xff]
      %v315 = vld [vmem:[%s203 + $0xd0] sm:$0xff]
      %v316 = vld [vmem:[%s203 + $0xd8] sm:$0xff]
      %v317 = vld [vmem:[%s203 + $0xe0] sm:$0xff]
      %v318 = vld [vmem:[%s203 + $0xe8] sm:$0xff]
      %v319 = vld [vmem:[%s203 + $0xf0] sm:$0xff]
      %v320 = vld [vmem:[%s203 + $0xf8] sm:$0xff]
      %s321 = scalar_lea.vmem [#allocation2], 32
      %322 = vst.msk [vmem:[%s321 + $0x8] sm:$0xff] %vm216, %v289
      %323 = vst.msk [vmem:[%s321 + $0x10] sm:$0xff] %vm216, %v290
      %324 = vst.msk [vmem:[%s321 + $0x28] sm:$0xff] %vm216, %v291
      %325 = vst.msk [vmem:[%s321 + $0x30] sm:$0xff] %vm216, %v292
      %326 = vst.msk [vmem:[%s321 + $0x48] sm:$0xff] %vm216, %v293
      %327 = vst.msk [vmem:[%s321 + $0x50] sm:$0xff] %vm216, %v294
      %328 = vst.msk [vmem:[%s321 + $0x68] sm:$0xff] %vm216, %v295
      %329 = vst.msk [vmem:[%s321 + $0x70] sm:$0xff] %vm216, %v296
      %330 = vst.msk [vmem:[%s321 + $0x88] sm:$0xff] %vm216, %v297
      %331 = vst.msk [vmem:[%s321 + $0x90] sm:$0xff] %vm216, %v298
      %332 = vst.msk [vmem:[%s321 + $0xa8] sm:$0xff] %vm216, %v299
      %333 = vst.msk [vmem:[%s321 + $0xb0] sm:$0xff] %vm216, %v300
      %334 = vst.msk [vmem:[%s321 + $0xc8] sm:$0xff] %vm216, %v301
      %335 = vst.msk [vmem:[%s321 + $0xd0] sm:$0xff] %vm216, %v302
      %336 = vst.msk [vmem:[%s321 + $0xe8] sm:$0xff] %vm216, %v303
      %337 = vst.msk [vmem:[%s321 + $0xf0] sm:$0xff] %vm216, %v304
      %338 = vst.msk [vmem:[%s321 + $0x108] sm:$0xff] %vm216, %v305
      %339 = vst.msk [vmem:[%s321 + $0x110] sm:$0xff] %vm216, %v306
      %340 = vst.msk [vmem:[%s321 + $0x128] sm:$0xff] %vm216, %v307
      %341 = vst.msk [vmem:[%s321 + $0x130] sm:$0xff] %vm216, %v308
      %342 = vst.msk [vmem:[%s321 + $0x148] sm:$0xff] %vm216, %v309
      %343 = vst.msk [vmem:[%s321 + $0x150] sm:$0xff] %vm216, %v310
      %344 = vst.msk [vmem:[%s321 + $0x168] sm:$0xff] %vm216, %v311
      %345 = vst.msk [vmem:[%s321 + $0x170] sm:$0xff] %vm216, %v312
      %346 = vst.msk [vmem:[%s321 + $0x188] sm:$0xff] %vm216, %v313
      %347 = vst.msk [vmem:[%s321 + $0x190] sm:$0xff] %vm216, %v314
      %348 = vst.msk [vmem:[%s321 + $0x1a8] sm:$0xff] %vm216, %v315
      %349 = vst.msk [vmem:[%s321 + $0x1b0] sm:$0xff] %vm216, %v316
      %350 = vst.msk [vmem:[%s321 + $0x1c8] sm:$0xff] %vm216, %v317
      %351 = vst.msk [vmem:[%s321 + $0x1d0] sm:$0xff] %vm216, %v318
      %352 = vst.msk [vmem:[%s321 + $0x1e8] sm:$0xff] %vm216, %v319
      %353 = vst.msk [vmem:[%s321 + $0x1f0] sm:$0xff] %vm216, %v320
      %v354 = vld [vmem:[#allocation2 + $0x7] sm:$0xff]
      %v355 = vld [vmem:[#allocation2 + $0xf] sm:$0xff]
      %v356 = vld [vmem:[#allocation2 + $0x27] sm:$0xff]
      %v357 = vld [vmem:[#allocation2 + $0x2f] sm:$0xff]
      %v358 = vld [vmem:[#allocation2 + $0x47] sm:$0xff]
      %v359 = vld [vmem:[#allocation2 + $0x4f] sm:$0xff]
      %v360 = vld [vmem:[#allocation2 + $0x67] sm:$0xff]
      %v361 = vld [vmem:[#allocation2 + $0x6f] sm:$0xff]
      %v362 = vld [vmem:[#allocation2 + $0x87] sm:$0xff]
      %v363 = vld [vmem:[#allocation2 + $0x8f] sm:$0xff]
      %v364 = vld [vmem:[#allocation2 + $0xa7] sm:$0xff]
      %v365 = vld [vmem:[#allocation2 + $0xaf] sm:$0xff]
      %v366 = vld [vmem:[#allocation2 + $0xc7] sm:$0xff]
      %v367 = vld [vmem:[#allocation2 + $0xcf] sm:$0xff]
      %v368 = vld [vmem:[#allocation2 + $0xe7] sm:$0xff]
      %v369 = vld [vmem:[#allocation2 + $0xef] sm:$0xff]
      %v370 = vld [vmem:[#allocation2 + $0x107] sm:$0xff]
      %v371 = vld [vmem:[#allocation2 + $0x10f] sm:$0xff]
      %v372 = vld [vmem:[#allocation2 + $0x127] sm:$0xff]
      %v373 = vld [vmem:[#allocation2 + $0x12f] sm:$0xff]
      %v374 = vld [vmem:[#allocation2 + $0x147] sm:$0xff]
      %v375 = vld [vmem:[#allocation2 + $0x14f] sm:$0xff]
      %v376 = vld [vmem:[#allocation2 + $0x167] sm:$0xff]
      %v377 = vld [vmem:[#allocation2 + $0x16f] sm:$0xff]
      %v378 = vld [vmem:[#allocation2 + $0x187] sm:$0xff]
      %v379 = vld [vmem:[#allocation2 + $0x18f] sm:$0xff]
      %v380 = vld [vmem:[#allocation2 + $0x1a7] sm:$0xff]
      %v381 = vld [vmem:[#allocation2 + $0x1af] sm:$0xff]
      %v382 = vld [vmem:[#allocation2 + $0x1c7] sm:$0xff]
      %v383 = vld [vmem:[#allocation2 + $0x1cf] sm:$0xff]
      %v384 = vld [vmem:[#allocation2 + $0x1e7] sm:$0xff]
      %v385 = vld [vmem:[#allocation2 + $0x1ef] sm:$0xff]
      %v386 = vpack.c.bf16 %v355, %v354
      %v387 = vpack.c.bf16 %v357, %v356
      %v388 = vpack.c.bf16 %v359, %v358
      %v389 = vpack.c.bf16 %v361, %v360
      %v390 = vpack.c.bf16 %v363, %v362
      %v391 = vpack.c.bf16 %v365, %v364
      %v392 = vpack.c.bf16 %v367, %v366
      %v393 = vpack.c.bf16 %v369, %v368
      %v394 = vpack.c.bf16 %v371, %v370
      %v395 = vpack.c.bf16 %v373, %v372
      %v396 = vpack.c.bf16 %v375, %v374
      %v397 = vpack.c.bf16 %v377, %v376
      %v398 = vpack.c.bf16 %v379, %v378
      %v399 = vpack.c.bf16 %v381, %v380
      %v400 = vpack.c.bf16 %v383, %v382
      %v401 = vpack.c.bf16 %v385, %v384
      %v402 = vld [vmem:[%s1] sm:$0x3]
      %v403 = vld [vmem:[#allocation2 + $0x8] sm:$0xff]
      %v404 = vld [vmem:[#allocation2 + $0x10] sm:$0xff]
      %v405 = vld [vmem:[#allocation2 + $0x28] sm:$0xff]
      %v406 = vld [vmem:[#allocation2 + $0x30] sm:$0xff]
      %v407 = vld [vmem:[#allocation2 + $0x48] sm:$0xff]
      %v408 = vld [vmem:[#allocation2 + $0x50] sm:$0xff]
      %v409 = vld [vmem:[#allocation2 + $0x68] sm:$0xff]
      %v410 = vld [vmem:[#allocation2 + $0x70] sm:$0xff]
      %v411 = vld [vmem:[#allocation2 + $0x88] sm:$0xff]
      %v412 = vld [vmem:[#allocation2 + $0x90] sm:$0xff]
      %v413 = vld [vmem:[#allocation2 + $0xa8] sm:$0xff]
      %v414 = vld [vmem:[#allocation2 + $0xb0] sm:$0xff]
      %v415 = vld [vmem:[#allocation2 + $0xc8] sm:$0xff]
      %v416 = vld [vmem:[#allocation2 + $0xd0] sm:$0xff]
      %v417 = vld [vmem:[#allocation2 + $0xe8] sm:$0xff]
      %v418 = vld [vmem:[#allocation2 + $0xf0] sm:$0xff]
      %v419 = vld [vmem:[#allocation2 + $0x108] sm:$0xff]
      %v420 = vld [vmem:[#allocation2 + $0x110] sm:$0xff]
      %v421 = vld [vmem:[#allocation2 + $0x128] sm:$0xff]
      %v422 = vld [vmem:[#allocation2 + $0x130] sm:$0xff]
      %v423 = vld [vmem:[#allocation2 + $0x148] sm:$0xff]
      %v424 = vld [vmem:[#allocation2 + $0x150] sm:$0xff]
      %v425 = vld [vmem:[#allocation2 + $0x168] sm:$0xff]
      %v426 = vld [vmem:[#allocation2 + $0x170] sm:$0xff]
      %v427 = vld [vmem:[#allocation2 + $0x188] sm:$0xff]
      %v428 = vld [vmem:[#allocation2 + $0x190] sm:$0xff]
      %v429 = vld [vmem:[#allocation2 + $0x1a8] sm:$0xff]
      %v430 = vld [vmem:[#allocation2 + $0x1b0] sm:$0xff]
      %v431 = vld [vmem:[#allocation2 + $0x1c8] sm:$0xff]
      %v432 = vld [vmem:[#allocation2 + $0x1d0] sm:$0xff]
      %v433 = vld [vmem:[#allocation2 + $0x1e8] sm:$0xff]
      %v434 = vld [vmem:[#allocation2 + $0x1f0] sm:$0xff]
      %v435 = vpack.c.bf16 %v404, %v403
      %v436 = vpack.c.bf16 %v406, %v405
      %v437 = vpack.c.bf16 %v408, %v407
      %v438 = vpack.c.bf16 %v410, %v409
      %v439 = vpack.c.bf16 %v412, %v411
      %v440 = vpack.c.bf16 %v414, %v413
      %v441 = vpack.c.bf16 %v416, %v415
      %v442 = vpack.c.bf16 %v418, %v417
      %v443 = vpack.c.bf16 %v420, %v419
      %v444 = vpack.c.bf16 %v422, %v421
      %v445 = vpack.c.bf16 %v424, %v423
      %v446 = vpack.c.bf16 %v426, %v425
      %v447 = vpack.c.bf16 %v428, %v427
      %v448 = vpack.c.bf16 %v430, %v429
      %v449 = vpack.c.bf16 %v432, %v431
      %v450 = vpack.c.bf16 %v434, %v433
      %s451 = scalar_lea.vmem %s1, 2
      %v452 = vld [vmem:[%s451] sm:$0x3]
      %v454 = vsel %vm216, %v435, 0
      %v457 = vsel %vm216, %v436, 0
      %v460 = vsel %vm216, %v437, 0
      %v463 = vsel %vm216, %v438, 0
      %v466 = vsel %vm216, %v439, 0
      %v469 = vsel %vm216, %v440, 0
      %v472 = vsel %vm216, %v441, 0
      %v475 = vsel %vm216, %v442, 0
      %v478 = vsel %vm216, %v443, 0
      %v481 = vsel %vm216, %v444, 0
      %v484 = vsel %vm216, %v445, 0
      %v487 = vsel %vm216, %v446, 0
      %v490 = vsel %vm216, %v447, 0
      %v493 = vsel %vm216, %v448, 0
      %v496 = vsel %vm216, %v449, 0
      %v499 = vsel %vm216, %v450, 0
      %vm501 = vcmask 1041408
      %v503 = vsel %vm501, %v452, 0
      %505 = vmatprep.subr.bf16.mxu0 0
      %506 = vmatpush1.bf16.msra.mxu0 %v503
      %507 = vmatprep.subr.bf16.mxu0 0
      %508 = vmatpush1.bf16.msra.mxu0 0
      %509 = vmatprep.subr.bf16.mxu0 0
      %510 = vmatpush1.bf16.msra.mxu0 0
      %511 = vmatprep.subr.bf16.mxu0 0
      %512 = vmatpush1.bf16.msra.mxu0 0
      %513 = vmatprep.subr.bf16.mxu0 0
      %514 = vmatpush1.bf16.msra.mxu0 0
      %515 = vmatprep.subr.bf16.mxu0 0
      %516 = vmatpush1.bf16.msra.mxu0 0
      %517 = vmatprep.subr.bf16.mxu0 0
      %518 = vmatpush1.bf16.msra.mxu0 0
      %519 = vmatprep.subr.bf16.mxu0 0
      %520 = vmatpush1.bf16.msra.mxu0 0
      %521 = vmatprep.subr.bf16.mxu0 0
      %522 = vmatpush1.bf16.msra.mxu0 0
      %523 = vmatprep.subr.bf16.mxu0 0
      %524 = vmatpush1.bf16.msra.mxu0 0
      %525 = vmatprep.subr.bf16.mxu0 0
      %526 = vmatpush1.bf16.msra.mxu0 0
      %527 = vmatprep.subr.bf16.mxu0 0
      %528 = vmatpush1.bf16.msra.mxu0 0
      %529 = vmatprep.subr.bf16.mxu0 0
      %530 = vmatpush1.bf16.msra.mxu0 0
      %531 = vmatprep.subr.bf16.mxu0 0
      %532 = vmatpush1.bf16.msra.mxu0 0
      %533 = vmatprep.subr.bf16.mxu0 0
      %534 = vmatpush1.bf16.msra.mxu0 0
      %535 = vmatprep.subr.bf16.mxu0 0
      %536 = vmatpush1.bf16.msra.mxu0 0
      %537 = vmatprep.mubr.bf16.mxu0 0
      %538 = vmatmul.mubr.bf16.gmra.mrb[0].mxu0 %v454
      %v539 = vpop.f32.mrb[0].mxu0
      %v540 = vadd.f32 0.0, %v539
      %v541 = vpop.f32.mrb[0].mxu0
      %v542 = vpop.f32.mrb[0].mxu0
      %v543 = vadd.f32 0.0, %v542
      %v544 = vpop.f32.mrb[0].mxu0
      %545 = vmatprep.mubr.bf16.mxu0 0
      %546 = vmatmul.mubr.bf16.gmra.mrb[0].mxu0 %v457
      %v547 = vpop.f32.mrb[0].mxu0
      %v548 = vadd.f32 0.0, %v547
      %v549 = vpop.f32.mrb[0].mxu0
      %v550 = vpop.f32.mrb[0].mxu0
      %v551 = vadd.f32 0.0, %v550
      %v552 = vpop.f32.mrb[0].mxu0
      %553 = vmatprep.mubr.bf16.mxu0 0
      %554 = vmatmul.mubr.bf16.gmra.mrb[0].mxu0 %v460
      %v555 = vpop.f32.mrb[0].mxu0
      %v556 = vadd.f32 0.0, %v555
      %v557 = vpop.f32.mrb[0].mxu0
      %v558 = vpop.f32.mrb[0].mxu0
      %v559 = vadd.f32 0.0, %v558
      %v560 = vpop.f32.mrb[0].mxu0
      %561 = vmatprep.mubr.bf16.mxu0 0
      %562 = vmatmul.mubr.bf16.gmra.mrb[0].mxu0 %v463
      %v563 = vpop.f32.mrb[0].mxu0
      %v564 = vadd.f32 0.0, %v563
      %v565 = vpop.f32.mrb[0].mxu0
      %v566 = vpop.f32.mrb[0].mxu0
      %v567 = vadd.f32 0.0, %v566
      %v568 = vpop.f32.mrb[0].mxu0
      %569 = vmatprep.mubr.bf16.mxu0 0
      %570 = vmatmul.mubr.bf16.gmra.mrb[0].mxu0 %v466
      %v571 = vpop.f32.mrb[0].mxu0
      %v572 = vadd.f32 0.0, %v571
      %v573 = vpop.f32.mrb[0].mxu0
      %v574 = vpop.f32.mrb[0].mxu0
      %v575 = vadd.f32 0.0, %v574
      %v576 = vpop.f32.mrb[0].mxu0
      %577 = vmatprep.mubr.bf16.mxu0 0
      %578 = vmatmul.mubr.bf16.gmra.mrb[0].mxu0 %v469
      %v579 = vpop.f32.mrb[0].mxu0
      %v580 = vadd.f32 0.0, %v579
      %v581 = vpop.f32.mrb[0].mxu0
      %v582 = vpop.f32.mrb[0].mxu0
      %v583 = vadd.f32 0.0, %v582
      %v584 = vpop.f32.mrb[0].mxu0
      %585 = vmatprep.mubr.bf16.mxu0 0
      %586 = vmatmul.mubr.bf16.gmra.mrb[0].mxu0 %v472
      %v587 = vpop.f32.mrb[0].mxu0
      %v588 = vadd.f32 0.0, %v587
      %v589 = vpop.f32.mrb[0].mxu0
      %v590 = vpop.f32.mrb[0].mxu0
      %v591 = vadd.f32 0.0, %v590
      %v592 = vpop.f32.mrb[0].mxu0
      %593 = vmatprep.mubr.bf16.mxu0 0
      %594 = vmatmul.mubr.bf16.gmra.mrb[0].mxu0 %v475
      %v595 = vpop.f32.mrb[0].mxu0
      %v596 = vadd.f32 0.0, %v595
      %v597 = vpop.f32.mrb[0].mxu0
      %v598 = vpop.f32.mrb[0].mxu0
      %v599 = vadd.f32 0.0, %v598
      %v600 = vpop.f32.mrb[0].mxu0
      %601 = vmatprep.mubr.bf16.mxu0 0
      %602 = vmatmul.mubr.bf16.gmra.mrb[0].mxu0 %v478
      %v603 = vpop.f32.mrb[0].mxu0
      %v604 = vadd.f32 0.0, %v603
      %v605 = vpop.f32.mrb[0].mxu0
      %v606 = vpop.f32.mrb[0].mxu0
      %v607 = vadd.f32 0.0, %v606
      %v608 = vpop.f32.mrb[0].mxu0
      %609 = vmatprep.mubr.bf16.mxu0 0
      %610 = vmatmul.mubr.bf16.gmra.mrb[0].mxu0 %v481
      %v611 = vpop.f32.mrb[0].mxu0
      %v612 = vadd.f32 0.0, %v611
      %v613 = vpop.f32.mrb[0].mxu0
      %v614 = vpop.f32.mrb[0].mxu0
      %v615 = vadd.f32 0.0, %v614
      %v616 = vpop.f32.mrb[0].mxu0
      %617 = vmatprep.mubr.bf16.mxu0 0
      %618 = vmatmul.mubr.bf16.gmra.mrb[0].mxu0 %v484
      %v619 = vpop.f32.mrb[0].mxu0
      %v620 = vadd.f32 0.0, %v619
      %v621 = vpop.f32.mrb[0].mxu0
      %v622 = vpop.f32.mrb[0].mxu0
      %v623 = vadd.f32 0.0, %v622
      %v624 = vpop.f32.mrb[0].mxu0
      %625 = vmatprep.mubr.bf16.mxu0 0
      %626 = vmatmul.mubr.bf16.gmra.mrb[0].mxu0 %v487
      %v627 = vpop.f32.mrb[0].mxu0
      %v628 = vadd.f32 0.0, %v627
      %v629 = vpop.f32.mrb[0].mxu0
      %v630 = vpop.f32.mrb[0].mxu0
      %v631 = vadd.f32 0.0, %v630
      %v632 = vpop.f32.mrb[0].mxu0
      %633 = vmatprep.mubr.bf16.mxu0 0
      %634 = vmatmul.mubr.bf16.gmra.mrb[0].mxu0 %v490
      %v635 = vpop.f32.mrb[0].mxu0
      %v636 = vadd.f32 0.0, %v635
      %v637 = vpop.f32.mrb[0].mxu0
      %v638 = vpop.f32.mrb[0].mxu0
      %v639 = vadd.f32 0.0, %v638
      %v640 = vpop.f32.mrb[0].mxu0
      %641 = vmatprep.mubr.bf16.mxu0 0
      %642 = vmatmul.mubr.bf16.gmra.mrb[0].mxu0 %v493
      %v643 = vpop.f32.mrb[0].mxu0
      %v644 = vadd.f32 0.0, %v643
      %v645 = vpop.f32.mrb[0].mxu0
      %v646 = vpop.f32.mrb[0].mxu0
      %v647 = vadd.f32 0.0, %v646
      %v648 = vpop.f32.mrb[0].mxu0
      %649 = vmatprep.mubr.bf16.mxu0 0
      %650 = vmatmul.mubr.bf16.gmra.mrb[0].mxu0 %v496
      %v651 = vpop.f32.mrb[0].mxu0
      %v652 = vadd.f32 0.0, %v651
      %v653 = vpop.f32.mrb[0].mxu0
      %v654 = vpop.f32.mrb[0].mxu0
      %v655 = vadd.f32 0.0, %v654
      %v656 = vpop.f32.mrb[0].mxu0
      %657 = vmatprep.mubr.bf16.mxu0 0
      %658 = vmatmul.mubr.bf16.gmra.mrb[0].mxu0 %v499
      %v659 = vpop.f32.mrb[0].mxu0
      %v660 = vadd.f32 0.0, %v659
      %v661 = vpop.f32.mrb[0].mxu0
      %v662 = vpop.f32.mrb[0].mxu0
      %v663 = vadd.f32 0.0, %v662
      %v664 = vpop.f32.mrb[0].mxu0
      %665 = vdwg.mxu0
      %v667 = vsel %vm216, %v386, 0
      %v670 = vsel %vm216, %v387, 0
      %v673 = vsel %vm216, %v388, 0
      %v676 = vsel %vm216, %v389, 0
      %v679 = vsel %vm216, %v390, 0
      %v682 = vsel %vm216, %v391, 0
      %v685 = vsel %vm216, %v392, 0
      %v688 = vsel %vm216, %v393, 0
      %v691 = vsel %vm216, %v394, 0
      %v694 = vsel %vm216, %v395, 0
      %v697 = vsel %vm216, %v396, 0
      %v700 = vsel %vm216, %v397, 0
      %v703 = vsel %vm216, %v398, 0
      %v706 = vsel %vm216, %v399, 0
      %v709 = vsel %vm216, %v400, 0
      %v712 = vsel %vm216, %v401, 0
      %v715 = vsel %vm501, %v402, 0
      %717 = vmatprep.subr.bf16.mxu0 0
      %718 = vmatpush1.bf16.msra.mxu0 %v715
      %719 = vmatprep.subr.bf16.mxu0 0
      %720 = vmatpush1.bf16.msra.mxu0 0
      %721 = vmatprep.subr.bf16.mxu0 0
      %722 = vmatpush1.bf16.msra.mxu0 0
      %723 = vmatprep.subr.bf16.mxu0 0
      %724 = vmatpush1.bf16.msra.mxu0 0
      %725 = vmatprep.subr.bf16.mxu0 0
      %726 = vmatpush1.bf16.msra.mxu0 0
      %727 = vmatprep.subr.bf16.mxu0 0
      %728 = vmatpush1.bf16.msra.mxu0 0
      %729 = vmatprep.subr.bf16.mxu0 0
      %730 = vmatpush1.bf16.msra.mxu0 0
      %731 = vmatprep.subr.bf16.mxu0 0
      %732 = vmatpush1.bf16.msra.mxu0 0
      %733 = vmatprep.subr.bf16.mxu0 0
      %734 = vmatpush1.bf16.msra.mxu0 0
      %735 = vmatprep.subr.bf16.mxu0 0
      %736 = vmatpush1.bf16.msra.mxu0 0
      %737 = vmatprep.subr.bf16.mxu0 0
      %738 = vmatpush1.bf16.msra.mxu0 0
      %739 = vmatprep.subr.bf16.mxu0 0
      %740 = vmatpush1.bf16.msra.mxu0 0
      %741 = vmatprep.subr.bf16.mxu0 0
      %742 = vmatpush1.bf16.msra.mxu0 0
      %743 = vmatprep.subr.bf16.mxu0 0
      %744 = vmatpush1.bf16.msra.mxu0 0
      %745 = vmatprep.subr.bf16.mxu0 0
      %746 = vmatpush1.bf16.msra.mxu0 0
      %747 = vmatprep.subr.bf16.mxu0 0
      %748 = vmatpush1.bf16.msra.mxu0 0
      %749 = vmatprep.mubr.bf16.mxu0 0
      %750 = vmatmul.mubr.bf16.gmra.mrb[0].mxu0 %v667
      %v751 = vpop.f32.mrb[0].mxu0
      %v752 = vadd.f32 %v540, %v751
      %v753 = vpop.f32.mrb[0].mxu0
      %v754 = vpop.f32.mrb[0].mxu0
      %v755 = vadd.f32 %v543, %v754
      %v756 = vpop.f32.mrb[0].mxu0
      %757 = vmatprep.mubr.bf16.mxu0 0
      %758 = vmatmul.mubr.bf16.gmra.mrb[0].mxu0 %v670
      %v759 = vpop.f32.mrb[0].mxu0
      %v760 = vadd.f32 %v548, %v759
      %v761 = vpop.f32.mrb[0].mxu0
      %v762 = vpop.f32.mrb[0].mxu0
      %v763 = vadd.f32 %v551, %v762
      %v764 = vpop.f32.mrb[0].mxu0
      %765 = vmatprep.mubr.bf16.mxu0 0
      %766 = vmatmul.mubr.bf16.gmra.mrb[0].mxu0 %v673
      %v767 = vpop.f32.mrb[0].mxu0
      %v768 = vadd.f32 %v556, %v767
      %v769 = vpop.f32.mrb[0].mxu0
      %v770 = vpop.f32.mrb[0].mxu0
      %v771 = vadd.f32 %v559, %v770
      %v772 = vpop.f32.mrb[0].mxu0
      %773 = vmatprep.mubr.bf16.mxu0 0
      %774 = vmatmul.mubr.bf16.gmra.mrb[0].mxu0 %v676
      %v775 = vpop.f32.mrb[0].mxu0
      %v776 = vadd.f32 %v564, %v775
      %v777 = vpop.f32.mrb[0].mxu0
      %v778 = vpop.f32.mrb[0].mxu0
      %v779 = vadd.f32 %v567, %v778
      %v780 = vpop.f32.mrb[0].mxu0
      %781 = vmatprep.mubr.bf16.mxu0 0
      %782 = vmatmul.mubr.bf16.gmra.mrb[0].mxu0 %v679
      %v783 = vpop.f32.mrb[0].mxu0
      %v784 = vadd.f32 %v572, %v783
      %v785 = vpop.f32.mrb[0].mxu0
      %v786 = vpop.f32.mrb[0].mxu0
      %v787 = vadd.f32 %v575, %v786
      %v788 = vpop.f32.mrb[0].mxu0
      %789 = vmatprep.mubr.bf16.mxu0 0
      %790 = vmatmul.mubr.bf16.gmra.mrb[0].mxu0 %v682
      %v791 = vpop.f32.mrb[0].mxu0
      %v792 = vadd.f32 %v580, %v791
      %v793 = vpop.f32.mrb[0].mxu0
      %v794 = vpop.f32.mrb[0].mxu0
      %v795 = vadd.f32 %v583, %v794
      %v796 = vpop.f32.mrb[0].mxu0
      %797 = vmatprep.mubr.bf16.mxu0 0
      %798 = vmatmul.mubr.bf16.gmra.mrb[0].mxu0 %v685
      %v799 = vpop.f32.mrb[0].mxu0
      %v800 = vadd.f32 %v588, %v799
      %v801 = vpop.f32.mrb[0].mxu0
      %v802 = vpop.f32.mrb[0].mxu0
      %v803 = vadd.f32 %v591, %v802
      %v804 = vpop.f32.mrb[0].mxu0
      %805 = vmatprep.mubr.bf16.mxu0 0
      %806 = vmatmul.mubr.bf16.gmra.mrb[0].mxu0 %v688
      %v807 = vpop.f32.mrb[0].mxu0
      %v808 = vadd.f32 %v596, %v807
      %v809 = vpop.f32.mrb[0].mxu0
      %v810 = vpop.f32.mrb[0].mxu0
      %v811 = vadd.f32 %v599, %v810
      %v812 = vpop.f32.mrb[0].mxu0
      %813 = vmatprep.mubr.bf16.mxu0 0
      %814 = vmatmul.mubr.bf16.gmra.mrb[0].mxu0 %v691
      %v815 = vpop.f32.mrb[0].mxu0
      %v816 = vadd.f32 %v604, %v815
      %v817 = vpop.f32.mrb[0].mxu0
      %v818 = vpop.f32.mrb[0].mxu0
      %v819 = vadd.f32 %v607, %v818
      %v820 = vpop.f32.mrb[0].mxu0
      %821 = vmatprep.mubr.bf16.mxu0 0
      %822 = vmatmul.mubr.bf16.gmra.mrb[0].mxu0 %v694
      %v823 = vpop.f32.mrb[0].mxu0
      %v824 = vadd.f32 %v612, %v823
      %v825 = vpop.f32.mrb[0].mxu0
      %v826 = vpop.f32.mrb[0].mxu0
      %v827 = vadd.f32 %v615, %v826
      %v828 = vpop.f32.mrb[0].mxu0
      %829 = vmatprep.mubr.bf16.mxu0 0
      %830 = vmatmul.mubr.bf16.gmra.mrb[0].mxu0 %v697
      %v831 = vpop.f32.mrb[0].mxu0
      %v832 = vadd.f32 %v620, %v831
      %v833 = vpop.f32.mrb[0].mxu0
      %v834 = vpop.f32.mrb[0].mxu0
      %v835 = vadd.f32 %v623, %v834
      %v836 = vpop.f32.mrb[0].mxu0
      %837 = vmatprep.mubr.bf16.mxu0 0
      %838 = vmatmul.mubr.bf16.gmra.mrb[0].mxu0 %v700
      %v839 = vpop.f32.mrb[0].mxu0
      %v840 = vadd.f32 %v628, %v839
      %v841 = vpop.f32.mrb[0].mxu0
      %v842 = vpop.f32.mrb[0].mxu0
      %v843 = vadd.f32 %v631, %v842
      %v844 = vpop.f32.mrb[0].mxu0
      %845 = vmatprep.mubr.bf16.mxu0 0
      %846 = vmatmul.mubr.bf16.gmra.mrb[0].mxu0 %v703
      %v847 = vpop.f32.mrb[0].mxu0
      %v848 = vadd.f32 %v636, %v847
      %v849 = vpop.f32.mrb[0].mxu0
      %v850 = vpop.f32.mrb[0].mxu0
      %v851 = vadd.f32 %v639, %v850
      %v852 = vpop.f32.mrb[0].mxu0
      %853 = vmatprep.mubr.bf16.mxu0 0
      %854 = vmatmul.mubr.bf16.gmra.mrb[0].mxu0 %v706
      %v855 = vpop.f32.mrb[0].mxu0
      %v856 = vadd.f32 %v644, %v855
      %v857 = vpop.f32.mrb[0].mxu0
      %v858 = vpop.f32.mrb[0].mxu0
      %v859 = vadd.f32 %v647, %v858
      %v860 = vpop.f32.mrb[0].mxu0
      %861 = vmatprep.mubr.bf16.mxu0 0
      %862 = vmatmul.mubr.bf16.gmra.mrb[0].mxu0 %v709
      %v863 = vpop.f32.mrb[0].mxu0
      %v864 = vadd.f32 %v652, %v863
      %v865 = vpop.f32.mrb[0].mxu0
      %v866 = vpop.f32.mrb[0].mxu0
      %v867 = vadd.f32 %v655, %v866
      %v868 = vpop.f32.mrb[0].mxu0
      %869 = vmatprep.mubr.bf16.mxu0 0
      %870 = vmatmul.mubr.bf16.gmra.mrb[0].mxu0 %v712
      %v871 = vpop.f32.mrb[0].mxu0
      %v872 = vadd.f32 %v660, %v871
      %v873 = vpop.f32.mrb[0].mxu0
      %v874 = vpop.f32.mrb[0].mxu0
      %v875 = vadd.f32 %v663, %v874
      %v876 = vpop.f32.mrb[0].mxu0
      %877 = vdwg.mxu0
      %v878 = vld [vmem:[#allocation2 + $0x9] sm:$0xff]
      %v879 = vld [vmem:[#allocation2 + $0x11] sm:$0xff]
      %v880 = vld [vmem:[#allocation2 + $0x29] sm:$0xff]
      %v881 = vld [vmem:[#allocation2 + $0x31] sm:$0xff]
      %v882 = vld [vmem:[#allocation2 + $0x49] sm:$0xff]
      %v883 = vld [vmem:[#allocation2 + $0x51] sm:$0xff]
      %v884 = vld [vmem:[#allocation2 + $0x69] sm:$0xff]
      %v885 = vld [vmem:[#allocation2 + $0x71] sm:$0xff]
      %v886 = vld [vmem:[#allocation2 + $0x89] sm:$0xff]
      %v887 = vld [vmem:[#allocation2 + $0x91] sm:$0xff]
      %v888 = vld [vmem:[#allocation2 + $0xa9] sm:$0xff]
      %v889 = vld [vmem:[#allocation2 + $0xb1] sm:$0xff]
      %v890 = vld [vmem:[#allocation2 + $0xc9] sm:$0xff]
      %v891 = vld [vmem:[#allocation2 + $0xd1] sm:$0xff]
      %v892 = vld [vmem:[#allocation2 + $0xe9] sm:$0xff]
      %v893 = vld [vmem:[#allocation2 + $0xf1] sm:$0xff]
      %v894 = vld [vmem:[#allocation2 + $0x109] sm:$0xff]
      %v895 = vld [vmem:[#allocation2 + $0x111] sm:$0xff]
      %v896 = vld [vmem:[#allocation2 + $0x129] sm:$0xff]
      %v897 = vld [vmem:[#allocation2 + $0x131] sm:$0xff]
      %v898 = vld [vmem:[#allocation2 + $0x149] sm:$0xff]
      %v899 = vld [vmem:[#allocation2 + $0x151] sm:$0xff]
      %v900 = vld [vmem:[#allocation2 + $0x169] sm:$0xff]
      %v901 = vld [vmem:[#allocation2 + $0x171] sm:$0xff]
      %v902 = vld [vmem:[#allocation2 + $0x189] sm:$0xff]
      %v903 = vld [vmem:[#allocation2 + $0x191] sm:$0xff]
      %v904 = vld [vmem:[#allocation2 + $0x1a9] sm:$0xff]
      %v905 = vld [vmem:[#allocation2 + $0x1b1] sm:$0xff]
      %v906 = vld [vmem:[#allocation2 + $0x1c9] sm:$0xff]
      %v907 = vld [vmem:[#allocation2 + $0x1d1] sm:$0xff]
      %v908 = vld [vmem:[#allocation2 + $0x1e9] sm:$0xff]
      %v909 = vld [vmem:[#allocation2 + $0x1f1] sm:$0xff]
      %v910 = vpack.c.bf16 %v879, %v878
      %v911 = vpack.c.bf16 %v881, %v880
      %v912 = vpack.c.bf16 %v883, %v882
      %v913 = vpack.c.bf16 %v885, %v884
      %v914 = vpack.c.bf16 %v887, %v886
      %v915 = vpack.c.bf16 %v889, %v888
      %v916 = vpack.c.bf16 %v891, %v890
      %v917 = vpack.c.bf16 %v893, %v892
      %v918 = vpack.c.bf16 %v895, %v894
      %v919 = vpack.c.bf16 %v897, %v896
      %v920 = vpack.c.bf16 %v899, %v898
      %v921 = vpack.c.bf16 %v901, %v900
      %v922 = vpack.c.bf16 %v903, %v902
      %v923 = vpack.c.bf16 %v905, %v904
      %v924 = vpack.c.bf16 %v907, %v906
      %v925 = vpack.c.bf16 %v909, %v908
      %s926 = scalar_lea.vmem %s1, 4
      %v927 = vld [vmem:[%s926] sm:$0x3]
      %v929 = vsel %vm216, %v910, 0
      %v932 = vsel %vm216, %v911, 0
      %v935 = vsel %vm216, %v912, 0
      %v938 = vsel %vm216, %v913, 0
      %v941 = vsel %vm216, %v914, 0
      %v944 = vsel %vm216, %v915, 0
      %v947 = vsel %vm216, %v916, 0
      %v950 = vsel %vm216, %v917, 0
      %v953 = vsel %vm216, %v918, 0
      %v956 = vsel %vm216, %v919, 0
      %v959 = vsel %vm216, %v920, 0
      %v962 = vsel %vm216, %v921, 0
      %v965 = vsel %vm216, %v922, 0
      %v968 = vsel %vm216, %v923, 0
      %v971 = vsel %vm216, %v924, 0
      %v974 = vsel %vm216, %v925, 0
      %v977 = vsel %vm501, %v927, 0
      %979 = vmatprep.subr.bf16.mxu0 0
      %980 = vmatpush1.bf16.msra.mxu0 %v977
      %981 = vmatprep.subr.bf16.mxu0 0
      %982 = vmatpush1.bf16.msra.mxu0 0
      %983 = vmatprep.subr.bf16.mxu0 0
      %984 = vmatpush1.bf16.msra.mxu0 0
      %985 = vmatprep.subr.bf16.mxu0 0
      %986 = vmatpush1.bf16.msra.mxu0 0
      %987 = vmatprep.subr.bf16.mxu0 0
      %988 = vmatpush1.bf16.msra.mxu0 0
      %989 = vmatprep.subr.bf16.mxu0 0
      %990 = vmatpush1.bf16.msra.mxu0 0
      %991 = vmatprep.subr.bf16.mxu0 0
      %992 = vmatpush1.bf16.msra.mxu0 0
      %993 = vmatprep.subr.bf16.mxu0 0
      %994 = vmatpush1.bf16.msra.mxu0 0
      %995 = vmatprep.subr.bf16.mxu0 0
      %996 = vmatpush1.bf16.msra.mxu0 0
      %997 = vmatprep.subr.bf16.mxu0 0
      %998 = vmatpush1.bf16.msra.mxu0 0
      %999 = vmatprep.subr.bf16.mxu0 0
      %1000 = vmatpush1.bf16.msra.mxu0 0
      %1001 = vmatprep.subr.bf16.mxu0 0
      %1002 = vmatpush1.bf16.msra.mxu0 0
      %1003 = vmatprep.subr.bf16.mxu0 0
      %1004 = vmatpush1.bf16.msra.mxu0 0
      %1005 = vmatprep.subr.bf16.mxu0 0
      %1006 = vmatpush1.bf16.msra.mxu0 0
      %1007 = vmatprep.subr.bf16.mxu0 0
      %1008 = vmatpush1.bf16.msra.mxu0 0
      %1009 = vmatprep.subr.bf16.mxu0 0
      %1010 = vmatpush1.bf16.msra.mxu0 0
      %1011 = vmatprep.mubr.bf16.mxu0 0
      %1012 = vmatmul.mubr.bf16.gmra.mrb[0].mxu0 %v929
      %v1013 = vpop.f32.mrb[0].mxu0
      %v1014 = vadd.f32 0.0, %v1013
      %v1015 = vpop.f32.mrb[0].mxu0
      %v1016 = vpop.f32.mrb[0].mxu0
      %v1017 = vadd.f32 0.0, %v1016
      %v1018 = vpop.f32.mrb[0].mxu0
      %1019 = vmatprep.mubr.bf16.mxu0 0
      %1020 = vmatmul.mubr.bf16.gmra.mrb[0].mxu0 %v932
      %v1021 = vpop.f32.mrb[0].mxu0
      %v1022 = vadd.f32 0.0, %v1021
      %v1023 = vpop.f32.mrb[0].mxu0
      %v1024 = vpop.f32.mrb[0].mxu0
      %v1025 = vadd.f32 0.0, %v1024
      %v1026 = vpop.f32.mrb[0].mxu0
      %1027 = vmatprep.mubr.bf16.mxu0 0
      %1028 = vmatmul.mubr.bf16.gmra.mrb[0].mxu0 %v935
      %v1029 = vpop.f32.mrb[0].mxu0
      %v1030 = vadd.f32 0.0, %v1029
      %v1031 = vpop.f32.mrb[0].mxu0
      %v1032 = vpop.f32.mrb[0].mxu0
      %v1033 = vadd.f32 0.0, %v1032
      %v1034 = vpop.f32.mrb[0].mxu0
      %1035 = vmatprep.mubr.bf16.mxu0 0
      %1036 = vmatmul.mubr.bf16.gmra.mrb[0].mxu0 %v938
      %v1037 = vpop.f32.mrb[0].mxu0
      %v1038 = vadd.f32 0.0, %v1037
      %v1039 = vpop.f32.mrb[0].mxu0
      %v1040 = vpop.f32.mrb[0].mxu0
      %v1041 = vadd.f32 0.0, %v1040
      %v1042 = vpop.f32.mrb[0].mxu0
      %1043 = vmatprep.mubr.bf16.mxu0 0
      %1044 = vmatmul.mubr.bf16.gmra.mrb[0].mxu0 %v941
      %v1045 = vpop.f32.mrb[0].mxu0
      %v1046 = vadd.f32 0.0, %v1045
      %v1047 = vpop.f32.mrb[0].mxu0
      %v1048 = vpop.f32.mrb[0].mxu0
      %v1049 = vadd.f32 0.0, %v1048
      %v1050 = vpop.f32.mrb[0].mxu0
      %1051 = vmatprep.mubr.bf16.mxu0 0
      %1052 = vmatmul.mubr.bf16.gmra.mrb[0].mxu0 %v944
      %v1053 = vpop.f32.mrb[0].mxu0
      %v1054 = vadd.f32 0.0, %v1053
      %v1055 = vpop.f32.mrb[0].mxu0
      %v1056 = vpop.f32.mrb[0].mxu0
      %v1057 = vadd.f32 0.0, %v1056
      %v1058 = vpop.f32.mrb[0].mxu0
      %1059 = vmatprep.mubr.bf16.mxu0 0
      %1060 = vmatmul.mubr.bf16.gmra.mrb[0].mxu0 %v947
      %v1061 = vpop.f32.mrb[0].mxu0
      %v1062 = vadd.f32 0.0, %v1061
      %v1063 = vpop.f32.mrb[0].mxu0
      %v1064 = vpop.f32.mrb[0].mxu0
      %v1065 = vadd.f32 0.0, %v1064
      %v1066 = vpop.f32.mrb[0].mxu0
      %1067 = vmatprep.mubr.bf16.mxu0 0
      %1068 = vmatmul.mubr.bf16.gmra.mrb[0].mxu0 %v950
      %v1069 = vpop.f32.mrb[0].mxu0
      %v1070 = vadd.f32 0.0, %v1069
      %v1071 = vpop.f32.mrb[0].mxu0
      %v1072 = vpop.f32.mrb[0].mxu0
      %v1073 = vadd.f32 0.0, %v1072
      %v1074 = vpop.f32.mrb[0].mxu0
      %1075 = vmatprep.mubr.bf16.mxu0 0
      %1076 = vmatmul.mubr.bf16.gmra.mrb[0].mxu0 %v953
      %v1077 = vpop.f32.mrb[0].mxu0
      %v1078 = vadd.f32 0.0, %v1077
      %v1079 = vpop.f32.mrb[0].mxu0
      %v1080 = vpop.f32.mrb[0].mxu0
      %v1081 = vadd.f32 0.0, %v1080
      %v1082 = vpop.f32.mrb[0].mxu0
      %1083 = vmatprep.mubr.bf16.mxu0 0
      %1084 = vmatmul.mubr.bf16.gmra.mrb[0].mxu0 %v956
      %v1085 = vpop.f32.mrb[0].mxu0
      %v1086 = vadd.f32 0.0, %v1085
      %v1087 = vpop.f32.mrb[0].mxu0
      %v1088 = vpop.f32.mrb[0].mxu0
      %v1089 = vadd.f32 0.0, %v1088
      %v1090 = vpop.f32.mrb[0].mxu0
      %1091 = vmatprep.mubr.bf16.mxu0 0
      %1092 = vmatmul.mubr.bf16.gmra.mrb[0].mxu0 %v959
      %v1093 = vpop.f32.mrb[0].mxu0
      %v1094 = vadd.f32 0.0, %v1093
      %v1095 = vpop.f32.mrb[0].mxu0
      %v1096 = vpop.f32.mrb[0].mxu0
      %v1097 = vadd.f32 0.0, %v1096
      %v1098 = vpop.f32.mrb[0].mxu0
      %1099 = vmatprep.mubr.bf16.mxu0 0
      %1100 = vmatmul.mubr.bf16.gmra.mrb[0].mxu0 %v962
      %v1101 = vpop.f32.mrb[0].mxu0
      %v1102 = vadd.f32 0.0, %v1101
      %v1103 = vpop.f32.mrb[0].mxu0
      %v1104 = vpop.f32.mrb[0].mxu0
      %v1105 = vadd.f32 0.0, %v1104
      %v1106 = vpop.f32.mrb[0].mxu0
      %1107 = vmatprep.mubr.bf16.mxu0 0
      %1108 = vmatmul.mubr.bf16.gmra.mrb[0].mxu0 %v965
      %v1109 = vpop.f32.mrb[0].mxu0
      %v1110 = vadd.f32 0.0, %v1109
      %v1111 = vpop.f32.mrb[0].mxu0
      %v1112 = vpop.f32.mrb[0].mxu0
      %v1113 = vadd.f32 0.0, %v1112
      %v1114 = vpop.f32.mrb[0].mxu0
      %1115 = vmatprep.mubr.bf16.mxu0 0
      %1116 = vmatmul.mubr.bf16.gmra.mrb[0].mxu0 %v968
      %v1117 = vpop.f32.mrb[0].mxu0
      %v1118 = vadd.f32 0.0, %v1117
      %v1119 = vpop.f32.mrb[0].mxu0
      %v1120 = vpop.f32.mrb[0].mxu0
      %v1121 = vadd.f32 0.0, %v1120
      %v1122 = vpop.f32.mrb[0].mxu0
      %1123 = vmatprep.mubr.bf16.mxu0 0
      %1124 = vmatmul.mubr.bf16.gmra.mrb[0].mxu0 %v971
      %v1125 = vpop.f32.mrb[0].mxu0
      %v1126 = vadd.f32 0.0, %v1125
      %v1127 = vpop.f32.mrb[0].mxu0
      %v1128 = vpop.f32.mrb[0].mxu0
      %v1129 = vadd.f32 0.0, %v1128
      %v1130 = vpop.f32.mrb[0].mxu0
      %1131 = vmatprep.mubr.bf16.mxu0 0
      %1132 = vmatmul.mubr.bf16.gmra.mrb[0].mxu0 %v974
      %v1133 = vpop.f32.mrb[0].mxu0
      %v1134 = vadd.f32 0.0, %v1133
      %v1135 = vpop.f32.mrb[0].mxu0
      %v1136 = vpop.f32.mrb[0].mxu0
      %v1137 = vadd.f32 0.0, %v1136
      %v1138 = vpop.f32.mrb[0].mxu0
      %1139 = vdwg.mxu0
      %v1140 = vadd.f32 %v752, %v1014
      %v1141 = vadd.f32 %v755, %v1017
      %v1142 = vadd.f32 %v760, %v1022
      %v1143 = vadd.f32 %v763, %v1025
      %v1144 = vadd.f32 %v768, %v1030
      %v1145 = vadd.f32 %v771, %v1033
      %v1146 = vadd.f32 %v776, %v1038
      %v1147 = vadd.f32 %v779, %v1041
      %v1148 = vadd.f32 %v784, %v1046
      %v1149 = vadd.f32 %v787, %v1049
      %v1150 = vadd.f32 %v792, %v1054
      %v1151 = vadd.f32 %v795, %v1057
      %v1152 = vadd.f32 %v800, %v1062
      %v1153 = vadd.f32 %v803, %v1065
      %v1154 = vadd.f32 %v808, %v1070
      %v1155 = vadd.f32 %v811, %v1073
      %v1156 = vadd.f32 %v816, %v1078
      %v1157 = vadd.f32 %v819, %v1081
      %v1158 = vadd.f32 %v824, %v1086
      %v1159 = vadd.f32 %v827, %v1089
      %v1160 = vadd.f32 %v832, %v1094
      %v1161 = vadd.f32 %v835, %v1097
      %v1162 = vadd.f32 %v840, %v1102
      %v1163 = vadd.f32 %v843, %v1105
      %v1164 = vadd.f32 %v848, %v1110
      %v1165 = vadd.f32 %v851, %v1113
      %v1166 = vadd.f32 %v856, %v1118
      %v1167 = vadd.f32 %v859, %v1121
      %v1168 = vadd.f32 %v864, %v1126
      %v1169 = vadd.f32 %v867, %v1129
      %v1170 = vadd.f32 %v872, %v1134
      %v1171 = vadd.f32 %v875, %v1137
      %v1172 = vld [vmem:[%s321 + $0x7] sm:$0xff]
      %v1173 = vld [vmem:[%s321 + $0xf] sm:$0xff]
      %v1174 = vld [vmem:[%s321 + $0x27] sm:$0xff]
      %v1175 = vld [vmem:[%s321 + $0x2f] sm:$0xff]
      %v1176 = vld [vmem:[%s321 + $0x47] sm:$0xff]
      %v1177 = vld [vmem:[%s321 + $0x4f] sm:$0xff]
      %v1178 = vld [vmem:[%s321 + $0x67] sm:$0xff]
      %v1179 = vld [vmem:[%s321 + $0x6f] sm:$0xff]
      %v1180 = vld [vmem:[%s321 + $0x87] sm:$0xff]
      %v1181 = vld [vmem:[%s321 + $0x8f] sm:$0xff]
      %v1182 = vld [vmem:[%s321 + $0xa7] sm:$0xff]
      %v1183 = vld [vmem:[%s321 + $0xaf] sm:$0xff]
      %v1184 = vld [vmem:[%s321 + $0xc7] sm:$0xff]
      %v1185 = vld [vmem:[%s321 + $0xcf] sm:$0xff]
      %v1186 = vld [vmem:[%s321 + $0xe7] sm:$0xff]
      %v1187 = vld [vmem:[%s321 + $0xef] sm:$0xff]
      %v1188 = vld [vmem:[%s321 + $0x107] sm:$0xff]
      %v1189 = vld [vmem:[%s321 + $0x10f] sm:$0xff]
      %v1190 = vld [vmem:[%s321 + $0x127] sm:$0xff]
      %v1191 = vld [vmem:[%s321 + $0x12f] sm:$0xff]
      %v1192 = vld [vmem:[%s321 + $0x147] sm:$0xff]
      %v1193 = vld [vmem:[%s321 + $0x14f] sm:$0xff]
      %v1194 = vld [vmem:[%s321 + $0x167] sm:$0xff]
      %v1195 = vld [vmem:[%s321 + $0x16f] sm:$0xff]
      %v1196 = vld [vmem:[%s321 + $0x187] sm:$0xff]
      %v1197 = vld [vmem:[%s321 + $0x18f] sm:$0xff]
      %v1198 = vld [vmem:[%s321 + $0x1a7] sm:$0xff]
      %v1199 = vld [vmem:[%s321 + $0x1af] sm:$0xff]
      %v1200 = vld [vmem:[%s321 + $0x1c7] sm:$0xff]
      %v1201 = vld [vmem:[%s321 + $0x1cf] sm:$0xff]
      %v1202 = vld [vmem:[%s321 + $0x1e7] sm:$0xff]
      %v1203 = vld [vmem:[%s321 + $0x1ef] sm:$0xff]
      %v1204 = vpack.c.bf16 %v1173, %v1172
      %v1205 = vpack.c.bf16 %v1175, %v1174
      %v1206 = vpack.c.bf16 %v1177, %v1176
      %v1207 = vpack.c.bf16 %v1179, %v1178
      %v1208 = vpack.c.bf16 %v1181, %v1180
      %v1209 = vpack.c.bf16 %v1183, %v1182
      %v1210 = vpack.c.bf16 %v1185, %v1184
      %v1211 = vpack.c.bf16 %v1187, %v1186
      %v1212 = vpack.c.bf16 %v1189, %v1188
      %v1213 = vpack.c.bf16 %v1191, %v1190
      %v1214 = vpack.c.bf16 %v1193, %v1192
      %v1215 = vpack.c.bf16 %v1195, %v1194
      %v1216 = vpack.c.bf16 %v1197, %v1196
      %v1217 = vpack.c.bf16 %v1199, %v1198
      %v1218 = vpack.c.bf16 %v1201, %v1200
      %v1219 = vpack.c.bf16 %v1203, %v1202
      %s1220 = scalar_lea.vmem %s1, 6
      %v1221 = vld [vmem:[%s1220] sm:$0x3]
      %v1223 = vsel %vm216, %v1204, 0
      %v1226 = vsel %vm216, %v1205, 0
      %v1229 = vsel %vm216, %v1206, 0
      %v1232 = vsel %vm216, %v1207, 0
      %v1235 = vsel %vm216, %v1208, 0
      %v1238 = vsel %vm216, %v1209, 0
      %v1241 = vsel %vm216, %v1210, 0
      %v1244 = vsel %vm216, %v1211, 0
      %v1247 = vsel %vm216, %v1212, 0
      %v1250 = vsel %vm216, %v1213, 0
      %v1253 = vsel %vm216, %v1214, 0
      %v1256 = vsel %vm216, %v1215, 0
      %v1259 = vsel %vm216, %v1216, 0
      %v1262 = vsel %vm216, %v1217, 0
      %v1265 = vsel %vm216, %v1218, 0
      %v1268 = vsel %vm216, %v1219, 0
      %v1271 = vsel %vm501, %v1221, 0
      %1273 = vmatprep.subr.bf16.mxu0 0
      %1274 = vmatpush1.bf16.msra.mxu0 %v1271
      %1275 = vmatprep.subr.bf16.mxu0 0
      %1276 = vmatpush1.bf16.msra.mxu0 0
      %1277 = vmatprep.subr.bf16.mxu0 0
      %1278 = vmatpush1.bf16.msra.mxu0 0
      %1279 = vmatprep.subr.bf16.mxu0 0
      %1280 = vmatpush1.bf16.msra.mxu0 0
      %1281 = vmatprep.subr.bf16.mxu0 0
      %1282 = vmatpush1.bf16.msra.mxu0 0
      %1283 = vmatprep.subr.bf16.mxu0 0
      %1284 = vmatpush1.bf16.msra.mxu0 0
      %1285 = vmatprep.subr.bf16.mxu0 0
      %1286 = vmatpush1.bf16.msra.mxu0 0
      %1287 = vmatprep.subr.bf16.mxu0 0
      %1288 = vmatpush1.bf16.msra.mxu0 0
      %1289 = vmatprep.subr.bf16.mxu0 0
      %1290 = vmatpush1.bf16.msra.mxu0 0
      %1291 = vmatprep.subr.bf16.mxu0 0
      %1292 = vmatpush1.bf16.msra.mxu0 0
      %1293 = vmatprep.subr.bf16.mxu0 0
      %1294 = vmatpush1.bf16.msra.mxu0 0
      %1295 = vmatprep.subr.bf16.mxu0 0
      %1296 = vmatpush1.bf16.msra.mxu0 0
      %1297 = vmatprep.subr.bf16.mxu0 0
      %1298 = vmatpush1.bf16.msra.mxu0 0
      %1299 = vmatprep.subr.bf16.mxu0 0
      %1300 = vmatpush1.bf16.msra.mxu0 0
      %1301 = vmatprep.subr.bf16.mxu0 0
      %1302 = vmatpush1.bf16.msra.mxu0 0
      %1303 = vmatprep.subr.bf16.mxu0 0
      %1304 = vmatpush1.bf16.msra.mxu0 0
      %1305 = vmatprep.mubr.bf16.mxu0 0
      %1306 = vmatmul.mubr.bf16.gmra.mrb[0].mxu0 %v1223
      %v1307 = vpop.f32.mrb[0].mxu0
      %v1308 = vadd.f32 0.0, %v1307
      %v1309 = vpop.f32.mrb[0].mxu0
      %v1310 = vpop.f32.mrb[0].mxu0
      %v1311 = vadd.f32 0.0, %v1310
      %v1312 = vpop.f32.mrb[0].mxu0
      %1313 = vmatprep.mubr.bf16.mxu0 0
      %1314 = vmatmul.mubr.bf16.gmra.mrb[0].mxu0 %v1226
      %v1315 = vpop.f32.mrb[0].mxu0
      %v1316 = vadd.f32 0.0, %v1315
      %v1317 = vpop.f32.mrb[0].mxu0
      %v1318 = vpop.f32.mrb[0].mxu0
      %v1319 = vadd.f32 0.0, %v1318
      %v1320 = vpop.f32.mrb[0].mxu0
      %1321 = vmatprep.mubr.bf16.mxu0 0
      %1322 = vmatmul.mubr.bf16.gmra.mrb[0].mxu0 %v1229
      %v1323 = vpop.f32.mrb[0].mxu0
      %v1324 = vadd.f32 0.0, %v1323
      %v1325 = vpop.f32.mrb[0].mxu0
      %v1326 = vpop.f32.mrb[0].mxu0
      %v1327 = vadd.f32 0.0, %v1326
      %v1328 = vpop.f32.mrb[0].mxu0
      %1329 = vmatprep.mubr.bf16.mxu0 0
      %1330 = vmatmul.mubr.bf16.gmra.mrb[0].mxu0 %v1232
      %v1331 = vpop.f32.mrb[0].mxu0
      %v1332 = vadd.f32 0.0, %v1331
      %v1333 = vpop.f32.mrb[0].mxu0
      %v1334 = vpop.f32.mrb[0].mxu0
      %v1335 = vadd.f32 0.0, %v1334
      %v1336 = vpop.f32.mrb[0].mxu0
      %1337 = vmatprep.mubr.bf16.mxu0 0
      %1338 = vmatmul.mubr.bf16.gmra.mrb[0].mxu0 %v1235
      %v1339 = vpop.f32.mrb[0].mxu0
      %v1340 = vadd.f32 0.0, %v1339
      %v1341 = vpop.f32.mrb[0].mxu0
      %v1342 = vpop.f32.mrb[0].mxu0
      %v1343 = vadd.f32 0.0, %v1342
      %v1344 = vpop.f32.mrb[0].mxu0
      %1345 = vmatprep.mubr.bf16.mxu0 0
      %1346 = vmatmul.mubr.bf16.gmra.mrb[0].mxu0 %v1238
      %v1347 = vpop.f32.mrb[0].mxu0
      %v1348 = vadd.f32 0.0, %v1347
      %v1349 = vpop.f32.mrb[0].mxu0
      %v1350 = vpop.f32.mrb[0].mxu0
      %v1351 = vadd.f32 0.0, %v1350
      %v1352 = vpop.f32.mrb[0].mxu0
      %1353 = vmatprep.mubr.bf16.mxu0 0
      %1354 = vmatmul.mubr.bf16.gmra.mrb[0].mxu0 %v1241
      %v1355 = vpop.f32.mrb[0].mxu0
      %v1356 = vadd.f32 0.0, %v1355
      %v1357 = vpop.f32.mrb[0].mxu0
      %v1358 = vpop.f32.mrb[0].mxu0
      %v1359 = vadd.f32 0.0, %v1358
      %v1360 = vpop.f32.mrb[0].mxu0
      %1361 = vmatprep.mubr.bf16.mxu0 0
      %1362 = vmatmul.mubr.bf16.gmra.mrb[0].mxu0 %v1244
      %v1363 = vpop.f32.mrb[0].mxu0
      %v1364 = vadd.f32 0.0, %v1363
      %v1365 = vpop.f32.mrb[0].mxu0
      %v1366 = vpop.f32.mrb[0].mxu0
      %v1367 = vadd.f32 0.0, %v1366
      %v1368 = vpop.f32.mrb[0].mxu0
      %1369 = vmatprep.mubr.bf16.mxu0 0
      %1370 = vmatmul.mubr.bf16.gmra.mrb[0].mxu0 %v1247
      %v1371 = vpop.f32.mrb[0].mxu0
      %v1372 = vadd.f32 0.0, %v1371
      %v1373 = vpop.f32.mrb[0].mxu0
      %v1374 = vpop.f32.mrb[0].mxu0
      %v1375 = vadd.f32 0.0, %v1374
      %v1376 = vpop.f32.mrb[0].mxu0
      %1377 = vmatprep.mubr.bf16.mxu0 0
      %1378 = vmatmul.mubr.bf16.gmra.mrb[0].mxu0 %v1250
      %v1379 = vpop.f32.mrb[0].mxu0
      %v1380 = vadd.f32 0.0, %v1379
      %v1381 = vpop.f32.mrb[0].mxu0
      %v1382 = vpop.f32.mrb[0].mxu0
      %v1383 = vadd.f32 0.0, %v1382
      %v1384 = vpop.f32.mrb[0].mxu0
      %1385 = vmatprep.mubr.bf16.mxu0 0
      %1386 = vmatmul.mubr.bf16.gmra.mrb[0].mxu0 %v1253
      %v1387 = vpop.f32.mrb[0].mxu0
      %v1388 = vadd.f32 0.0, %v1387
      %v1389 = vpop.f32.mrb[0].mxu0
      %v1390 = vpop.f32.mrb[0].mxu0
      %v1391 = vadd.f32 0.0, %v1390
      %v1392 = vpop.f32.mrb[0].mxu0
      %1393 = vmatprep.mubr.bf16.mxu0 0
      %1394 = vmatmul.mubr.bf16.gmra.mrb[0].mxu0 %v1256
      %v1395 = vpop.f32.mrb[0].mxu0
      %v1396 = vadd.f32 0.0, %v1395
      %v1397 = vpop.f32.mrb[0].mxu0
      %v1398 = vpop.f32.mrb[0].mxu0
      %v1399 = vadd.f32 0.0, %v1398
      %v1400 = vpop.f32.mrb[0].mxu0
      %1401 = vmatprep.mubr.bf16.mxu0 0
      %1402 = vmatmul.mubr.bf16.gmra.mrb[0].mxu0 %v1259
      %v1403 = vpop.f32.mrb[0].mxu0
      %v1404 = vadd.f32 0.0, %v1403
      %v1405 = vpop.f32.mrb[0].mxu0
      %v1406 = vpop.f32.mrb[0].mxu0
      %v1407 = vadd.f32 0.0, %v1406
      %v1408 = vpop.f32.mrb[0].mxu0
      %1409 = vmatprep.mubr.bf16.mxu0 0
      %1410 = vmatmul.mubr.bf16.gmra.mrb[0].mxu0 %v1262
      %v1411 = vpop.f32.mrb[0].mxu0
      %v1412 = vadd.f32 0.0, %v1411
      %v1413 = vpop.f32.mrb[0].mxu0
      %v1414 = vpop.f32.mrb[0].mxu0
      %v1415 = vadd.f32 0.0, %v1414
      %v1416 = vpop.f32.mrb[0].mxu0
      %1417 = vmatprep.mubr.bf16.mxu0 0
      %1418 = vmatmul.mubr.bf16.gmra.mrb[0].mxu0 %v1265
      %v1419 = vpop.f32.mrb[0].mxu0
      %v1420 = vadd.f32 0.0, %v1419
      %v1421 = vpop.f32.mrb[0].mxu0
      %v1422 = vpop.f32.mrb[0].mxu0
      %v1423 = vadd.f32 0.0, %v1422
      %v1424 = vpop.f32.mrb[0].mxu0
      %1425 = vmatprep.mubr.bf16.mxu0 0
      %1426 = vmatmul.mubr.bf16.gmra.mrb[0].mxu0 %v1268
      %v1427 = vpop.f32.mrb[0].mxu0
      %v1428 = vadd.f32 0.0, %v1427
      %v1429 = vpop.f32.mrb[0].mxu0
      %v1430 = vpop.f32.mrb[0].mxu0
      %v1431 = vadd.f32 0.0, %v1430
      %v1432 = vpop.f32.mrb[0].mxu0
      %1433 = vdwg.mxu0
      %v1434 = vadd.f32 %v1140, %v1308
      %v1435 = vadd.f32 %v1141, %v1311
      %v1436 = vadd.f32 %v1142, %v1316
      %v1437 = vadd.f32 %v1143, %v1319
      %v1438 = vadd.f32 %v1144, %v1324
      %v1439 = vadd.f32 %v1145, %v1327
      %v1440 = vadd.f32 %v1146, %v1332
      %v1441 = vadd.f32 %v1147, %v1335
      %v1442 = vadd.f32 %v1148, %v1340
      %v1443 = vadd.f32 %v1149, %v1343
      %v1444 = vadd.f32 %v1150, %v1348
      %v1445 = vadd.f32 %v1151, %v1351
      %v1446 = vadd.f32 %v1152, %v1356
      %v1447 = vadd.f32 %v1153, %v1359
      %v1448 = vadd.f32 %v1154, %v1364
      %v1449 = vadd.f32 %v1155, %v1367
      %v1450 = vadd.f32 %v1156, %v1372
      %v1451 = vadd.f32 %v1157, %v1375
      %v1452 = vadd.f32 %v1158, %v1380
      %v1453 = vadd.f32 %v1159, %v1383
      %v1454 = vadd.f32 %v1160, %v1388
      %v1455 = vadd.f32 %v1161, %v1391
      %v1456 = vadd.f32 %v1162, %v1396
      %v1457 = vadd.f32 %v1163, %v1399
      %v1458 = vadd.f32 %v1164, %v1404
      %v1459 = vadd.f32 %v1165, %v1407
      %v1460 = vadd.f32 %v1166, %v1412
      %v1461 = vadd.f32 %v1167, %v1415
      %v1462 = vadd.f32 %v1168, %v1420
      %v1463 = vadd.f32 %v1169, %v1423
      %v1464 = vadd.f32 %v1170, %v1428
      %v1465 = vadd.f32 %v1171, %v1431
      %v1466 = vld [vmem:[%s321 + $0x8] sm:$0xff]
      %v1467 = vld [vmem:[%s321 + $0x10] sm:$0xff]
      %v1468 = vld [vmem:[%s321 + $0x28] sm:$0xff]
      %v1469 = vld [vmem:[%s321 + $0x30] sm:$0xff]
      %v1470 = vld [vmem:[%s321 + $0x48] sm:$0xff]
      %v1471 = vld [vmem:[%s321 + $0x50] sm:$0xff]
      %v1472 = vld [vmem:[%s321 + $0x68] sm:$0xff]
      %v1473 = vld [vmem:[%s321 + $0x70] sm:$0xff]
      %v1474 = vld [vmem:[%s321 + $0x88] sm:$0xff]
      %v1475 = vld [vmem:[%s321 + $0x90] sm:$0xff]
      %v1476 = vld [vmem:[%s321 + $0xa8] sm:$0xff]
      %v1477 = vld [vmem:[%s321 + $0xb0] sm:$0xff]
      %v1478 = vld [vmem:[%s321 + $0xc8] sm:$0xff]
      %v1479 = vld [vmem:[%s321 + $0xd0] sm:$0xff]
      %v1480 = vld [vmem:[%s321 + $0xe8] sm:$0xff]
      %v1481 = vld [vmem:[%s321 + $0xf0] sm:$0xff]
      %v1482 = vld [vmem:[%s321 + $0x108] sm:$0xff]
      %v1483 = vld [vmem:[%s321 + $0x110] sm:$0xff]
      %v1484 = vld [vmem:[%s321 + $0x128] sm:$0xff]
      %v1485 = vld [vmem:[%s321 + $0x130] sm:$0xff]
      %v1486 = vld [vmem:[%s321 + $0x148] sm:$0xff]
      %v1487 = vld [vmem:[%s321 + $0x150] sm:$0xff]
      %v1488 = vld [vmem:[%s321 + $0x168] sm:$0xff]
      %v1489 = vld [vmem:[%s321 + $0x170] sm:$0xff]
      %v1490 = vld [vmem:[%s321 + $0x188] sm:$0xff]
      %v1491 = vld [vmem:[%s321 + $0x190] sm:$0xff]
      %v1492 = vld [vmem:[%s321 + $0x1a8] sm:$0xff]
      %v1493 = vld [vmem:[%s321 + $0x1b0] sm:$0xff]
      %v1494 = vld [vmem:[%s321 + $0x1c8] sm:$0xff]
      %v1495 = vld [vmem:[%s321 + $0x1d0] sm:$0xff]
      %v1496 = vld [vmem:[%s321 + $0x1e8] sm:$0xff]
      %v1497 = vld [vmem:[%s321 + $0x1f0] sm:$0xff]
      %v1498 = vpack.c.bf16 %v1467, %v1466
      %v1499 = vpack.c.bf16 %v1469, %v1468
      %v1500 = vpack.c.bf16 %v1471, %v1470
      %v1501 = vpack.c.bf16 %v1473, %v1472
      %v1502 = vpack.c.bf16 %v1475, %v1474
      %v1503 = vpack.c.bf16 %v1477, %v1476
      %v1504 = vpack.c.bf16 %v1479, %v1478
      %v1505 = vpack.c.bf16 %v1481, %v1480
      %v1506 = vpack.c.bf16 %v1483, %v1482
      %v1507 = vpack.c.bf16 %v1485, %v1484
      %v1508 = vpack.c.bf16 %v1487, %v1486
      %v1509 = vpack.c.bf16 %v1489, %v1488
      %v1510 = vpack.c.bf16 %v1491, %v1490
      %v1511 = vpack.c.bf16 %v1493, %v1492
      %v1512 = vpack.c.bf16 %v1495, %v1494
      %v1513 = vpack.c.bf16 %v1497, %v1496
      %s1514 = scalar_lea.vmem %s1, 8
      %v1515 = vld [vmem:[%s1514] sm:$0x3]
      %v1517 = vsel %vm216, %v1498, 0
      %v1520 = vsel %vm216, %v1499, 0
      %v1523 = vsel %vm216, %v1500, 0
      %v1526 = vsel %vm216, %v1501, 0
      %v1529 = vsel %vm216, %v1502, 0
      %v1532 = vsel %vm216, %v1503, 0
      %v1535 = vsel %vm216, %v1504, 0
      %v1538 = vsel %vm216, %v1505, 0
      %v1541 = vsel %vm216, %v1506, 0
      %v1544 = vsel %vm216, %v1507, 0
      %v1547 = vsel %vm216, %v1508, 0
      %v1550 = vsel %vm216, %v1509, 0
      %v1553 = vsel %vm216, %v1510, 0
      %v1556 = vsel %vm216, %v1511, 0
      %v1559 = vsel %vm216, %v1512, 0
      %v1562 = vsel %vm216, %v1513, 0
      %v1565 = vsel %vm501, %v1515, 0
      %1567 = vmatprep.subr.bf16.mxu0 0
      %1568 = vmatpush1.bf16.msra.mxu0 %v1565
      %1569 = vmatprep.subr.bf16.mxu0 0
      %1570 = vmatpush1.bf16.msra.mxu0 0
      %1571 = vmatprep.subr.bf16.mxu0 0
      %1572 = vmatpush1.bf16.msra.mxu0 0
      %1573 = vmatprep.subr.bf16.mxu0 0
      %1574 = vmatpush1.bf16.msra.mxu0 0
      %1575 = vmatprep.subr.bf16.mxu0 0
      %1576 = vmatpush1.bf16.msra.mxu0 0
      %1577 = vmatprep.subr.bf16.mxu0 0
      %1578 = vmatpush1.bf16.msra.mxu0 0
      %1579 = vmatprep.subr.bf16.mxu0 0
      %1580 = vmatpush1.bf16.msra.mxu0 0
      %1581 = vmatprep.subr.bf16.mxu0 0
      %1582 = vmatpush1.bf16.msra.mxu0 0
      %1583 = vmatprep.subr.bf16.mxu0 0
      %1584 = vmatpush1.bf16.msra.mxu0 0
      %1585 = vmatprep.subr.bf16.mxu0 0
      %1586 = vmatpush1.bf16.msra.mxu0 0
      %1587 = vmatprep.subr.bf16.mxu0 0
      %1588 = vmatpush1.bf16.msra.mxu0 0
      %1589 = vmatprep.subr.bf16.mxu0 0
      %1590 = vmatpush1.bf16.msra.mxu0 0
      %1591 = vmatprep.subr.bf16.mxu0 0
      %1592 = vmatpush1.bf16.msra.mxu0 0
      %1593 = vmatprep.subr.bf16.mxu0 0
      %1594 = vmatpush1.bf16.msra.mxu0 0
      %1595 = vmatprep.subr.bf16.mxu0 0
      %1596 = vmatpush1.bf16.msra.mxu0 0
      %1597 = vmatprep.subr.bf16.mxu0 0
      %1598 = vmatpush1.bf16.msra.mxu0 0
      %1599 = vmatprep.mubr.bf16.mxu0 0
      %1600 = vmatmul.mubr.bf16.gmra.mrb[0].mxu0 %v1517
      %v1601 = vpop.f32.mrb[0].mxu0
      %v1602 = vadd.f32 0.0, %v1601
      %v1603 = vpop.f32.mrb[0].mxu0
      %v1604 = vpop.f32.mrb[0].mxu0
      %v1605 = vadd.f32 0.0, %v1604
      %v1606 = vpop.f32.mrb[0].mxu0
      %1607 = vmatprep.mubr.bf16.mxu0 0
      %1608 = vmatmul.mubr.bf16.gmra.mrb[0].mxu0 %v1520
      %v1609 = vpop.f32.mrb[0].mxu0
      %v1610 = vadd.f32 0.0, %v1609
      %v1611 = vpop.f32.mrb[0].mxu0
      %v1612 = vpop.f32.mrb[0].mxu0
      %v1613 = vadd.f32 0.0, %v1612
      %v1614 = vpop.f32.mrb[0].mxu0
      %1615 = vmatprep.mubr.bf16.mxu0 0
      %1616 = vmatmul.mubr.bf16.gmra.mrb[0].mxu0 %v1523
      %v1617 = vpop.f32.mrb[0].mxu0
      %v1618 = vadd.f32 0.0, %v1617
      %v1619 = vpop.f32.mrb[0].mxu0
      %v1620 = vpop.f32.mrb[0].mxu0
      %v1621 = vadd.f32 0.0, %v1620
      %v1622 = vpop.f32.mrb[0].mxu0
      %1623 = vmatprep.mubr.bf16.mxu0 0
      %1624 = vmatmul.mubr.bf16.gmra.mrb[0].mxu0 %v1526
      %v1625 = vpop.f32.mrb[0].mxu0
      %v1626 = vadd.f32 0.0, %v1625
      %v1627 = vpop.f32.mrb[0].mxu0
      %v1628 = vpop.f32.mrb[0].mxu0
      %v1629 = vadd.f32 0.0, %v1628
      %v1630 = vpop.f32.mrb[0].mxu0
      %1631 = vmatprep.mubr.bf16.mxu0 0
      %1632 = vmatmul.mubr.bf16.gmra.mrb[0].mxu0 %v1529
      %v1633 = vpop.f32.mrb[0].mxu0
      %v1634 = vadd.f32 0.0, %v1633
      %v1635 = vpop.f32.mrb[0].mxu0
      %v1636 = vpop.f32.mrb[0].mxu0
      %v1637 = vadd.f32 0.0, %v1636
      %v1638 = vpop.f32.mrb[0].mxu0
      %1639 = vmatprep.mubr.bf16.mxu0 0
      %1640 = vmatmul.mubr.bf16.gmra.mrb[0].mxu0 %v1532
      %v1641 = vpop.f32.mrb[0].mxu0
      %v1642 = vadd.f32 0.0, %v1641
      %v1643 = vpop.f32.mrb[0].mxu0
      %v1644 = vpop.f32.mrb[0].mxu0
      %v1645 = vadd.f32 0.0, %v1644
      %v1646 = vpop.f32.mrb[0].mxu0
      %1647 = vmatprep.mubr.bf16.mxu0 0
      %1648 = vmatmul.mubr.bf16.gmra.mrb[0].mxu0 %v1535
      %v1649 = vpop.f32.mrb[0].mxu0
      %v1650 = vadd.f32 0.0, %v1649
      %v1651 = vpop.f32.mrb[0].mxu0
      %v1652 = vpop.f32.mrb[0].mxu0
      %v1653 = vadd.f32 0.0, %v1652
      %v1654 = vpop.f32.mrb[0].mxu0
      %1655 = vmatprep.mubr.bf16.mxu0 0
      %1656 = vmatmul.mubr.bf16.gmra.mrb[0].mxu0 %v1538
      %v1657 = vpop.f32.mrb[0].mxu0
      %v1658 = vadd.f32 0.0, %v1657
      %v1659 = vpop.f32.mrb[0].mxu0
      %v1660 = vpop.f32.mrb[0].mxu0
      %v1661 = vadd.f32 0.0, %v1660
      %v1662 = vpop.f32.mrb[0].mxu0
      %1663 = vmatprep.mubr.bf16.mxu0 0
      %1664 = vmatmul.mubr.bf16.gmra.mrb[0].mxu0 %v1541
      %v1665 = vpop.f32.mrb[0].mxu0
      %v1666 = vadd.f32 0.0, %v1665
      %v1667 = vpop.f32.mrb[0].mxu0
      %v1668 = vpop.f32.mrb[0].mxu0
      %v1669 = vadd.f32 0.0, %v1668
      %v1670 = vpop.f32.mrb[0].mxu0
      %1671 = vmatprep.mubr.bf16.mxu0 0
      %1672 = vmatmul.mubr.bf16.gmra.mrb[0].mxu0 %v1544
      %v1673 = vpop.f32.mrb[0].mxu0
      %v1674 = vadd.f32 0.0, %v1673
      %v1675 = vpop.f32.mrb[0].mxu0
      %v1676 = vpop.f32.mrb[0].mxu0
      %v1677 = vadd.f32 0.0, %v1676
      %v1678 = vpop.f32.mrb[0].mxu0
      %1679 = vmatprep.mubr.bf16.mxu0 0
      %1680 = vmatmul.mubr.bf16.gmra.mrb[0].mxu0 %v1547
      %v1681 = vpop.f32.mrb[0].mxu0
      %v1682 = vadd.f32 0.0, %v1681
      %v1683 = vpop.f32.mrb[0].mxu0
      %v1684 = vpop.f32.mrb[0].mxu0
      %v1685 = vadd.f32 0.0, %v1684
      %v1686 = vpop.f32.mrb[0].mxu0
      %1687 = vmatprep.mubr.bf16.mxu0 0
      %1688 = vmatmul.mubr.bf16.gmra.mrb[0].mxu0 %v1550
      %v1689 = vpop.f32.mrb[0].mxu0
      %v1690 = vadd.f32 0.0, %v1689
      %v1691 = vpop.f32.mrb[0].mxu0
      %v1692 = vpop.f32.mrb[0].mxu0
      %v1693 = vadd.f32 0.0, %v1692
      %v1694 = vpop.f32.mrb[0].mxu0
      %1695 = vmatprep.mubr.bf16.mxu0 0
      %1696 = vmatmul.mubr.bf16.gmra.mrb[0].mxu0 %v1553
      %v1697 = vpop.f32.mrb[0].mxu0
      %v1698 = vadd.f32 0.0, %v1697
      %v1699 = vpop.f32.mrb[0].mxu0
      %v1700 = vpop.f32.mrb[0].mxu0
      %v1701 = vadd.f32 0.0, %v1700
      %v1702 = vpop.f32.mrb[0].mxu0
      %1703 = vmatprep.mubr.bf16.mxu0 0
      %1704 = vmatmul.mubr.bf16.gmra.mrb[0].mxu0 %v1556
      %v1705 = vpop.f32.mrb[0].mxu0
      %v1706 = vadd.f32 0.0, %v1705
      %v1707 = vpop.f32.mrb[0].mxu0
      %v1708 = vpop.f32.mrb[0].mxu0
      %v1709 = vadd.f32 0.0, %v1708
      %v1710 = vpop.f32.mrb[0].mxu0
      %1711 = vmatprep.mubr.bf16.mxu0 0
      %1712 = vmatmul.mubr.bf16.gmra.mrb[0].mxu0 %v1559
      %v1713 = vpop.f32.mrb[0].mxu0
      %v1714 = vadd.f32 0.0, %v1713
      %v1715 = vpop.f32.mrb[0].mxu0
      %v1716 = vpop.f32.mrb[0].mxu0
      %v1717 = vadd.f32 0.0, %v1716
      %v1718 = vpop.f32.mrb[0].mxu0
      %1719 = vmatprep.mubr.bf16.mxu0 0
      %1720 = vmatmul.mubr.bf16.gmra.mrb[0].mxu0 %v1562
      %v1721 = vpop.f32.mrb[0].mxu0
      %v1722 = vadd.f32 0.0, %v1721
      %v1723 = vpop.f32.mrb[0].mxu0
      %v1724 = vpop.f32.mrb[0].mxu0
      %v1725 = vadd.f32 0.0, %v1724
      %v1726 = vpop.f32.mrb[0].mxu0
      %1727 = vdwg.mxu0
      %v1728 = vadd.f32 %v1434, %v1602
      %v1729 = vadd.f32 %v1435, %v1605
      %v1730 = vadd.f32 %v1436, %v1610
      %v1731 = vadd.f32 %v1437, %v1613
      %v1732 = vadd.f32 %v1438, %v1618
      %v1733 = vadd.f32 %v1439, %v1621
      %v1734 = vadd.f32 %v1440, %v1626
      %v1735 = vadd.f32 %v1441, %v1629
      %v1736 = vadd.f32 %v1442, %v1634
      %v1737 = vadd.f32 %v1443, %v1637
      %v1738 = vadd.f32 %v1444, %v1642
      %v1739 = vadd.f32 %v1445, %v1645
      %v1740 = vadd.f32 %v1446, %v1650
      %v1741 = vadd.f32 %v1447, %v1653
      %v1742 = vadd.f32 %v1448, %v1658
      %v1743 = vadd.f32 %v1449, %v1661
      %v1744 = vadd.f32 %v1450, %v1666
      %v1745 = vadd.f32 %v1451, %v1669
      %v1746 = vadd.f32 %v1452, %v1674
      %v1747 = vadd.f32 %v1453, %v1677
      %v1748 = vadd.f32 %v1454, %v1682
      %v1749 = vadd.f32 %v1455, %v1685
      %v1750 = vadd.f32 %v1456, %v1690
      %v1751 = vadd.f32 %v1457, %v1693
      %v1752 = vadd.f32 %v1458, %v1698
      %v1753 = vadd.f32 %v1459, %v1701
      %v1754 = vadd.f32 %v1460, %v1706
      %v1755 = vadd.f32 %v1461, %v1709
      %v1756 = vadd.f32 %v1462, %v1714
      %v1757 = vadd.f32 %v1463, %v1717
      %v1758 = vadd.f32 %v1464, %v1722
      %v1759 = vadd.f32 %v1465, %v1725
      %v1760 = vld [vmem:[%s321 + $0x9] sm:$0xff]
      %v1761 = vld [vmem:[%s321 + $0x11] sm:$0xff]
      %v1762 = vld [vmem:[%s321 + $0x29] sm:$0xff]
      %v1763 = vld [vmem:[%s321 + $0x31] sm:$0xff]
      %v1764 = vld [vmem:[%s321 + $0x49] sm:$0xff]
      %v1765 = vld [vmem:[%s321 + $0x51] sm:$0xff]
      %v1766 = vld [vmem:[%s321 + $0x69] sm:$0xff]
      %v1767 = vld [vmem:[%s321 + $0x71] sm:$0xff]
      %v1768 = vld [vmem:[%s321 + $0x89] sm:$0xff]
      %v1769 = vld [vmem:[%s321 + $0x91] sm:$0xff]
      %v1770 = vld [vmem:[%s321 + $0xa9] sm:$0xff]
      %v1771 = vld [vmem:[%s321 + $0xb1] sm:$0xff]
      %v1772 = vld [vmem:[%s321 + $0xc9] sm:$0xff]
      %v1773 = vld [vmem:[%s321 + $0xd1] sm:$0xff]
      %v1774 = vld [vmem:[%s321 + $0xe9] sm:$0xff]
      %v1775 = vld [vmem:[%s321 + $0xf1] sm:$0xff]
      %v1776 = vld [vmem:[%s321 + $0x109] sm:$0xff]
      %v1777 = vld [vmem:[%s321 + $0x111] sm:$0xff]
      %v1778 = vld [vmem:[%s321 + $0x129] sm:$0xff]
      %v1779 = vld [vmem:[%s321 + $0x131] sm:$0xff]
      %v1780 = vld [vmem:[%s321 + $0x149] sm:$0xff]
      %v1781 = vld [vmem:[%s321 + $0x151] sm:$0xff]
      %v1782 = vld [vmem:[%s321 + $0x169] sm:$0xff]
      %v1783 = vld [vmem:[%s321 + $0x171] sm:$0xff]
      %v1784 = vld [vmem:[%s321 + $0x189] sm:$0xff]
      %v1785 = vld [vmem:[%s321 + $0x191] sm:$0xff]
      %v1786 = vld [vmem:[%s321 + $0x1a9] sm:$0xff]
      %v1787 = vld [vmem:[%s321 + $0x1b1] sm:$0xff]
      %v1788 = vld [vmem:[%s321 + $0x1c9] sm:$0xff]
      %v1789 = vld [vmem:[%s321 + $0x1d1] sm:$0xff]
      %v1790 = vld [vmem:[%s321 + $0x1e9] sm:$0xff]
      %v1791 = vld [vmem:[%s321 + $0x1f1] sm:$0xff]
      %v1792 = vpack.c.bf16 %v1761, %v1760
      %v1793 = vpack.c.bf16 %v1763, %v1762
      %v1794 = vpack.c.bf16 %v1765, %v1764
      %v1795 = vpack.c.bf16 %v1767, %v1766
      %v1796 = vpack.c.bf16 %v1769, %v1768
      %v1797 = vpack.c.bf16 %v1771, %v1770
      %v1798 = vpack.c.bf16 %v1773, %v1772
      %v1799 = vpack.c.bf16 %v1775, %v1774
      %v1800 = vpack.c.bf16 %v1777, %v1776
      %v1801 = vpack.c.bf16 %v1779, %v1778
      %v1802 = vpack.c.bf16 %v1781, %v1780
      %v1803 = vpack.c.bf16 %v1783, %v1782
      %v1804 = vpack.c.bf16 %v1785, %v1784
      %v1805 = vpack.c.bf16 %v1787, %v1786
      %v1806 = vpack.c.bf16 %v1789, %v1788
      %v1807 = vpack.c.bf16 %v1791, %v1790
      %s1808 = scalar_lea.vmem %s1, 10
      %v1809 = vld [vmem:[%s1808] sm:$0x3]
      %v1811 = vsel %vm216, %v1792, 0
      %v1814 = vsel %vm216, %v1793, 0
      %v1817 = vsel %vm216, %v1794, 0
      %v1820 = vsel %vm216, %v1795, 0
      %v1823 = vsel %vm216, %v1796, 0
      %v1826 = vsel %vm216, %v1797, 0
      %v1829 = vsel %vm216, %v1798, 0
      %v1832 = vsel %vm216, %v1799, 0
      %v1835 = vsel %vm216, %v1800, 0
      %v1838 = vsel %vm216, %v1801, 0
      %v1841 = vsel %vm216, %v1802, 0
      %v1844 = vsel %vm216, %v1803, 0
      %v1847 = vsel %vm216, %v1804, 0
      %v1850 = vsel %vm216, %v1805, 0
      %v1853 = vsel %vm216, %v1806, 0
      %v1856 = vsel %vm216, %v1807, 0
      %v1859 = vsel %vm501, %v1809, 0
      %1861 = vmatprep.subr.bf16.mxu0 0
      %1862 = vmatpush1.bf16.msra.mxu0 %v1859
      %1863 = vmatprep.subr.bf16.mxu0 0
      %1864 = vmatpush1.bf16.msra.mxu0 0
      %1865 = vmatprep.subr.bf16.mxu0 0
      %1866 = vmatpush1.bf16.msra.mxu0 0
      %1867 = vmatprep.subr.bf16.mxu0 0
      %1868 = vmatpush1.bf16.msra.mxu0 0
      %1869 = vmatprep.subr.bf16.mxu0 0
      %1870 = vmatpush1.bf16.msra.mxu0 0
      %1871 = vmatprep.subr.bf16.mxu0 0
      %1872 = vmatpush1.bf16.msra.mxu0 0
      %1873 = vmatprep.subr.bf16.mxu0 0
      %1874 = vmatpush1.bf16.msra.mxu0 0
      %1875 = vmatprep.subr.bf16.mxu0 0
      %1876 = vmatpush1.bf16.msra.mxu0 0
      %1877 = vmatprep.subr.bf16.mxu0 0
      %1878 = vmatpush1.bf16.msra.mxu0 0
      %1879 = vmatprep.subr.bf16.mxu0 0
      %1880 = vmatpush1.bf16.msra.mxu0 0
      %1881 = vmatprep.subr.bf16.mxu0 0
      %1882 = vmatpush1.bf16.msra.mxu0 0
      %1883 = vmatprep.subr.bf16.mxu0 0
      %1884 = vmatpush1.bf16.msra.mxu0 0
      %1885 = vmatprep.subr.bf16.mxu0 0
      %1886 = vmatpush1.bf16.msra.mxu0 0
      %1887 = vmatprep.subr.bf16.mxu0 0
      %1888 = vmatpush1.bf16.msra.mxu0 0
      %1889 = vmatprep.subr.bf16.mxu0 0
      %1890 = vmatpush1.bf16.msra.mxu0 0
      %1891 = vmatprep.subr.bf16.mxu0 0
      %1892 = vmatpush1.bf16.msra.mxu0 0
      %1893 = vmatprep.mubr.bf16.mxu0 0
      %1894 = vmatmul.mubr.bf16.gmra.mrb[0].mxu0 %v1811
      %v1895 = vpop.f32.mrb[0].mxu0
      %v1896 = vadd.f32 0.0, %v1895
      %v1897 = vpop.f32.mrb[0].mxu0
      %v1898 = vpop.f32.mrb[0].mxu0
      %v1899 = vadd.f32 0.0, %v1898
      %v1900 = vpop.f32.mrb[0].mxu0
      %1901 = vmatprep.mubr.bf16.mxu0 0
      %1902 = vmatmul.mubr.bf16.gmra.mrb[0].mxu0 %v1814
      %v1903 = vpop.f32.mrb[0].mxu0
      %v1904 = vadd.f32 0.0, %v1903
      %v1905 = vpop.f32.mrb[0].mxu0
      %v1906 = vpop.f32.mrb[0].mxu0
      %v1907 = vadd.f32 0.0, %v1906
      %v1908 = vpop.f32.mrb[0].mxu0
      %1909 = vmatprep.mubr.bf16.mxu0 0
      %1910 = vmatmul.mubr.bf16.gmra.mrb[0].mxu0 %v1817
      %v1911 = vpop.f32.mrb[0].mxu0
      %v1912 = vadd.f32 0.0, %v1911
      %v1913 = vpop.f32.mrb[0].mxu0
      %v1914 = vpop.f32.mrb[0].mxu0
      %v1915 = vadd.f32 0.0, %v1914
      %v1916 = vpop.f32.mrb[0].mxu0
      %1917 = vmatprep.mubr.bf16.mxu0 0
      %1918 = vmatmul.mubr.bf16.gmra.mrb[0].mxu0 %v1820
      %v1919 = vpop.f32.mrb[0].mxu0
      %v1920 = vadd.f32 0.0, %v1919
      %v1921 = vpop.f32.mrb[0].mxu0
      %v1922 = vpop.f32.mrb[0].mxu0
      %v1923 = vadd.f32 0.0, %v1922
      %v1924 = vpop.f32.mrb[0].mxu0
      %1925 = vmatprep.mubr.bf16.mxu0 0
      %1926 = vmatmul.mubr.bf16.gmra.mrb[0].mxu0 %v1823
      %v1927 = vpop.f32.mrb[0].mxu0
      %v1928 = vadd.f32 0.0, %v1927
      %v1929 = vpop.f32.mrb[0].mxu0
      %v1930 = vpop.f32.mrb[0].mxu0
      %v1931 = vadd.f32 0.0, %v1930
      %v1932 = vpop.f32.mrb[0].mxu0
      %1933 = vmatprep.mubr.bf16.mxu0 0
      %1934 = vmatmul.mubr.bf16.gmra.mrb[0].mxu0 %v1826
      %v1935 = vpop.f32.mrb[0].mxu0
      %v1936 = vadd.f32 0.0, %v1935
      %v1937 = vpop.f32.mrb[0].mxu0
      %v1938 = vpop.f32.mrb[0].mxu0
      %v1939 = vadd.f32 0.0, %v1938
      %v1940 = vpop.f32.mrb[0].mxu0
      %1941 = vmatprep.mubr.bf16.mxu0 0
      %1942 = vmatmul.mubr.bf16.gmra.mrb[0].mxu0 %v1829
      %v1943 = vpop.f32.mrb[0].mxu0
      %v1944 = vadd.f32 0.0, %v1943
      %v1945 = vpop.f32.mrb[0].mxu0
      %v1946 = vpop.f32.mrb[0].mxu0
      %v1947 = vadd.f32 0.0, %v1946
      %v1948 = vpop.f32.mrb[0].mxu0
      %1949 = vmatprep.mubr.bf16.mxu0 0
      %1950 = vmatmul.mubr.bf16.gmra.mrb[0].mxu0 %v1832
      %v1951 = vpop.f32.mrb[0].mxu0
      %v1952 = vadd.f32 0.0, %v1951
      %v1953 = vpop.f32.mrb[0].mxu0
      %v1954 = vpop.f32.mrb[0].mxu0
      %v1955 = vadd.f32 0.0, %v1954
      %v1956 = vpop.f32.mrb[0].mxu0
      %1957 = vmatprep.mubr.bf16.mxu0 0
      %1958 = vmatmul.mubr.bf16.gmra.mrb[0].mxu0 %v1835
      %v1959 = vpop.f32.mrb[0].mxu0
      %v1960 = vadd.f32 0.0, %v1959
      %v1961 = vpop.f32.mrb[0].mxu0
      %v1962 = vpop.f32.mrb[0].mxu0
      %v1963 = vadd.f32 0.0, %v1962
      %v1964 = vpop.f32.mrb[0].mxu0
      %1965 = vmatprep.mubr.bf16.mxu0 0
      %1966 = vmatmul.mubr.bf16.gmra.mrb[0].mxu0 %v1838
      %v1967 = vpop.f32.mrb[0].mxu0
      %v1968 = vadd.f32 0.0, %v1967
      %v1969 = vpop.f32.mrb[0].mxu0
      %v1970 = vpop.f32.mrb[0].mxu0
      %v1971 = vadd.f32 0.0, %v1970
      %v1972 = vpop.f32.mrb[0].mxu0
      %1973 = vmatprep.mubr.bf16.mxu0 0
      %1974 = vmatmul.mubr.bf16.gmra.mrb[0].mxu0 %v1841
      %v1975 = vpop.f32.mrb[0].mxu0
      %v1976 = vadd.f32 0.0, %v1975
      %v1977 = vpop.f32.mrb[0].mxu0
      %v1978 = vpop.f32.mrb[0].mxu0
      %v1979 = vadd.f32 0.0, %v1978
      %v1980 = vpop.f32.mrb[0].mxu0
      %1981 = vmatprep.mubr.bf16.mxu0 0
      %1982 = vmatmul.mubr.bf16.gmra.mrb[0].mxu0 %v1844
      %v1983 = vpop.f32.mrb[0].mxu0
      %v1984 = vadd.f32 0.0, %v1983
      %v1985 = vpop.f32.mrb[0].mxu0
      %v1986 = vpop.f32.mrb[0].mxu0
      %v1987 = vadd.f32 0.0, %v1986
      %v1988 = vpop.f32.mrb[0].mxu0
      %1989 = vmatprep.mubr.bf16.mxu0 0
      %1990 = vmatmul.mubr.bf16.gmra.mrb[0].mxu0 %v1847
      %v1991 = vpop.f32.mrb[0].mxu0
      %v1992 = vadd.f32 0.0, %v1991
      %v1993 = vpop.f32.mrb[0].mxu0
      %v1994 = vpop.f32.mrb[0].mxu0
      %v1995 = vadd.f32 0.0, %v1994
      %v1996 = vpop.f32.mrb[0].mxu0
      %1997 = vmatprep.mubr.bf16.mxu0 0
      %1998 = vmatmul.mubr.bf16.gmra.mrb[0].mxu0 %v1850
      %v1999 = vpop.f32.mrb[0].mxu0
      %v2000 = vadd.f32 0.0, %v1999
      %v2001 = vpop.f32.mrb[0].mxu0
      %v2002 = vpop.f32.mrb[0].mxu0
      %v2003 = vadd.f32 0.0, %v2002
      %v2004 = vpop.f32.mrb[0].mxu0
      %2005 = vmatprep.mubr.bf16.mxu0 0
      %2006 = vmatmul.mubr.bf16.gmra.mrb[0].mxu0 %v1853
      %v2007 = vpop.f32.mrb[0].mxu0
      %v2008 = vadd.f32 0.0, %v2007
      %v2009 = vpop.f32.mrb[0].mxu0
      %v2010 = vpop.f32.mrb[0].mxu0
      %v2011 = vadd.f32 0.0, %v2010
      %v2012 = vpop.f32.mrb[0].mxu0
      %2013 = vmatprep.mubr.bf16.mxu0 0
      %2014 = vmatmul.mubr.bf16.gmra.mrb[0].mxu0 %v1856
      %v2015 = vpop.f32.mrb[0].mxu0
      %v2016 = vadd.f32 0.0, %v2015
      %v2017 = vpop.f32.mrb[0].mxu0
      %v2018 = vpop.f32.mrb[0].mxu0
      %v2019 = vadd.f32 0.0, %v2018
      %v2020 = vpop.f32.mrb[0].mxu0
      %2021 = vdwg.mxu0
      %v2022 = vadd.f32 %v1728, %v1896
      %v2023 = vadd.f32 %v1729, %v1899
      %v2024 = vadd.f32 %v1730, %v1904
      %v2025 = vadd.f32 %v1731, %v1907
      %v2026 = vadd.f32 %v1732, %v1912
      %v2027 = vadd.f32 %v1733, %v1915
      %v2028 = vadd.f32 %v1734, %v1920
      %v2029 = vadd.f32 %v1735, %v1923
      %v2030 = vadd.f32 %v1736, %v1928
      %v2031 = vadd.f32 %v1737, %v1931
      %v2032 = vadd.f32 %v1738, %v1936
      %v2033 = vadd.f32 %v1739, %v1939
      %v2034 = vadd.f32 %v1740, %v1944
      %v2035 = vadd.f32 %v1741, %v1947
      %v2036 = vadd.f32 %v1742, %v1952
      %v2037 = vadd.f32 %v1743, %v1955
      %v2038 = vadd.f32 %v1744, %v1960
      %v2039 = vadd.f32 %v1745, %v1963
      %v2040 = vadd.f32 %v1746, %v1968
      %v2041 = vadd.f32 %v1747, %v1971
      %v2042 = vadd.f32 %v1748, %v1976
      %v2043 = vadd.f32 %v1749, %v1979
      %v2044 = vadd.f32 %v1750, %v1984
      %v2045 = vadd.f32 %v1751, %v1987
      %v2046 = vadd.f32 %v1752, %v1992
      %v2047 = vadd.f32 %v1753, %v1995
      %v2048 = vadd.f32 %v1754, %v2000
      %v2049 = vadd.f32 %v1755, %v2003
      %v2050 = vadd.f32 %v1756, %v2008
      %v2051 = vadd.f32 %v1757, %v2011
      %v2052 = vadd.f32 %v1758, %v2016
      %v2053 = vadd.f32 %v1759, %v2019
      %s2054 = scalar_lea.vmem [#allocation2], 64
      %v2055 = vld [vmem:[%s2054 + $0x7] sm:$0xff]
      %v2056 = vld [vmem:[%s2054 + $0xf] sm:$0xff]
      %v2057 = vld [vmem:[%s2054 + $0x27] sm:$0xff]
      %v2058 = vld [vmem:[%s2054 + $0x2f] sm:$0xff]
      %v2059 = vld [vmem:[%s2054 + $0x47] sm:$0xff]
      %v2060 = vld [vmem:[%s2054 + $0x4f] sm:$0xff]
      %v2061 = vld [vmem:[%s2054 + $0x67] sm:$0xff]
      %v2062 = vld [vmem:[%s2054 + $0x6f] sm:$0xff]
      %v2063 = vld [vmem:[%s2054 + $0x87] sm:$0xff]
      %v2064 = vld [vmem:[%s2054 + $0x8f] sm:$0xff]
      %v2065 = vld [vmem:[%s2054 + $0xa7] sm:$0xff]
      %v2066 = vld [vmem:[%s2054 + $0xaf] sm:$0xff]
      %v2067 = vld [vmem:[%s2054 + $0xc7] sm:$0xff]
      %v2068 = vld [vmem:[%s2054 + $0xcf] sm:$0xff]
      %v2069 = vld [vmem:[%s2054 + $0xe7] sm:$0xff]
      %v2070 = vld [vmem:[%s2054 + $0xef] sm:$0xff]
      %v2071 = vld [vmem:[%s2054 + $0x107] sm:$0xff]
      %v2072 = vld [vmem:[%s2054 + $0x10f] sm:$0xff]
      %v2073 = vld [vmem:[%s2054 + $0x127] sm:$0xff]
      %v2074 = vld [vmem:[%s2054 + $0x12f] sm:$0xff]
      %v2075 = vld [vmem:[%s2054 + $0x147] sm:$0xff]
      %v2076 = vld [vmem:[%s2054 + $0x14f] sm:$0xff]
      %v2077 = vld [vmem:[%s2054 + $0x167] sm:$0xff]
      %v2078 = vld [vmem:[%s2054 + $0x16f] sm:$0xff]
      %v2079 = vld [vmem:[%s2054 + $0x187] sm:$0xff]
      %v2080 = vld [vmem:[%s2054 + $0x18f] sm:$0xff]
      %v2081 = vld [vmem:[%s2054 + $0x1a7] sm:$0xff]
      %v2082 = vld [vmem:[%s2054 + $0x1af] sm:$0xff]
      %v2083 = vld [vmem:[%s2054 + $0x1c7] sm:$0xff]
      %v2084 = vld [vmem:[%s2054 + $0x1cf] sm:$0xff]
      %v2085 = vld [vmem:[%s2054 + $0x1e7] sm:$0xff]
      %v2086 = vld [vmem:[%s2054 + $0x1ef] sm:$0xff]
      %v2087 = vpack.c.bf16 %v2056, %v2055
      %v2088 = vpack.c.bf16 %v2058, %v2057
      %v2089 = vpack.c.bf16 %v2060, %v2059
      %v2090 = vpack.c.bf16 %v2062, %v2061
      %v2091 = vpack.c.bf16 %v2064, %v2063
      %v2092 = vpack.c.bf16 %v2066, %v2065
      %v2093 = vpack.c.bf16 %v2068, %v2067
      %v2094 = vpack.c.bf16 %v2070, %v2069
      %v2095 = vpack.c.bf16 %v2072, %v2071
      %v2096 = vpack.c.bf16 %v2074, %v2073
      %v2097 = vpack.c.bf16 %v2076, %v2075
      %v2098 = vpack.c.bf16 %v2078, %v2077
      %v2099 = vpack.c.bf16 %v2080, %v2079
      %v2100 = vpack.c.bf16 %v2082, %v2081
      %v2101 = vpack.c.bf16 %v2084, %v2083
      %v2102 = vpack.c.bf16 %v2086, %v2085
      %s2103 = scalar_lea.vmem %s1, 12
      %v2104 = vld [vmem:[%s2103] sm:$0x3]
      %v2106 = vsel %vm216, %v2087, 0
      %v2109 = vsel %vm216, %v2088, 0
      %v2112 = vsel %vm216, %v2089, 0
      %v2115 = vsel %vm216, %v2090, 0
      %v2118 = vsel %vm216, %v2091, 0
      %v2121 = vsel %vm216, %v2092, 0
      %v2124 = vsel %vm216, %v2093, 0
      %v2127 = vsel %vm216, %v2094, 0
      %v2130 = vsel %vm216, %v2095, 0
      %v2133 = vsel %vm216, %v2096, 0
      %v2136 = vsel %vm216, %v2097, 0
      %v2139 = vsel %vm216, %v2098, 0
      %v2142 = vsel %vm216, %v2099, 0
      %v2145 = vsel %vm216, %v2100, 0
      %v2148 = vsel %vm216, %v2101, 0
      %v2151 = vsel %vm216, %v2102, 0
      %v2154 = vsel %vm501, %v2104, 0
      %2156 = vmatprep.subr.bf16.mxu0 0
      %2157 = vmatpush1.bf16.msra.mxu0 %v2154
      %2158 = vmatprep.subr.bf16.mxu0 0
      %2159 = vmatpush1.bf16.msra.mxu0 0
      %2160 = vmatprep.subr.bf16.mxu0 0
      %2161 = vmatpush1.bf16.msra.mxu0 0
      %2162 = vmatprep.subr.bf16.mxu0 0
      %2163 = vmatpush1.bf16.msra.mxu0 0
      %2164 = vmatprep.subr.bf16.mxu0 0
      %2165 = vmatpush1.bf16.msra.mxu0 0
      %2166 = vmatprep.subr.bf16.mxu0 0
      %2167 = vmatpush1.bf16.msra.mxu0 0
      %2168 = vmatprep.subr.bf16.mxu0 0
      %2169 = vmatpush1.bf16.msra.mxu0 0
      %2170 = vmatprep.subr.bf16.mxu0 0
      %2171 = vmatpush1.bf16.msra.mxu0 0
      %2172 = vmatprep.subr.bf16.mxu0 0
      %2173 = vmatpush1.bf16.msra.mxu0 0
      %2174 = vmatprep.subr.bf16.mxu0 0
      %2175 = vmatpush1.bf16.msra.mxu0 0
      %2176 = vmatprep.subr.bf16.mxu0 0
      %2177 = vmatpush1.bf16.msra.mxu0 0
      %2178 = vmatprep.subr.bf16.mxu0 0
      %2179 = vmatpush1.bf16.msra.mxu0 0
      %2180 = vmatprep.subr.bf16.mxu0 0
      %2181 = vmatpush1.bf16.msra.mxu0 0
      %2182 = vmatprep.subr.bf16.mxu0 0
      %2183 = vmatpush1.bf16.msra.mxu0 0
      %2184 = vmatprep.subr.bf16.mxu0 0
      %2185 = vmatpush1.bf16.msra.mxu0 0
      %2186 = vmatprep.subr.bf16.mxu0 0
      %2187 = vmatpush1.bf16.msra.mxu0 0
      %2188 = vmatprep.mubr.bf16.mxu0 0
      %2189 = vmatmul.mubr.bf16.gmra.mrb[0].mxu0 %v2106
      %v2190 = vpop.f32.mrb[0].mxu0
      %v2191 = vadd.f32 0.0, %v2190
      %v2192 = vpop.f32.mrb[0].mxu0
      %v2193 = vpop.f32.mrb[0].mxu0
      %v2194 = vadd.f32 0.0, %v2193
      %v2195 = vpop.f32.mrb[0].mxu0
      %2196 = vmatprep.mubr.bf16.mxu0 0
      %2197 = vmatmul.mubr.bf16.gmra.mrb[0].mxu0 %v2109
      %v2198 = vpop.f32.mrb[0].mxu0
      %v2199 = vadd.f32 0.0, %v2198
      %v2200 = vpop.f32.mrb[0].mxu0
      %v2201 = vpop.f32.mrb[0].mxu0
      %v2202 = vadd.f32 0.0, %v2201
      %v2203 = vpop.f32.mrb[0].mxu0
      %2204 = vmatprep.mubr.bf16.mxu0 0
      %2205 = vmatmul.mubr.bf16.gmra.mrb[0].mxu0 %v2112
      %v2206 = vpop.f32.mrb[0].mxu0
      %v2207 = vadd.f32 0.0, %v2206
      %v2208 = vpop.f32.mrb[0].mxu0
      %v2209 = vpop.f32.mrb[0].mxu0
      %v2210 = vadd.f32 0.0, %v2209
      %v2211 = vpop.f32.mrb[0].mxu0
      %2212 = vmatprep.mubr.bf16.mxu0 0
      %2213 = vmatmul.mubr.bf16.gmra.mrb[0].mxu0 %v2115
      %v2214 = vpop.f32.mrb[0].mxu0
      %v2215 = vadd.f32 0.0, %v2214
      %v2216 = vpop.f32.mrb[0].mxu0
      %v2217 = vpop.f32.mrb[0].mxu0
      %v2218 = vadd.f32 0.0, %v2217
      %v2219 = vpop.f32.mrb[0].mxu0
      %2220 = vmatprep.mubr.bf16.mxu0 0
      %2221 = vmatmul.mubr.bf16.gmra.mrb[0].mxu0 %v2118
      %v2222 = vpop.f32.mrb[0].mxu0
      %v2223 = vadd.f32 0.0, %v2222
      %v2224 = vpop.f32.mrb[0].mxu0
      %v2225 = vpop.f32.mrb[0].mxu0
      %v2226 = vadd.f32 0.0, %v2225
      %v2227 = vpop.f32.mrb[0].mxu0
      %2228 = vmatprep.mubr.bf16.mxu0 0
      %2229 = vmatmul.mubr.bf16.gmra.mrb[0].mxu0 %v2121
      %v2230 = vpop.f32.mrb[0].mxu0
      %v2231 = vadd.f32 0.0, %v2230
      %v2232 = vpop.f32.mrb[0].mxu0
      %v2233 = vpop.f32.mrb[0].mxu0
      %v2234 = vadd.f32 0.0, %v2233
      %v2235 = vpop.f32.mrb[0].mxu0
      %2236 = vmatprep.mubr.bf16.mxu0 0
      %2237 = vmatmul.mubr.bf16.gmra.mrb[0].mxu0 %v2124
      %v2238 = vpop.f32.mrb[0].mxu0
      %v2239 = vadd.f32 0.0, %v2238
      %v2240 = vpop.f32.mrb[0].mxu0
      %v2241 = vpop.f32.mrb[0].mxu0
      %v2242 = vadd.f32 0.0, %v2241
      %v2243 = vpop.f32.mrb[0].mxu0
      %2244 = vmatprep.mubr.bf16.mxu0 0
      %2245 = vmatmul.mubr.bf16.gmra.mrb[0].mxu0 %v2127
      %v2246 = vpop.f32.mrb[0].mxu0
      %v2247 = vadd.f32 0.0, %v2246
      %v2248 = vpop.f32.mrb[0].mxu0
      %v2249 = vpop.f32.mrb[0].mxu0
      %v2250 = vadd.f32 0.0, %v2249
      %v2251 = vpop.f32.mrb[0].mxu0
      %2252 = vmatprep.mubr.bf16.mxu0 0
      %2253 = vmatmul.mubr.bf16.gmra.mrb[0].mxu0 %v2130
      %v2254 = vpop.f32.mrb[0].mxu0
      %v2255 = vadd.f32 0.0, %v2254
      %v2256 = vpop.f32.mrb[0].mxu0
      %v2257 = vpop.f32.mrb[0].mxu0
      %v2258 = vadd.f32 0.0, %v2257
      %v2259 = vpop.f32.mrb[0].mxu0
      %2260 = vmatprep.mubr.bf16.mxu0 0
      %2261 = vmatmul.mubr.bf16.gmra.mrb[0].mxu0 %v2133
      %v2262 = vpop.f32.mrb[0].mxu0
      %v2263 = vadd.f32 0.0, %v2262
      %v2264 = vpop.f32.mrb[0].mxu0
      %v2265 = vpop.f32.mrb[0].mxu0
      %v2266 = vadd.f32 0.0, %v2265
      %v2267 = vpop.f32.mrb[0].mxu0
      %2268 = vmatprep.mubr.bf16.mxu0 0
      %2269 = vmatmul.mubr.bf16.gmra.mrb[0].mxu0 %v2136
      %v2270 = vpop.f32.mrb[0].mxu0
      %v2271 = vadd.f32 0.0, %v2270
      %v2272 = vpop.f32.mrb[0].mxu0
      %v2273 = vpop.f32.mrb[0].mxu0
      %v2274 = vadd.f32 0.0, %v2273
      %v2275 = vpop.f32.mrb[0].mxu0
      %2276 = vmatprep.mubr.bf16.mxu0 0
      %2277 = vmatmul.mubr.bf16.gmra.mrb[0].mxu0 %v2139
      %v2278 = vpop.f32.mrb[0].mxu0
      %v2279 = vadd.f32 0.0, %v2278
      %v2280 = vpop.f32.mrb[0].mxu0
      %v2281 = vpop.f32.mrb[0].mxu0
      %v2282 = vadd.f32 0.0, %v2281
      %v2283 = vpop.f32.mrb[0].mxu0
      %2284 = vmatprep.mubr.bf16.mxu0 0
      %2285 = vmatmul.mubr.bf16.gmra.mrb[0].mxu0 %v2142
      %v2286 = vpop.f32.mrb[0].mxu0
      %v2287 = vadd.f32 0.0, %v2286
      %v2288 = vpop.f32.mrb[0].mxu0
      %v2289 = vpop.f32.mrb[0].mxu0
      %v2290 = vadd.f32 0.0, %v2289
      %v2291 = vpop.f32.mrb[0].mxu0
      %2292 = vmatprep.mubr.bf16.mxu0 0
      %2293 = vmatmul.mubr.bf16.gmra.mrb[0].mxu0 %v2145
      %v2294 = vpop.f32.mrb[0].mxu0
      %v2295 = vadd.f32 0.0, %v2294
      %v2296 = vpop.f32.mrb[0].mxu0
      %v2297 = vpop.f32.mrb[0].mxu0
      %v2298 = vadd.f32 0.0, %v2297
      %v2299 = vpop.f32.mrb[0].mxu0
      %2300 = vmatprep.mubr.bf16.mxu0 0
      %2301 = vmatmul.mubr.bf16.gmra.mrb[0].mxu0 %v2148
      %v2302 = vpop.f32.mrb[0].mxu0
      %v2303 = vadd.f32 0.0, %v2302
      %v2304 = vpop.f32.mrb[0].mxu0
      %v2305 = vpop.f32.mrb[0].mxu0
      %v2306 = vadd.f32 0.0, %v2305
      %v2307 = vpop.f32.mrb[0].mxu0
      %2308 = vmatprep.mubr.bf16.mxu0 0
      %2309 = vmatmul.mubr.bf16.gmra.mrb[0].mxu0 %v2151
      %v2310 = vpop.f32.mrb[0].mxu0
      %v2311 = vadd.f32 0.0, %v2310
      %v2312 = vpop.f32.mrb[0].mxu0
      %v2313 = vpop.f32.mrb[0].mxu0
      %v2314 = vadd.f32 0.0, %v2313
      %v2315 = vpop.f32.mrb[0].mxu0
      %2316 = vdwg.mxu0
      %v2317 = vadd.f32 %v2022, %v2191
      %v2318 = vadd.f32 %v2023, %v2194
      %v2319 = vadd.f32 %v2024, %v2199
      %v2320 = vadd.f32 %v2025, %v2202
      %v2321 = vadd.f32 %v2026, %v2207
      %v2322 = vadd.f32 %v2027, %v2210
      %v2323 = vadd.f32 %v2028, %v2215
      %v2324 = vadd.f32 %v2029, %v2218
      %v2325 = vadd.f32 %v2030, %v2223
      %v2326 = vadd.f32 %v2031, %v2226
      %v2327 = vadd.f32 %v2032, %v2231
      %v2328 = vadd.f32 %v2033, %v2234
      %v2329 = vadd.f32 %v2034, %v2239
      %v2330 = vadd.f32 %v2035, %v2242
      %v2331 = vadd.f32 %v2036, %v2247
      %v2332 = vadd.f32 %v2037, %v2250
      %v2333 = vadd.f32 %v2038, %v2255
      %v2334 = vadd.f32 %v2039, %v2258
      %v2335 = vadd.f32 %v2040, %v2263
      %v2336 = vadd.f32 %v2041, %v2266
      %v2337 = vadd.f32 %v2042, %v2271
      %v2338 = vadd.f32 %v2043, %v2274
      %v2339 = vadd.f32 %v2044, %v2279
      %v2340 = vadd.f32 %v2045, %v2282
      %v2341 = vadd.f32 %v2046, %v2287
      %v2342 = vadd.f32 %v2047, %v2290
      %v2343 = vadd.f32 %v2048, %v2295
      %v2344 = vadd.f32 %v2049, %v2298
      %v2345 = vadd.f32 %v2050, %v2303
      %v2346 = vadd.f32 %v2051, %v2306
      %v2347 = vadd.f32 %v2052, %v2311
      %v2348 = vadd.f32 %v2053, %v2314
      %v2349 = vld [vmem:[%s2054 + $0x8] sm:$0xff]
      %v2350 = vld [vmem:[%s2054 + $0x10] sm:$0xff]
      %v2351 = vld [vmem:[%s2054 + $0x28] sm:$0xff]
      %v2352 = vld [vmem:[%s2054 + $0x30] sm:$0xff]
      %v2353 = vld [vmem:[%s2054 + $0x48] sm:$0xff]
      %v2354 = vld [vmem:[%s2054 + $0x50] sm:$0xff]
      %v2355 = vld [vmem:[%s2054 + $0x68] sm:$0xff]
      %v2356 = vld [vmem:[%s2054 + $0x70] sm:$0xff]
      %v2357 = vld [vmem:[%s2054 + $0x88] sm:$0xff]
      %v2358 = vld [vmem:[%s2054 + $0x90] sm:$0xff]
      %v2359 = vld [vmem:[%s2054 + $0xa8] sm:$0xff]
      %v2360 = vld [vmem:[%s2054 + $0xb0] sm:$0xff]
      %v2361 = vld [vmem:[%s2054 + $0xc8] sm:$0xff]
      %v2362 = vld [vmem:[%s2054 + $0xd0] sm:$0xff]
      %v2363 = vld [vmem:[%s2054 + $0xe8] sm:$0xff]
      %v2364 = vld [vmem:[%s2054 + $0xf0] sm:$0xff]
      %v2365 = vld [vmem:[%s2054 + $0x108] sm:$0xff]
      %v2366 = vld [vmem:[%s2054 + $0x110] sm:$0xff]
      %v2367 = vld [vmem:[%s2054 + $0x128] sm:$0xff]
      %v2368 = vld [vmem:[%s2054 + $0x130] sm:$0xff]
      %v2369 = vld [vmem:[%s2054 + $0x148] sm:$0xff]
      %v2370 = vld [vmem:[%s2054 + $0x150] sm:$0xff]
      %v2371 = vld [vmem:[%s2054 + $0x168] sm:$0xff]
      %v2372 = vld [vmem:[%s2054 + $0x170] sm:$0xff]
      %v2373 = vld [vmem:[%s2054 + $0x188] sm:$0xff]
      %v2374 = vld [vmem:[%s2054 + $0x190] sm:$0xff]
      %v2375 = vld [vmem:[%s2054 + $0x1a8] sm:$0xff]
      %v2376 = vld [vmem:[%s2054 + $0x1b0] sm:$0xff]
      %v2377 = vld [vmem:[%s2054 + $0x1c8] sm:$0xff]
      %v2378 = vld [vmem:[%s2054 + $0x1d0] sm:$0xff]
      %v2379 = vld [vmem:[%s2054 + $0x1e8] sm:$0xff]
      %v2380 = vld [vmem:[%s2054 + $0x1f0] sm:$0xff]
      %v2381 = vpack.c.bf16 %v2350, %v2349
      %v2382 = vpack.c.bf16 %v2352, %v2351
      %v2383 = vpack.c.bf16 %v2354, %v2353
      %v2384 = vpack.c.bf16 %v2356, %v2355
      %v2385 = vpack.c.bf16 %v2358, %v2357
      %v2386 = vpack.c.bf16 %v2360, %v2359
      %v2387 = vpack.c.bf16 %v2362, %v2361
      %v2388 = vpack.c.bf16 %v2364, %v2363
      %v2389 = vpack.c.bf16 %v2366, %v2365
      %v2390 = vpack.c.bf16 %v2368, %v2367
      %v2391 = vpack.c.bf16 %v2370, %v2369
      %v2392 = vpack.c.bf16 %v2372, %v2371
      %v2393 = vpack.c.bf16 %v2374, %v2373
      %v2394 = vpack.c.bf16 %v2376, %v2375
      %v2395 = vpack.c.bf16 %v2378, %v2377
      %v2396 = vpack.c.bf16 %v2380, %v2379
      %s2397 = scalar_lea.vmem %s1, 14
      %v2398 = vld [vmem:[%s2397] sm:$0x3]
      %v2400 = vsel %vm216, %v2381, 0
      %v2403 = vsel %vm216, %v2382, 0
      %v2406 = vsel %vm216, %v2383, 0
      %v2409 = vsel %vm216, %v2384, 0
      %v2412 = vsel %vm216, %v2385, 0
      %v2415 = vsel %vm216, %v2386, 0
      %v2418 = vsel %vm216, %v2387, 0
      %v2421 = vsel %vm216, %v2388, 0
      %v2424 = vsel %vm216, %v2389, 0
      %v2427 = vsel %vm216, %v2390, 0
      %v2430 = vsel %vm216, %v2391, 0
      %v2433 = vsel %vm216, %v2392, 0
      %v2436 = vsel %vm216, %v2393, 0
      %v2439 = vsel %vm216, %v2394, 0
      %v2442 = vsel %vm216, %v2395, 0
      %v2445 = vsel %vm216, %v2396, 0
      %v2448 = vsel %vm501, %v2398, 0
      %2450 = vmatprep.subr.bf16.mxu0 0
      %2451 = vmatpush1.bf16.msra.mxu0 %v2448
      %2452 = vmatprep.subr.bf16.mxu0 0
      %2453 = vmatpush1.bf16.msra.mxu0 0
      %2454 = vmatprep.subr.bf16.mxu0 0
      %2455 = vmatpush1.bf16.msra.mxu0 0
      %2456 = vmatprep.subr.bf16.mxu0 0
      %2457 = vmatpush1.bf16.msra.mxu0 0
      %2458 = vmatprep.subr.bf16.mxu0 0
      %2459 = vmatpush1.bf16.msra.mxu0 0
      %2460 = vmatprep.subr.bf16.mxu0 0
      %2461 = vmatpush1.bf16.msra.mxu0 0
      %2462 = vmatprep.subr.bf16.mxu0 0
      %2463 = vmatpush1.bf16.msra.mxu0 0
      %2464 = vmatprep.subr.bf16.mxu0 0
      %2465 = vmatpush1.bf16.msra.mxu0 0
      %2466 = vmatprep.subr.bf16.mxu0 0
      %2467 = vmatpush1.bf16.msra.mxu0 0
      %2468 = vmatprep.subr.bf16.mxu0 0
      %2469 = vmatpush1.bf16.msra.mxu0 0
      %2470 = vmatprep.subr.bf16.mxu0 0
      %2471 = vmatpush1.bf16.msra.mxu0 0
      %2472 = vmatprep.subr.bf16.mxu0 0
      %2473 = vmatpush1.bf16.msra.mxu0 0
      %2474 = vmatprep.subr.bf16.mxu0 0
      %2475 = vmatpush1.bf16.msra.mxu0 0
      %2476 = vmatprep.subr.bf16.mxu0 0
      %2477 = vmatpush1.bf16.msra.mxu0 0
      %2478 = vmatprep.subr.bf16.mxu0 0
      %2479 = vmatpush1.bf16.msra.mxu0 0
      %2480 = vmatprep.subr.bf16.mxu0 0
      %2481 = vmatpush1.bf16.msra.mxu0 0
      %2482 = vmatprep.mubr.bf16.mxu0 0
      %2483 = vmatmul.mubr.bf16.gmra.mrb[0].mxu0 %v2400
      %v2484 = vpop.f32.mrb[0].mxu0
      %v2485 = vadd.f32 0.0, %v2484
      %v2486 = vpop.f32.mrb[0].mxu0
      %v2487 = vpop.f32.mrb[0].mxu0
      %v2488 = vadd.f32 0.0, %v2487
      %v2489 = vpop.f32.mrb[0].mxu0
      %2490 = vmatprep.mubr.bf16.mxu0 0
      %2491 = vmatmul.mubr.bf16.gmra.mrb[0].mxu0 %v2403
      %v2492 = vpop.f32.mrb[0].mxu0
      %v2493 = vadd.f32 0.0, %v2492
      %v2494 = vpop.f32.mrb[0].mxu0
      %v2495 = vpop.f32.mrb[0].mxu0
      %v2496 = vadd.f32 0.0, %v2495
      %v2497 = vpop.f32.mrb[0].mxu0
      %2498 = vmatprep.mubr.bf16.mxu0 0
      %2499 = vmatmul.mubr.bf16.gmra.mrb[0].mxu0 %v2406
      %v2500 = vpop.f32.mrb[0].mxu0
      %v2501 = vadd.f32 0.0, %v2500
      %v2502 = vpop.f32.mrb[0].mxu0
      %v2503 = vpop.f32.mrb[0].mxu0
      %v2504 = vadd.f32 0.0, %v2503
      %v2505 = vpop.f32.mrb[0].mxu0
      %2506 = vmatprep.mubr.bf16.mxu0 0
      %2507 = vmatmul.mubr.bf16.gmra.mrb[0].mxu0 %v2409
      %v2508 = vpop.f32.mrb[0].mxu0
      %v2509 = vadd.f32 0.0, %v2508
      %v2510 = vpop.f32.mrb[0].mxu0
      %v2511 = vpop.f32.mrb[0].mxu0
      %v2512 = vadd.f32 0.0, %v2511
      %v2513 = vpop.f32.mrb[0].mxu0
      %2514 = vmatprep.mubr.bf16.mxu0 0
      %2515 = vmatmul.mubr.bf16.gmra.mrb[0].mxu0 %v2412
      %v2516 = vpop.f32.mrb[0].mxu0
      %v2517 = vadd.f32 0.0, %v2516
      %v2518 = vpop.f32.mrb[0].mxu0
      %v2519 = vpop.f32.mrb[0].mxu0
      %v2520 = vadd.f32 0.0, %v2519
      %v2521 = vpop.f32.mrb[0].mxu0
      %2522 = vmatprep.mubr.bf16.mxu0 0
      %2523 = vmatmul.mubr.bf16.gmra.mrb[0].mxu0 %v2415
      %v2524 = vpop.f32.mrb[0].mxu0
      %v2525 = vadd.f32 0.0, %v2524
      %v2526 = vpop.f32.mrb[0].mxu0
      %v2527 = vpop.f32.mrb[0].mxu0
      %v2528 = vadd.f32 0.0, %v2527
      %v2529 = vpop.f32.mrb[0].mxu0
      %2530 = vmatprep.mubr.bf16.mxu0 0
      %2531 = vmatmul.mubr.bf16.gmra.mrb[0].mxu0 %v2418
      %v2532 = vpop.f32.mrb[0].mxu0
      %v2533 = vadd.f32 0.0, %v2532
      %v2534 = vpop.f32.mrb[0].mxu0
      %v2535 = vpop.f32.mrb[0].mxu0
      %v2536 = vadd.f32 0.0, %v2535
      %v2537 = vpop.f32.mrb[0].mxu0
      %2538 = vmatprep.mubr.bf16.mxu0 0
      %2539 = vmatmul.mubr.bf16.gmra.mrb[0].mxu0 %v2421
      %v2540 = vpop.f32.mrb[0].mxu0
      %v2541 = vadd.f32 0.0, %v2540
      %v2542 = vpop.f32.mrb[0].mxu0
      %v2543 = vpop.f32.mrb[0].mxu0
      %v2544 = vadd.f32 0.0, %v2543
      %v2545 = vpop.f32.mrb[0].mxu0
      %2546 = vmatprep.mubr.bf16.mxu0 0
      %2547 = vmatmul.mubr.bf16.gmra.mrb[0].mxu0 %v2424
      %v2548 = vpop.f32.mrb[0].mxu0
      %v2549 = vadd.f32 0.0, %v2548
      %v2550 = vpop.f32.mrb[0].mxu0
      %v2551 = vpop.f32.mrb[0].mxu0
      %v2552 = vadd.f32 0.0, %v2551
      %v2553 = vpop.f32.mrb[0].mxu0
      %2554 = vmatprep.mubr.bf16.mxu0 0
      %2555 = vmatmul.mubr.bf16.gmra.mrb[0].mxu0 %v2427
      %v2556 = vpop.f32.mrb[0].mxu0
      %v2557 = vadd.f32 0.0, %v2556
      %v2558 = vpop.f32.mrb[0].mxu0
      %v2559 = vpop.f32.mrb[0].mxu0
      %v2560 = vadd.f32 0.0, %v2559
      %v2561 = vpop.f32.mrb[0].mxu0
      %2562 = vmatprep.mubr.bf16.mxu0 0
      %2563 = vmatmul.mubr.bf16.gmra.mrb[0].mxu0 %v2430
      %v2564 = vpop.f32.mrb[0].mxu0
      %v2565 = vadd.f32 0.0, %v2564
      %v2566 = vpop.f32.mrb[0].mxu0
      %v2567 = vpop.f32.mrb[0].mxu0
      %v2568 = vadd.f32 0.0, %v2567
      %v2569 = vpop.f32.mrb[0].mxu0
      %2570 = vmatprep.mubr.bf16.mxu0 0
      %2571 = vmatmul.mubr.bf16.gmra.mrb[0].mxu0 %v2433
      %v2572 = vpop.f32.mrb[0].mxu0
      %v2573 = vadd.f32 0.0, %v2572
      %v2574 = vpop.f32.mrb[0].mxu0
      %v2575 = vpop.f32.mrb[0].mxu0
      %v2576 = vadd.f32 0.0, %v2575
      %v2577 = vpop.f32.mrb[0].mxu0
      %2578 = vmatprep.mubr.bf16.mxu0 0
      %2579 = vmatmul.mubr.bf16.gmra.mrb[0].mxu0 %v2436
      %v2580 = vpop.f32.mrb[0].mxu0
      %v2581 = vadd.f32 0.0, %v2580
      %v2582 = vpop.f32.mrb[0].mxu0
      %v2583 = vpop.f32.mrb[0].mxu0
      %v2584 = vadd.f32 0.0, %v2583
      %v2585 = vpop.f32.mrb[0].mxu0
      %2586 = vmatprep.mubr.bf16.mxu0 0
      %2587 = vmatmul.mubr.bf16.gmra.mrb[0].mxu0 %v2439
      %v2588 = vpop.f32.mrb[0].mxu0
      %v2589 = vadd.f32 0.0, %v2588
      %v2590 = vpop.f32.mrb[0].mxu0
      %v2591 = vpop.f32.mrb[0].mxu0
      %v2592 = vadd.f32 0.0, %v2591
      %v2593 = vpop.f32.mrb[0].mxu0
      %2594 = vmatprep.mubr.bf16.mxu0 0
      %2595 = vmatmul.mubr.bf16.gmra.mrb[0].mxu0 %v2442
      %v2596 = vpop.f32.mrb[0].mxu0
      %v2597 = vadd.f32 0.0, %v2596
      %v2598 = vpop.f32.mrb[0].mxu0
      %v2599 = vpop.f32.mrb[0].mxu0
      %v2600 = vadd.f32 0.0, %v2599
      %v2601 = vpop.f32.mrb[0].mxu0
      %2602 = vmatprep.mubr.bf16.mxu0 0
      %2603 = vmatmul.mubr.bf16.gmra.mrb[0].mxu0 %v2445
      %v2604 = vpop.f32.mrb[0].mxu0
      %v2605 = vadd.f32 0.0, %v2604
      %v2606 = vpop.f32.mrb[0].mxu0
      %v2607 = vpop.f32.mrb[0].mxu0
      %v2608 = vadd.f32 0.0, %v2607
      %v2609 = vpop.f32.mrb[0].mxu0
      %2610 = vdwg.mxu0
      %v2611 = vadd.f32 %v2317, %v2485
      %v2612 = vadd.f32 %v2318, %v2488
      %v2613 = vadd.f32 %v2319, %v2493
      %v2614 = vadd.f32 %v2320, %v2496
      %v2615 = vadd.f32 %v2321, %v2501
      %v2616 = vadd.f32 %v2322, %v2504
      %v2617 = vadd.f32 %v2323, %v2509
      %v2618 = vadd.f32 %v2324, %v2512
      %v2619 = vadd.f32 %v2325, %v2517
      %v2620 = vadd.f32 %v2326, %v2520
      %v2621 = vadd.f32 %v2327, %v2525
      %v2622 = vadd.f32 %v2328, %v2528
      %v2623 = vadd.f32 %v2329, %v2533
      %v2624 = vadd.f32 %v2330, %v2536
      %v2625 = vadd.f32 %v2331, %v2541
      %v2626 = vadd.f32 %v2332, %v2544
      %v2627 = vadd.f32 %v2333, %v2549
      %v2628 = vadd.f32 %v2334, %v2552
      %v2629 = vadd.f32 %v2335, %v2557
      %v2630 = vadd.f32 %v2336, %v2560
      %v2631 = vadd.f32 %v2337, %v2565
      %v2632 = vadd.f32 %v2338, %v2568
      %v2633 = vadd.f32 %v2339, %v2573
      %v2634 = vadd.f32 %v2340, %v2576
      %v2635 = vadd.f32 %v2341, %v2581
      %v2636 = vadd.f32 %v2342, %v2584
      %v2637 = vadd.f32 %v2343, %v2589
      %v2638 = vadd.f32 %v2344, %v2592
      %v2639 = vadd.f32 %v2345, %v2597
      %v2640 = vadd.f32 %v2346, %v2600
      %v2641 = vadd.f32 %v2347, %v2605
      %v2642 = vadd.f32 %v2348, %v2608
      %v2643 = vld [vmem:[%s2054 + $0x9] sm:$0xff]
      %v2644 = vld [vmem:[%s2054 + $0x11] sm:$0xff]
      %v2645 = vld [vmem:[%s2054 + $0x29] sm:$0xff]
      %v2646 = vld [vmem:[%s2054 + $0x31] sm:$0xff]
      %v2647 = vld [vmem:[%s2054 + $0x49] sm:$0xff]
      %v2648 = vld [vmem:[%s2054 + $0x51] sm:$0xff]
      %v2649 = vld [vmem:[%s2054 + $0x69] sm:$0xff]
      %v2650 = vld [vmem:[%s2054 + $0x71] sm:$0xff]
      %v2651 = vld [vmem:[%s2054 + $0x89] sm:$0xff]
      %v2652 = vld [vmem:[%s2054 + $0x91] sm:$0xff]
      %v2653 = vld [vmem:[%s2054 + $0xa9] sm:$0xff]
      %v2654 = vld [vmem:[%s2054 + $0xb1] sm:$0xff]
      %v2655 = vld [vmem:[%s2054 + $0xc9] sm:$0xff]
      %v2656 = vld [vmem:[%s2054 + $0xd1] sm:$0xff]
      %v2657 = vld [vmem:[%s2054 + $0xe9] sm:$0xff]
      %v2658 = vld [vmem:[%s2054 + $0xf1] sm:$0xff]
      %v2659 = vld [vmem:[%s2054 + $0x109] sm:$0xff]
      %v2660 = vld [vmem:[%s2054 + $0x111] sm:$0xff]
      %v2661 = vld [vmem:[%s2054 + $0x129] sm:$0xff]
      %v2662 = vld [vmem:[%s2054 + $0x131] sm:$0xff]
      %v2663 = vld [vmem:[%s2054 + $0x149] sm:$0xff]
      %v2664 = vld [vmem:[%s2054 + $0x151] sm:$0xff]
      %v2665 = vld [vmem:[%s2054 + $0x169] sm:$0xff]
      %v2666 = vld [vmem:[%s2054 + $0x171] sm:$0xff]
      %v2667 = vld [vmem:[%s2054 + $0x189] sm:$0xff]
      %v2668 = vld [vmem:[%s2054 + $0x191] sm:$0xff]
      %v2669 = vld [vmem:[%s2054 + $0x1a9] sm:$0xff]
      %v2670 = vld [vmem:[%s2054 + $0x1b1] sm:$0xff]
      %v2671 = vld [vmem:[%s2054 + $0x1c9] sm:$0xff]
      %v2672 = vld [vmem:[%s2054 + $0x1d1] sm:$0xff]
      %v2673 = vld [vmem:[%s2054 + $0x1e9] sm:$0xff]
      %v2674 = vld [vmem:[%s2054 + $0x1f1] sm:$0xff]
      %v2675 = vpack.c.bf16 %v2644, %v2643
      %v2676 = vpack.c.bf16 %v2646, %v2645
      %v2677 = vpack.c.bf16 %v2648, %v2647
      %v2678 = vpack.c.bf16 %v2650, %v2649
      %v2679 = vpack.c.bf16 %v2652, %v2651
      %v2680 = vpack.c.bf16 %v2654, %v2653
      %v2681 = vpack.c.bf16 %v2656, %v2655
      %v2682 = vpack.c.bf16 %v2658, %v2657
      %v2683 = vpack.c.bf16 %v2660, %v2659
      %v2684 = vpack.c.bf16 %v2662, %v2661
      %v2685 = vpack.c.bf16 %v2664, %v2663
      %v2686 = vpack.c.bf16 %v2666, %v2665
      %v2687 = vpack.c.bf16 %v2668, %v2667
      %v2688 = vpack.c.bf16 %v2670, %v2669
      %v2689 = vpack.c.bf16 %v2672, %v2671
      %v2690 = vpack.c.bf16 %v2674, %v2673
      %s2691 = scalar_lea.vmem %s1, 16
      %v2692 = vld [vmem:[%s2691] sm:$0x3]
      %v2694 = vsel %vm216, %v2675, 0
      %v2697 = vsel %vm216, %v2676, 0
      %v2700 = vsel %vm216, %v2677, 0
      %v2703 = vsel %vm216, %v2678, 0
      %v2706 = vsel %vm216, %v2679, 0
      %v2709 = vsel %vm216, %v2680, 0
      %v2712 = vsel %vm216, %v2681, 0
      %v2715 = vsel %vm216, %v2682, 0
      %v2718 = vsel %vm216, %v2683, 0
      %v2721 = vsel %vm216, %v2684, 0
      %v2724 = vsel %vm216, %v2685, 0
      %v2727 = vsel %vm216, %v2686, 0
      %v2730 = vsel %vm216, %v2687, 0
      %v2733 = vsel %vm216, %v2688, 0
      %v2736 = vsel %vm216, %v2689, 0
      %v2739 = vsel %vm216, %v2690, 0
      %v2742 = vsel %vm501, %v2692, 0
      %2744 = vmatprep.subr.bf16.mxu0 0
      %2745 = vmatpush1.bf16.msra.mxu0 %v2742
      %2746 = vmatprep.subr.bf16.mxu0 0
      %2747 = vmatpush1.bf16.msra.mxu0 0
      %2748 = vmatprep.subr.bf16.mxu0 0
      %2749 = vmatpush1.bf16.msra.mxu0 0
      %2750 = vmatprep.subr.bf16.mxu0 0
      %2751 = vmatpush1.bf16.msra.mxu0 0
      %2752 = vmatprep.subr.bf16.mxu0 0
      %2753 = vmatpush1.bf16.msra.mxu0 0
      %2754 = vmatprep.subr.bf16.mxu0 0
      %2755 = vmatpush1.bf16.msra.mxu0 0
      %2756 = vmatprep.subr.bf16.mxu0 0
      %2757 = vmatpush1.bf16.msra.mxu0 0
      %2758 = vmatprep.subr.bf16.mxu0 0
      %2759 = vmatpush1.bf16.msra.mxu0 0
      %2760 = vmatprep.subr.bf16.mxu0 0
      %2761 = vmatpush1.bf16.msra.mxu0 0
      %2762 = vmatprep.subr.bf16.mxu0 0
      %2763 = vmatpush1.bf16.msra.mxu0 0
      %2764 = vmatprep.subr.bf16.mxu0 0
      %2765 = vmatpush1.bf16.msra.mxu0 0
      %2766 = vmatprep.subr.bf16.mxu0 0
      %2767 = vmatpush1.bf16.msra.mxu0 0
      %2768 = vmatprep.subr.bf16.mxu0 0
      %2769 = vmatpush1.bf16.msra.mxu0 0
      %2770 = vmatprep.subr.bf16.mxu0 0
      %2771 = vmatpush1.bf16.msra.mxu0 0
      %2772 = vmatprep.subr.bf16.mxu0 0
      %2773 = vmatpush1.bf16.msra.mxu0 0
      %2774 = vmatprep.subr.bf16.mxu0 0
      %2775 = vmatpush1.bf16.msra.mxu0 0
      %2776 = vmatprep.mubr.bf16.mxu0 0
      %2777 = vmatmul.mubr.bf16.gmra.mrb[0].mxu0 %v2694
      %v2778 = vpop.f32.mrb[0].mxu0
      %v2779 = vadd.f32 0.0, %v2778
      %v2780 = vpop.f32.mrb[0].mxu0
      %v2781 = vpop.f32.mrb[0].mxu0
      %v2782 = vadd.f32 0.0, %v2781
      %v2783 = vpop.f32.mrb[0].mxu0
      %2784 = vmatprep.mubr.bf16.mxu0 0
      %2785 = vmatmul.mubr.bf16.gmra.mrb[0].mxu0 %v2697
      %v2786 = vpop.f32.mrb[0].mxu0
      %v2787 = vadd.f32 0.0, %v2786
      %v2788 = vpop.f32.mrb[0].mxu0
      %v2789 = vpop.f32.mrb[0].mxu0
      %v2790 = vadd.f32 0.0, %v2789
      %v2791 = vpop.f32.mrb[0].mxu0
      %2792 = vmatprep.mubr.bf16.mxu0 0
      %2793 = vmatmul.mubr.bf16.gmra.mrb[0].mxu0 %v2700
      %v2794 = vpop.f32.mrb[0].mxu0
      %v2795 = vadd.f32 0.0, %v2794
      %v2796 = vpop.f32.mrb[0].mxu0
      %v2797 = vpop.f32.mrb[0].mxu0
      %v2798 = vadd.f32 0.0, %v2797
      %v2799 = vpop.f32.mrb[0].mxu0
      %2800 = vmatprep.mubr.bf16.mxu0 0
      %2801 = vmatmul.mubr.bf16.gmra.mrb[0].mxu0 %v2703
      %v2802 = vpop.f32.mrb[0].mxu0
      %v2803 = vadd.f32 0.0, %v2802
      %v2804 = vpop.f32.mrb[0].mxu0
      %v2805 = vpop.f32.mrb[0].mxu0
      %v2806 = vadd.f32 0.0, %v2805
      %v2807 = vpop.f32.mrb[0].mxu0
      %2808 = vmatprep.mubr.bf16.mxu0 0
      %2809 = vmatmul.mubr.bf16.gmra.mrb[0].mxu0 %v2706
      %v2810 = vpop.f32.mrb[0].mxu0
      %v2811 = vadd.f32 0.0, %v2810
      %v2812 = vpop.f32.mrb[0].mxu0
      %v2813 = vpop.f32.mrb[0].mxu0
      %v2814 = vadd.f32 0.0, %v2813
      %v2815 = vpop.f32.mrb[0].mxu0
      %2816 = vmatprep.mubr.bf16.mxu0 0
      %2817 = vmatmul.mubr.bf16.gmra.mrb[0].mxu0 %v2709
      %v2818 = vpop.f32.mrb[0].mxu0
      %v2819 = vadd.f32 0.0, %v2818
      %v2820 = vpop.f32.mrb[0].mxu0
      %v2821 = vpop.f32.mrb[0].mxu0
      %v2822 = vadd.f32 0.0, %v2821
      %v2823 = vpop.f32.mrb[0].mxu0
      %2824 = vmatprep.mubr.bf16.mxu0 0
      %2825 = vmatmul.mubr.bf16.gmra.mrb[0].mxu0 %v2712
      %v2826 = vpop.f32.mrb[0].mxu0
      %v2827 = vadd.f32 0.0, %v2826
      %v2828 = vpop.f32.mrb[0].mxu0
      %v2829 = vpop.f32.mrb[0].mxu0
      %v2830 = vadd.f32 0.0, %v2829
      %v2831 = vpop.f32.mrb[0].mxu0
      %2832 = vmatprep.mubr.bf16.mxu0 0
      %2833 = vmatmul.mubr.bf16.gmra.mrb[0].mxu0 %v2715
      %v2834 = vpop.f32.mrb[0].mxu0
      %v2835 = vadd.f32 0.0, %v2834
      %v2836 = vpop.f32.mrb[0].mxu0
      %v2837 = vpop.f32.mrb[0].mxu0
      %v2838 = vadd.f32 0.0, %v2837
      %v2839 = vpop.f32.mrb[0].mxu0
      %2840 = vmatprep.mubr.bf16.mxu0 0
      %2841 = vmatmul.mubr.bf16.gmra.mrb[0].mxu0 %v2718
      %v2842 = vpop.f32.mrb[0].mxu0
      %v2843 = vadd.f32 0.0, %v2842
      %v2844 = vpop.f32.mrb[0].mxu0
      %v2845 = vpop.f32.mrb[0].mxu0
      %v2846 = vadd.f32 0.0, %v2845
      %v2847 = vpop.f32.mrb[0].mxu0
      %2848 = vmatprep.mubr.bf16.mxu0 0
      %2849 = vmatmul.mubr.bf16.gmra.mrb[0].mxu0 %v2721
      %v2850 = vpop.f32.mrb[0].mxu0
      %v2851 = vadd.f32 0.0, %v2850
      %v2852 = vpop.f32.mrb[0].mxu0
      %v2853 = vpop.f32.mrb[0].mxu0
      %v2854 = vadd.f32 0.0, %v2853
      %v2855 = vpop.f32.mrb[0].mxu0
      %2856 = vmatprep.mubr.bf16.mxu0 0
      %2857 = vmatmul.mubr.bf16.gmra.mrb[0].mxu0 %v2724
      %v2858 = vpop.f32.mrb[0].mxu0
      %v2859 = vadd.f32 0.0, %v2858
      %v2860 = vpop.f32.mrb[0].mxu0
      %v2861 = vpop.f32.mrb[0].mxu0
      %v2862 = vadd.f32 0.0, %v2861
      %v2863 = vpop.f32.mrb[0].mxu0
      %2864 = vmatprep.mubr.bf16.mxu0 0
      %2865 = vmatmul.mubr.bf16.gmra.mrb[0].mxu0 %v2727
      %v2866 = vpop.f32.mrb[0].mxu0
      %v2867 = vadd.f32 0.0, %v2866
      %v2868 = vpop.f32.mrb[0].mxu0
      %v2869 = vpop.f32.mrb[0].mxu0
      %v2870 = vadd.f32 0.0, %v2869
      %v2871 = vpop.f32.mrb[0].mxu0
      %2872 = vmatprep.mubr.bf16.mxu0 0
      %2873 = vmatmul.mubr.bf16.gmra.mrb[0].mxu0 %v2730
      %v2874 = vpop.f32.mrb[0].mxu0
      %v2875 = vadd.f32 0.0, %v2874
      %v2876 = vpop.f32.mrb[0].mxu0
      %v2877 = vpop.f32.mrb[0].mxu0
      %v2878 = vadd.f32 0.0, %v2877
      %v2879 = vpop.f32.mrb[0].mxu0
      %2880 = vmatprep.mubr.bf16.mxu0 0
      %2881 = vmatmul.mubr.bf16.gmra.mrb[0].mxu0 %v2733
      %v2882 = vpop.f32.mrb[0].mxu0
      %v2883 = vadd.f32 0.0, %v2882
      %v2884 = vpop.f32.mrb[0].mxu0
      %v2885 = vpop.f32.mrb[0].mxu0
      %v2886 = vadd.f32 0.0, %v2885
      %v2887 = vpop.f32.mrb[0].mxu0
      %2888 = vmatprep.mubr.bf16.mxu0 0
      %2889 = vmatmul.mubr.bf16.gmra.mrb[0].mxu0 %v2736
      %v2890 = vpop.f32.mrb[0].mxu0
      %v2891 = vadd.f32 0.0, %v2890
      %v2892 = vpop.f32.mrb[0].mxu0
      %v2893 = vpop.f32.mrb[0].mxu0
      %v2894 = vadd.f32 0.0, %v2893
      %v2895 = vpop.f32.mrb[0].mxu0
      %2896 = vmatprep.mubr.bf16.mxu0 0
      %2897 = vmatmul.mubr.bf16.gmra.mrb[0].mxu0 %v2739
      %v2898 = vpop.f32.mrb[0].mxu0
      %v2899 = vadd.f32 0.0, %v2898
      %v2900 = vpop.f32.mrb[0].mxu0
      %v2901 = vpop.f32.mrb[0].mxu0
      %v2902 = vadd.f32 0.0, %v2901
      %v2903 = vpop.f32.mrb[0].mxu0
      %2904 = vdwg.mxu0
      %v2905 = vadd.f32 %v2611, %v2779
      %v2906 = vadd.f32 %v2612, %v2782
      %v2907 = vadd.f32 %v2613, %v2787
      %v2908 = vadd.f32 %v2614, %v2790
      %v2909 = vadd.f32 %v2615, %v2795
      %v2910 = vadd.f32 %v2616, %v2798
      %v2911 = vadd.f32 %v2617, %v2803
      %v2912 = vadd.f32 %v2618, %v2806
      %v2913 = vadd.f32 %v2619, %v2811
      %v2914 = vadd.f32 %v2620, %v2814
      %v2915 = vadd.f32 %v2621, %v2819
      %v2916 = vadd.f32 %v2622, %v2822
      %v2917 = vadd.f32 %v2623, %v2827
      %v2918 = vadd.f32 %v2624, %v2830
      %v2919 = vadd.f32 %v2625, %v2835
      %v2920 = vadd.f32 %v2626, %v2838
      %v2921 = vadd.f32 %v2627, %v2843
      %v2922 = vadd.f32 %v2628, %v2846
      %v2923 = vadd.f32 %v2629, %v2851
      %v2924 = vadd.f32 %v2630, %v2854
      %v2925 = vadd.f32 %v2631, %v2859
      %v2926 = vadd.f32 %v2632, %v2862
      %v2927 = vadd.f32 %v2633, %v2867
      %v2928 = vadd.f32 %v2634, %v2870
      %v2929 = vadd.f32 %v2635, %v2875
      %v2930 = vadd.f32 %v2636, %v2878
      %v2931 = vadd.f32 %v2637, %v2883
      %v2932 = vadd.f32 %v2638, %v2886
      %v2933 = vadd.f32 %v2639, %v2891
      %v2934 = vadd.f32 %v2640, %v2894
      %v2935 = vadd.f32 %v2641, %v2899
      %v2936 = vadd.f32 %v2642, %v2902
      %v2937 = vpack.c.bf16 %v2906, %v2905
      %v2938 = vpack.c.bf16 %v2908, %v2907
      %v2939 = vpack.c.bf16 %v2910, %v2909
      %v2940 = vpack.c.bf16 %v2912, %v2911
      %v2941 = vpack.c.bf16 %v2914, %v2913
      %v2942 = vpack.c.bf16 %v2916, %v2915
      %v2943 = vpack.c.bf16 %v2918, %v2917
      %v2944 = vpack.c.bf16 %v2920, %v2919
      %v2945 = vpack.c.bf16 %v2922, %v2921
      %v2946 = vpack.c.bf16 %v2924, %v2923
      %v2947 = vpack.c.bf16 %v2926, %v2925
      %v2948 = vpack.c.bf16 %v2928, %v2927
      %v2949 = vpack.c.bf16 %v2930, %v2929
      %v2950 = vpack.c.bf16 %v2932, %v2931
      %v2951 = vpack.c.bf16 %v2934, %v2933
      %v2952 = vpack.c.bf16 %v2936, %v2935
      %v2953 = vunpack.c.l.bf16 %v2937
      %v2954 = vunpack.c.h.bf16 %v2937
      %v2955 = vunpack.c.l.bf16 %v2938
      %v2956 = vunpack.c.h.bf16 %v2938
      %v2957 = vunpack.c.l.bf16 %v2939
      %v2958 = vunpack.c.h.bf16 %v2939
      %v2959 = vunpack.c.l.bf16 %v2940
      %v2960 = vunpack.c.h.bf16 %v2940
      %v2961 = vunpack.c.l.bf16 %v2941
      %v2962 = vunpack.c.h.bf16 %v2941
      %v2963 = vunpack.c.l.bf16 %v2942
      %v2964 = vunpack.c.h.bf16 %v2942
      %v2965 = vunpack.c.l.bf16 %v2943
      %v2966 = vunpack.c.h.bf16 %v2943
      %v2967 = vunpack.c.l.bf16 %v2944
      %v2968 = vunpack.c.h.bf16 %v2944
      %v2969 = vunpack.c.l.bf16 %v2945
      %v2970 = vunpack.c.h.bf16 %v2945
      %v2971 = vunpack.c.l.bf16 %v2946
      %v2972 = vunpack.c.h.bf16 %v2946
      %v2973 = vunpack.c.l.bf16 %v2947
      %v2974 = vunpack.c.h.bf16 %v2947
      %v2975 = vunpack.c.l.bf16 %v2948
      %v2976 = vunpack.c.h.bf16 %v2948
      %v2977 = vunpack.c.l.bf16 %v2949
      %v2978 = vunpack.c.h.bf16 %v2949
      %v2979 = vunpack.c.l.bf16 %v2950
      %v2980 = vunpack.c.h.bf16 %v2950
      %v2981 = vunpack.c.l.bf16 %v2951
      %v2982 = vunpack.c.h.bf16 %v2951
      %v2983 = vunpack.c.l.bf16 %v2952
      %v2984 = vunpack.c.h.bf16 %v2952
      %v2985 = vpack.c.bf16 %v2954, %v2953
      %v2986 = vpack.c.bf16 %v2956, %v2955
      %v2987 = vpack.c.bf16 %v2958, %v2957
      %v2988 = vpack.c.bf16 %v2960, %v2959
      %v2989 = vpack.c.bf16 %v2962, %v2961
      %v2990 = vpack.c.bf16 %v2964, %v2963
      %v2991 = vpack.c.bf16 %v2966, %v2965
      %v2992 = vpack.c.bf16 %v2968, %v2967
      %v2993 = vpack.c.bf16 %v2970, %v2969
      %v2994 = vpack.c.bf16 %v2972, %v2971
      %v2995 = vpack.c.bf16 %v2974, %v2973
      %v2996 = vpack.c.bf16 %v2976, %v2975
      %v2997 = vpack.c.bf16 %v2978, %v2977
      %v2998 = vpack.c.bf16 %v2980, %v2979
      %v2999 = vpack.c.bf16 %v2982, %v2981
      %v3000 = vpack.c.bf16 %v2984, %v2983
      %v3017 = vunpack.c.l.b16 %v2985
      %v3018 = vunpack.c.h.b16 %v2985
      %v3019 = vunpack.c.l.b16 %v2986
      %v3020 = vunpack.c.h.b16 %v2986
      %v3021 = vunpack.c.l.b16 %v2987
      %v3022 = vunpack.c.h.b16 %v2987
      %v3023 = vunpack.c.l.b16 %v2988
      %v3024 = vunpack.c.h.b16 %v2988
      %v3025 = vunpack.c.l.b16 %v2989
      %v3026 = vunpack.c.h.b16 %v2989
      %v3027 = vunpack.c.l.b16 %v2990
      %v3028 = vunpack.c.h.b16 %v2990
      %v3029 = vunpack.c.l.b16 %v2991
      %v3030 = vunpack.c.h.b16 %v2991
      %v3031 = vunpack.c.l.b16 %v2992
      %v3032 = vunpack.c.h.b16 %v2992
      %v3033 = vunpack.c.l.b16 %v2993
      %v3034 = vunpack.c.h.b16 %v2993
      %v3035 = vunpack.c.l.b16 %v2994
      %v3036 = vunpack.c.h.b16 %v2994
      %v3037 = vunpack.c.l.b16 %v2995
      %v3038 = vunpack.c.h.b16 %v2995
      %v3039 = vunpack.c.l.b16 %v2996
      %v3040 = vunpack.c.h.b16 %v2996
      %v3041 = vunpack.c.l.b16 %v2997
      %v3042 = vunpack.c.h.b16 %v2997
      %v3043 = vunpack.c.l.b16 %v2998
      %v3044 = vunpack.c.h.b16 %v2998
      %v3045 = vunpack.c.l.b16 %v2999
      %v3046 = vunpack.c.h.b16 %v2999
      %v3047 = vunpack.c.l.b16 %v3000
      %v3048 = vunpack.c.h.b16 %v3000
      %v3049 = vpack.c.b16 %v3017, %v3017
      %v3050 = vpack.c.b16 %v3018, %v3018
      %v3051 = vpack.c.b16 %v3019, %v3019
      %v3052 = vpack.c.b16 %v3020, %v3020
      %v3053 = vpack.c.b16 %v3021, %v3021
      %v3054 = vpack.c.b16 %v3022, %v3022
      %v3055 = vpack.c.b16 %v3023, %v3023
      %v3056 = vpack.c.b16 %v3024, %v3024
      %v3057 = vpack.c.b16 %v3025, %v3025
      %v3058 = vpack.c.b16 %v3026, %v3026
      %v3059 = vpack.c.b16 %v3027, %v3027
      %v3060 = vpack.c.b16 %v3028, %v3028
      %v3061 = vpack.c.b16 %v3029, %v3029
      %v3062 = vpack.c.b16 %v3030, %v3030
      %v3063 = vpack.c.b16 %v3031, %v3031
      %v3064 = vpack.c.b16 %v3032, %v3032
      %v3065 = vpack.c.b16 %v3033, %v3033
      %v3066 = vpack.c.b16 %v3034, %v3034
      %v3067 = vpack.c.b16 %v3035, %v3035
      %v3068 = vpack.c.b16 %v3036, %v3036
      %v3069 = vpack.c.b16 %v3037, %v3037
      %v3070 = vpack.c.b16 %v3038, %v3038
      %v3071 = vpack.c.b16 %v3039, %v3039
      %v3072 = vpack.c.b16 %v3040, %v3040
      %v3073 = vpack.c.b16 %v3041, %v3041
      %v3074 = vpack.c.b16 %v3042, %v3042
      %v3075 = vpack.c.b16 %v3043, %v3043
      %v3076 = vpack.c.b16 %v3044, %v3044
      %v3077 = vpack.c.b16 %v3045, %v3045
      %v3078 = vpack.c.b16 %v3046, %v3046
      %v3079 = vpack.c.b16 %v3047, %v3047
      %v3080 = vpack.c.b16 %v3048, %v3048
      %vm3113 = vcmask 27648
      %3114 = vst.msk [vmem:[%s208] sm:$0xf] %vm3113, %v3049
      %3115 = vst.msk [vmem:[%s208 + $0x4] sm:$0xf] %vm3113, %v3050
      %3116 = vst.msk [vmem:[%s208 + $0x8] sm:$0xf] %vm3113, %v3051
      %3117 = vst.msk [vmem:[%s208 + $0xc] sm:$0xf] %vm3113, %v3052
      %3118 = vst.msk [vmem:[%s208 + $0x10] sm:$0xf] %vm3113, %v3053
      %3119 = vst.msk [vmem:[%s208 + $0x14] sm:$0xf] %vm3113, %v3054
      %3120 = vst.msk [vmem:[%s208 + $0x18] sm:$0xf] %vm3113, %v3055
      %3121 = vst.msk [vmem:[%s208 + $0x1c] sm:$0xf] %vm3113, %v3056
      %3122 = vst.msk [vmem:[%s208 + $0x20] sm:$0xf] %vm3113, %v3057
      %3123 = vst.msk [vmem:[%s208 + $0x24] sm:$0xf] %vm3113, %v3058
      %3124 = vst.msk [vmem:[%s208 + $0x28] sm:$0xf] %vm3113, %v3059
      %3125 = vst.msk [vmem:[%s208 + $0x2c] sm:$0xf] %vm3113, %v3060
      %3126 = vst.msk [vmem:[%s208 + $0x30] sm:$0xf] %vm3113, %v3061
      %3127 = vst.msk [vmem:[%s208 + $0x34] sm:$0xf] %vm3113, %v3062
      %3128 = vst.msk [vmem:[%s208 + $0x38] sm:$0xf] %vm3113, %v3063
      %3129 = vst.msk [vmem:[%s208 + $0x3c] sm:$0xf] %vm3113, %v3064
      %3130 = vst.msk [vmem:[%s208 + $0x40] sm:$0xf] %vm3113, %v3065
      %3131 = vst.msk [vmem:[%s208 + $0x44] sm:$0xf] %vm3113, %v3066
      %3132 = vst.msk [vmem:[%s208 + $0x48] sm:$0xf] %vm3113, %v3067
      %3133 = vst.msk [vmem:[%s208 + $0x4c] sm:$0xf] %vm3113, %v3068
      %3134 = vst.msk [vmem:[%s208 + $0x50] sm:$0xf] %vm3113, %v3069
      %3135 = vst.msk [vmem:[%s208 + $0x54] sm:$0xf] %vm3113, %v3070
      %3136 = vst.msk [vmem:[%s208 + $0x58] sm:$0xf] %vm3113, %v3071
      %3137 = vst.msk [vmem:[%s208 + $0x5c] sm:$0xf] %vm3113, %v3072
      %3138 = vst.msk [vmem:[%s208 + $0x60] sm:$0xf] %vm3113, %v3073
      %3139 = vst.msk [vmem:[%s208 + $0x64] sm:$0xf] %vm3113, %v3074
      %3140 = vst.msk [vmem:[%s208 + $0x68] sm:$0xf] %vm3113, %v3075
      %3141 = vst.msk [vmem:[%s208 + $0x6c] sm:$0xf] %vm3113, %v3076
      %3142 = vst.msk [vmem:[%s208 + $0x70] sm:$0xf] %vm3113, %v3077
      %3143 = vst.msk [vmem:[%s208 + $0x74] sm:$0xf] %vm3113, %v3078
      %3144 = vst.msk [vmem:[%s208 + $0x78] sm:$0xf] %vm3113, %v3079
      %3145 = vst.msk [vmem:[%s208 + $0x7c] sm:$0xf] %vm3113, %v3080
      %v3146 = vsel %vm216, %v2953, 0.0
      %v3147 = vsel %vm216, %v2954, 0.0
      %v3148 = vadd.f32 %v3146, %v3147
      %v3149 = vsel %vm216, %v2955, 0.0
      %v3150 = vadd.f32 %v3148, %v3149
      %v3151 = vsel %vm216, %v2956, 0.0
      %v3152 = vadd.f32 %v3150, %v3151
      %v3153 = vsel %vm216, %v2957, 0.0
      %v3154 = vadd.f32 %v3152, %v3153
      %v3155 = vsel %vm216, %v2958, 0.0
      %v3156 = vadd.f32 %v3154, %v3155
      %v3157 = vsel %vm216, %v2959, 0.0
      %v3158 = vadd.f32 %v3156, %v3157
      %v3159 = vsel %vm216, %v2960, 0.0
      %v3160 = vadd.f32 %v3158, %v3159
      %v3161 = vsel %vm216, %v2961, 0.0
      %v3162 = vadd.f32 %v3160, %v3161
      %v3163 = vsel %vm216, %v2962, 0.0
      %v3164 = vadd.f32 %v3162, %v3163
      %v3165 = vsel %vm216, %v2963, 0.0
      %v3166 = vadd.f32 %v3164, %v3165
      %v3167 = vsel %vm216, %v2964, 0.0
      %v3168 = vadd.f32 %v3166, %v3167
      %v3169 = vsel %vm216, %v2965, 0.0
      %v3170 = vadd.f32 %v3168, %v3169
      %v3171 = vsel %vm216, %v2966, 0.0
      %v3172 = vadd.f32 %v3170, %v3171
      %v3173 = vsel %vm216, %v2967, 0.0
      %v3174 = vadd.f32 %v3172, %v3173
      %v3175 = vsel %vm216, %v2968, 0.0
      %v3176 = vadd.f32 %v3174, %v3175
      %v3177 = vsel %vm216, %v2969, 0.0
      %v3178 = vadd.f32 %v3176, %v3177
      %v3179 = vsel %vm216, %v2970, 0.0
      %v3180 = vadd.f32 %v3178, %v3179
      %v3181 = vsel %vm216, %v2971, 0.0
      %v3182 = vadd.f32 %v3180, %v3181
      %v3183 = vsel %vm216, %v2972, 0.0
      %v3184 = vadd.f32 %v3182, %v3183
      %v3185 = vsel %vm216, %v2973, 0.0
      %v3186 = vadd.f32 %v3184, %v3185
      %v3187 = vsel %vm216, %v2974, 0.0
      %v3188 = vadd.f32 %v3186, %v3187
      %v3189 = vsel %vm216, %v2975, 0.0
      %v3190 = vadd.f32 %v3188, %v3189
      %v3191 = vsel %vm216, %v2976, 0.0
      %v3192 = vadd.f32 %v3190, %v3191
      %v3193 = vsel %vm216, %v2977, 0.0
      %v3194 = vadd.f32 %v3192, %v3193
      %v3195 = vsel %vm216, %v2978, 0.0
      %v3196 = vadd.f32 %v3194, %v3195
      %v3197 = vsel %vm216, %v2979, 0.0
      %v3198 = vadd.f32 %v3196, %v3197
      %v3199 = vsel %vm216, %v2980, 0.0
      %v3200 = vadd.f32 %v3198, %v3199
      %v3201 = vsel %vm216, %v2981, 0.0
      %v3202 = vadd.f32 %v3200, %v3201
      %v3203 = vsel %vm216, %v2982, 0.0
      %v3204 = vadd.f32 %v3202, %v3203
      %v3205 = vsel %vm216, %v2983, 0.0
      %v3206 = vadd.f32 %v3204, %v3205
      %v3207 = vsel %vm216, %v2984, 0.0
      %v3208 = vadd.f32 %v3206, %v3207
      %v3209 = vrot.slane %v3208, 4
      %v3210 = vadd.f32 %v3208, %v3209
      %v3211 = vrot.slane %v3210, 2
      %v3212 = vadd.f32 %v3210, %v3211
      %v3213 = vrot.slane %v3212, 1
      %v3214 = vadd.f32 %v3212, %v3213
      %vm3215 = vcmask 24576
      %3216 = vst.msk [vmem:[%s211] sm:$0x1] %vm3215, %v3214
      %v3217 = vmul.f32 %v2953, %v2953
      %v3218 = vmul.f32 %v2954, %v2954
      %v3219 = vmul.f32 %v2955, %v2955
      %v3220 = vmul.f32 %v2956, %v2956
      %v3221 = vmul.f32 %v2957, %v2957
      %v3222 = vmul.f32 %v2958, %v2958
      %v3223 = vmul.f32 %v2959, %v2959
      %v3224 = vmul.f32 %v2960, %v2960
      %v3225 = vmul.f32 %v2961, %v2961
      %v3226 = vmul.f32 %v2962, %v2962
      %v3227 = vmul.f32 %v2963, %v2963
      %v3228 = vmul.f32 %v2964, %v2964
      %v3229 = vmul.f32 %v2965, %v2965
      %v3230 = vmul.f32 %v2966, %v2966
      %v3231 = vmul.f32 %v2967, %v2967
      %v3232 = vmul.f32 %v2968, %v2968
      %v3233 = vmul.f32 %v2969, %v2969
      %v3234 = vmul.f32 %v2970, %v2970
      %v3235 = vmul.f32 %v2971, %v2971
      %v3236 = vmul.f32 %v2972, %v2972
      %v3237 = vmul.f32 %v2973, %v2973
      %v3238 = vmul.f32 %v2974, %v2974
      %v3239 = vmul.f32 %v2975, %v2975
      %v3240 = vmul.f32 %v2976, %v2976
      %v3241 = vmul.f32 %v2977, %v2977
      %v3242 = vmul.f32 %v2978, %v2978
      %v3243 = vmul.f32 %v2979, %v2979
      %v3244 = vmul.f32 %v2980, %v2980
      %v3245 = vmul.f32 %v2981, %v2981
      %v3246 = vmul.f32 %v2982, %v2982
      %v3247 = vmul.f32 %v2983, %v2983
      %v3248 = vmul.f32 %v2984, %v2984
      %v3249 = vsel %vm216, %v3217, 0.0
      %v3250 = vsel %vm216, %v3218, 0.0
      %v3251 = vadd.f32 %v3249, %v3250
      %v3252 = vsel %vm216, %v3219, 0.0
      %v3253 = vadd.f32 %v3251, %v3252
      %v3254 = vsel %vm216, %v3220, 0.0
      %v3255 = vadd.f32 %v3253, %v3254
      %v3256 = vsel %vm216, %v3221, 0.0
      %v3257 = vadd.f32 %v3255, %v3256
      %v3258 = vsel %vm216, %v3222, 0.0
      %v3259 = vadd.f32 %v3257, %v3258
      %v3260 = vsel %vm216, %v3223, 0.0
      %v3261 = vadd.f32 %v3259, %v3260
      %v3262 = vsel %vm216, %v3224, 0.0
      %v3263 = vadd.f32 %v3261, %v3262
      %v3264 = vsel %vm216, %v3225, 0.0
      %v3265 = vadd.f32 %v3263, %v3264
      %v3266 = vsel %vm216, %v3226, 0.0
      %v3267 = vadd.f32 %v3265, %v3266
      %v3268 = vsel %vm216, %v3227, 0.0
      %v3269 = vadd.f32 %v3267, %v3268
      %v3270 = vsel %vm216, %v3228, 0.0
      %v3271 = vadd.f32 %v3269, %v3270
      %v3272 = vsel %vm216, %v3229, 0.0
      %v3273 = vadd.f32 %v3271, %v3272
      %v3274 = vsel %vm216, %v3230, 0.0
      %v3275 = vadd.f32 %v3273, %v3274
      %v3276 = vsel %vm216, %v3231, 0.0
      %v3277 = vadd.f32 %v3275, %v3276
      %v3278 = vsel %vm216, %v3232, 0.0
      %v3279 = vadd.f32 %v3277, %v3278
      %v3280 = vsel %vm216, %v3233, 0.0
      %v3281 = vadd.f32 %v3279, %v3280
      %v3282 = vsel %vm216, %v3234, 0.0
      %v3283 = vadd.f32 %v3281, %v3282
      %v3284 = vsel %vm216, %v3235, 0.0
      %v3285 = vadd.f32 %v3283, %v3284
      %v3286 = vsel %vm216, %v3236, 0.0
      %v3287 = vadd.f32 %v3285, %v3286
      %v3288 = vsel %vm216, %v3237, 0.0
      %v3289 = vadd.f32 %v3287, %v3288
      %v3290 = vsel %vm216, %v3238, 0.0
      %v3291 = vadd.f32 %v3289, %v3290
      %v3292 = vsel %vm216, %v3239, 0.0
      %v3293 = vadd.f32 %v3291, %v3292
      %v3294 = vsel %vm216, %v3240, 0.0
      %v3295 = vadd.f32 %v3293, %v3294
      %v3296 = vsel %vm216, %v3241, 0.0
      %v3297 = vadd.f32 %v3295, %v3296
      %v3298 = vsel %vm216, %v3242, 0.0
      %v3299 = vadd.f32 %v3297, %v3298
      %v3300 = vsel %vm216, %v3243, 0.0
      %v3301 = vadd.f32 %v3299, %v3300
      %v3302 = vsel %vm216, %v3244, 0.0
      %v3303 = vadd.f32 %v3301, %v3302
      %v3304 = vsel %vm216, %v3245, 0.0
      %v3305 = vadd.f32 %v3303, %v3304
      %v3306 = vsel %vm216, %v3246, 0.0
      %v3307 = vadd.f32 %v3305, %v3306
      %v3308 = vsel %vm216, %v3247, 0.0
      %v3309 = vadd.f32 %v3307, %v3308
      %v3310 = vsel %vm216, %v3248, 0.0
      %v3311 = vadd.f32 %v3309, %v3310
      %v3312 = vrot.slane %v3311, 4
      %v3313 = vadd.f32 %v3311, %v3312
      %v3314 = vrot.slane %v3313, 2
      %v3315 = vadd.f32 %v3313, %v3314
      %v3316 = vrot.slane %v3315, 1
      %v3317 = vadd.f32 %v3315, %v3316
      %3318 = vst.msk [vmem:[%s214] sm:$0x1] %vm3215, %v3317
      %p3319 = scmp.lt.s32.totalorder %s16, 1
      %s3320 = scalar_select %p3319, %s16, 1
      %s3321 = smul.addr %s3320, 32
      %s3322 = smul.addr %s3321, 4
      %s3323 = scalar_lea.vmem %s2, %s3322
      %p3324 = scmp.lt.s32.totalorder %s16, 1
      %s3325 = scalar_select %p3324, %s16, 1
      %s3326 = scalar_lea.vmem %s3, %s3325
      %p3327 = scmp.lt.s32.totalorder %s16, 1
      %s3328 = scalar_select %p3327, %s16, 1
      %s3329 = scalar_lea.vmem %s4, %s3328
      // Predicated region
      $region29: #{basic_block_forward_nhwc.3} parent=27 // pred_check
        %p3330 = pneg %p81
      $region30: #{basic_block_forward_nhwc.3} parent=27 // pred_check_branch
        %3332 = sbr.rel (%p3330) target = $region32
      $region31: #{basic_block_forward_nhwc.3} parent=27 // pred_region
        _
      $region32: #{basic_block_forward_nhwc.3} parent=27 // pred_fallthru
        _
      // Predicated region
      $region33: #{basic_block_forward_nhwc.3} parent=27 // pred_check
        %p3333 = pneg %p107
      $region34: #{basic_block_forward_nhwc.3} parent=27 // pred_check_branch
        %3335 = sbr.rel (%p3333) target = $region36
      $region35: #{basic_block_forward_nhwc.3} parent=27 // pred_region
        _
      $region36: #{basic_block_forward_nhwc.3} parent=27 // pred_fallthru
        _
      // Predicated region
      $region37: #{basic_block_forward_nhwc.3} parent=27 // pred_check
        %p3336 = pneg %p133
      $region38: #{basic_block_forward_nhwc.3} parent=27 // pred_check_branch
        %3338 = sbr.rel (%p3336) target = $region40
      $region39: #{basic_block_forward_nhwc.3} parent=27 // pred_region
        _
      $region40: #{basic_block_forward_nhwc.3} parent=27 // pred_fallthru
        _
    $region28: #{basic_block_forward_nhwc.3} parent=5 // pred_fallthru
      _
    %p3339 = scmp.le.s32.totalorder 2, %s11
    // Predicated region
    $region41: #{basic_block_forward_nhwc.3} parent=5 // pred_check
      %p3340 = pneg %p3339
    $region42: #{basic_block_forward_nhwc.3} parent=5 // pred_check_branch
      %3342 = sbr.rel (%p3340) target = $region44
    $region43: #{basic_block_forward_nhwc.3} parent=5 // pred_region
      %s3343 = ssub.s32 %s11, 2
      // Predicated region
      $region45: #{basic_block_forward_nhwc.3} parent=43 // pred_check
        %p3344 = pneg %p87
      $region46: #{basic_block_forward_nhwc.3} parent=43 // pred_check_branch
        %3346 = sbr.rel (%p3344) target = $region48
      $region47: #{basic_block_forward_nhwc.3} parent=43 // pred_region
        %p3347 = scmp.lt.s32.totalorder %s17, 1
        %s3348 = scalar_select %p3347, %s17, 1
        %s3349 = smul.addr %s3348, 32
        %s3350 = smul.addr %s3349, 4
        %s3351 = scalar_lea.vmem %s2, %s3350
      $region48: #{basic_block_forward_nhwc.3} parent=43 // pred_fallthru
        _
      // Predicated region
      $region49: #{basic_block_forward_nhwc.3} parent=43 // pred_check
        %p3352 = pneg %p113
      $region50: #{basic_block_forward_nhwc.3} parent=43 // pred_check_branch
        %3354 = sbr.rel (%p3352) target = $region52
      $region51: #{basic_block_forward_nhwc.3} parent=43 // pred_region
        %p3355 = scmp.lt.s32.totalorder %s17, 1
        %s3356 = scalar_select %p3355, %s17, 1
        %s3357 = scalar_lea.vmem %s3, %s3356
      $region52: #{basic_block_forward_nhwc.3} parent=43 // pred_fallthru
        _
      // Predicated region
      $region53: #{basic_block_forward_nhwc.3} parent=43 // pred_check
        %p3358 = pneg %p139
      $region54: #{basic_block_forward_nhwc.3} parent=43 // pred_check_branch
        %3360 = sbr.rel (%p3358) target = $region56
      $region55: #{basic_block_forward_nhwc.3} parent=43 // pred_region
        %p3361 = scmp.lt.s32.totalorder %s17, 1
        %s3362 = scalar_select %p3361, %s17, 1
        %s3363 = scalar_lea.vmem %s4, %s3362
      $region56: #{basic_block_forward_nhwc.3} parent=43 // pred_fallthru
        _
    $region44: #{basic_block_forward_nhwc.3} parent=5 // pred_fallthru
      _
  $region6: #{basic_block_forward_nhwc.3} parent=0 // loop_footer
    %s15 = sadd.s32 1, %s11
  $region7: #{basic_block_forward_nhwc.3} parent=0 // loop_footer_branch
    %10 = sbr.rel target = $region3
  $region8: #{basic_block_forward_nhwc.3} parent=0 // loop_exit
    _

// kernel: basic_block_forward_nhwc.4
$region0: #{basic_block_forward_nhwc.4}
  #allocation0 [shape = 'u32[]', space=smem, size = 0x4, offset = 0x4, fixed_abs, tag = 'smem constant byte address 0x4 - core index']
  #allocation1 [shape = 'u32[144,128]{1,0:T(1,128)}', space=vmem, size = 0x12000, scoped, tag = 'internal scratch']
  #allocation2 [shape = 'f32[18,32,4]{2,1,0:T(8,128)}', space=vmem, size = 0x48000, scoped, tag = 'scratch operand']
  %s0 = inlined_call_operand.vmem [shape: bf16[2,16,16,4], index: 0, kind: input, shape index: {}]
  %s1 = inlined_call_operand.vmem [shape: f32[1,4], index: 1, kind: input, shape index: {}]
  %s2 = inlined_call_operand.vmem [shape: f32[1,4], index: 2, kind: input, shape index: {}]
  %s3 = inlined_call_operand.vmem [shape: bf16[9,4,4], index: 3, kind: input, shape index: {}]
  %s4 = inlined_call_operand.vmem [shape: bf16[2,16,16,4], index: 4, kind: output, shape index: {0}]
  %s5 = inlined_call_operand.vmem [shape: f32[2,1,4], index: 5, kind: output, shape index: {1}]
  %s6 = inlined_call_operand.vmem [shape: f32[2,1,4], index: 6, kind: output, shape index: {2}]
  %7 = xla_tuple %s4, %s5, %s6
  %s8 = sld [smem:[#allocation0]]
  $region65: #{basic_block_forward_nhwc.4} parent=0
    _
  %s10 = ssub.s32 1, %s8
  %s11 = scalar_select 0, %s10, %s8
  loop: start=0, step=1, limit=4
  $region2: #{basic_block_forward_nhwc.4} parent=0 // loop_pre_header
    _
  $region3: #{basic_block_forward_nhwc.4} parent=0 // loop_header
    %s13 = sphi 0, %s17
    %p14 = scmp.ge.s32.totalorder %s13, 4
    %s23 = sphi 0, %s25
    %s26 = sphi 0, %s23
    %s27 = sphi 0, %s26
    %s43 = sphi 0, %s27
    %s47 = sphi 0, %s47
    %s49 = sphi 0, %s47
    %s50 = sphi 0, %s49
    %s64 = sphi 0, %s50
    %s68 = sphi 0, %s68
    %s70 = sphi 0, %s68
    %s71 = sphi 0, %s70
    %s85 = sphi 0, %s71
    %s89 = sphi 0, %s89
    %s91 = sphi 0, %s89
    %s92 = sphi 0, %s91
    %s106 = sphi 0, %s92
    %s112 = sphi 0, %s114
    %s115 = sphi 0, %s112
    %s116 = sphi 0, %s115
    %s132 = sphi 0, %s116
    %s138 = sphi 0, %s140
    %s141 = sphi 0, %s138
    %s142 = sphi 0, %s141
    %s158 = sphi 0, %s142
    %s164 = sphi 0, %s166
    %s167 = sphi 0, %s164
    %s168 = sphi 0, %s167
    %s184 = sphi 0, %s168
  $region4: #{basic_block_forward_nhwc.4} parent=0 // loop_header_branch
    %16 = sbr.rel (%p14) target = $region8
  $region5: #{basic_block_forward_nhwc.4} parent=0 // loop_body
    %s18 = ssub.s32 %s13, 1
    %s19 = ssub.s32 %s13, 2
    %s20 = sadd.s32 %s13, 1
    %s21 = ssub.s32 %s13, %s20
    %p22 = scmp.eq.s32.totalorder %s21, 0
    %s24 = sadd.s32 %s23, 1
    %s25 = scalar_select %p22, %s23, %s24
    %p28 = pneg %p22
    %p29 = scmp.eq.s32.totalorder %s13, 1
    %p30 = por %p28, %p29
    %p31 = scmp.ne.s32.totalorder %s23, %s26
    %p32 = scmp.eq.s32.totalorder %s13, 0
    %p33 = por %p31, %p32
    %p34 = scmp.ne.s32.totalorder %s23, %s26
    %p35 = scmp.eq.s32.totalorder %s18, 1
    %p36 = por %p34, %p35
    %p37 = scmp.ne.s32.totalorder %s26, %s27
    %p38 = scmp.eq.s32.totalorder %s18, 0
    %p39 = por %p37, %p38
    %p40 = scmp.ne.s32.totalorder %s26, %s27
    %p41 = scmp.eq.s32.totalorder %s19, 1
    %p42 = por %p40, %p41
    %p44 = scmp.ne.s32.totalorder %s27, %s43
    %p45 = scmp.eq.s32.totalorder %s19, 0
    %p46 = por %p44, %p45
    %s48 = sadd.s32 %s47, 1
    %p51 = scmp.eq.s32.totalorder %s13, 1
    %p52 = scmp.ne.s32.totalorder %s47, %s49
    %p53 = scmp.eq.s32.totalorder %s13, 0
    %p54 = por %p52, %p53
    %p55 = scmp.ne.s32.totalorder %s47, %s49
    %p56 = scmp.eq.s32.totalorder %s18, 1
    %p57 = por %p55, %p56
    %p58 = scmp.ne.s32.totalorder %s49, %s50
    %p59 = scmp.eq.s32.totalorder %s18, 0
    %p60 = por %p58, %p59
    %p61 = scmp.ne.s32.totalorder %s49, %s50
    %p62 = scmp.eq.s32.totalorder %s19, 1
    %p63 = por %p61, %p62
    %p65 = scmp.ne.s32.totalorder %s50, %s64
    %p66 = scmp.eq.s32.totalorder %s19, 0
    %p67 = por %p65, %p66
    %s69 = sadd.s32 %s68, 1
    %p72 = scmp.eq.s32.totalorder %s13, 1
    %p73 = scmp.ne.s32.totalorder %s68, %s70
    %p74 = scmp.eq.s32.totalorder %s13, 0
    %p75 = por %p73, %p74
    %p76 = scmp.ne.s32.totalorder %s68, %s70
    %p77 = scmp.eq.s32.totalorder %s18, 1
    %p78 = por %p76, %p77
    %p79 = scmp.ne.s32.totalorder %s70, %s71
    %p80 = scmp.eq.s32.totalorder %s18, 0
    %p81 = por %p79, %p80
    %p82 = scmp.ne.s32.totalorder %s70, %s71
    %p83 = scmp.eq.s32.totalorder %s19, 1
    %p84 = por %p82, %p83
    %p86 = scmp.ne.s32.totalorder %s71, %s85
    %p87 = scmp.eq.s32.totalorder %s19, 0
    %p88 = por %p86, %p87
    %s90 = sadd.s32 %s89, 1
    %p93 = scmp.eq.s32.totalorder %s13, 1
    %p94 = scmp.ne.s32.totalorder %s89, %s91
    %p95 = scmp.eq.s32.totalorder %s13, 0
    %p96 = por %p94, %p95
    %p97 = scmp.ne.s32.totalorder %s89, %s91
    %p98 = scmp.eq.s32.totalorder %s18, 1
    %p99 = por %p97, %p98
    %p100 = scmp.ne.s32.totalorder %s91, %s92
    %p101 = scmp.eq.s32.totalorder %s18, 0
    %p102 = por %p100, %p101
    %p103 = scmp.ne.s32.totalorder %s91, %s92
    %p104 = scmp.eq.s32.totalorder %s19, 1
    %p105 = por %p103, %p104
    %p107 = scmp.ne.s32.totalorder %s92, %s106
    %p108 = scmp.eq.s32.totalorder %s19, 0
    %p109 = por %p107, %p108
    %s110 = ssub.s32 %s13, %s20
    %p111 = scmp.eq.s32.totalorder %s110, 0
    %s113 = sadd.s32 %s112, 1
    %s114 = scalar_select %p111, %s112, %s113
    %p117 = pneg %p111
    %p118 = scmp.eq.s32.totalorder %s13, 1
    %p119 = por %p117, %p118
    %p120 = scmp.ne.s32.totalorder %s112, %s115
    %p121 = scmp.eq.s32.totalorder %s13, 0
    %p122 = por %p120, %p121
    %p123 = scmp.ne.s32.totalorder %s112, %s115
    %p124 = scmp.eq.s32.totalorder %s18, 1
    %p125 = por %p123, %p124
    %p126 = scmp.ne.s32.totalorder %s115, %s116
    %p127 = scmp.eq.s32.totalorder %s18, 0
    %p128 = por %p126, %p127
    %p129 = scmp.ne.s32.totalorder %s115, %s116
    %p130 = scmp.eq.s32.totalorder %s19, 1
    %p131 = por %p129, %p130
    %p133 = scmp.ne.s32.totalorder %s116, %s132
    %p134 = scmp.eq.s32.totalorder %s19, 0
    %p135 = por %p133, %p134
    %s136 = ssub.s32 %s13, %s20
    %p137 = scmp.eq.s32.totalorder %s136, 0
    %s139 = sadd.s32 %s138, 1
    %s140 = scalar_select %p137, %s138, %s139
    %p143 = pneg %p137
    %p144 = scmp.eq.s32.totalorder %s13, 1
    %p145 = por %p143, %p144
    %p146 = scmp.ne.s32.totalorder %s138, %s141
    %p147 = scmp.eq.s32.totalorder %s13, 0
    %p148 = por %p146, %p147
    %p149 = scmp.ne.s32.totalorder %s138, %s141
    %p150 = scmp.eq.s32.totalorder %s18, 1
    %p151 = por %p149, %p150
    %p152 = scmp.ne.s32.totalorder %s141, %s142
    %p153 = scmp.eq.s32.totalorder %s18, 0
    %p154 = por %p152, %p153
    %p155 = scmp.ne.s32.totalorder %s141, %s142
    %p156 = scmp.eq.s32.totalorder %s19, 1
    %p157 = por %p155, %p156
    %p159 = scmp.ne.s32.totalorder %s142, %s158
    %p160 = scmp.eq.s32.totalorder %s19, 0
    %p161 = por %p159, %p160
    %s162 = ssub.s32 %s13, %s20
    %p163 = scmp.eq.s32.totalorder %s162, 0
    %s165 = sadd.s32 %s164, 1
    %s166 = scalar_select %p163, %s164, %s165
    %p169 = pneg %p163
    %p170 = scmp.eq.s32.totalorder %s13, 1
    %p171 = por %p169, %p170
    %p172 = scmp.ne.s32.totalorder %s164, %s167
    %p173 = scmp.eq.s32.totalorder %s13, 0
    %p174 = por %p172, %p173
    %p175 = scmp.ne.s32.totalorder %s164, %s167
    %p176 = scmp.eq.s32.totalorder %s18, 1
    %p177 = por %p175, %p176
    %p178 = scmp.ne.s32.totalorder %s167, %s168
    %p179 = scmp.eq.s32.totalorder %s18, 0
    %p180 = por %p178, %p179
    %p181 = scmp.ne.s32.totalorder %s167, %s168
    %p182 = scmp.eq.s32.totalorder %s19, 1
    %p183 = por %p181, %p182
    %p185 = scmp.ne.s32.totalorder %s168, %s184
    %p186 = scmp.eq.s32.totalorder %s19, 0
    %p187 = por %p185, %p186
    %p188 = scmp.le.s32.totalorder 1, %s13
    %p189 = scmp.lt.s32.totalorder %s13, 3
    %p190 = pnand %p188, %p189
    %p191 = pneg %p190
    // Predicated region
    $region9: #{basic_block_forward_nhwc.4} parent=5 // pred_check
      _
    $region10: #{basic_block_forward_nhwc.4} parent=5 // pred_check_branch
      %193 = sbr.rel (%p190) target = $region12
    $region11: #{basic_block_forward_nhwc.4} parent=5 // pred_region
      %s194 = ssub.s32 %s13, 1
      // Predicated region
      $region13: #{basic_block_forward_nhwc.4} parent=11 // pred_check
        %p195 = pneg %p60
      $region14: #{basic_block_forward_nhwc.4} parent=11 // pred_check_branch
        %197 = sbr.rel (%p195) target = $region16
      $region15: #{basic_block_forward_nhwc.4} parent=11 // pred_region
        _
      $region16: #{basic_block_forward_nhwc.4} parent=11 // pred_fallthru
        _
      // Predicated region
      $region17: #{basic_block_forward_nhwc.4} parent=11 // pred_check
        %p198 = pneg %p81
      $region18: #{basic_block_forward_nhwc.4} parent=11 // pred_check_branch
        %200 = sbr.rel (%p198) target = $region20
      $region19: #{basic_block_forward_nhwc.4} parent=11 // pred_region
        _
      $region20: #{basic_block_forward_nhwc.4} parent=11 // pred_fallthru
        _
      // Predicated region
      $region21: #{basic_block_forward_nhwc.4} parent=11 // pred_check
        %p201 = pneg %p102
      $region22: #{basic_block_forward_nhwc.4} parent=11 // pred_check_branch
        %203 = sbr.rel (%p201) target = $region24
      $region23: #{basic_block_forward_nhwc.4} parent=11 // pred_region
        _
      $region24: #{basic_block_forward_nhwc.4} parent=11 // pred_fallthru
        _
    $region12: #{basic_block_forward_nhwc.4} parent=5 // pred_fallthru
      _
    %p204 = scmp.lt.s32.totalorder %s13, 2
    // Predicated region
    $region25: #{basic_block_forward_nhwc.4} parent=5 // pred_check
      %p205 = pneg %p204
    $region26: #{basic_block_forward_nhwc.4} parent=5 // pred_check_branch
      %207 = sbr.rel (%p205) target = $region28
    $region27: #{basic_block_forward_nhwc.4} parent=5 // pred_region
      // Predicated region
      $region29: #{basic_block_forward_nhwc.4} parent=27 // pred_check
        %p208 = pneg %p33
      $region30: #{basic_block_forward_nhwc.4} parent=27 // pred_check_branch
        %210 = sbr.rel (%p208) target = $region32
      $region31: #{basic_block_forward_nhwc.4} parent=27 // pred_region
        %p211 = scmp.lt.s32.totalorder %s13, 1
        %s212 = scalar_select %p211, %s13, 1
        %s213 = smul.addr %s212, 32
        %s214 = smul.addr %s213, 4
        %s215 = scalar_lea.vmem %s0, %s214
      $region32: #{basic_block_forward_nhwc.4} parent=27 // pred_fallthru
        _
    $region28: #{basic_block_forward_nhwc.4} parent=5 // pred_fallthru
      _
    %p216 = scmp.le.s32.totalorder 1, %s13
    %p217 = scmp.lt.s32.totalorder %s13, 3
    %p218 = pnand %p216, %p217
    %p219 = pneg %p218
    // Predicated region
    $region33: #{basic_block_forward_nhwc.4} parent=5 // pred_check
      _
    $region34: #{basic_block_forward_nhwc.4} parent=5 // pred_check_branch
      %221 = sbr.rel (%p218) target = $region36
    $region35: #{basic_block_forward_nhwc.4} parent=5 // pred_region
      %s222 = ssub.s32 %s13, 1
      %p223 = scmp.lt.s32.totalorder %s18, 1
      %s224 = scalar_select %p223, %s18, 1
      %s225 = smul.addr %s224, 32
      %s226 = smul.addr %s225, 4
      %s227 = scalar_lea.vmem %s0, %s226
      %p228 = pneg %p39
      %p229 = pneg %p36
      %p230 = pneg %p60
      %p231 = pneg %p57
      %p232 = pneg %p81
      %p233 = pneg %p78
      %p234 = pneg %p102
      %p235 = pneg %p99
      %p236 = pneg %p128
      %p237 = pneg %p125
      %p238 = scmp.lt.s32.totalorder %s18, 1
      %s239 = scalar_select %p238, %s18, 1
      %s240 = smul.addr %s239, 32
      %s241 = smul.addr %s240, 4
      %s242 = scalar_lea.vmem %s4, %s241
      %p243 = pneg %p154
      %p244 = pneg %p151
      %p245 = scmp.lt.s32.totalorder %s18, 1
      %s246 = scalar_select %p245, %s18, 1
      %s247 = scalar_lea.vmem %s5, %s246
      %p248 = pneg %p180
      %p249 = pneg %p177
      %p250 = scmp.lt.s32.totalorder %s18, 1
      %s251 = scalar_select %p250, %s18, 1
      %s252 = scalar_lea.vmem %s6, %s251
      %p253 = scmp.lt.s32.totalorder %s18, 1
      %s254 = scalar_select %p253, %s18, 1
      %s255 = smul.addr %s254, 32
      %s256 = smul.addr %s255, 4
      %s257 = scalar_lea.vmem %s0, %s256
      %p258 = scmp.lt.s32.totalorder %s18, 1
      %s259 = scalar_select %p258, %s18, 1
      %s260 = smul.addr %s259, 32
      %s261 = smul.addr %s260, 4
      %s262 = scalar_lea.vmem %s4, %s261
      %p263 = scmp.lt.s32.totalorder %s18, 1
      %s264 = scalar_select %p263, %s18, 1
      %s265 = scalar_lea.vmem %s5, %s264
      %p266 = scmp.lt.s32.totalorder %s18, 1
      %s267 = scalar_select %p266, %s18, 1
      %s268 = scalar_lea.vmem %s6, %s267
      %v270 = vld [vmem:[%s257] sm:$0xf]
      %v271 = vld [vmem:[%s257 + $0x4] sm:$0xf]
      %v272 = vld [vmem:[%s257 + $0x8] sm:$0xf]
      %v273 = vld [vmem:[%s257 + $0xc] sm:$0xf]
      %v274 = vld [vmem:[%s257 + $0x10] sm:$0xf]
      %v275 = vld [vmem:[%s257 + $0x14] sm:$0xf]
      %v276 = vld [vmem:[%s257 + $0x18] sm:$0xf]
      %v277 = vld [vmem:[%s257 + $0x1c] sm:$0xf]
      %v278 = vld [vmem:[%s257 + $0x20] sm:$0xf]
      %v279 = vld [vmem:[%s257 + $0x24] sm:$0xf]
      %v280 = vld [vmem:[%s257 + $0x28] sm:$0xf]
      %v281 = vld [vmem:[%s257 + $0x2c] sm:$0xf]
      %v282 = vld [vmem:[%s257 + $0x30] sm:$0xf]
      %v283 = vld [vmem:[%s257 + $0x34] sm:$0xf]
      %v284 = vld [vmem:[%s257 + $0x38] sm:$0xf]
      %v285 = vld [vmem:[%s257 + $0x3c] sm:$0xf]
      %v286 = vld [vmem:[%s257 + $0x40] sm:$0xf]
      %v287 = vld [vmem:[%s257 + $0x44] sm:$0xf]
      %v288 = vld [vmem:[%s257 + $0x48] sm:$0xf]
      %v289 = vld [vmem:[%s257 + $0x4c] sm:$0xf]
      %v290 = vld [vmem:[%s257 + $0x50] sm:$0xf]
      %v291 = vld [vmem:[%s257 + $0x54] sm:$0xf]
      %v292 = vld [vmem:[%s257 + $0x58] sm:$0xf]
      %v293 = vld [vmem:[%s257 + $0x5c] sm:$0xf]
      %v294 = vld [vmem:[%s257 + $0x60] sm:$0xf]
      %v295 = vld [vmem:[%s257 + $0x64] sm:$0xf]
      %v296 = vld [vmem:[%s257 + $0x68] sm:$0xf]
      %v297 = vld [vmem:[%s257 + $0x6c] sm:$0xf]
      %v298 = vld [vmem:[%s257 + $0x70] sm:$0xf]
      %v299 = vld [vmem:[%s257 + $0x74] sm:$0xf]
      %v300 = vld [vmem:[%s257 + $0x78] sm:$0xf]
      %v301 = vld [vmem:[%s257 + $0x7c] sm:$0xf]
      %v302 = vunpack.c.l.bf16 %v270
      %v303 = vunpack.c.l.bf16 %v271
      %v304 = vunpack.c.l.bf16 %v272
      %v305 = vunpack.c.l.bf16 %v273
      %v306 = vunpack.c.l.bf16 %v274
      %v307 = vunpack.c.l.bf16 %v275
      %v308 = vunpack.c.l.bf16 %v276
      %v309 = vunpack.c.l.bf16 %v277
      %v310 = vunpack.c.l.bf16 %v278
      %v311 = vunpack.c.l.bf16 %v279
      %v312 = vunpack.c.l.bf16 %v280
      %v313 = vunpack.c.l.bf16 %v281
      %v314 = vunpack.c.l.bf16 %v282
      %v315 = vunpack.c.l.bf16 %v283
      %v316 = vunpack.c.l.bf16 %v284
      %v317 = vunpack.c.l.bf16 %v285
      %v318 = vunpack.c.l.bf16 %v286
      %v319 = vunpack.c.l.bf16 %v287
      %v320 = vunpack.c.l.bf16 %v288
      %v321 = vunpack.c.l.bf16 %v289
      %v322 = vunpack.c.l.bf16 %v290
      %v323 = vunpack.c.l.bf16 %v291
      %v324 = vunpack.c.l.bf16 %v292
      %v325 = vunpack.c.l.bf16 %v293
      %v326 = vunpack.c.l.bf16 %v294
      %v327 = vunpack.c.l.bf16 %v295
      %v328 = vunpack.c.l.bf16 %v296
      %v329 = vunpack.c.l.bf16 %v297
      %v330 = vunpack.c.l.bf16 %v298
      %v331 = vunpack.c.l.bf16 %v299
      %v332 = vunpack.c.l.bf16 %v300
      %v333 = vunpack.c.l.bf16 %v301
      %v334 = vld [vmem:[%s1] sm:$0x1]
      %v336 = vlaneseq
      %v337 = vshrl.u32 %v336, 7
      %v338 = vsub.s32 0, %v337
      %v339 = vrot.slane %v334, %v338
      %v341 = vmul.f32 %v302, %v339
      %v342 = vmul.f32 %v303, %v339
      %v343 = vmul.f32 %v304, %v339
      %v344 = vmul.f32 %v305, %v339
      %v345 = vmul.f32 %v306, %v339
      %v346 = vmul.f32 %v307, %v339
      %v347 = vmul.f32 %v308, %v339
      %v348 = vmul.f32 %v309, %v339
      %v349 = vmul.f32 %v310, %v339
      %v350 = vmul.f32 %v311, %v339
      %v351 = vmul.f32 %v312, %v339
      %v352 = vmul.f32 %v313, %v339
      %v353 = vmul.f32 %v314, %v339
      %v354 = vmul.f32 %v315, %v339
      %v355 = vmul.f32 %v316, %v339
      %v356 = vmul.f32 %v317, %v339
      %v357 = vmul.f32 %v318, %v339
      %v358 = vmul.f32 %v319, %v339
      %v359 = vmul.f32 %v320, %v339
      %v360 = vmul.f32 %v321, %v339
      %v361 = vmul.f32 %v322, %v339
      %v362 = vmul.f32 %v323, %v339
      %v363 = vmul.f32 %v324, %v339
      %v364 = vmul.f32 %v325, %v339
      %v365 = vmul.f32 %v326, %v339
      %v366 = vmul.f32 %v327, %v339
      %v367 = vmul.f32 %v328, %v339
      %v368 = vmul.f32 %v329, %v339
      %v369 = vmul.f32 %v330, %v339
      %v370 = vmul.f32 %v331, %v339
      %v371 = vmul.f32 %v332, %v339
      %v372 = vmul.f32 %v333, %v339
      %v373 = vld [vmem:[%s2] sm:$0x1]
      %v375 = vlaneseq
      %v376 = vshrl.u32 %v375, 7
      %v377 = vsub.s32 0, %v376
      %v378 = vrot.slane %v373, %v377
      %v380 = vadd.f32 %v341, %v378
      %v381 = vadd.f32 %v342, %v378
      %v382 = vadd.f32 %v343, %v378
      %v383 = vadd.f32 %v344, %v378
      %v384 = vadd.f32 %v345, %v378
      %v385 = vadd.f32 %v346, %v378
      %v386 = vadd.f32 %v347, %v378
      %v387 = vadd.f32 %v348, %v378
      %v388 = vadd.f32 %v349, %v378
      %v389 = vadd.f32 %v350, %v378
      %v390 = vadd.f32 %v351, %v378
      %v391 = vadd.f32 %v352, %v378
      %v392 = vadd.f32 %v353, %v378
      %v393 = vadd.f32 %v354, %v378
      %v394 = vadd.f32 %v355, %v378
      %v395 = vadd.f32 %v356, %v378
      %v396 = vadd.f32 %v357, %v378
      %v397 = vadd.f32 %v358, %v378
      %v398 = vadd.f32 %v359, %v378
      %v399 = vadd.f32 %v360, %v378
      %v400 = vadd.f32 %v361, %v378
      %v401 = vadd.f32 %v362, %v378
      %v402 = vadd.f32 %v363, %v378
      %v403 = vadd.f32 %v364, %v378
      %v404 = vadd.f32 %v365, %v378
      %v405 = vadd.f32 %v366, %v378
      %v406 = vadd.f32 %v367, %v378
      %v407 = vadd.f32 %v368, %v378
      %v408 = vadd.f32 %v369, %v378
      %v409 = vadd.f32 %v370, %v378
      %v410 = vadd.f32 %v371, %v378
      %v411 = vadd.f32 %v372, %v378
      %v412 = vmax.f32 %v380, 0.0
      %v413 = vmax.f32 %v381, 0.0
      %v414 = vmax.f32 %v382, 0.0
      %v415 = vmax.f32 %v383, 0.0
      %v416 = vmax.f32 %v384, 0.0
      %v417 = vmax.f32 %v385, 0.0
      %v418 = vmax.f32 %v386, 0.0
      %v419 = vmax.f32 %v387, 0.0
      %v420 = vmax.f32 %v388, 0.0
      %v421 = vmax.f32 %v389, 0.0
      %v422 = vmax.f32 %v390, 0.0
      %v423 = vmax.f32 %v391, 0.0
      %v424 = vmax.f32 %v392, 0.0
      %v425 = vmax.f32 %v393, 0.0
      %v426 = vmax.f32 %v394, 0.0
      %v427 = vmax.f32 %v395, 0.0
      %v428 = vmax.f32 %v396, 0.0
      %v429 = vmax.f32 %v397, 0.0
      %v430 = vmax.f32 %v398, 0.0
      %v431 = vmax.f32 %v399, 0.0
      %v432 = vmax.f32 %v400, 0.0
      %v433 = vmax.f32 %v401, 0.0
      %v434 = vmax.f32 %v402, 0.0
      %v435 = vmax.f32 %v403, 0.0
      %v436 = vmax.f32 %v404, 0.0
      %v437 = vmax.f32 %v405, 0.0
      %v438 = vmax.f32 %v406, 0.0
      %v439 = vmax.f32 %v407, 0.0
      %v440 = vmax.f32 %v408, 0.0
      %v441 = vmax.f32 %v409, 0.0
      %v442 = vmax.f32 %v410, 0.0
      %v443 = vmax.f32 %v411, 0.0
      %vm444 = vcmask 31744
      %445 = vst.msk [vmem:[#allocation2] sm:$0xff] %vm444, 0.0
      %446 = vst.msk [vmem:[#allocation2 + $0x8] sm:$0xff] %vm444, 0.0
      %447 = vst.msk [vmem:[#allocation2 + $0x10] sm:$0xff] %vm444, 0.0
      %448 = vst.msk [vmem:[#allocation2 + $0x18] sm:$0xff] %vm444, 0.0
      %449 = vst.msk [vmem:[#allocation2 + $0x20] sm:$0xff] %vm444, 0.0
      %450 = vst.msk [vmem:[#allocation2 + $0x28] sm:$0xff] %vm444, 0.0
      %451 = vst.msk [vmem:[#allocation2 + $0x30] sm:$0xff] %vm444, 0.0
      %452 = vst.msk [vmem:[#allocation2 + $0x38] sm:$0xff] %vm444, 0.0
      %453 = vst.msk [vmem:[#allocation2 + $0x40] sm:$0xff] %vm444, 0.0
      %454 = vst.msk [vmem:[#allocation2 + $0x48] sm:$0xff] %vm444, 0.0
      %455 = vst.msk [vmem:[#allocation2 + $0x50] sm:$0xff] %vm444, 0.0
      %456 = vst.msk [vmem:[#allocation2 + $0x58] sm:$0xff] %vm444, 0.0
      %457 = vst.msk [vmem:[#allocation2 + $0x60] sm:$0xff] %vm444, 0.0
      %458 = vst.msk [vmem:[#allocation2 + $0x68] sm:$0xff] %vm444, 0.0
      %459 = vst.msk [vmem:[#allocation2 + $0x70] sm:$0xff] %vm444, 0.0
      %460 = vst.msk [vmem:[#allocation2 + $0x78] sm:$0xff] %vm444, 0.0
      %461 = vst.msk [vmem:[#allocation2 + $0x80] sm:$0xff] %vm444, 0.0
      %462 = vst.msk [vmem:[#allocation2 + $0x88] sm:$0xff] %vm444, 0.0
      %463 = vst.msk [vmem:[#allocation2 + $0x90] sm:$0xff] %vm444, 0.0
      %464 = vst.msk [vmem:[#allocation2 + $0x98] sm:$0xff] %vm444, 0.0
      %465 = vst.msk [vmem:[#allocation2 + $0xa0] sm:$0xff] %vm444, 0.0
      %466 = vst.msk [vmem:[#allocation2 + $0xa8] sm:$0xff] %vm444, 0.0
      %467 = vst.msk [vmem:[#allocation2 + $0xb0] sm:$0xff] %vm444, 0.0
      %468 = vst.msk [vmem:[#allocation2 + $0xb8] sm:$0xff] %vm444, 0.0
      %469 = vst.msk [vmem:[#allocation2 + $0xc0] sm:$0xff] %vm444, 0.0
      %470 = vst.msk [vmem:[#allocation2 + $0xc8] sm:$0xff] %vm444, 0.0
      %471 = vst.msk [vmem:[#allocation2 + $0xd0] sm:$0xff] %vm444, 0.0
      %472 = vst.msk [vmem:[#allocation2 + $0xd8] sm:$0xff] %vm444, 0.0
      %473 = vst.msk [vmem:[#allocation2 + $0xe0] sm:$0xff] %vm444, 0.0
      %474 = vst.msk [vmem:[#allocation2 + $0xe8] sm:$0xff] %vm444, 0.0
      %475 = vst.msk [vmem:[#allocation2 + $0xf0] sm:$0xff] %vm444, 0.0
      %476 = vst.msk [vmem:[#allocation2 + $0xf8] sm:$0xff] %vm444, 0.0
      %477 = vst.msk [vmem:[#allocation2 + $0x100] sm:$0xff] %vm444, 0.0
      %478 = vst.msk [vmem:[#allocation2 + $0x108] sm:$0xff] %vm444, 0.0
      %479 = vst.msk [vmem:[#allocation2 + $0x110] sm:$0xff] %vm444, 0.0
      %480 = vst.msk [vmem:[#allocation2 + $0x118] sm:$0xff] %vm444, 0.0
      %481 = vst.msk [vmem:[#allocation2 + $0x120] sm:$0xff] %vm444, 0.0
      %482 = vst.msk [vmem:[#allocation2 + $0x128] sm:$0xff] %vm444, 0.0
      %483 = vst.msk [vmem:[#allocation2 + $0x130] sm:$0xff] %vm444, 0.0
      %484 = vst.msk [vmem:[#allocation2 + $0x138] sm:$0xff] %vm444, 0.0
      %485 = vst.msk [vmem:[#allocation2 + $0x140] sm:$0xff] %vm444, 0.0
      %486 = vst.msk [vmem:[#allocation2 + $0x148] sm:$0xff] %vm444, 0.0
      %487 = vst.msk [vmem:[#allocation2 + $0x150] sm:$0xff] %vm444, 0.0
      %488 = vst.msk [vmem:[#allocation2 + $0x158] sm:$0xff] %vm444, 0.0
      %489 = vst.msk [vmem:[#allocation2 + $0x160] sm:$0xff] %vm444, 0.0
      %490 = vst.msk [vmem:[#allocation2 + $0x168] sm:$0xff] %vm444, 0.0
      %491 = vst.msk [vmem:[#allocation2 + $0x170] sm:$0xff] %vm444, 0.0
      %492 = vst.msk [vmem:[#allocation2 + $0x178] sm:$0xff] %vm444, 0.0
      %493 = vst.msk [vmem:[#allocation2 + $0x180] sm:$0xff] %vm444, 0.0
      %494 = vst.msk [vmem:[#allocation2 + $0x188] sm:$0xff] %vm444, 0.0
      %495 = vst.msk [vmem:[#allocation2 + $0x190] sm:$0xff] %vm444, 0.0
      %496 = vst.msk [vmem:[#allocation2 + $0x198] sm:$0xff] %vm444, 0.0
      %497 = vst.msk [vmem:[#allocation2 + $0x1a0] sm:$0xff] %vm444, 0.0
      %498 = vst.msk [vmem:[#allocation2 + $0x1a8] sm:$0xff] %vm444, 0.0
      %499 = vst.msk [vmem:[#allocation2 + $0x1b0] sm:$0xff] %vm444, 0.0
      %500 = vst.msk [vmem:[#allocation2 + $0x1b8] sm:$0xff] %vm444, 0.0
      %501 = vst.msk [vmem:[#allocation2 + $0x1c0] sm:$0xff] %vm444, 0.0
      %502 = vst.msk [vmem:[#allocation2 + $0x1c8] sm:$0xff] %vm444, 0.0
      %503 = vst.msk [vmem:[#allocation2 + $0x1d0] sm:$0xff] %vm444, 0.0
      %504 = vst.msk [vmem:[#allocation2 + $0x1d8] sm:$0xff] %vm444, 0.0
      %505 = vst.msk [vmem:[#allocation2 + $0x1e0] sm:$0xff] %vm444, 0.0
      %506 = vst.msk [vmem:[#allocation2 + $0x1e8] sm:$0xff] %vm444, 0.0
      %507 = vst.msk [vmem:[#allocation2 + $0x1f0] sm:$0xff] %vm444, 0.0
      %508 = vst.msk [vmem:[#allocation2 + $0x1f8] sm:$0xff] %vm444, 0.0
      %509 = vst.msk [vmem:[#allocation2 + $0x200] sm:$0xff] %vm444, 0.0
      %510 = vst.msk [vmem:[#allocation2 + $0x208] sm:$0xff] %vm444, 0.0
      %511 = vst.msk [vmem:[#allocation2 + $0x210] sm:$0xff] %vm444, 0.0
      %512 = vst.msk [vmem:[#allocation2 + $0x218] sm:$0xff] %vm444, 0.0
      %513 = vst.msk [vmem:[#allocation2 + $0x220] sm:$0xff] %vm444, 0.0
      %514 = vst.msk [vmem:[#allocation2 + $0x228] sm:$0xff] %vm444, 0.0
      %515 = vst.msk [vmem:[#allocation2 + $0x230] sm:$0xff] %vm444, 0.0
      %516 = vst.msk [vmem:[#allocation2 + $0x238] sm:$0xff] %vm444, 0.0
      %s517 = scalar_lea.vmem [#allocation2], 32
      %518 = vst.msk [vmem:[%s517 + $0x8] sm:$0xff] %vm444, %v412
      %519 = vst.msk [vmem:[%s517 + $0x10] sm:$0xff] %vm444, %v413
      %520 = vst.msk [vmem:[%s517 + $0x28] sm:$0xff] %vm444, %v414
      %521 = vst.msk [vmem:[%s517 + $0x30] sm:$0xff] %vm444, %v415
      %522 = vst.msk [vmem:[%s517 + $0x48] sm:$0xff] %vm444, %v416
      %523 = vst.msk [vmem:[%s517 + $0x50] sm:$0xff] %vm444, %v417
      %524 = vst.msk [vmem:[%s517 + $0x68] sm:$0xff] %vm444, %v418
      %525 = vst.msk [vmem:[%s517 + $0x70] sm:$0xff] %vm444, %v419
      %526 = vst.msk [vmem:[%s517 + $0x88] sm:$0xff] %vm444, %v420
      %527 = vst.msk [vmem:[%s517 + $0x90] sm:$0xff] %vm444, %v421
      %528 = vst.msk [vmem:[%s517 + $0xa8] sm:$0xff] %vm444, %v422
      %529 = vst.msk [vmem:[%s517 + $0xb0] sm:$0xff] %vm444, %v423
      %530 = vst.msk [vmem:[%s517 + $0xc8] sm:$0xff] %vm444, %v424
      %531 = vst.msk [vmem:[%s517 + $0xd0] sm:$0xff] %vm444, %v425
      %532 = vst.msk [vmem:[%s517 + $0xe8] sm:$0xff] %vm444, %v426
      %533 = vst.msk [vmem:[%s517 + $0xf0] sm:$0xff] %vm444, %v427
      %534 = vst.msk [vmem:[%s517 + $0x108] sm:$0xff] %vm444, %v428
      %535 = vst.msk [vmem:[%s517 + $0x110] sm:$0xff] %vm444, %v429
      %536 = vst.msk [vmem:[%s517 + $0x128] sm:$0xff] %vm444, %v430
      %537 = vst.msk [vmem:[%s517 + $0x130] sm:$0xff] %vm444, %v431
      %538 = vst.msk [vmem:[%s517 + $0x148] sm:$0xff] %vm444, %v432
      %539 = vst.msk [vmem:[%s517 + $0x150] sm:$0xff] %vm444, %v433
      %540 = vst.msk [vmem:[%s517 + $0x168] sm:$0xff] %vm444, %v434
      %541 = vst.msk [vmem:[%s517 + $0x170] sm:$0xff] %vm444, %v435
      %542 = vst.msk [vmem:[%s517 + $0x188] sm:$0xff] %vm444, %v436
      %543 = vst.msk [vmem:[%s517 + $0x190] sm:$0xff] %vm444, %v437
      %544 = vst.msk [vmem:[%s517 + $0x1a8] sm:$0xff] %vm444, %v438
      %545 = vst.msk [vmem:[%s517 + $0x1b0] sm:$0xff] %vm444, %v439
      %546 = vst.msk [vmem:[%s517 + $0x1c8] sm:$0xff] %vm444, %v440
      %547 = vst.msk [vmem:[%s517 + $0x1d0] sm:$0xff] %vm444, %v441
      %548 = vst.msk [vmem:[%s517 + $0x1e8] sm:$0xff] %vm444, %v442
      %549 = vst.msk [vmem:[%s517 + $0x1f0] sm:$0xff] %vm444, %v443
      %v550 = vld [vmem:[#allocation2 + $0x7] sm:$0xff]
      %v551 = vld [vmem:[#allocation2 + $0xf] sm:$0xff]
      %v552 = vld [vmem:[#allocation2 + $0x27] sm:$0xff]
      %v553 = vld [vmem:[#allocation2 + $0x2f] sm:$0xff]
      %v554 = vld [vmem:[#allocation2 + $0x47] sm:$0xff]
      %v555 = vld [vmem:[#allocation2 + $0x4f] sm:$0xff]
      %v556 = vld [vmem:[#allocation2 + $0x67] sm:$0xff]
      %v557 = vld [vmem:[#allocation2 + $0x6f] sm:$0xff]
      %v558 = vld [vmem:[#allocation2 + $0x87] sm:$0xff]
      %v559 = vld [vmem:[#allocation2 + $0x8f] sm:$0xff]
      %v560 = vld [vmem:[#allocation2 + $0xa7] sm:$0xff]
      %v561 = vld [vmem:[#allocation2 + $0xaf] sm:$0xff]
      %v562 = vld [vmem:[#allocation2 + $0xc7] sm:$0xff]
      %v563 = vld [vmem:[#allocation2 + $0xcf] sm:$0xff]
      %v564 = vld [vmem:[#allocation2 + $0xe7] sm:$0xff]
      %v565 = vld [vmem:[#allocation2 + $0xef] sm:$0xff]
      %v566 = vld [vmem:[#allocation2 + $0x107] sm:$0xff]
      %v567 = vld [vmem:[#allocation2 + $0x10f] sm:$0xff]
      %v568 = vld [vmem:[#allocation2 + $0x127] sm:$0xff]
      %v569 = vld [vmem:[#allocation2 + $0x12f] sm:$0xff]
      %v570 = vld [vmem:[#allocation2 + $0x147] sm:$0xff]
      %v571 = vld [vmem:[#allocation2 + $0x14f] sm:$0xff]
      %v572 = vld [vmem:[#allocation2 + $0x167] sm:$0xff]
      %v573 = vld [vmem:[#allocation2 + $0x16f] sm:$0xff]
      %v574 = vld [vmem:[#allocation2 + $0x187] sm:$0xff]
      %v575 = vld [vmem:[#allocation2 + $0x18f] sm:$0xff]
      %v576 = vld [vmem:[#allocation2 + $0x1a7] sm:$0xff]
      %v577 = vld [vmem:[#allocation2 + $0x1af] sm:$0xff]
      %v578 = vld [vmem:[#allocation2 + $0x1c7] sm:$0xff]
      %v579 = vld [vmem:[#allocation2 + $0x1cf] sm:$0xff]
      %v580 = vld [vmem:[#allocation2 + $0x1e7] sm:$0xff]
      %v581 = vld [vmem:[#allocation2 + $0x1ef] sm:$0xff]
      %v582 = vpack.c.bf16 %v551, %v550
      %v583 = vpack.c.bf16 %v553, %v552
      %v584 = vpack.c.bf16 %v555, %v554
      %v585 = vpack.c.bf16 %v557, %v556
      %v586 = vpack.c.bf16 %v559, %v558
      %v587 = vpack.c.bf16 %v561, %v560
      %v588 = vpack.c.bf16 %v563, %v562
      %v589 = vpack.c.bf16 %v565, %v564
      %v590 = vpack.c.bf16 %v567, %v566
      %v591 = vpack.c.bf16 %v569, %v568
      %v592 = vpack.c.bf16 %v571, %v570
      %v593 = vpack.c.bf16 %v573, %v572
      %v594 = vpack.c.bf16 %v575, %v574
      %v595 = vpack.c.bf16 %v577, %v576
      %v596 = vpack.c.bf16 %v579, %v578
      %v597 = vpack.c.bf16 %v581, %v580
      %v598 = vld [vmem:[%s3] sm:$0x3]
      %v599 = vld [vmem:[#allocation2 + $0x8] sm:$0xff]
      %v600 = vld [vmem:[#allocation2 + $0x10] sm:$0xff]
      %v601 = vld [vmem:[#allocation2 + $0x28] sm:$0xff]
      %v602 = vld [vmem:[#allocation2 + $0x30] sm:$0xff]
      %v603 = vld [vmem:[#allocation2 + $0x48] sm:$0xff]
      %v604 = vld [vmem:[#allocation2 + $0x50] sm:$0xff]
      %v605 = vld [vmem:[#allocation2 + $0x68] sm:$0xff]
      %v606 = vld [vmem:[#allocation2 + $0x70] sm:$0xff]
      %v607 = vld [vmem:[#allocation2 + $0x88] sm:$0xff]
      %v608 = vld [vmem:[#allocation2 + $0x90] sm:$0xff]
      %v609 = vld [vmem:[#allocation2 + $0xa8] sm:$0xff]
      %v610 = vld [vmem:[#allocation2 + $0xb0] sm:$0xff]
      %v611 = vld [vmem:[#allocation2 + $0xc8] sm:$0xff]
      %v612 = vld [vmem:[#allocation2 + $0xd0] sm:$0xff]
      %v613 = vld [vmem:[#allocation2 + $0xe8] sm:$0xff]
      %v614 = vld [vmem:[#allocation2 + $0xf0] sm:$0xff]
      %v615 = vld [vmem:[#allocation2 + $0x108] sm:$0xff]
      %v616 = vld [vmem:[#allocation2 + $0x110] sm:$0xff]
      %v617 = vld [vmem:[#allocation2 + $0x128] sm:$0xff]
      %v618 = vld [vmem:[#allocation2 + $0x130] sm:$0xff]
      %v619 = vld [vmem:[#allocation2 + $0x148] sm:$0xff]
      %v620 = vld [vmem:[#allocation2 + $0x150] sm:$0xff]
      %v621 = vld [vmem:[#allocation2 + $0x168] sm:$0xff]
      %v622 = vld [vmem:[#allocation2 + $0x170] sm:$0xff]
      %v623 = vld [vmem:[#allocation2 + $0x188] sm:$0xff]
      %v624 = vld [vmem:[#allocation2 + $0x190] sm:$0xff]
      %v625 = vld [vmem:[#allocation2 + $0x1a8] sm:$0xff]
      %v626 = vld [vmem:[#allocation2 + $0x1b0] sm:$0xff]
      %v627 = vld [vmem:[#allocation2 + $0x1c8] sm:$0xff]
      %v628 = vld [vmem:[#allocation2 + $0x1d0] sm:$0xff]
      %v629 = vld [vmem:[#allocation2 + $0x1e8] sm:$0xff]
      %v630 = vld [vmem:[#allocation2 + $0x1f0] sm:$0xff]
      %v631 = vpack.c.bf16 %v600, %v599
      %v632 = vpack.c.bf16 %v602, %v601
      %v633 = vpack.c.bf16 %v604, %v603
      %v634 = vpack.c.bf16 %v606, %v605
      %v635 = vpack.c.bf16 %v608, %v607
      %v636 = vpack.c.bf16 %v610, %v609
      %v637 = vpack.c.bf16 %v612, %v611
      %v638 = vpack.c.bf16 %v614, %v613
      %v639 = vpack.c.bf16 %v616, %v615
      %v640 = vpack.c.bf16 %v618, %v617
      %v641 = vpack.c.bf16 %v620, %v619
      %v642 = vpack.c.bf16 %v622, %v621
      %v643 = vpack.c.bf16 %v624, %v623
      %v644 = vpack.c.bf16 %v626, %v625
      %v645 = vpack.c.bf16 %v628, %v627
      %v646 = vpack.c.bf16 %v630, %v629
      %s647 = scalar_lea.vmem %s3, 2
      %v648 = vld [vmem:[%s647] sm:$0x3]
      %v650 = vsel %vm444, %v631, 0
      %v653 = vsel %vm444, %v632, 0
      %v656 = vsel %vm444, %v633, 0
      %v659 = vsel %vm444, %v634, 0
      %v662 = vsel %vm444, %v635, 0
      %v665 = vsel %vm444, %v636, 0
      %v668 = vsel %vm444, %v637, 0
      %v671 = vsel %vm444, %v638, 0
      %v674 = vsel %vm444, %v639, 0
      %v677 = vsel %vm444, %v640, 0
      %v680 = vsel %vm444, %v641, 0
      %v683 = vsel %vm444, %v642, 0
      %v686 = vsel %vm444, %v643, 0
      %v689 = vsel %vm444, %v644, 0
      %v692 = vsel %vm444, %v645, 0
      %v695 = vsel %vm444, %v646, 0
      %vm697 = vcmask 1041408
      %v699 = vsel %vm697, %v648, 0
      %701 = vmatprep.subr.bf16.mxu0 0
      %702 = vmatpush1.bf16.msra.mxu0 %v699
      %703 = vmatprep.subr.bf16.mxu0 0
      %704 = vmatpush1.bf16.msra.mxu0 0
      %705 = vmatprep.subr.bf16.mxu0 0
      %706 = vmatpush1.bf16.msra.mxu0 0
      %707 = vmatprep.subr.bf16.mxu0 0
      %708 = vmatpush1.bf16.msra.mxu0 0
      %709 = vmatprep.subr.bf16.mxu0 0
      %710 = vmatpush1.bf16.msra.mxu0 0
      %711 = vmatprep.subr.bf16.mxu0 0
      %712 = vmatpush1.bf16.msra.mxu0 0
      %713 = vmatprep.subr.bf16.mxu0 0
      %714 = vmatpush1.bf16.msra.mxu0 0
      %715 = vmatprep.subr.bf16.mxu0 0
      %716 = vmatpush1.bf16.msra.mxu0 0
      %717 = vmatprep.subr.bf16.mxu0 0
      %718 = vmatpush1.bf16.msra.mxu0 0
      %719 = vmatprep.subr.bf16.mxu0 0
      %720 = vmatpush1.bf16.msra.mxu0 0
      %721 = vmatprep.subr.bf16.mxu0 0
      %722 = vmatpush1.bf16.msra.mxu0 0
      %723 = vmatprep.subr.bf16.mxu0 0
      %724 = vmatpush1.bf16.msra.mxu0 0
      %725 = vmatprep.subr.bf16.mxu0 0
      %726 = vmatpush1.bf16.msra.mxu0 0
      %727 = vmatprep.subr.bf16.mxu0 0
      %728 = vmatpush1.bf16.msra.mxu0 0
      %729 = vmatprep.subr.bf16.mxu0 0
      %730 = vmatpush1.bf16.msra.mxu0 0
      %731 = vmatprep.subr.bf16.mxu0 0
      %732 = vmatpush1.bf16.msra.mxu0 0
      %733 = vmatprep.mubr.bf16.mxu0 0
      %734 = vmatmul.mubr.bf16.gmra.mrb[0].mxu0 %v650
      %v735 = vpop.f32.mrb[0].mxu0
      %v736 = vadd.f32 0.0, %v735
      %v737 = vpop.f32.mrb[0].mxu0
      %v738 = vpop.f32.mrb[0].mxu0
      %v739 = vadd.f32 0.0, %v738
      %v740 = vpop.f32.mrb[0].mxu0
      %741 = vmatprep.mubr.bf16.mxu0 0
      %742 = vmatmul.mubr.bf16.gmra.mrb[0].mxu0 %v653
      %v743 = vpop.f32.mrb[0].mxu0
      %v744 = vadd.f32 0.0, %v743
      %v745 = vpop.f32.mrb[0].mxu0
      %v746 = vpop.f32.mrb[0].mxu0
      %v747 = vadd.f32 0.0, %v746
      %v748 = vpop.f32.mrb[0].mxu0
      %749 = vmatprep.mubr.bf16.mxu0 0
      %750 = vmatmul.mubr.bf16.gmra.mrb[0].mxu0 %v656
      %v751 = vpop.f32.mrb[0].mxu0
      %v752 = vadd.f32 0.0, %v751
      %v753 = vpop.f32.mrb[0].mxu0
      %v754 = vpop.f32.mrb[0].mxu0
      %v755 = vadd.f32 0.0, %v754
      %v756 = vpop.f32.mrb[0].mxu0
      %757 = vmatprep.mubr.bf16.mxu0 0
      %758 = vmatmul.mubr.bf16.gmra.mrb[0].mxu0 %v659
      %v759 = vpop.f32.mrb[0].mxu0
      %v760 = vadd.f32 0.0, %v759
      %v761 = vpop.f32.mrb[0].mxu0
      %v762 = vpop.f32.mrb[0].mxu0
      %v763 = vadd.f32 0.0, %v762
      %v764 = vpop.f32.mrb[0].mxu0
      %765 = vmatprep.mubr.bf16.mxu0 0
      %766 = vmatmul.mubr.bf16.gmra.mrb[0].mxu0 %v662
      %v767 = vpop.f32.mrb[0].mxu0
      %v768 = vadd.f32 0.0, %v767
      %v769 = vpop.f32.mrb[0].mxu0
      %v770 = vpop.f32.mrb[0].mxu0
      %v771 = vadd.f32 0.0, %v770
      %v772 = vpop.f32.mrb[0].mxu0
      %773 = vmatprep.mubr.bf16.mxu0 0
      %774 = vmatmul.mubr.bf16.gmra.mrb[0].mxu0 %v665
      %v775 = vpop.f32.mrb[0].mxu0
      %v776 = vadd.f32 0.0, %v775
      %v777 = vpop.f32.mrb[0].mxu0
      %v778 = vpop.f32.mrb[0].mxu0
      %v779 = vadd.f32 0.0, %v778
      %v780 = vpop.f32.mrb[0].mxu0
      %781 = vmatprep.mubr.bf16.mxu0 0
      %782 = vmatmul.mubr.bf16.gmra.mrb[0].mxu0 %v668
      %v783 = vpop.f32.mrb[0].mxu0
      %v784 = vadd.f32 0.0, %v783
      %v785 = vpop.f32.mrb[0].mxu0
      %v786 = vpop.f32.mrb[0].mxu0
      %v787 = vadd.f32 0.0, %v786
      %v788 = vpop.f32.mrb[0].mxu0
      %789 = vmatprep.mubr.bf16.mxu0 0
      %790 = vmatmul.mubr.bf16.gmra.mrb[0].mxu0 %v671
      %v791 = vpop.f32.mrb[0].mxu0
      %v792 = vadd.f32 0.0, %v791
      %v793 = vpop.f32.mrb[0].mxu0
      %v794 = vpop.f32.mrb[0].mxu0
      %v795 = vadd.f32 0.0, %v794
      %v796 = vpop.f32.mrb[0].mxu0
      %797 = vmatprep.mubr.bf16.mxu0 0
      %798 = vmatmul.mubr.bf16.gmra.mrb[0].mxu0 %v674
      %v799 = vpop.f32.mrb[0].mxu0
      %v800 = vadd.f32 0.0, %v799
      %v801 = vpop.f32.mrb[0].mxu0
      %v802 = vpop.f32.mrb[0].mxu0
      %v803 = vadd.f32 0.0, %v802
      %v804 = vpop.f32.mrb[0].mxu0
      %805 = vmatprep.mubr.bf16.mxu0 0
      %806 = vmatmul.mubr.bf16.gmra.mrb[0].mxu0 %v677
      %v807 = vpop.f32.mrb[0].mxu0
      %v808 = vadd.f32 0.0, %v807
      %v809 = vpop.f32.mrb[0].mxu0
      %v810 = vpop.f32.mrb[0].mxu0
      %v811 = vadd.f32 0.0, %v810
      %v812 = vpop.f32.mrb[0].mxu0
      %813 = vmatprep.mubr.bf16.mxu0 0
      %814 = vmatmul.mubr.bf16.gmra.mrb[0].mxu0 %v680
      %v815 = vpop.f32.mrb[0].mxu0
      %v816 = vadd.f32 0.0, %v815
      %v817 = vpop.f32.mrb[0].mxu0
      %v818 = vpop.f32.mrb[0].mxu0
      %v819 = vadd.f32 0.0, %v818
      %v820 = vpop.f32.mrb[0].mxu0
      %821 = vmatprep.mubr.bf16.mxu0 0
      %822 = vmatmul.mubr.bf16.gmra.mrb[0].mxu0 %v683
      %v823 = vpop.f32.mrb[0].mxu0
      %v824 = vadd.f32 0.0, %v823
      %v825 = vpop.f32.mrb[0].mxu0
      %v826 = vpop.f32.mrb[0].mxu0
      %v827 = vadd.f32 0.0, %v826
      %v828 = vpop.f32.mrb[0].mxu0
      %829 = vmatprep.mubr.bf16.mxu0 0
      %830 = vmatmul.mubr.bf16.gmra.mrb[0].mxu0 %v686
      %v831 = vpop.f32.mrb[0].mxu0
      %v832 = vadd.f32 0.0, %v831
      %v833 = vpop.f32.mrb[0].mxu0
      %v834 = vpop.f32.mrb[0].mxu0
      %v835 = vadd.f32 0.0, %v834
      %v836 = vpop.f32.mrb[0].mxu0
      %837 = vmatprep.mubr.bf16.mxu0 0
      %838 = vmatmul.mubr.bf16.gmra.mrb[0].mxu0 %v689
      %v839 = vpop.f32.mrb[0].mxu0
      %v840 = vadd.f32 0.0, %v839
      %v841 = vpop.f32.mrb[0].mxu0
      %v842 = vpop.f32.mrb[0].mxu0
      %v843 = vadd.f32 0.0, %v842
      %v844 = vpop.f32.mrb[0].mxu0
      %845 = vmatprep.mubr.bf16.mxu0 0
      %846 = vmatmul.mubr.bf16.gmra.mrb[0].mxu0 %v692
      %v847 = vpop.f32.mrb[0].mxu0
      %v848 = vadd.f32 0.0, %v847
      %v849 = vpop.f32.mrb[0].mxu0
      %v850 = vpop.f32.mrb[0].mxu0
      %v851 = vadd.f32 0.0, %v850
      %v852 = vpop.f32.mrb[0].mxu0
      %853 = vmatprep.mubr.bf16.mxu0 0
      %854 = vmatmul.mubr.bf16.gmra.mrb[0].mxu0 %v695
      %v855 = vpop.f32.mrb[0].mxu0
      %v856 = vadd.f32 0.0, %v855
      %v857 = vpop.f32.mrb[0].mxu0
      %v858 = vpop.f32.mrb[0].mxu0
      %v859 = vadd.f32 0.0, %v858
      %v860 = vpop.f32.mrb[0].mxu0
      %861 = vdwg.mxu0
      %v863 = vsel %vm444, %v582, 0
      %v866 = vsel %vm444, %v583, 0
      %v869 = vsel %vm444, %v584, 0
      %v872 = vsel %vm444, %v585, 0
      %v875 = vsel %vm444, %v586, 0
      %v878 = vsel %vm444, %v587, 0
      %v881 = vsel %vm444, %v588, 0
      %v884 = vsel %vm444, %v589, 0
      %v887 = vsel %vm444, %v590, 0
      %v890 = vsel %vm444, %v591, 0
      %v893 = vsel %vm444, %v592, 0
      %v896 = vsel %vm444, %v593, 0
      %v899 = vsel %vm444, %v594, 0
      %v902 = vsel %vm444, %v595, 0
      %v905 = vsel %vm444, %v596, 0
      %v908 = vsel %vm444, %v597, 0
      %v911 = vsel %vm697, %v598, 0
      %913 = vmatprep.subr.bf16.mxu0 0
      %914 = vmatpush1.bf16.msra.mxu0 %v911
      %915 = vmatprep.subr.bf16.mxu0 0
      %916 = vmatpush1.bf16.msra.mxu0 0
      %917 = vmatprep.subr.bf16.mxu0 0
      %918 = vmatpush1.bf16.msra.mxu0 0
      %919 = vmatprep.subr.bf16.mxu0 0
      %920 = vmatpush1.bf16.msra.mxu0 0
      %921 = vmatprep.subr.bf16.mxu0 0
      %922 = vmatpush1.bf16.msra.mxu0 0
      %923 = vmatprep.subr.bf16.mxu0 0
      %924 = vmatpush1.bf16.msra.mxu0 0
      %925 = vmatprep.subr.bf16.mxu0 0
      %926 = vmatpush1.bf16.msra.mxu0 0
      %927 = vmatprep.subr.bf16.mxu0 0
      %928 = vmatpush1.bf16.msra.mxu0 0
      %929 = vmatprep.subr.bf16.mxu0 0
      %930 = vmatpush1.bf16.msra.mxu0 0
      %931 = vmatprep.subr.bf16.mxu0 0
      %932 = vmatpush1.bf16.msra.mxu0 0
      %933 = vmatprep.subr.bf16.mxu0 0
      %934 = vmatpush1.bf16.msra.mxu0 0
      %935 = vmatprep.subr.bf16.mxu0 0
      %936 = vmatpush1.bf16.msra.mxu0 0
      %937 = vmatprep.subr.bf16.mxu0 0
      %938 = vmatpush1.bf16.msra.mxu0 0
      %939 = vmatprep.subr.bf16.mxu0 0
      %940 = vmatpush1.bf16.msra.mxu0 0
      %941 = vmatprep.subr.bf16.mxu0 0
      %942 = vmatpush1.bf16.msra.mxu0 0
      %943 = vmatprep.subr.bf16.mxu0 0
      %944 = vmatpush1.bf16.msra.mxu0 0
      %945 = vmatprep.mubr.bf16.mxu0 0
      %946 = vmatmul.mubr.bf16.gmra.mrb[0].mxu0 %v863
      %v947 = vpop.f32.mrb[0].mxu0
      %v948 = vadd.f32 %v736, %v947
      %v949 = vpop.f32.mrb[0].mxu0
      %v950 = vpop.f32.mrb[0].mxu0
      %v951 = vadd.f32 %v739, %v950
      %v952 = vpop.f32.mrb[0].mxu0
      %953 = vmatprep.mubr.bf16.mxu0 0
      %954 = vmatmul.mubr.bf16.gmra.mrb[0].mxu0 %v866
      %v955 = vpop.f32.mrb[0].mxu0
      %v956 = vadd.f32 %v744, %v955
      %v957 = vpop.f32.mrb[0].mxu0
      %v958 = vpop.f32.mrb[0].mxu0
      %v959 = vadd.f32 %v747, %v958
      %v960 = vpop.f32.mrb[0].mxu0
      %961 = vmatprep.mubr.bf16.mxu0 0
      %962 = vmatmul.mubr.bf16.gmra.mrb[0].mxu0 %v869
      %v963 = vpop.f32.mrb[0].mxu0
      %v964 = vadd.f32 %v752, %v963
      %v965 = vpop.f32.mrb[0].mxu0
      %v966 = vpop.f32.mrb[0].mxu0
      %v967 = vadd.f32 %v755, %v966
      %v968 = vpop.f32.mrb[0].mxu0
      %969 = vmatprep.mubr.bf16.mxu0 0
      %970 = vmatmul.mubr.bf16.gmra.mrb[0].mxu0 %v872
      %v971 = vpop.f32.mrb[0].mxu0
      %v972 = vadd.f32 %v760, %v971
      %v973 = vpop.f32.mrb[0].mxu0
      %v974 = vpop.f32.mrb[0].mxu0
      %v975 = vadd.f32 %v763, %v974
      %v976 = vpop.f32.mrb[0].mxu0
      %977 = vmatprep.mubr.bf16.mxu0 0
      %978 = vmatmul.mubr.bf16.gmra.mrb[0].mxu0 %v875
      %v979 = vpop.f32.mrb[0].mxu0
      %v980 = vadd.f32 %v768, %v979
      %v981 = vpop.f32.mrb[0].mxu0
      %v982 = vpop.f32.mrb[0].mxu0
      %v983 = vadd.f32 %v771, %v982
      %v984 = vpop.f32.mrb[0].mxu0
      %985 = vmatprep.mubr.bf16.mxu0 0
      %986 = vmatmul.mubr.bf16.gmra.mrb[0].mxu0 %v878
      %v987 = vpop.f32.mrb[0].mxu0
      %v988 = vadd.f32 %v776, %v987
      %v989 = vpop.f32.mrb[0].mxu0
      %v990 = vpop.f32.mrb[0].mxu0
      %v991 = vadd.f32 %v779, %v990
      %v992 = vpop.f32.mrb[0].mxu0
      %993 = vmatprep.mubr.bf16.mxu0 0
      %994 = vmatmul.mubr.bf16.gmra.mrb[0].mxu0 %v881
      %v995 = vpop.f32.mrb[0].mxu0
      %v996 = vadd.f32 %v784, %v995
      %v997 = vpop.f32.mrb[0].mxu0
      %v998 = vpop.f32.mrb[0].mxu0
      %v999 = vadd.f32 %v787, %v998
      %v1000 = vpop.f32.mrb[0].mxu0
      %1001 = vmatprep.mubr.bf16.mxu0 0
      %1002 = vmatmul.mubr.bf16.gmra.mrb[0].mxu0 %v884
      %v1003 = vpop.f32.mrb[0].mxu0
      %v1004 = vadd.f32 %v792, %v1003
      %v1005 = vpop.f32.mrb[0].mxu0
      %v1006 = vpop.f32.mrb[0].mxu0
      %v1007 = vadd.f32 %v795, %v1006
      %v1008 = vpop.f32.mrb[0].mxu0
      %1009 = vmatprep.mubr.bf16.mxu0 0
      %1010 = vmatmul.mubr.bf16.gmra.mrb[0].mxu0 %v887
      %v1011 = vpop.f32.mrb[0].mxu0
      %v1012 = vadd.f32 %v800, %v1011
      %v1013 = vpop.f32.mrb[0].mxu0
      %v1014 = vpop.f32.mrb[0].mxu0
      %v1015 = vadd.f32 %v803, %v1014
      %v1016 = vpop.f32.mrb[0].mxu0
      %1017 = vmatprep.mubr.bf16.mxu0 0
      %1018 = vmatmul.mubr.bf16.gmra.mrb[0].mxu0 %v890
      %v1019 = vpop.f32.mrb[0].mxu0
      %v1020 = vadd.f32 %v808, %v1019
      %v1021 = vpop.f32.mrb[0].mxu0
      %v1022 = vpop.f32.mrb[0].mxu0
      %v1023 = vadd.f32 %v811, %v1022
      %v1024 = vpop.f32.mrb[0].mxu0
      %1025 = vmatprep.mubr.bf16.mxu0 0
      %1026 = vmatmul.mubr.bf16.gmra.mrb[0].mxu0 %v893
      %v1027 = vpop.f32.mrb[0].mxu0
      %v1028 = vadd.f32 %v816, %v1027
      %v1029 = vpop.f32.mrb[0].mxu0
      %v1030 = vpop.f32.mrb[0].mxu0
      %v1031 = vadd.f32 %v819, %v1030
      %v1032 = vpop.f32.mrb[0].mxu0
      %1033 = vmatprep.mubr.bf16.mxu0 0
      %1034 = vmatmul.mubr.bf16.gmra.mrb[0].mxu0 %v896
      %v1035 = vpop.f32.mrb[0].mxu0
      %v1036 = vadd.f32 %v824, %v1035
      %v1037 = vpop.f32.mrb[0].mxu0
      %v1038 = vpop.f32.mrb[0].mxu0
      %v1039 = vadd.f32 %v827, %v1038
      %v1040 = vpop.f32.mrb[0].mxu0
      %1041 = vmatprep.mubr.bf16.mxu0 0
      %1042 = vmatmul.mubr.bf16.gmra.mrb[0].mxu0 %v899
      %v1043 = vpop.f32.mrb[0].mxu0
      %v1044 = vadd.f32 %v832, %v1043
      %v1045 = vpop.f32.mrb[0].mxu0
      %v1046 = vpop.f32.mrb[0].mxu0
      %v1047 = vadd.f32 %v835, %v1046
      %v1048 = vpop.f32.mrb[0].mxu0
      %1049 = vmatprep.mubr.bf16.mxu0 0
      %1050 = vmatmul.mubr.bf16.gmra.mrb[0].mxu0 %v902
      %v1051 = vpop.f32.mrb[0].mxu0
      %v1052 = vadd.f32 %v840, %v1051
      %v1053 = vpop.f32.mrb[0].mxu0
      %v1054 = vpop.f32.mrb[0].mxu0
      %v1055 = vadd.f32 %v843, %v1054
      %v1056 = vpop.f32.mrb[0].mxu0
      %1057 = vmatprep.mubr.bf16.mxu0 0
      %1058 = vmatmul.mubr.bf16.gmra.mrb[0].mxu0 %v905
      %v1059 = vpop.f32.mrb[0].mxu0
      %v1060 = vadd.f32 %v848, %v1059
      %v1061 = vpop.f32.mrb[0].mxu0
      %v1062 = vpop.f32.mrb[0].mxu0
      %v1063 = vadd.f32 %v851, %v1062
      %v1064 = vpop.f32.mrb[0].mxu0
      %1065 = vmatprep.mubr.bf16.mxu0 0
      %1066 = vmatmul.mubr.bf16.gmra.mrb[0].mxu0 %v908
      %v1067 = vpop.f32.mrb[0].mxu0
      %v1068 = vadd.f32 %v856, %v1067
      %v1069 = vpop.f32.mrb[0].mxu0
      %v1070 = vpop.f32.mrb[0].mxu0
      %v1071 = vadd.f32 %v859, %v1070
      %v1072 = vpop.f32.mrb[0].mxu0
      %1073 = vdwg.mxu0
      %v1074 = vld [vmem:[#allocation2 + $0x9] sm:$0xff]
      %v1075 = vld [vmem:[#allocation2 + $0x11] sm:$0xff]
      %v1076 = vld [vmem:[#allocation2 + $0x29] sm:$0xff]
      %v1077 = vld [vmem:[#allocation2 + $0x31] sm:$0xff]
      %v1078 = vld [vmem:[#allocation2 + $0x49] sm:$0xff]
      %v1079 = vld [vmem:[#allocation2 + $0x51] sm:$0xff]
      %v1080 = vld [vmem:[#allocation2 + $0x69] sm:$0xff]
      %v1081 = vld [vmem:[#allocation2 + $0x71] sm:$0xff]
      %v1082 = vld [vmem:[#allocation2 + $0x89] sm:$0xff]
      %v1083 = vld [vmem:[#allocation2 + $0x91] sm:$0xff]
      %v1084 = vld [vmem:[#allocation2 + $0xa9] sm:$0xff]
      %v1085 = vld [vmem:[#allocation2 + $0xb1] sm:$0xff]
      %v1086 = vld [vmem:[#allocation2 + $0xc9] sm:$0xff]
      %v1087 = vld [vmem:[#allocation2 + $0xd1] sm:$0xff]
      %v1088 = vld [vmem:[#allocation2 + $0xe9] sm:$0xff]
      %v1089 = vld [vmem:[#allocation2 + $0xf1] sm:$0xff]
      %v1090 = vld [vmem:[#allocation2 + $0x109] sm:$0xff]
      %v1091 = vld [vmem:[#allocation2 + $0x111] sm:$0xff]
      %v1092 = vld [vmem:[#allocation2 + $0x129] sm:$0xff]
      %v1093 = vld [vmem:[#allocation2 + $0x131] sm:$0xff]
      %v1094 = vld [vmem:[#allocation2 + $0x149] sm:$0xff]
      %v1095 = vld [vmem:[#allocation2 + $0x151] sm:$0xff]
      %v1096 = vld [vmem:[#allocation2 + $0x169] sm:$0xff]
      %v1097 = vld [vmem:[#allocation2 + $0x171] sm:$0xff]
      %v1098 = vld [vmem:[#allocation2 + $0x189] sm:$0xff]
      %v1099 = vld [vmem:[#allocation2 + $0x191] sm:$0xff]
      %v1100 = vld [vmem:[#allocation2 + $0x1a9] sm:$0xff]
      %v1101 = vld [vmem:[#allocation2 + $0x1b1] sm:$0xff]
      %v1102 = vld [vmem:[#allocation2 + $0x1c9] sm:$0xff]
      %v1103 = vld [vmem:[#allocation2 + $0x1d1] sm:$0xff]
      %v1104 = vld [vmem:[#allocation2 + $0x1e9] sm:$0xff]
      %v1105 = vld [vmem:[#allocation2 + $0x1f1] sm:$0xff]
      %v1106 = vpack.c.bf16 %v1075, %v1074
      %v1107 = vpack.c.bf16 %v1077, %v1076
      %v1108 = vpack.c.bf16 %v1079, %v1078
      %v1109 = vpack.c.bf16 %v1081, %v1080
      %v1110 = vpack.c.bf16 %v1083, %v1082
      %v1111 = vpack.c.bf16 %v1085, %v1084
      %v1112 = vpack.c.bf16 %v1087, %v1086
      %v1113 = vpack.c.bf16 %v1089, %v1088
      %v1114 = vpack.c.bf16 %v1091, %v1090
      %v1115 = vpack.c.bf16 %v1093, %v1092
      %v1116 = vpack.c.bf16 %v1095, %v1094
      %v1117 = vpack.c.bf16 %v1097, %v1096
      %v1118 = vpack.c.bf16 %v1099, %v1098
      %v1119 = vpack.c.bf16 %v1101, %v1100
      %v1120 = vpack.c.bf16 %v1103, %v1102
      %v1121 = vpack.c.bf16 %v1105, %v1104
      %s1122 = scalar_lea.vmem %s3, 4
      %v1123 = vld [vmem:[%s1122] sm:$0x3]
      %v1125 = vsel %vm444, %v1106, 0
      %v1128 = vsel %vm444, %v1107, 0
      %v1131 = vsel %vm444, %v1108, 0
      %v1134 = vsel %vm444, %v1109, 0
      %v1137 = vsel %vm444, %v1110, 0
      %v1140 = vsel %vm444, %v1111, 0
      %v1143 = vsel %vm444, %v1112, 0
      %v1146 = vsel %vm444, %v1113, 0
      %v1149 = vsel %vm444, %v1114, 0
      %v1152 = vsel %vm444, %v1115, 0
      %v1155 = vsel %vm444, %v1116, 0
      %v1158 = vsel %vm444, %v1117, 0
      %v1161 = vsel %vm444, %v1118, 0
      %v1164 = vsel %vm444, %v1119, 0
      %v1167 = vsel %vm444, %v1120, 0
      %v1170 = vsel %vm444, %v1121, 0
      %v1173 = vsel %vm697, %v1123, 0
      %1175 = vmatprep.subr.bf16.mxu0 0
      %1176 = vmatpush1.bf16.msra.mxu0 %v1173
      %1177 = vmatprep.subr.bf16.mxu0 0
      %1178 = vmatpush1.bf16.msra.mxu0 0
      %1179 = vmatprep.subr.bf16.mxu0 0
      %1180 = vmatpush1.bf16.msra.mxu0 0
      %1181 = vmatprep.subr.bf16.mxu0 0
      %1182 = vmatpush1.bf16.msra.mxu0 0
      %1183 = vmatprep.subr.bf16.mxu0 0
      %1184 = vmatpush1.bf16.msra.mxu0 0
      %1185 = vmatprep.subr.bf16.mxu0 0
      %1186 = vmatpush1.bf16.msra.mxu0 0
      %1187 = vmatprep.subr.bf16.mxu0 0
      %1188 = vmatpush1.bf16.msra.mxu0 0
      %1189 = vmatprep.subr.bf16.mxu0 0
      %1190 = vmatpush1.bf16.msra.mxu0 0
      %1191 = vmatprep.subr.bf16.mxu0 0
      %1192 = vmatpush1.bf16.msra.mxu0 0
      %1193 = vmatprep.subr.bf16.mxu0 0
      %1194 = vmatpush1.bf16.msra.mxu0 0
      %1195 = vmatprep.subr.bf16.mxu0 0
      %1196 = vmatpush1.bf16.msra.mxu0 0
      %1197 = vmatprep.subr.bf16.mxu0 0
      %1198 = vmatpush1.bf16.msra.mxu0 0
      %1199 = vmatprep.subr.bf16.mxu0 0
      %1200 = vmatpush1.bf16.msra.mxu0 0
      %1201 = vmatprep.subr.bf16.mxu0 0
      %1202 = vmatpush1.bf16.msra.mxu0 0
      %1203 = vmatprep.subr.bf16.mxu0 0
      %1204 = vmatpush1.bf16.msra.mxu0 0
      %1205 = vmatprep.subr.bf16.mxu0 0
      %1206 = vmatpush1.bf16.msra.mxu0 0
      %1207 = vmatprep.mubr.bf16.mxu0 0
      %1208 = vmatmul.mubr.bf16.gmra.mrb[0].mxu0 %v1125
      %v1209 = vpop.f32.mrb[0].mxu0
      %v1210 = vadd.f32 0.0, %v1209
      %v1211 = vpop.f32.mrb[0].mxu0
      %v1212 = vpop.f32.mrb[0].mxu0
      %v1213 = vadd.f32 0.0, %v1212
      %v1214 = vpop.f32.mrb[0].mxu0
      %1215 = vmatprep.mubr.bf16.mxu0 0
      %1216 = vmatmul.mubr.bf16.gmra.mrb[0].mxu0 %v1128
      %v1217 = vpop.f32.mrb[0].mxu0
      %v1218 = vadd.f32 0.0, %v1217
      %v1219 = vpop.f32.mrb[0].mxu0
      %v1220 = vpop.f32.mrb[0].mxu0
      %v1221 = vadd.f32 0.0, %v1220
      %v1222 = vpop.f32.mrb[0].mxu0
      %1223 = vmatprep.mubr.bf16.mxu0 0
      %1224 = vmatmul.mubr.bf16.gmra.mrb[0].mxu0 %v1131
      %v1225 = vpop.f32.mrb[0].mxu0
      %v1226 = vadd.f32 0.0, %v1225
      %v1227 = vpop.f32.mrb[0].mxu0
      %v1228 = vpop.f32.mrb[0].mxu0
      %v1229 = vadd.f32 0.0, %v1228
      %v1230 = vpop.f32.mrb[0].mxu0
      %1231 = vmatprep.mubr.bf16.mxu0 0
      %1232 = vmatmul.mubr.bf16.gmra.mrb[0].mxu0 %v1134
      %v1233 = vpop.f32.mrb[0].mxu0
      %v1234 = vadd.f32 0.0, %v1233
      %v1235 = vpop.f32.mrb[0].mxu0
      %v1236 = vpop.f32.mrb[0].mxu0
      %v1237 = vadd.f32 0.0, %v1236
      %v1238 = vpop.f32.mrb[0].mxu0
      %1239 = vmatprep.mubr.bf16.mxu0 0
      %1240 = vmatmul.mubr.bf16.gmra.mrb[0].mxu0 %v1137
      %v1241 = vpop.f32.mrb[0].mxu0
      %v1242 = vadd.f32 0.0, %v1241
      %v1243 = vpop.f32.mrb[0].mxu0
      %v1244 = vpop.f32.mrb[0].mxu0
      %v1245 = vadd.f32 0.0, %v1244
      %v1246 = vpop.f32.mrb[0].mxu0
      %1247 = vmatprep.mubr.bf16.mxu0 0
      %1248 = vmatmul.mubr.bf16.gmra.mrb[0].mxu0 %v1140
      %v1249 = vpop.f32.mrb[0].mxu0
      %v1250 = vadd.f32 0.0, %v1249
      %v1251 = vpop.f32.mrb[0].mxu0
      %v1252 = vpop.f32.mrb[0].mxu0
      %v1253 = vadd.f32 0.0, %v1252
      %v1254 = vpop.f32.mrb[0].mxu0
      %1255 = vmatprep.mubr.bf16.mxu0 0
      %1256 = vmatmul.mubr.bf16.gmra.mrb[0].mxu0 %v1143
      %v1257 = vpop.f32.mrb[0].mxu0
      %v1258 = vadd.f32 0.0, %v1257
      %v1259 = vpop.f32.mrb[0].mxu0
      %v1260 = vpop.f32.mrb[0].mxu0
      %v1261 = vadd.f32 0.0, %v1260
      %v1262 = vpop.f32.mrb[0].mxu0
      %1263 = vmatprep.mubr.bf16.mxu0 0
      %1264 = vmatmul.mubr.bf16.gmra.mrb[0].mxu0 %v1146
      %v1265 = vpop.f32.mrb[0].mxu0
      %v1266 = vadd.f32 0.0, %v1265
      %v1267 = vpop.f32.mrb[0].mxu0
      %v1268 = vpop.f32.mrb[0].mxu0
      %v1269 = vadd.f32 0.0, %v1268
      %v1270 = vpop.f32.mrb[0].mxu0
      %1271 = vmatprep.mubr.bf16.mxu0 0
      %1272 = vmatmul.mubr.bf16.gmra.mrb[0].mxu0 %v1149
      %v1273 = vpop.f32.mrb[0].mxu0
      %v1274 = vadd.f32 0.0, %v1273
      %v1275 = vpop.f32.mrb[0].mxu0
      %v1276 = vpop.f32.mrb[0].mxu0
      %v1277 = vadd.f32 0.0, %v1276
      %v1278 = vpop.f32.mrb[0].mxu0
      %1279 = vmatprep.mubr.bf16.mxu0 0
      %1280 = vmatmul.mubr.bf16.gmra.mrb[0].mxu0 %v1152
      %v1281 = vpop.f32.mrb[0].mxu0
      %v1282 = vadd.f32 0.0, %v1281
      %v1283 = vpop.f32.mrb[0].mxu0
      %v1284 = vpop.f32.mrb[0].mxu0
      %v1285 = vadd.f32 0.0, %v1284
      %v1286 = vpop.f32.mrb[0].mxu0
      %1287 = vmatprep.mubr.bf16.mxu0 0
      %1288 = vmatmul.mubr.bf16.gmra.mrb[0].mxu0 %v1155
      %v1289 = vpop.f32.mrb[0].mxu0
      %v1290 = vadd.f32 0.0, %v1289
      %v1291 = vpop.f32.mrb[0].mxu0
      %v1292 = vpop.f32.mrb[0].mxu0
      %v1293 = vadd.f32 0.0, %v1292
      %v1294 = vpop.f32.mrb[0].mxu0
      %1295 = vmatprep.mubr.bf16.mxu0 0
      %1296 = vmatmul.mubr.bf16.gmra.mrb[0].mxu0 %v1158
      %v1297 = vpop.f32.mrb[0].mxu0
      %v1298 = vadd.f32 0.0, %v1297
      %v1299 = vpop.f32.mrb[0].mxu0
      %v1300 = vpop.f32.mrb[0].mxu0
      %v1301 = vadd.f32 0.0, %v1300
      %v1302 = vpop.f32.mrb[0].mxu0
      %1303 = vmatprep.mubr.bf16.mxu0 0
      %1304 = vmatmul.mubr.bf16.gmra.mrb[0].mxu0 %v1161
      %v1305 = vpop.f32.mrb[0].mxu0
      %v1306 = vadd.f32 0.0, %v1305
      %v1307 = vpop.f32.mrb[0].mxu0
      %v1308 = vpop.f32.mrb[0].mxu0
      %v1309 = vadd.f32 0.0, %v1308
      %v1310 = vpop.f32.mrb[0].mxu0
      %1311 = vmatprep.mubr.bf16.mxu0 0
      %1312 = vmatmul.mubr.bf16.gmra.mrb[0].mxu0 %v1164
      %v1313 = vpop.f32.mrb[0].mxu0
      %v1314 = vadd.f32 0.0, %v1313
      %v1315 = vpop.f32.mrb[0].mxu0
      %v1316 = vpop.f32.mrb[0].mxu0
      %v1317 = vadd.f32 0.0, %v1316
      %v1318 = vpop.f32.mrb[0].mxu0
      %1319 = vmatprep.mubr.bf16.mxu0 0
      %1320 = vmatmul.mubr.bf16.gmra.mrb[0].mxu0 %v1167
      %v1321 = vpop.f32.mrb[0].mxu0
      %v1322 = vadd.f32 0.0, %v1321
      %v1323 = vpop.f32.mrb[0].mxu0
      %v1324 = vpop.f32.mrb[0].mxu0
      %v1325 = vadd.f32 0.0, %v1324
      %v1326 = vpop.f32.mrb[0].mxu0
      %1327 = vmatprep.mubr.bf16.mxu0 0
      %1328 = vmatmul.mubr.bf16.gmra.mrb[0].mxu0 %v1170
      %v1329 = vpop.f32.mrb[0].mxu0
      %v1330 = vadd.f32 0.0, %v1329
      %v1331 = vpop.f32.mrb[0].mxu0
      %v1332 = vpop.f32.mrb[0].mxu0
      %v1333 = vadd.f32 0.0, %v1332
      %v1334 = vpop.f32.mrb[0].mxu0
      %1335 = vdwg.mxu0
      %v1336 = vadd.f32 %v948, %v1210
      %v1337 = vadd.f32 %v951, %v1213
      %v1338 = vadd.f32 %v956, %v1218
      %v1339 = vadd.f32 %v959, %v1221
      %v1340 = vadd.f32 %v964, %v1226
      %v1341 = vadd.f32 %v967, %v1229
      %v1342 = vadd.f32 %v972, %v1234
      %v1343 = vadd.f32 %v975, %v1237
      %v1344 = vadd.f32 %v980, %v1242
      %v1345 = vadd.f32 %v983, %v1245
      %v1346 = vadd.f32 %v988, %v1250
      %v1347 = vadd.f32 %v991, %v1253
      %v1348 = vadd.f32 %v996, %v1258
      %v1349 = vadd.f32 %v999, %v1261
      %v1350 = vadd.f32 %v1004, %v1266
      %v1351 = vadd.f32 %v1007, %v1269
      %v1352 = vadd.f32 %v1012, %v1274
      %v1353 = vadd.f32 %v1015, %v1277
      %v1354 = vadd.f32 %v1020, %v1282
      %v1355 = vadd.f32 %v1023, %v1285
      %v1356 = vadd.f32 %v1028, %v1290
      %v1357 = vadd.f32 %v1031, %v1293
      %v1358 = vadd.f32 %v1036, %v1298
      %v1359 = vadd.f32 %v1039, %v1301
      %v1360 = vadd.f32 %v1044, %v1306
      %v1361 = vadd.f32 %v1047, %v1309
      %v1362 = vadd.f32 %v1052, %v1314
      %v1363 = vadd.f32 %v1055, %v1317
      %v1364 = vadd.f32 %v1060, %v1322
      %v1365 = vadd.f32 %v1063, %v1325
      %v1366 = vadd.f32 %v1068, %v1330
      %v1367 = vadd.f32 %v1071, %v1333
      %v1368 = vld [vmem:[%s517 + $0x7] sm:$0xff]
      %v1369 = vld [vmem:[%s517 + $0xf] sm:$0xff]
      %v1370 = vld [vmem:[%s517 + $0x27] sm:$0xff]
      %v1371 = vld [vmem:[%s517 + $0x2f] sm:$0xff]
      %v1372 = vld [vmem:[%s517 + $0x47] sm:$0xff]
      %v1373 = vld [vmem:[%s517 + $0x4f] sm:$0xff]
      %v1374 = vld [vmem:[%s517 + $0x67] sm:$0xff]
      %v1375 = vld [vmem:[%s517 + $0x6f] sm:$0xff]
      %v1376 = vld [vmem:[%s517 + $0x87] sm:$0xff]
      %v1377 = vld [vmem:[%s517 + $0x8f] sm:$0xff]
      %v1378 = vld [vmem:[%s517 + $0xa7] sm:$0xff]
      %v1379 = vld [vmem:[%s517 + $0xaf] sm:$0xff]
      %v1380 = vld [vmem:[%s517 + $0xc7] sm:$0xff]
      %v1381 = vld [vmem:[%s517 + $0xcf] sm:$0xff]
      %v1382 = vld [vmem:[%s517 + $0xe7] sm:$0xff]
      %v1383 = vld [vmem:[%s517 + $0xef] sm:$0xff]
      %v1384 = vld [vmem:[%s517 + $0x107] sm:$0xff]
      %v1385 = vld [vmem:[%s517 + $0x10f] sm:$0xff]
      %v1386 = vld [vmem:[%s517 + $0x127] sm:$0xff]
      %v1387 = vld [vmem:[%s517 + $0x12f] sm:$0xff]
      %v1388 = vld [vmem:[%s517 + $0x147] sm:$0xff]
      %v1389 = vld [vmem:[%s517 + $0x14f] sm:$0xff]
      %v1390 = vld [vmem:[%s517 + $0x167] sm:$0xff]
      %v1391 = vld [vmem:[%s517 + $0x16f] sm:$0xff]
      %v1392 = vld [vmem:[%s517 + $0x187] sm:$0xff]
      %v1393 = vld [vmem:[%s517 + $0x18f] sm:$0xff]
      %v1394 = vld [vmem:[%s517 + $0x1a7] sm:$0xff]
      %v1395 = vld [vmem:[%s517 + $0x1af] sm:$0xff]
      %v1396 = vld [vmem:[%s517 + $0x1c7] sm:$0xff]
      %v1397 = vld [vmem:[%s517 + $0x1cf] sm:$0xff]
      %v1398 = vld [vmem:[%s517 + $0x1e7] sm:$0xff]
      %v1399 = vld [vmem:[%s517 + $0x1ef] sm:$0xff]
      %v1400 = vpack.c.bf16 %v1369, %v1368
      %v1401 = vpack.c.bf16 %v1371, %v1370
      %v1402 = vpack.c.bf16 %v1373, %v1372
      %v1403 = vpack.c.bf16 %v1375, %v1374
      %v1404 = vpack.c.bf16 %v1377, %v1376
      %v1405 = vpack.c.bf16 %v1379, %v1378
      %v1406 = vpack.c.bf16 %v1381, %v1380
      %v1407 = vpack.c.bf16 %v1383, %v1382
      %v1408 = vpack.c.bf16 %v1385, %v1384
      %v1409 = vpack.c.bf16 %v1387, %v1386
      %v1410 = vpack.c.bf16 %v1389, %v1388
      %v1411 = vpack.c.bf16 %v1391, %v1390
      %v1412 = vpack.c.bf16 %v1393, %v1392
      %v1413 = vpack.c.bf16 %v1395, %v1394
      %v1414 = vpack.c.bf16 %v1397, %v1396
      %v1415 = vpack.c.bf16 %v1399, %v1398
      %s1416 = scalar_lea.vmem %s3, 6
      %v1417 = vld [vmem:[%s1416] sm:$0x3]
      %v1419 = vsel %vm444, %v1400, 0
      %v1422 = vsel %vm444, %v1401, 0
      %v1425 = vsel %vm444, %v1402, 0
      %v1428 = vsel %vm444, %v1403, 0
      %v1431 = vsel %vm444, %v1404, 0
      %v1434 = vsel %vm444, %v1405, 0
      %v1437 = vsel %vm444, %v1406, 0
      %v1440 = vsel %vm444, %v1407, 0
      %v1443 = vsel %vm444, %v1408, 0
      %v1446 = vsel %vm444, %v1409, 0
      %v1449 = vsel %vm444, %v1410, 0
      %v1452 = vsel %vm444, %v1411, 0
      %v1455 = vsel %vm444, %v1412, 0
      %v1458 = vsel %vm444, %v1413, 0
      %v1461 = vsel %vm444, %v1414, 0
      %v1464 = vsel %vm444, %v1415, 0
      %v1467 = vsel %vm697, %v1417, 0
      %1469 = vmatprep.subr.bf16.mxu0 0
      %1470 = vmatpush1.bf16.msra.mxu0 %v1467
      %1471 = vmatprep.subr.bf16.mxu0 0
      %1472 = vmatpush1.bf16.msra.mxu0 0
      %1473 = vmatprep.subr.bf16.mxu0 0
      %1474 = vmatpush1.bf16.msra.mxu0 0
      %1475 = vmatprep.subr.bf16.mxu0 0
      %1476 = vmatpush1.bf16.msra.mxu0 0
      %1477 = vmatprep.subr.bf16.mxu0 0
      %1478 = vmatpush1.bf16.msra.mxu0 0
      %1479 = vmatprep.subr.bf16.mxu0 0
      %1480 = vmatpush1.bf16.msra.mxu0 0
      %1481 = vmatprep.subr.bf16.mxu0 0
      %1482 = vmatpush1.bf16.msra.mxu0 0
      %1483 = vmatprep.subr.bf16.mxu0 0
      %1484 = vmatpush1.bf16.msra.mxu0 0
      %1485 = vmatprep.subr.bf16.mxu0 0
      %1486 = vmatpush1.bf16.msra.mxu0 0
      %1487 = vmatprep.subr.bf16.mxu0 0
      %1488 = vmatpush1.bf16.msra.mxu0 0
      %1489 = vmatprep.subr.bf16.mxu0 0
      %1490 = vmatpush1.bf16.msra.mxu0 0
      %1491 = vmatprep.subr.bf16.mxu0 0
      %1492 = vmatpush1.bf16.msra.mxu0 0
      %1493 = vmatprep.subr.bf16.mxu0 0
      %1494 = vmatpush1.bf16.msra.mxu0 0
      %1495 = vmatprep.subr.bf16.mxu0 0
      %1496 = vmatpush1.bf16.msra.mxu0 0
      %1497 = vmatprep.subr.bf16.mxu0 0
      %1498 = vmatpush1.bf16.msra.mxu0 0
      %1499 = vmatprep.subr.bf16.mxu0 0
      %1500 = vmatpush1.bf16.msra.mxu0 0
      %1501 = vmatprep.mubr.bf16.mxu0 0
      %1502 = vmatmul.mubr.bf16.gmra.mrb[0].mxu0 %v1419
      %v1503 = vpop.f32.mrb[0].mxu0
      %v1504 = vadd.f32 0.0, %v1503
      %v1505 = vpop.f32.mrb[0].mxu0
      %v1506 = vpop.f32.mrb[0].mxu0
      %v1507 = vadd.f32 0.0, %v1506
      %v1508 = vpop.f32.mrb[0].mxu0
      %1509 = vmatprep.mubr.bf16.mxu0 0
      %1510 = vmatmul.mubr.bf16.gmra.mrb[0].mxu0 %v1422
      %v1511 = vpop.f32.mrb[0].mxu0
      %v1512 = vadd.f32 0.0, %v1511
      %v1513 = vpop.f32.mrb[0].mxu0
      %v1514 = vpop.f32.mrb[0].mxu0
      %v1515 = vadd.f32 0.0, %v1514
      %v1516 = vpop.f32.mrb[0].mxu0
      %1517 = vmatprep.mubr.bf16.mxu0 0
      %1518 = vmatmul.mubr.bf16.gmra.mrb[0].mxu0 %v1425
      %v1519 = vpop.f32.mrb[0].mxu0
      %v1520 = vadd.f32 0.0, %v1519
      %v1521 = vpop.f32.mrb[0].mxu0
      %v1522 = vpop.f32.mrb[0].mxu0
      %v1523 = vadd.f32 0.0, %v1522
      %v1524 = vpop.f32.mrb[0].mxu0
      %1525 = vmatprep.mubr.bf16.mxu0 0
      %1526 = vmatmul.mubr.bf16.gmra.mrb[0].mxu0 %v1428
      %v1527 = vpop.f32.mrb[0].mxu0
      %v1528 = vadd.f32 0.0, %v1527
      %v1529 = vpop.f32.mrb[0].mxu0
      %v1530 = vpop.f32.mrb[0].mxu0
      %v1531 = vadd.f32 0.0, %v1530
      %v1532 = vpop.f32.mrb[0].mxu0
      %1533 = vmatprep.mubr.bf16.mxu0 0
      %1534 = vmatmul.mubr.bf16.gmra.mrb[0].mxu0 %v1431
      %v1535 = vpop.f32.mrb[0].mxu0
      %v1536 = vadd.f32 0.0, %v1535
      %v1537 = vpop.f32.mrb[0].mxu0
      %v1538 = vpop.f32.mrb[0].mxu0
      %v1539 = vadd.f32 0.0, %v1538
      %v1540 = vpop.f32.mrb[0].mxu0
      %1541 = vmatprep.mubr.bf16.mxu0 0
      %1542 = vmatmul.mubr.bf16.gmra.mrb[0].mxu0 %v1434
      %v1543 = vpop.f32.mrb[0].mxu0
      %v1544 = vadd.f32 0.0, %v1543
      %v1545 = vpop.f32.mrb[0].mxu0
      %v1546 = vpop.f32.mrb[0].mxu0
      %v1547 = vadd.f32 0.0, %v1546
      %v1548 = vpop.f32.mrb[0].mxu0
      %1549 = vmatprep.mubr.bf16.mxu0 0
      %1550 = vmatmul.mubr.bf16.gmra.mrb[0].mxu0 %v1437
      %v1551 = vpop.f32.mrb[0].mxu0
      %v1552 = vadd.f32 0.0, %v1551
      %v1553 = vpop.f32.mrb[0].mxu0
      %v1554 = vpop.f32.mrb[0].mxu0
      %v1555 = vadd.f32 0.0, %v1554
      %v1556 = vpop.f32.mrb[0].mxu0
      %1557 = vmatprep.mubr.bf16.mxu0 0
      %1558 = vmatmul.mubr.bf16.gmra.mrb[0].mxu0 %v1440
      %v1559 = vpop.f32.mrb[0].mxu0
      %v1560 = vadd.f32 0.0, %v1559
      %v1561 = vpop.f32.mrb[0].mxu0
      %v1562 = vpop.f32.mrb[0].mxu0
      %v1563 = vadd.f32 0.0, %v1562
      %v1564 = vpop.f32.mrb[0].mxu0
      %1565 = vmatprep.mubr.bf16.mxu0 0
      %1566 = vmatmul.mubr.bf16.gmra.mrb[0].mxu0 %v1443
      %v1567 = vpop.f32.mrb[0].mxu0
      %v1568 = vadd.f32 0.0, %v1567
      %v1569 = vpop.f32.mrb[0].mxu0
      %v1570 = vpop.f32.mrb[0].mxu0
      %v1571 = vadd.f32 0.0, %v1570
      %v1572 = vpop.f32.mrb[0].mxu0
      %1573 = vmatprep.mubr.bf16.mxu0 0
      %1574 = vmatmul.mubr.bf16.gmra.mrb[0].mxu0 %v1446
      %v1575 = vpop.f32.mrb[0].mxu0
      %v1576 = vadd.f32 0.0, %v1575
      %v1577 = vpop.f32.mrb[0].mxu0
      %v1578 = vpop.f32.mrb[0].mxu0
      %v1579 = vadd.f32 0.0, %v1578
      %v1580 = vpop.f32.mrb[0].mxu0
      %1581 = vmatprep.mubr.bf16.mxu0 0
      %1582 = vmatmul.mubr.bf16.gmra.mrb[0].mxu0 %v1449
      %v1583 = vpop.f32.mrb[0].mxu0
      %v1584 = vadd.f32 0.0, %v1583
      %v1585 = vpop.f32.mrb[0].mxu0
      %v1586 = vpop.f32.mrb[0].mxu0
      %v1587 = vadd.f32 0.0, %v1586
      %v1588 = vpop.f32.mrb[0].mxu0
      %1589 = vmatprep.mubr.bf16.mxu0 0
      %1590 = vmatmul.mubr.bf16.gmra.mrb[0].mxu0 %v1452
      %v1591 = vpop.f32.mrb[0].mxu0
      %v1592 = vadd.f32 0.0, %v1591
      %v1593 = vpop.f32.mrb[0].mxu0
      %v1594 = vpop.f32.mrb[0].mxu0
      %v1595 = vadd.f32 0.0, %v1594
      %v1596 = vpop.f32.mrb[0].mxu0
      %1597 = vmatprep.mubr.bf16.mxu0 0
      %1598 = vmatmul.mubr.bf16.gmra.mrb[0].mxu0 %v1455
      %v1599 = vpop.f32.mrb[0].mxu0
      %v1600 = vadd.f32 0.0, %v1599
      %v1601 = vpop.f32.mrb[0].mxu0
      %v1602 = vpop.f32.mrb[0].mxu0
      %v1603 = vadd.f32 0.0, %v1602
      %v1604 = vpop.f32.mrb[0].mxu0
      %1605 = vmatprep.mubr.bf16.mxu0 0
      %1606 = vmatmul.mubr.bf16.gmra.mrb[0].mxu0 %v1458
      %v1607 = vpop.f32.mrb[0].mxu0
      %v1608 = vadd.f32 0.0, %v1607
      %v1609 = vpop.f32.mrb[0].mxu0
      %v1610 = vpop.f32.mrb[0].mxu0
      %v1611 = vadd.f32 0.0, %v1610
      %v1612 = vpop.f32.mrb[0].mxu0
      %1613 = vmatprep.mubr.bf16.mxu0 0
      %1614 = vmatmul.mubr.bf16.gmra.mrb[0].mxu0 %v1461
      %v1615 = vpop.f32.mrb[0].mxu0
      %v1616 = vadd.f32 0.0, %v1615
      %v1617 = vpop.f32.mrb[0].mxu0
      %v1618 = vpop.f32.mrb[0].mxu0
      %v1619 = vadd.f32 0.0, %v1618
      %v1620 = vpop.f32.mrb[0].mxu0
      %1621 = vmatprep.mubr.bf16.mxu0 0
      %1622 = vmatmul.mubr.bf16.gmra.mrb[0].mxu0 %v1464
      %v1623 = vpop.f32.mrb[0].mxu0
      %v1624 = vadd.f32 0.0, %v1623
      %v1625 = vpop.f32.mrb[0].mxu0
      %v1626 = vpop.f32.mrb[0].mxu0
      %v1627 = vadd.f32 0.0, %v1626
      %v1628 = vpop.f32.mrb[0].mxu0
      %1629 = vdwg.mxu0
      %v1630 = vadd.f32 %v1336, %v1504
      %v1631 = vadd.f32 %v1337, %v1507
      %v1632 = vadd.f32 %v1338, %v1512
      %v1633 = vadd.f32 %v1339, %v1515
      %v1634 = vadd.f32 %v1340, %v1520
      %v1635 = vadd.f32 %v1341, %v1523
      %v1636 = vadd.f32 %v1342, %v1528
      %v1637 = vadd.f32 %v1343, %v1531
      %v1638 = vadd.f32 %v1344, %v1536
      %v1639 = vadd.f32 %v1345, %v1539
      %v1640 = vadd.f32 %v1346, %v1544
      %v1641 = vadd.f32 %v1347, %v1547
      %v1642 = vadd.f32 %v1348, %v1552
      %v1643 = vadd.f32 %v1349, %v1555
      %v1644 = vadd.f32 %v1350, %v1560
      %v1645 = vadd.f32 %v1351, %v1563
      %v1646 = vadd.f32 %v1352, %v1568
      %v1647 = vadd.f32 %v1353, %v1571
      %v1648 = vadd.f32 %v1354, %v1576
      %v1649 = vadd.f32 %v1355, %v1579
      %v1650 = vadd.f32 %v1356, %v1584
      %v1651 = vadd.f32 %v1357, %v1587
      %v1652 = vadd.f32 %v1358, %v1592
      %v1653 = vadd.f32 %v1359, %v1595
      %v1654 = vadd.f32 %v1360, %v1600
      %v1655 = vadd.f32 %v1361, %v1603
      %v1656 = vadd.f32 %v1362, %v1608
      %v1657 = vadd.f32 %v1363, %v1611
      %v1658 = vadd.f32 %v1364, %v1616
      %v1659 = vadd.f32 %v1365, %v1619
      %v1660 = vadd.f32 %v1366, %v1624
      %v1661 = vadd.f32 %v1367, %v1627
      %v1662 = vld [vmem:[%s517 + $0x8] sm:$0xff]
      %v1663 = vld [vmem:[%s517 + $0x10] sm:$0xff]
      %v1664 = vld [vmem:[%s517 + $0x28] sm:$0xff]
      %v1665 = vld [vmem:[%s517 + $0x30] sm:$0xff]
      %v1666 = vld [vmem:[%s517 + $0x48] sm:$0xff]
      %v1667 = vld [vmem:[%s517 + $0x50] sm:$0xff]
      %v1668 = vld [vmem:[%s517 + $0x68] sm:$0xff]
      %v1669 = vld [vmem:[%s517 + $0x70] sm:$0xff]
      %v1670 = vld [vmem:[%s517 + $0x88] sm:$0xff]
      %v1671 = vld [vmem:[%s517 + $0x90] sm:$0xff]
      %v1672 = vld [vmem:[%s517 + $0xa8] sm:$0xff]
      %v1673 = vld [vmem:[%s517 + $0xb0] sm:$0xff]
      %v1674 = vld [vmem:[%s517 + $0xc8] sm:$0xff]
      %v1675 = vld [vmem:[%s517 + $0xd0] sm:$0xff]
      %v1676 = vld [vmem:[%s517 + $0xe8] sm:$0xff]
      %v1677 = vld [vmem:[%s517 + $0xf0] sm:$0xff]
      %v1678 = vld [vmem:[%s517 + $0x108] sm:$0xff]
      %v1679 = vld [vmem:[%s517 + $0x110] sm:$0xff]
      %v1680 = vld [vmem:[%s517 + $0x128] sm:$0xff]
      %v1681 = vld [vmem:[%s517 + $0x130] sm:$0xff]
      %v1682 = vld [vmem:[%s517 + $0x148] sm:$0xff]
      %v1683 = vld [vmem:[%s517 + $0x150] sm:$0xff]
      %v1684 = vld [vmem:[%s517 + $0x168] sm:$0xff]
      %v1685 = vld [vmem:[%s517 + $0x170] sm:$0xff]
      %v1686 = vld [vmem:[%s517 + $0x188] sm:$0xff]
      %v1687 = vld [vmem:[%s517 + $0x190] sm:$0xff]
      %v1688 = vld [vmem:[%s517 + $0x1a8] sm:$0xff]
      %v1689 = vld [vmem:[%s517 + $0x1b0] sm:$0xff]
      %v1690 = vld [vmem:[%s517 + $0x1c8] sm:$0xff]
      %v1691 = vld [vmem:[%s517 + $0x1d0] sm:$0xff]
      %v1692 = vld [vmem:[%s517 + $0x1e8] sm:$0xff]
      %v1693 = vld [vmem:[%s517 + $0x1f0] sm:$0xff]
      %v1694 = vpack.c.bf16 %v1663, %v1662
      %v1695 = vpack.c.bf16 %v1665, %v1664
      %v1696 = vpack.c.bf16 %v1667, %v1666
      %v1697 = vpack.c.bf16 %v1669, %v1668
      %v1698 = vpack.c.bf16 %v1671, %v1670
      %v1699 = vpack.c.bf16 %v1673, %v1672
      %v1700 = vpack.c.bf16 %v1675, %v1674
      %v1701 = vpack.c.bf16 %v1677, %v1676
      %v1702 = vpack.c.bf16 %v1679, %v1678
      %v1703 = vpack.c.bf16 %v1681, %v1680
      %v1704 = vpack.c.bf16 %v1683, %v1682
      %v1705 = vpack.c.bf16 %v1685, %v1684
      %v1706 = vpack.c.bf16 %v1687, %v1686
      %v1707 = vpack.c.bf16 %v1689, %v1688
      %v1708 = vpack.c.bf16 %v1691, %v1690
      %v1709 = vpack.c.bf16 %v1693, %v1692
      %s1710 = scalar_lea.vmem %s3, 8
      %v1711 = vld [vmem:[%s1710] sm:$0x3]
      %v1713 = vsel %vm444, %v1694, 0
      %v1716 = vsel %vm444, %v1695, 0
      %v1719 = vsel %vm444, %v1696, 0
      %v1722 = vsel %vm444, %v1697, 0
      %v1725 = vsel %vm444, %v1698, 0
      %v1728 = vsel %vm444, %v1699, 0
      %v1731 = vsel %vm444, %v1700, 0
      %v1734 = vsel %vm444, %v1701, 0
      %v1737 = vsel %vm444, %v1702, 0
      %v1740 = vsel %vm444, %v1703, 0
      %v1743 = vsel %vm444, %v1704, 0
      %v1746 = vsel %vm444, %v1705, 0
      %v1749 = vsel %vm444, %v1706, 0
      %v1752 = vsel %vm444, %v1707, 0
      %v1755 = vsel %vm444, %v1708, 0
      %v1758 = vsel %vm444, %v1709, 0
      %v1761 = vsel %vm697, %v1711, 0
      %1763 = vmatprep.subr.bf16.mxu0 0
      %1764 = vmatpush1.bf16.msra.mxu0 %v1761
      %1765 = vmatprep.subr.bf16.mxu0 0
      %1766 = vmatpush1.bf16.msra.mxu0 0
      %1767 = vmatprep.subr.bf16.mxu0 0
      %1768 = vmatpush1.bf16.msra.mxu0 0
      %1769 = vmatprep.subr.bf16.mxu0 0
      %1770 = vmatpush1.bf16.msra.mxu0 0
      %1771 = vmatprep.subr.bf16.mxu0 0
      %1772 = vmatpush1.bf16.msra.mxu0 0
      %1773 = vmatprep.subr.bf16.mxu0 0
      %1774 = vmatpush1.bf16.msra.mxu0 0
      %1775 = vmatprep.subr.bf16.mxu0 0
      %1776 = vmatpush1.bf16.msra.mxu0 0
      %1777 = vmatprep.subr.bf16.mxu0 0
      %1778 = vmatpush1.bf16.msra.mxu0 0
      %1779 = vmatprep.subr.bf16.mxu0 0
      %1780 = vmatpush1.bf16.msra.mxu0 0
      %1781 = vmatprep.subr.bf16.mxu0 0
      %1782 = vmatpush1.bf16.msra.mxu0 0
      %1783 = vmatprep.subr.bf16.mxu0 0
      %1784 = vmatpush1.bf16.msra.mxu0 0
      %1785 = vmatprep.subr.bf16.mxu0 0
      %1786 = vmatpush1.bf16.msra.mxu0 0
      %1787 = vmatprep.subr.bf16.mxu0 0
      %1788 = vmatpush1.bf16.msra.mxu0 0
      %1789 = vmatprep.subr.bf16.mxu0 0
      %1790 = vmatpush1.bf16.msra.mxu0 0
      %1791 = vmatprep.subr.bf16.mxu0 0
      %1792 = vmatpush1.bf16.msra.mxu0 0
      %1793 = vmatprep.subr.bf16.mxu0 0
      %1794 = vmatpush1.bf16.msra.mxu0 0
      %1795 = vmatprep.mubr.bf16.mxu0 0
      %1796 = vmatmul.mubr.bf16.gmra.mrb[0].mxu0 %v1713
      %v1797 = vpop.f32.mrb[0].mxu0
      %v1798 = vadd.f32 0.0, %v1797
      %v1799 = vpop.f32.mrb[0].mxu0
      %v1800 = vpop.f32.mrb[0].mxu0
      %v1801 = vadd.f32 0.0, %v1800
      %v1802 = vpop.f32.mrb[0].mxu0
      %1803 = vmatprep.mubr.bf16.mxu0 0
      %1804 = vmatmul.mubr.bf16.gmra.mrb[0].mxu0 %v1716
      %v1805 = vpop.f32.mrb[0].mxu0
      %v1806 = vadd.f32 0.0, %v1805
      %v1807 = vpop.f32.mrb[0].mxu0
      %v1808 = vpop.f32.mrb[0].mxu0
      %v1809 = vadd.f32 0.0, %v1808
      %v1810 = vpop.f32.mrb[0].mxu0
      %1811 = vmatprep.mubr.bf16.mxu0 0
      %1812 = vmatmul.mubr.bf16.gmra.mrb[0].mxu0 %v1719
      %v1813 = vpop.f32.mrb[0].mxu0
      %v1814 = vadd.f32 0.0, %v1813
      %v1815 = vpop.f32.mrb[0].mxu0
      %v1816 = vpop.f32.mrb[0].mxu0
      %v1817 = vadd.f32 0.0, %v1816
      %v1818 = vpop.f32.mrb[0].mxu0
      %1819 = vmatprep.mubr.bf16.mxu0 0
      %1820 = vmatmul.mubr.bf16.gmra.mrb[0].mxu0 %v1722
      %v1821 = vpop.f32.mrb[0].mxu0
      %v1822 = vadd.f32 0.0, %v1821
      %v1823 = vpop.f32.mrb[0].mxu0
      %v1824 = vpop.f32.mrb[0].mxu0
      %v1825 = vadd.f32 0.0, %v1824
      %v1826 = vpop.f32.mrb[0].mxu0
      %1827 = vmatprep.mubr.bf16.mxu0 0
      %1828 = vmatmul.mubr.bf16.gmra.mrb[0].mxu0 %v1725
      %v1829 = vpop.f32.mrb[0].mxu0
      %v1830 = vadd.f32 0.0, %v1829
      %v1831 = vpop.f32.mrb[0].mxu0
      %v1832 = vpop.f32.mrb[0].mxu0
      %v1833 = vadd.f32 0.0, %v1832
      %v1834 = vpop.f32.mrb[0].mxu0
      %1835 = vmatprep.mubr.bf16.mxu0 0
      %1836 = vmatmul.mubr.bf16.gmra.mrb[0].mxu0 %v1728
      %v1837 = vpop.f32.mrb[0].mxu0
      %v1838 = vadd.f32 0.0, %v1837
      %v1839 = vpop.f32.mrb[0].mxu0
      %v1840 = vpop.f32.mrb[0].mxu0
      %v1841 = vadd.f32 0.0, %v1840
      %v1842 = vpop.f32.mrb[0].mxu0
      %1843 = vmatprep.mubr.bf16.mxu0 0
      %1844 = vmatmul.mubr.bf16.gmra.mrb[0].mxu0 %v1731
      %v1845 = vpop.f32.mrb[0].mxu0
      %v1846 = vadd.f32 0.0, %v1845
      %v1847 = vpop.f32.mrb[0].mxu0
      %v1848 = vpop.f32.mrb[0].mxu0
      %v1849 = vadd.f32 0.0, %v1848
      %v1850 = vpop.f32.mrb[0].mxu0
      %1851 = vmatprep.mubr.bf16.mxu0 0
      %1852 = vmatmul.mubr.bf16.gmra.mrb[0].mxu0 %v1734
      %v1853 = vpop.f32.mrb[0].mxu0
      %v1854 = vadd.f32 0.0, %v1853
      %v1855 = vpop.f32.mrb[0].mxu0
      %v1856 = vpop.f32.mrb[0].mxu0
      %v1857 = vadd.f32 0.0, %v1856
      %v1858 = vpop.f32.mrb[0].mxu0
      %1859 = vmatprep.mubr.bf16.mxu0 0
      %1860 = vmatmul.mubr.bf16.gmra.mrb[0].mxu0 %v1737
      %v1861 = vpop.f32.mrb[0].mxu0
      %v1862 = vadd.f32 0.0, %v1861
      %v1863 = vpop.f32.mrb[0].mxu0
      %v1864 = vpop.f32.mrb[0].mxu0
      %v1865 = vadd.f32 0.0, %v1864
      %v1866 = vpop.f32.mrb[0].mxu0
      %1867 = vmatprep.mubr.bf16.mxu0 0
      %1868 = vmatmul.mubr.bf16.gmra.mrb[0].mxu0 %v1740
      %v1869 = vpop.f32.mrb[0].mxu0
      %v1870 = vadd.f32 0.0, %v1869
      %v1871 = vpop.f32.mrb[0].mxu0
      %v1872 = vpop.f32.mrb[0].mxu0
      %v1873 = vadd.f32 0.0, %v1872
      %v1874 = vpop.f32.mrb[0].mxu0
      %1875 = vmatprep.mubr.bf16.mxu0 0
      %1876 = vmatmul.mubr.bf16.gmra.mrb[0].mxu0 %v1743
      %v1877 = vpop.f32.mrb[0].mxu0
      %v1878 = vadd.f32 0.0, %v1877
      %v1879 = vpop.f32.mrb[0].mxu0
      %v1880 = vpop.f32.mrb[0].mxu0
      %v1881 = vadd.f32 0.0, %v1880
      %v1882 = vpop.f32.mrb[0].mxu0
      %1883 = vmatprep.mubr.bf16.mxu0 0
      %1884 = vmatmul.mubr.bf16.gmra.mrb[0].mxu0 %v1746
      %v1885 = vpop.f32.mrb[0].mxu0
      %v1886 = vadd.f32 0.0, %v1885
      %v1887 = vpop.f32.mrb[0].mxu0
      %v1888 = vpop.f32.mrb[0].mxu0
      %v1889 = vadd.f32 0.0, %v1888
      %v1890 = vpop.f32.mrb[0].mxu0
      %1891 = vmatprep.mubr.bf16.mxu0 0
      %1892 = vmatmul.mubr.bf16.gmra.mrb[0].mxu0 %v1749
      %v1893 = vpop.f32.mrb[0].mxu0
      %v1894 = vadd.f32 0.0, %v1893
      %v1895 = vpop.f32.mrb[0].mxu0
      %v1896 = vpop.f32.mrb[0].mxu0
      %v1897 = vadd.f32 0.0, %v1896
      %v1898 = vpop.f32.mrb[0].mxu0
      %1899 = vmatprep.mubr.bf16.mxu0 0
      %1900 = vmatmul.mubr.bf16.gmra.mrb[0].mxu0 %v1752
      %v1901 = vpop.f32.mrb[0].mxu0
      %v1902 = vadd.f32 0.0, %v1901
      %v1903 = vpop.f32.mrb[0].mxu0
      %v1904 = vpop.f32.mrb[0].mxu0
      %v1905 = vadd.f32 0.0, %v1904
      %v1906 = vpop.f32.mrb[0].mxu0
      %1907 = vmatprep.mubr.bf16.mxu0 0
      %1908 = vmatmul.mubr.bf16.gmra.mrb[0].mxu0 %v1755
      %v1909 = vpop.f32.mrb[0].mxu0
      %v1910 = vadd.f32 0.0, %v1909
      %v1911 = vpop.f32.mrb[0].mxu0
      %v1912 = vpop.f32.mrb[0].mxu0
      %v1913 = vadd.f32 0.0, %v1912
      %v1914 = vpop.f32.mrb[0].mxu0
      %1915 = vmatprep.mubr.bf16.mxu0 0
      %1916 = vmatmul.mubr.bf16.gmra.mrb[0].mxu0 %v1758
      %v1917 = vpop.f32.mrb[0].mxu0
      %v1918 = vadd.f32 0.0, %v1917
      %v1919 = vpop.f32.mrb[0].mxu0
      %v1920 = vpop.f32.mrb[0].mxu0
      %v1921 = vadd.f32 0.0, %v1920
      %v1922 = vpop.f32.mrb[0].mxu0
      %1923 = vdwg.mxu0
      %v1924 = vadd.f32 %v1630, %v1798
      %v1925 = vadd.f32 %v1631, %v1801
      %v1926 = vadd.f32 %v1632, %v1806
      %v1927 = vadd.f32 %v1633, %v1809
      %v1928 = vadd.f32 %v1634, %v1814
      %v1929 = vadd.f32 %v1635, %v1817
      %v1930 = vadd.f32 %v1636, %v1822
      %v1931 = vadd.f32 %v1637, %v1825
      %v1932 = vadd.f32 %v1638, %v1830
      %v1933 = vadd.f32 %v1639, %v1833
      %v1934 = vadd.f32 %v1640, %v1838
      %v1935 = vadd.f32 %v1641, %v1841
      %v1936 = vadd.f32 %v1642, %v1846
      %v1937 = vadd.f32 %v1643, %v1849
      %v1938 = vadd.f32 %v1644, %v1854
      %v1939 = vadd.f32 %v1645, %v1857
      %v1940 = vadd.f32 %v1646, %v1862
      %v1941 = vadd.f32 %v1647, %v1865
      %v1942 = vadd.f32 %v1648, %v1870
      %v1943 = vadd.f32 %v1649, %v1873
      %v1944 = vadd.f32 %v1650, %v1878
      %v1945 = vadd.f32 %v1651, %v1881
      %v1946 = vadd.f32 %v1652, %v1886
      %v1947 = vadd.f32 %v1653, %v1889
      %v1948 = vadd.f32 %v1654, %v1894
      %v1949 = vadd.f32 %v1655, %v1897
      %v1950 = vadd.f32 %v1656, %v1902
      %v1951 = vadd.f32 %v1657, %v1905
      %v1952 = vadd.f32 %v1658, %v1910
      %v1953 = vadd.f32 %v1659, %v1913
      %v1954 = vadd.f32 %v1660, %v1918
      %v1955 = vadd.f32 %v1661, %v1921
      %v1956 = vld [vmem:[%s517 + $0x9] sm:$0xff]
      %v1957 = vld [vmem:[%s517 + $0x11] sm:$0xff]
      %v1958 = vld [vmem:[%s517 + $0x29] sm:$0xff]
      %v1959 = vld [vmem:[%s517 + $0x31] sm:$0xff]
      %v1960 = vld [vmem:[%s517 + $0x49] sm:$0xff]
      %v1961 = vld [vmem:[%s517 + $0x51] sm:$0xff]
      %v1962 = vld [vmem:[%s517 + $0x69] sm:$0xff]
      %v1963 = vld [vmem:[%s517 + $0x71] sm:$0xff]
      %v1964 = vld [vmem:[%s517 + $0x89] sm:$0xff]
      %v1965 = vld [vmem:[%s517 + $0x91] sm:$0xff]
      %v1966 = vld [vmem:[%s517 + $0xa9] sm:$0xff]
      %v1967 = vld [vmem:[%s517 + $0xb1] sm:$0xff]
      %v1968 = vld [vmem:[%s517 + $0xc9] sm:$0xff]
      %v1969 = vld [vmem:[%s517 + $0xd1] sm:$0xff]
      %v1970 = vld [vmem:[%s517 + $0xe9] sm:$0xff]
      %v1971 = vld [vmem:[%s517 + $0xf1] sm:$0xff]
      %v1972 = vld [vmem:[%s517 + $0x109] sm:$0xff]
      %v1973 = vld [vmem:[%s517 + $0x111] sm:$0xff]
      %v1974 = vld [vmem:[%s517 + $0x129] sm:$0xff]
      %v1975 = vld [vmem:[%s517 + $0x131] sm:$0xff]
      %v1976 = vld [vmem:[%s517 + $0x149] sm:$0xff]
      %v1977 = vld [vmem:[%s517 + $0x151] sm:$0xff]
      %v1978 = vld [vmem:[%s517 + $0x169] sm:$0xff]
      %v1979 = vld [vmem:[%s517 + $0x171] sm:$0xff]
      %v1980 = vld [vmem:[%s517 + $0x189] sm:$0xff]
      %v1981 = vld [vmem:[%s517 + $0x191] sm:$0xff]
      %v1982 = vld [vmem:[%s517 + $0x1a9] sm:$0xff]
      %v1983 = vld [vmem:[%s517 + $0x1b1] sm:$0xff]
      %v1984 = vld [vmem:[%s517 + $0x1c9] sm:$0xff]
      %v1985 = vld [vmem:[%s517 + $0x1d1] sm:$0xff]
      %v1986 = vld [vmem:[%s517 + $0x1e9] sm:$0xff]
      %v1987 = vld [vmem:[%s517 + $0x1f1] sm:$0xff]
      %v1988 = vpack.c.bf16 %v1957, %v1956
      %v1989 = vpack.c.bf16 %v1959, %v1958
      %v1990 = vpack.c.bf16 %v1961, %v1960
      %v1991 = vpack.c.bf16 %v1963, %v1962
      %v1992 = vpack.c.bf16 %v1965, %v1964
      %v1993 = vpack.c.bf16 %v1967, %v1966
      %v1994 = vpack.c.bf16 %v1969, %v1968
      %v1995 = vpack.c.bf16 %v1971, %v1970
      %v1996 = vpack.c.bf16 %v1973, %v1972
      %v1997 = vpack.c.bf16 %v1975, %v1974
      %v1998 = vpack.c.bf16 %v1977, %v1976
      %v1999 = vpack.c.bf16 %v1979, %v1978
      %v2000 = vpack.c.bf16 %v1981, %v1980
      %v2001 = vpack.c.bf16 %v1983, %v1982
      %v2002 = vpack.c.bf16 %v1985, %v1984
      %v2003 = vpack.c.bf16 %v1987, %v1986
      %s2004 = scalar_lea.vmem %s3, 10
      %v2005 = vld [vmem:[%s2004] sm:$0x3]
      %v2007 = vsel %vm444, %v1988, 0
      %v2010 = vsel %vm444, %v1989, 0
      %v2013 = vsel %vm444, %v1990, 0
      %v2016 = vsel %vm444, %v1991, 0
      %v2019 = vsel %vm444, %v1992, 0
      %v2022 = vsel %vm444, %v1993, 0
      %v2025 = vsel %vm444, %v1994, 0
      %v2028 = vsel %vm444, %v1995, 0
      %v2031 = vsel %vm444, %v1996, 0
      %v2034 = vsel %vm444, %v1997, 0
      %v2037 = vsel %vm444, %v1998, 0
      %v2040 = vsel %vm444, %v1999, 0
      %v2043 = vsel %vm444, %v2000, 0
      %v2046 = vsel %vm444, %v2001, 0
      %v2049 = vsel %vm444, %v2002, 0
      %v2052 = vsel %vm444, %v2003, 0
      %v2055 = vsel %vm697, %v2005, 0
      %2057 = vmatprep.subr.bf16.mxu0 0
      %2058 = vmatpush1.bf16.msra.mxu0 %v2055
      %2059 = vmatprep.subr.bf16.mxu0 0
      %2060 = vmatpush1.bf16.msra.mxu0 0
      %2061 = vmatprep.subr.bf16.mxu0 0
      %2062 = vmatpush1.bf16.msra.mxu0 0
      %2063 = vmatprep.subr.bf16.mxu0 0
      %2064 = vmatpush1.bf16.msra.mxu0 0
      %2065 = vmatprep.subr.bf16.mxu0 0
      %2066 = vmatpush1.bf16.msra.mxu0 0
      %2067 = vmatprep.subr.bf16.mxu0 0
      %2068 = vmatpush1.bf16.msra.mxu0 0
      %2069 = vmatprep.subr.bf16.mxu0 0
      %2070 = vmatpush1.bf16.msra.mxu0 0
      %2071 = vmatprep.subr.bf16.mxu0 0
      %2072 = vmatpush1.bf16.msra.mxu0 0
      %2073 = vmatprep.subr.bf16.mxu0 0
      %2074 = vmatpush1.bf16.msra.mxu0 0
      %2075 = vmatprep.subr.bf16.mxu0 0
      %2076 = vmatpush1.bf16.msra.mxu0 0
      %2077 = vmatprep.subr.bf16.mxu0 0
      %2078 = vmatpush1.bf16.msra.mxu0 0
      %2079 = vmatprep.subr.bf16.mxu0 0
      %2080 = vmatpush1.bf16.msra.mxu0 0
      %2081 = vmatprep.subr.bf16.mxu0 0
      %2082 = vmatpush1.bf16.msra.mxu0 0
      %2083 = vmatprep.subr.bf16.mxu0 0
      %2084 = vmatpush1.bf16.msra.mxu0 0
      %2085 = vmatprep.subr.bf16.mxu0 0
      %2086 = vmatpush1.bf16.msra.mxu0 0
      %2087 = vmatprep.subr.bf16.mxu0 0
      %2088 = vmatpush1.bf16.msra.mxu0 0
      %2089 = vmatprep.mubr.bf16.mxu0 0
      %2090 = vmatmul.mubr.bf16.gmra.mrb[0].mxu0 %v2007
      %v2091 = vpop.f32.mrb[0].mxu0
      %v2092 = vadd.f32 0.0, %v2091
      %v2093 = vpop.f32.mrb[0].mxu0
      %v2094 = vpop.f32.mrb[0].mxu0
      %v2095 = vadd.f32 0.0, %v2094
      %v2096 = vpop.f32.mrb[0].mxu0
      %2097 = vmatprep.mubr.bf16.mxu0 0
      %2098 = vmatmul.mubr.bf16.gmra.mrb[0].mxu0 %v2010
      %v2099 = vpop.f32.mrb[0].mxu0
      %v2100 = vadd.f32 0.0, %v2099
      %v2101 = vpop.f32.mrb[0].mxu0
      %v2102 = vpop.f32.mrb[0].mxu0
      %v2103 = vadd.f32 0.0, %v2102
      %v2104 = vpop.f32.mrb[0].mxu0
      %2105 = vmatprep.mubr.bf16.mxu0 0
      %2106 = vmatmul.mubr.bf16.gmra.mrb[0].mxu0 %v2013
      %v2107 = vpop.f32.mrb[0].mxu0
      %v2108 = vadd.f32 0.0, %v2107
      %v2109 = vpop.f32.mrb[0].mxu0
      %v2110 = vpop.f32.mrb[0].mxu0
      %v2111 = vadd.f32 0.0, %v2110
      %v2112 = vpop.f32.mrb[0].mxu0
      %2113 = vmatprep.mubr.bf16.mxu0 0
      %2114 = vmatmul.mubr.bf16.gmra.mrb[0].mxu0 %v2016
      %v2115 = vpop.f32.mrb[0].mxu0
      %v2116 = vadd.f32 0.0, %v2115
      %v2117 = vpop.f32.mrb[0].mxu0
      %v2118 = vpop.f32.mrb[0].mxu0
      %v2119 = vadd.f32 0.0, %v2118
      %v2120 = vpop.f32.mrb[0].mxu0
      %2121 = vmatprep.mubr.bf16.mxu0 0
      %2122 = vmatmul.mubr.bf16.gmra.mrb[0].mxu0 %v2019
      %v2123 = vpop.f32.mrb[0].mxu0
      %v2124 = vadd.f32 0.0, %v2123
      %v2125 = vpop.f32.mrb[0].mxu0
      %v2126 = vpop.f32.mrb[0].mxu0
      %v2127 = vadd.f32 0.0, %v2126
      %v2128 = vpop.f32.mrb[0].mxu0
      %2129 = vmatprep.mubr.bf16.mxu0 0
      %2130 = vmatmul.mubr.bf16.gmra.mrb[0].mxu0 %v2022
      %v2131 = vpop.f32.mrb[0].mxu0
      %v2132 = vadd.f32 0.0, %v2131
      %v2133 = vpop.f32.mrb[0].mxu0
      %v2134 = vpop.f32.mrb[0].mxu0
      %v2135 = vadd.f32 0.0, %v2134
      %v2136 = vpop.f32.mrb[0].mxu0
      %2137 = vmatprep.mubr.bf16.mxu0 0
      %2138 = vmatmul.mubr.bf16.gmra.mrb[0].mxu0 %v2025
      %v2139 = vpop.f32.mrb[0].mxu0
      %v2140 = vadd.f32 0.0, %v2139
      %v2141 = vpop.f32.mrb[0].mxu0
      %v2142 = vpop.f32.mrb[0].mxu0
      %v2143 = vadd.f32 0.0, %v2142
      %v2144 = vpop.f32.mrb[0].mxu0
      %2145 = vmatprep.mubr.bf16.mxu0 0
      %2146 = vmatmul.mubr.bf16.gmra.mrb[0].mxu0 %v2028
      %v2147 = vpop.f32.mrb[0].mxu0
      %v2148 = vadd.f32 0.0, %v2147
      %v2149 = vpop.f32.mrb[0].mxu0
      %v2150 = vpop.f32.mrb[0].mxu0
      %v2151 = vadd.f32 0.0, %v2150
      %v2152 = vpop.f32.mrb[0].mxu0
      %2153 = vmatprep.mubr.bf16.mxu0 0
      %2154 = vmatmul.mubr.bf16.gmra.mrb[0].mxu0 %v2031
      %v2155 = vpop.f32.mrb[0].mxu0
      %v2156 = vadd.f32 0.0, %v2155
      %v2157 = vpop.f32.mrb[0].mxu0
      %v2158 = vpop.f32.mrb[0].mxu0
      %v2159 = vadd.f32 0.0, %v2158
      %v2160 = vpop.f32.mrb[0].mxu0
      %2161 = vmatprep.mubr.bf16.mxu0 0
      %2162 = vmatmul.mubr.bf16.gmra.mrb[0].mxu0 %v2034
      %v2163 = vpop.f32.mrb[0].mxu0
      %v2164 = vadd.f32 0.0, %v2163
      %v2165 = vpop.f32.mrb[0].mxu0
      %v2166 = vpop.f32.mrb[0].mxu0
      %v2167 = vadd.f32 0.0, %v2166
      %v2168 = vpop.f32.mrb[0].mxu0
      %2169 = vmatprep.mubr.bf16.mxu0 0
      %2170 = vmatmul.mubr.bf16.gmra.mrb[0].mxu0 %v2037
      %v2171 = vpop.f32.mrb[0].mxu0
      %v2172 = vadd.f32 0.0, %v2171
      %v2173 = vpop.f32.mrb[0].mxu0
      %v2174 = vpop.f32.mrb[0].mxu0
      %v2175 = vadd.f32 0.0, %v2174
      %v2176 = vpop.f32.mrb[0].mxu0
      %2177 = vmatprep.mubr.bf16.mxu0 0
      %2178 = vmatmul.mubr.bf16.gmra.mrb[0].mxu0 %v2040
      %v2179 = vpop.f32.mrb[0].mxu0
      %v2180 = vadd.f32 0.0, %v2179
      %v2181 = vpop.f32.mrb[0].mxu0
      %v2182 = vpop.f32.mrb[0].mxu0
      %v2183 = vadd.f32 0.0, %v2182
      %v2184 = vpop.f32.mrb[0].mxu0
      %2185 = vmatprep.mubr.bf16.mxu0 0
      %2186 = vmatmul.mubr.bf16.gmra.mrb[0].mxu0 %v2043
      %v2187 = vpop.f32.mrb[0].mxu0
      %v2188 = vadd.f32 0.0, %v2187
      %v2189 = vpop.f32.mrb[0].mxu0
      %v2190 = vpop.f32.mrb[0].mxu0
      %v2191 = vadd.f32 0.0, %v2190
      %v2192 = vpop.f32.mrb[0].mxu0
      %2193 = vmatprep.mubr.bf16.mxu0 0
      %2194 = vmatmul.mubr.bf16.gmra.mrb[0].mxu0 %v2046
      %v2195 = vpop.f32.mrb[0].mxu0
      %v2196 = vadd.f32 0.0, %v2195
      %v2197 = vpop.f32.mrb[0].mxu0
      %v2198 = vpop.f32.mrb[0].mxu0
      %v2199 = vadd.f32 0.0, %v2198
      %v2200 = vpop.f32.mrb[0].mxu0
      %2201 = vmatprep.mubr.bf16.mxu0 0
      %2202 = vmatmul.mubr.bf16.gmra.mrb[0].mxu0 %v2049
      %v2203 = vpop.f32.mrb[0].mxu0
      %v2204 = vadd.f32 0.0, %v2203
      %v2205 = vpop.f32.mrb[0].mxu0
      %v2206 = vpop.f32.mrb[0].mxu0
      %v2207 = vadd.f32 0.0, %v2206
      %v2208 = vpop.f32.mrb[0].mxu0
      %2209 = vmatprep.mubr.bf16.mxu0 0
      %2210 = vmatmul.mubr.bf16.gmra.mrb[0].mxu0 %v2052
      %v2211 = vpop.f32.mrb[0].mxu0
      %v2212 = vadd.f32 0.0, %v2211
      %v2213 = vpop.f32.mrb[0].mxu0
      %v2214 = vpop.f32.mrb[0].mxu0
      %v2215 = vadd.f32 0.0, %v2214
      %v2216 = vpop.f32.mrb[0].mxu0
      %2217 = vdwg.mxu0
      %v2218 = vadd.f32 %v1924, %v2092
      %v2219 = vadd.f32 %v1925, %v2095
      %v2220 = vadd.f32 %v1926, %v2100
      %v2221 = vadd.f32 %v1927, %v2103
      %v2222 = vadd.f32 %v1928, %v2108
      %v2223 = vadd.f32 %v1929, %v2111
      %v2224 = vadd.f32 %v1930, %v2116
      %v2225 = vadd.f32 %v1931, %v2119
      %v2226 = vadd.f32 %v1932, %v2124
      %v2227 = vadd.f32 %v1933, %v2127
      %v2228 = vadd.f32 %v1934, %v2132
      %v2229 = vadd.f32 %v1935, %v2135
      %v2230 = vadd.f32 %v1936, %v2140
      %v2231 = vadd.f32 %v1937, %v2143
      %v2232 = vadd.f32 %v1938, %v2148
      %v2233 = vadd.f32 %v1939, %v2151
      %v2234 = vadd.f32 %v1940, %v2156
      %v2235 = vadd.f32 %v1941, %v2159
      %v2236 = vadd.f32 %v1942, %v2164
      %v2237 = vadd.f32 %v1943, %v2167
      %v2238 = vadd.f32 %v1944, %v2172
      %v2239 = vadd.f32 %v1945, %v2175
      %v2240 = vadd.f32 %v1946, %v2180
      %v2241 = vadd.f32 %v1947, %v2183
      %v2242 = vadd.f32 %v1948, %v2188
      %v2243 = vadd.f32 %v1949, %v2191
      %v2244 = vadd.f32 %v1950, %v2196
      %v2245 = vadd.f32 %v1951, %v2199
      %v2246 = vadd.f32 %v1952, %v2204
      %v2247 = vadd.f32 %v1953, %v2207
      %v2248 = vadd.f32 %v1954, %v2212
      %v2249 = vadd.f32 %v1955, %v2215
      %s2250 = scalar_lea.vmem [#allocation2], 64
      %v2251 = vld [vmem:[%s2250 + $0x7] sm:$0xff]
      %v2252 = vld [vmem:[%s2250 + $0xf] sm:$0xff]
      %v2253 = vld [vmem:[%s2250 + $0x27] sm:$0xff]
      %v2254 = vld [vmem:[%s2250 + $0x2f] sm:$0xff]
      %v2255 = vld [vmem:[%s2250 + $0x47] sm:$0xff]
      %v2256 = vld [vmem:[%s2250 + $0x4f] sm:$0xff]
      %v2257 = vld [vmem:[%s2250 + $0x67] sm:$0xff]
      %v2258 = vld [vmem:[%s2250 + $0x6f] sm:$0xff]
      %v2259 = vld [vmem:[%s2250 + $0x87] sm:$0xff]
      %v2260 = vld [vmem:[%s2250 + $0x8f] sm:$0xff]
      %v2261 = vld [vmem:[%s2250 + $0xa7] sm:$0xff]
      %v2262 = vld [vmem:[%s2250 + $0xaf] sm:$0xff]
      %v2263 = vld [vmem:[%s2250 + $0xc7] sm:$0xff]
      %v2264 = vld [vmem:[%s2250 + $0xcf] sm:$0xff]
      %v2265 = vld [vmem:[%s2250 + $0xe7] sm:$0xff]
      %v2266 = vld [vmem:[%s2250 + $0xef] sm:$0xff]
      %v2267 = vld [vmem:[%s2250 + $0x107] sm:$0xff]
      %v2268 = vld [vmem:[%s2250 + $0x10f] sm:$0xff]
      %v2269 = vld [vmem:[%s2250 + $0x127] sm:$0xff]
      %v2270 = vld [vmem:[%s2250 + $0x12f] sm:$0xff]
      %v2271 = vld [vmem:[%s2250 + $0x147] sm:$0xff]
      %v2272 = vld [vmem:[%s2250 + $0x14f] sm:$0xff]
      %v2273 = vld [vmem:[%s2250 + $0x167] sm:$0xff]
      %v2274 = vld [vmem:[%s2250 + $0x16f] sm:$0xff]
      %v2275 = vld [vmem:[%s2250 + $0x187] sm:$0xff]
      %v2276 = vld [vmem:[%s2250 + $0x18f] sm:$0xff]
      %v2277 = vld [vmem:[%s2250 + $0x1a7] sm:$0xff]
      %v2278 = vld [vmem:[%s2250 + $0x1af] sm:$0xff]
      %v2279 = vld [vmem:[%s2250 + $0x1c7] sm:$0xff]
      %v2280 = vld [vmem:[%s2250 + $0x1cf] sm:$0xff]
      %v2281 = vld [vmem:[%s2250 + $0x1e7] sm:$0xff]
      %v2282 = vld [vmem:[%s2250 + $0x1ef] sm:$0xff]
      %v2283 = vpack.c.bf16 %v2252, %v2251
      %v2284 = vpack.c.bf16 %v2254, %v2253
      %v2285 = vpack.c.bf16 %v2256, %v2255
      %v2286 = vpack.c.bf16 %v2258, %v2257
      %v2287 = vpack.c.bf16 %v2260, %v2259
      %v2288 = vpack.c.bf16 %v2262, %v2261
      %v2289 = vpack.c.bf16 %v2264, %v2263
      %v2290 = vpack.c.bf16 %v2266, %v2265
      %v2291 = vpack.c.bf16 %v2268, %v2267
      %v2292 = vpack.c.bf16 %v2270, %v2269
      %v2293 = vpack.c.bf16 %v2272, %v2271
      %v2294 = vpack.c.bf16 %v2274, %v2273
      %v2295 = vpack.c.bf16 %v2276, %v2275
      %v2296 = vpack.c.bf16 %v2278, %v2277
      %v2297 = vpack.c.bf16 %v2280, %v2279
      %v2298 = vpack.c.bf16 %v2282, %v2281
      %s2299 = scalar_lea.vmem %s3, 12
      %v2300 = vld [vmem:[%s2299] sm:$0x3]
      %v2302 = vsel %vm444, %v2283, 0
      %v2305 = vsel %vm444, %v2284, 0
      %v2308 = vsel %vm444, %v2285, 0
      %v2311 = vsel %vm444, %v2286, 0
      %v2314 = vsel %vm444, %v2287, 0
      %v2317 = vsel %vm444, %v2288, 0
      %v2320 = vsel %vm444, %v2289, 0
      %v2323 = vsel %vm444, %v2290, 0
      %v2326 = vsel %vm444, %v2291, 0
      %v2329 = vsel %vm444, %v2292, 0
      %v2332 = vsel %vm444, %v2293, 0
      %v2335 = vsel %vm444, %v2294, 0
      %v2338 = vsel %vm444, %v2295, 0
      %v2341 = vsel %vm444, %v2296, 0
      %v2344 = vsel %vm444, %v2297, 0
      %v2347 = vsel %vm444, %v2298, 0
      %v2350 = vsel %vm697, %v2300, 0
      %2352 = vmatprep.subr.bf16.mxu0 0
      %2353 = vmatpush1.bf16.msra.mxu0 %v2350
      %2354 = vmatprep.subr.bf16.mxu0 0
      %2355 = vmatpush1.bf16.msra.mxu0 0
      %2356 = vmatprep.subr.bf16.mxu0 0
      %2357 = vmatpush1.bf16.msra.mxu0 0
      %2358 = vmatprep.subr.bf16.mxu0 0
      %2359 = vmatpush1.bf16.msra.mxu0 0
      %2360 = vmatprep.subr.bf16.mxu0 0
      %2361 = vmatpush1.bf16.msra.mxu0 0
      %2362 = vmatprep.subr.bf16.mxu0 0
      %2363 = vmatpush1.bf16.msra.mxu0 0
      %2364 = vmatprep.subr.bf16.mxu0 0
      %2365 = vmatpush1.bf16.msra.mxu0 0
      %2366 = vmatprep.subr.bf16.mxu0 0
      %2367 = vmatpush1.bf16.msra.mxu0 0
      %2368 = vmatprep.subr.bf16.mxu0 0
      %2369 = vmatpush1.bf16.msra.mxu0 0
      %2370 = vmatprep.subr.bf16.mxu0 0
      %2371 = vmatpush1.bf16.msra.mxu0 0
      %2372 = vmatprep.subr.bf16.mxu0 0
      %2373 = vmatpush1.bf16.msra.mxu0 0
      %2374 = vmatprep.subr.bf16.mxu0 0
      %2375 = vmatpush1.bf16.msra.mxu0 0
      %2376 = vmatprep.subr.bf16.mxu0 0
      %2377 = vmatpush1.bf16.msra.mxu0 0
      %2378 = vmatprep.subr.bf16.mxu0 0
      %2379 = vmatpush1.bf16.msra.mxu0 0
      %2380 = vmatprep.subr.bf16.mxu0 0
      %2381 = vmatpush1.bf16.msra.mxu0 0
      %2382 = vmatprep.subr.bf16.mxu0 0
      %2383 = vmatpush1.bf16.msra.mxu0 0
      %2384 = vmatprep.mubr.bf16.mxu0 0
      %2385 = vmatmul.mubr.bf16.gmra.mrb[0].mxu0 %v2302
      %v2386 = vpop.f32.mrb[0].mxu0
      %v2387 = vadd.f32 0.0, %v2386
      %v2388 = vpop.f32.mrb[0].mxu0
      %v2389 = vpop.f32.mrb[0].mxu0
      %v2390 = vadd.f32 0.0, %v2389
      %v2391 = vpop.f32.mrb[0].mxu0
      %2392 = vmatprep.mubr.bf16.mxu0 0
      %2393 = vmatmul.mubr.bf16.gmra.mrb[0].mxu0 %v2305
      %v2394 = vpop.f32.mrb[0].mxu0
      %v2395 = vadd.f32 0.0, %v2394
      %v2396 = vpop.f32.mrb[0].mxu0
      %v2397 = vpop.f32.mrb[0].mxu0
      %v2398 = vadd.f32 0.0, %v2397
      %v2399 = vpop.f32.mrb[0].mxu0
      %2400 = vmatprep.mubr.bf16.mxu0 0
      %2401 = vmatmul.mubr.bf16.gmra.mrb[0].mxu0 %v2308
      %v2402 = vpop.f32.mrb[0].mxu0
      %v2403 = vadd.f32 0.0, %v2402
      %v2404 = vpop.f32.mrb[0].mxu0
      %v2405 = vpop.f32.mrb[0].mxu0
      %v2406 = vadd.f32 0.0, %v2405
      %v2407 = vpop.f32.mrb[0].mxu0
      %2408 = vmatprep.mubr.bf16.mxu0 0
      %2409 = vmatmul.mubr.bf16.gmra.mrb[0].mxu0 %v2311
      %v2410 = vpop.f32.mrb[0].mxu0
      %v2411 = vadd.f32 0.0, %v2410
      %v2412 = vpop.f32.mrb[0].mxu0
      %v2413 = vpop.f32.mrb[0].mxu0
      %v2414 = vadd.f32 0.0, %v2413
      %v2415 = vpop.f32.mrb[0].mxu0
      %2416 = vmatprep.mubr.bf16.mxu0 0
      %2417 = vmatmul.mubr.bf16.gmra.mrb[0].mxu0 %v2314
      %v2418 = vpop.f32.mrb[0].mxu0
      %v2419 = vadd.f32 0.0, %v2418
      %v2420 = vpop.f32.mrb[0].mxu0
      %v2421 = vpop.f32.mrb[0].mxu0
      %v2422 = vadd.f32 0.0, %v2421
      %v2423 = vpop.f32.mrb[0].mxu0
      %2424 = vmatprep.mubr.bf16.mxu0 0
      %2425 = vmatmul.mubr.bf16.gmra.mrb[0].mxu0 %v2317
      %v2426 = vpop.f32.mrb[0].mxu0
      %v2427 = vadd.f32 0.0, %v2426
      %v2428 = vpop.f32.mrb[0].mxu0
      %v2429 = vpop.f32.mrb[0].mxu0
      %v2430 = vadd.f32 0.0, %v2429
      %v2431 = vpop.f32.mrb[0].mxu0
      %2432 = vmatprep.mubr.bf16.mxu0 0
      %2433 = vmatmul.mubr.bf16.gmra.mrb[0].mxu0 %v2320
      %v2434 = vpop.f32.mrb[0].mxu0
      %v2435 = vadd.f32 0.0, %v2434
      %v2436 = vpop.f32.mrb[0].mxu0
      %v2437 = vpop.f32.mrb[0].mxu0
      %v2438 = vadd.f32 0.0, %v2437
      %v2439 = vpop.f32.mrb[0].mxu0
      %2440 = vmatprep.mubr.bf16.mxu0 0
      %2441 = vmatmul.mubr.bf16.gmra.mrb[0].mxu0 %v2323
      %v2442 = vpop.f32.mrb[0].mxu0
      %v2443 = vadd.f32 0.0, %v2442
      %v2444 = vpop.f32.mrb[0].mxu0
      %v2445 = vpop.f32.mrb[0].mxu0
      %v2446 = vadd.f32 0.0, %v2445
      %v2447 = vpop.f32.mrb[0].mxu0
      %2448 = vmatprep.mubr.bf16.mxu0 0
      %2449 = vmatmul.mubr.bf16.gmra.mrb[0].mxu0 %v2326
      %v2450 = vpop.f32.mrb[0].mxu0
      %v2451 = vadd.f32 0.0, %v2450
      %v2452 = vpop.f32.mrb[0].mxu0
      %v2453 = vpop.f32.mrb[0].mxu0
      %v2454 = vadd.f32 0.0, %v2453
      %v2455 = vpop.f32.mrb[0].mxu0
      %2456 = vmatprep.mubr.bf16.mxu0 0
      %2457 = vmatmul.mubr.bf16.gmra.mrb[0].mxu0 %v2329
      %v2458 = vpop.f32.mrb[0].mxu0
      %v2459 = vadd.f32 0.0, %v2458
      %v2460 = vpop.f32.mrb[0].mxu0
      %v2461 = vpop.f32.mrb[0].mxu0
      %v2462 = vadd.f32 0.0, %v2461
      %v2463 = vpop.f32.mrb[0].mxu0
      %2464 = vmatprep.mubr.bf16.mxu0 0
      %2465 = vmatmul.mubr.bf16.gmra.mrb[0].mxu0 %v2332
      %v2466 = vpop.f32.mrb[0].mxu0
      %v2467 = vadd.f32 0.0, %v2466
      %v2468 = vpop.f32.mrb[0].mxu0
      %v2469 = vpop.f32.mrb[0].mxu0
      %v2470 = vadd.f32 0.0, %v2469
      %v2471 = vpop.f32.mrb[0].mxu0
      %2472 = vmatprep.mubr.bf16.mxu0 0
      %2473 = vmatmul.mubr.bf16.gmra.mrb[0].mxu0 %v2335
      %v2474 = vpop.f32.mrb[0].mxu0
      %v2475 = vadd.f32 0.0, %v2474
      %v2476 = vpop.f32.mrb[0].mxu0
      %v2477 = vpop.f32.mrb[0].mxu0
      %v2478 = vadd.f32 0.0, %v2477
      %v2479 = vpop.f32.mrb[0].mxu0
      %2480 = vmatprep.mubr.bf16.mxu0 0
      %2481 = vmatmul.mubr.bf16.gmra.mrb[0].mxu0 %v2338
      %v2482 = vpop.f32.mrb[0].mxu0
      %v2483 = vadd.f32 0.0, %v2482
      %v2484 = vpop.f32.mrb[0].mxu0
      %v2485 = vpop.f32.mrb[0].mxu0
      %v2486 = vadd.f32 0.0, %v2485
      %v2487 = vpop.f32.mrb[0].mxu0
      %2488 = vmatprep.mubr.bf16.mxu0 0
      %2489 = vmatmul.mubr.bf16.gmra.mrb[0].mxu0 %v2341
      %v2490 = vpop.f32.mrb[0].mxu0
      %v2491 = vadd.f32 0.0, %v2490
      %v2492 = vpop.f32.mrb[0].mxu0
      %v2493 = vpop.f32.mrb[0].mxu0
      %v2494 = vadd.f32 0.0, %v2493
      %v2495 = vpop.f32.mrb[0].mxu0
      %2496 = vmatprep.mubr.bf16.mxu0 0
      %2497 = vmatmul.mubr.bf16.gmra.mrb[0].mxu0 %v2344
      %v2498 = vpop.f32.mrb[0].mxu0
      %v2499 = vadd.f32 0.0, %v2498
      %v2500 = vpop.f32.mrb[0].mxu0
      %v2501 = vpop.f32.mrb[0].mxu0
      %v2502 = vadd.f32 0.0, %v2501
      %v2503 = vpop.f32.mrb[0].mxu0
      %2504 = vmatprep.mubr.bf16.mxu0 0
      %2505 = vmatmul.mubr.bf16.gmra.mrb[0].mxu0 %v2347
      %v2506 = vpop.f32.mrb[0].mxu0
      %v2507 = vadd.f32 0.0, %v2506
      %v2508 = vpop.f32.mrb[0].mxu0
      %v2509 = vpop.f32.mrb[0].mxu0
      %v2510 = vadd.f32 0.0, %v2509
      %v2511 = vpop.f32.mrb[0].mxu0
      %2512 = vdwg.mxu0
      %v2513 = vadd.f32 %v2218, %v2387
      %v2514 = vadd.f32 %v2219, %v2390
      %v2515 = vadd.f32 %v2220, %v2395
      %v2516 = vadd.f32 %v2221, %v2398
      %v2517 = vadd.f32 %v2222, %v2403
      %v2518 = vadd.f32 %v2223, %v2406
      %v2519 = vadd.f32 %v2224, %v2411
      %v2520 = vadd.f32 %v2225, %v2414
      %v2521 = vadd.f32 %v2226, %v2419
      %v2522 = vadd.f32 %v2227, %v2422
      %v2523 = vadd.f32 %v2228, %v2427
      %v2524 = vadd.f32 %v2229, %v2430
      %v2525 = vadd.f32 %v2230, %v2435
      %v2526 = vadd.f32 %v2231, %v2438
      %v2527 = vadd.f32 %v2232, %v2443
      %v2528 = vadd.f32 %v2233, %v2446
      %v2529 = vadd.f32 %v2234, %v2451
      %v2530 = vadd.f32 %v2235, %v2454
      %v2531 = vadd.f32 %v2236, %v2459
      %v2532 = vadd.f32 %v2237, %v2462
      %v2533 = vadd.f32 %v2238, %v2467
      %v2534 = vadd.f32 %v2239, %v2470
      %v2535 = vadd.f32 %v2240, %v2475
      %v2536 = vadd.f32 %v2241, %v2478
      %v2537 = vadd.f32 %v2242, %v2483
      %v2538 = vadd.f32 %v2243, %v2486
      %v2539 = vadd.f32 %v2244, %v2491
      %v2540 = vadd.f32 %v2245, %v2494
      %v2541 = vadd.f32 %v2246, %v2499
      %v2542 = vadd.f32 %v2247, %v2502
      %v2543 = vadd.f32 %v2248, %v2507
      %v2544 = vadd.f32 %v2249, %v2510
      %v2545 = vld [vmem:[%s2250 + $0x8] sm:$0xff]
      %v2546 = vld [vmem:[%s2250 + $0x10] sm:$0xff]
      %v2547 = vld [vmem:[%s2250 + $0x28] sm:$0xff]
      %v2548 = vld [vmem:[%s2250 + $0x30] sm:$0xff]
      %v2549 = vld [vmem:[%s2250 + $0x48] sm:$0xff]
      %v2550 = vld [vmem:[%s2250 + $0x50] sm:$0xff]
      %v2551 = vld [vmem:[%s2250 + $0x68] sm:$0xff]
      %v2552 = vld [vmem:[%s2250 + $0x70] sm:$0xff]
      %v2553 = vld [vmem:[%s2250 + $0x88] sm:$0xff]
      %v2554 = vld [vmem:[%s2250 + $0x90] sm:$0xff]
      %v2555 = vld [vmem:[%s2250 + $0xa8] sm:$0xff]
      %v2556 = vld [vmem:[%s2250 + $0xb0] sm:$0xff]
      %v2557 = vld [vmem:[%s2250 + $0xc8] sm:$0xff]
      %v2558 = vld [vmem:[%s2250 + $0xd0] sm:$0xff]
      %v2559 = vld [vmem:[%s2250 + $0xe8] sm:$0xff]
      %v2560 = vld [vmem:[%s2250 + $0xf0] sm:$0xff]
      %v2561 = vld [vmem:[%s2250 + $0x108] sm:$0xff]
      %v2562 = vld [vmem:[%s2250 + $0x110] sm:$0xff]
      %v2563 = vld [vmem:[%s2250 + $0x128] sm:$0xff]
      %v2564 = vld [vmem:[%s2250 + $0x130] sm:$0xff]
      %v2565 = vld [vmem:[%s2250 + $0x148] sm:$0xff]
      %v2566 = vld [vmem:[%s2250 + $0x150] sm:$0xff]
      %v2567 = vld [vmem:[%s2250 + $0x168] sm:$0xff]
      %v2568 = vld [vmem:[%s2250 + $0x170] sm:$0xff]
      %v2569 = vld [vmem:[%s2250 + $0x188] sm:$0xff]
      %v2570 = vld [vmem:[%s2250 + $0x190] sm:$0xff]
      %v2571 = vld [vmem:[%s2250 + $0x1a8] sm:$0xff]
      %v2572 = vld [vmem:[%s2250 + $0x1b0] sm:$0xff]
      %v2573 = vld [vmem:[%s2250 + $0x1c8] sm:$0xff]
      %v2574 = vld [vmem:[%s2250 + $0x1d0] sm:$0xff]
      %v2575 = vld [vmem:[%s2250 + $0x1e8] sm:$0xff]
      %v2576 = vld [vmem:[%s2250 + $0x1f0] sm:$0xff]
      %v2577 = vpack.c.bf16 %v2546, %v2545
      %v2578 = vpack.c.bf16 %v2548, %v2547
      %v2579 = vpack.c.bf16 %v2550, %v2549
      %v2580 = vpack.c.bf16 %v2552, %v2551
      %v2581 = vpack.c.bf16 %v2554, %v2553
      %v2582 = vpack.c.bf16 %v2556, %v2555
      %v2583 = vpack.c.bf16 %v2558, %v2557
      %v2584 = vpack.c.bf16 %v2560, %v2559
      %v2585 = vpack.c.bf16 %v2562, %v2561
      %v2586 = vpack.c.bf16 %v2564, %v2563
      %v2587 = vpack.c.bf16 %v2566, %v2565
      %v2588 = vpack.c.bf16 %v2568, %v2567
      %v2589 = vpack.c.bf16 %v2570, %v2569
      %v2590 = vpack.c.bf16 %v2572, %v2571
      %v2591 = vpack.c.bf16 %v2574, %v2573
      %v2592 = vpack.c.bf16 %v2576, %v2575
      %s2593 = scalar_lea.vmem %s3, 14
      %v2594 = vld [vmem:[%s2593] sm:$0x3]
      %v2596 = vsel %vm444, %v2577, 0
      %v2599 = vsel %vm444, %v2578, 0
      %v2602 = vsel %vm444, %v2579, 0
      %v2605 = vsel %vm444, %v2580, 0
      %v2608 = vsel %vm444, %v2581, 0
      %v2611 = vsel %vm444, %v2582, 0
      %v2614 = vsel %vm444, %v2583, 0
      %v2617 = vsel %vm444, %v2584, 0
      %v2620 = vsel %vm444, %v2585, 0
      %v2623 = vsel %vm444, %v2586, 0
      %v2626 = vsel %vm444, %v2587, 0
      %v2629 = vsel %vm444, %v2588, 0
      %v2632 = vsel %vm444, %v2589, 0
      %v2635 = vsel %vm444, %v2590, 0
      %v2638 = vsel %vm444, %v2591, 0
      %v2641 = vsel %vm444, %v2592, 0
      %v2644 = vsel %vm697, %v2594, 0
      %2646 = vmatprep.subr.bf16.mxu0 0
      %2647 = vmatpush1.bf16.msra.mxu0 %v2644
      %2648 = vmatprep.subr.bf16.mxu0 0
      %2649 = vmatpush1.bf16.msra.mxu0 0
      %2650 = vmatprep.subr.bf16.mxu0 0
      %2651 = vmatpush1.bf16.msra.mxu0 0
      %2652 = vmatprep.subr.bf16.mxu0 0
      %2653 = vmatpush1.bf16.msra.mxu0 0
      %2654 = vmatprep.subr.bf16.mxu0 0
      %2655 = vmatpush1.bf16.msra.mxu0 0
      %2656 = vmatprep.subr.bf16.mxu0 0
      %2657 = vmatpush1.bf16.msra.mxu0 0
      %2658 = vmatprep.subr.bf16.mxu0 0
      %2659 = vmatpush1.bf16.msra.mxu0 0
      %2660 = vmatprep.subr.bf16.mxu0 0
      %2661 = vmatpush1.bf16.msra.mxu0 0
      %2662 = vmatprep.subr.bf16.mxu0 0
      %2663 = vmatpush1.bf16.msra.mxu0 0
      %2664 = vmatprep.subr.bf16.mxu0 0
      %2665 = vmatpush1.bf16.msra.mxu0 0
      %2666 = vmatprep.subr.bf16.mxu0 0
      %2667 = vmatpush1.bf16.msra.mxu0 0
      %2668 = vmatprep.subr.bf16.mxu0 0
      %2669 = vmatpush1.bf16.msra.mxu0 0
      %2670 = vmatprep.subr.bf16.mxu0 0
      %2671 = vmatpush1.bf16.msra.mxu0 0
      %2672 = vmatprep.subr.bf16.mxu0 0
      %2673 = vmatpush1.bf16.msra.mxu0 0
      %2674 = vmatprep.subr.bf16.mxu0 0
      %2675 = vmatpush1.bf16.msra.mxu0 0
      %2676 = vmatprep.subr.bf16.mxu0 0
      %2677 = vmatpush1.bf16.msra.mxu0 0
      %2678 = vmatprep.mubr.bf16.mxu0 0
      %2679 = vmatmul.mubr.bf16.gmra.mrb[0].mxu0 %v2596
      %v2680 = vpop.f32.mrb[0].mxu0
      %v2681 = vadd.f32 0.0, %v2680
      %v2682 = vpop.f32.mrb[0].mxu0
      %v2683 = vpop.f32.mrb[0].mxu0
      %v2684 = vadd.f32 0.0, %v2683
      %v2685 = vpop.f32.mrb[0].mxu0
      %2686 = vmatprep.mubr.bf16.mxu0 0
      %2687 = vmatmul.mubr.bf16.gmra.mrb[0].mxu0 %v2599
      %v2688 = vpop.f32.mrb[0].mxu0
      %v2689 = vadd.f32 0.0, %v2688
      %v2690 = vpop.f32.mrb[0].mxu0
      %v2691 = vpop.f32.mrb[0].mxu0
      %v2692 = vadd.f32 0.0, %v2691
      %v2693 = vpop.f32.mrb[0].mxu0
      %2694 = vmatprep.mubr.bf16.mxu0 0
      %2695 = vmatmul.mubr.bf16.gmra.mrb[0].mxu0 %v2602
      %v2696 = vpop.f32.mrb[0].mxu0
      %v2697 = vadd.f32 0.0, %v2696
      %v2698 = vpop.f32.mrb[0].mxu0
      %v2699 = vpop.f32.mrb[0].mxu0
      %v2700 = vadd.f32 0.0, %v2699
      %v2701 = vpop.f32.mrb[0].mxu0
      %2702 = vmatprep.mubr.bf16.mxu0 0
      %2703 = vmatmul.mubr.bf16.gmra.mrb[0].mxu0 %v2605
      %v2704 = vpop.f32.mrb[0].mxu0
      %v2705 = vadd.f32 0.0, %v2704
      %v2706 = vpop.f32.mrb[0].mxu0
      %v2707 = vpop.f32.mrb[0].mxu0
      %v2708 = vadd.f32 0.0, %v2707
      %v2709 = vpop.f32.mrb[0].mxu0
      %2710 = vmatprep.mubr.bf16.mxu0 0
      %2711 = vmatmul.mubr.bf16.gmra.mrb[0].mxu0 %v2608
      %v2712 = vpop.f32.mrb[0].mxu0
      %v2713 = vadd.f32 0.0, %v2712
      %v2714 = vpop.f32.mrb[0].mxu0
      %v2715 = vpop.f32.mrb[0].mxu0
      %v2716 = vadd.f32 0.0, %v2715
      %v2717 = vpop.f32.mrb[0].mxu0
      %2718 = vmatprep.mubr.bf16.mxu0 0
      %2719 = vmatmul.mubr.bf16.gmra.mrb[0].mxu0 %v2611
      %v2720 = vpop.f32.mrb[0].mxu0
      %v2721 = vadd.f32 0.0, %v2720
      %v2722 = vpop.f32.mrb[0].mxu0
      %v2723 = vpop.f32.mrb[0].mxu0
      %v2724 = vadd.f32 0.0, %v2723
      %v2725 = vpop.f32.mrb[0].mxu0
      %2726 = vmatprep.mubr.bf16.mxu0 0
      %2727 = vmatmul.mubr.bf16.gmra.mrb[0].mxu0 %v2614
      %v2728 = vpop.f32.mrb[0].mxu0
      %v2729 = vadd.f32 0.0, %v2728
      %v2730 = vpop.f32.mrb[0].mxu0
      %v2731 = vpop.f32.mrb[0].mxu0
      %v2732 = vadd.f32 0.0, %v2731
      %v2733 = vpop.f32.mrb[0].mxu0
      %2734 = vmatprep.mubr.bf16.mxu0 0
      %2735 = vmatmul.mubr.bf16.gmra.mrb[0].mxu0 %v2617
      %v2736 = vpop.f32.mrb[0].mxu0
      %v2737 = vadd.f32 0.0, %v2736
      %v2738 = vpop.f32.mrb[0].mxu0
      %v2739 = vpop.f32.mrb[0].mxu0
      %v2740 = vadd.f32 0.0, %v2739
      %v2741 = vpop.f32.mrb[0].mxu0
      %2742 = vmatprep.mubr.bf16.mxu0 0
      %2743 = vmatmul.mubr.bf16.gmra.mrb[0].mxu0 %v2620
      %v2744 = vpop.f32.mrb[0].mxu0
      %v2745 = vadd.f32 0.0, %v2744
      %v2746 = vpop.f32.mrb[0].mxu0
      %v2747 = vpop.f32.mrb[0].mxu0
      %v2748 = vadd.f32 0.0, %v2747
      %v2749 = vpop.f32.mrb[0].mxu0
      %2750 = vmatprep.mubr.bf16.mxu0 0
      %2751 = vmatmul.mubr.bf16.gmra.mrb[0].mxu0 %v2623
      %v2752 = vpop.f32.mrb[0].mxu0
      %v2753 = vadd.f32 0.0, %v2752
      %v2754 = vpop.f32.mrb[0].mxu0
      %v2755 = vpop.f32.mrb[0].mxu0
      %v2756 = vadd.f32 0.0, %v2755
      %v2757 = vpop.f32.mrb[0].mxu0
      %2758 = vmatprep.mubr.bf16.mxu0 0
      %2759 = vmatmul.mubr.bf16.gmra.mrb[0].mxu0 %v2626
      %v2760 = vpop.f32.mrb[0].mxu0
      %v2761 = vadd.f32 0.0, %v2760
      %v2762 = vpop.f32.mrb[0].mxu0
      %v2763 = vpop.f32.mrb[0].mxu0
      %v2764 = vadd.f32 0.0, %v2763
      %v2765 = vpop.f32.mrb[0].mxu0
      %2766 = vmatprep.mubr.bf16.mxu0 0
      %2767 = vmatmul.mubr.bf16.gmra.mrb[0].mxu0 %v2629
      %v2768 = vpop.f32.mrb[0].mxu0
      %v2769 = vadd.f32 0.0, %v2768
      %v2770 = vpop.f32.mrb[0].mxu0
      %v2771 = vpop.f32.mrb[0].mxu0
      %v2772 = vadd.f32 0.0, %v2771
      %v2773 = vpop.f32.mrb[0].mxu0
      %2774 = vmatprep.mubr.bf16.mxu0 0
      %2775 = vmatmul.mubr.bf16.gmra.mrb[0].mxu0 %v2632
      %v2776 = vpop.f32.mrb[0].mxu0
      %v2777 = vadd.f32 0.0, %v2776
      %v2778 = vpop.f32.mrb[0].mxu0
      %v2779 = vpop.f32.mrb[0].mxu0
      %v2780 = vadd.f32 0.0, %v2779
      %v2781 = vpop.f32.mrb[0].mxu0
      %2782 = vmatprep.mubr.bf16.mxu0 0
      %2783 = vmatmul.mubr.bf16.gmra.mrb[0].mxu0 %v2635
      %v2784 = vpop.f32.mrb[0].mxu0
      %v2785 = vadd.f32 0.0, %v2784
      %v2786 = vpop.f32.mrb[0].mxu0
      %v2787 = vpop.f32.mrb[0].mxu0
      %v2788 = vadd.f32 0.0, %v2787
      %v2789 = vpop.f32.mrb[0].mxu0
      %2790 = vmatprep.mubr.bf16.mxu0 0
      %2791 = vmatmul.mubr.bf16.gmra.mrb[0].mxu0 %v2638
      %v2792 = vpop.f32.mrb[0].mxu0
      %v2793 = vadd.f32 0.0, %v2792
      %v2794 = vpop.f32.mrb[0].mxu0
      %v2795 = vpop.f32.mrb[0].mxu0
      %v2796 = vadd.f32 0.0, %v2795
      %v2797 = vpop.f32.mrb[0].mxu0
      %2798 = vmatprep.mubr.bf16.mxu0 0
      %2799 = vmatmul.mubr.bf16.gmra.mrb[0].mxu0 %v2641
      %v2800 = vpop.f32.mrb[0].mxu0
      %v2801 = vadd.f32 0.0, %v2800
      %v2802 = vpop.f32.mrb[0].mxu0
      %v2803 = vpop.f32.mrb[0].mxu0
      %v2804 = vadd.f32 0.0, %v2803
      %v2805 = vpop.f32.mrb[0].mxu0
      %2806 = vdwg.mxu0
      %v2807 = vadd.f32 %v2513, %v2681
      %v2808 = vadd.f32 %v2514, %v2684
      %v2809 = vadd.f32 %v2515, %v2689
      %v2810 = vadd.f32 %v2516, %v2692
      %v2811 = vadd.f32 %v2517, %v2697
      %v2812 = vadd.f32 %v2518, %v2700
      %v2813 = vadd.f32 %v2519, %v2705
      %v2814 = vadd.f32 %v2520, %v2708
      %v2815 = vadd.f32 %v2521, %v2713
      %v2816 = vadd.f32 %v2522, %v2716
      %v2817 = vadd.f32 %v2523, %v2721
      %v2818 = vadd.f32 %v2524, %v2724
      %v2819 = vadd.f32 %v2525, %v2729
      %v2820 = vadd.f32 %v2526, %v2732
      %v2821 = vadd.f32 %v2527, %v2737
      %v2822 = vadd.f32 %v2528, %v2740
      %v2823 = vadd.f32 %v2529, %v2745
      %v2824 = vadd.f32 %v2530, %v2748
      %v2825 = vadd.f32 %v2531, %v2753
      %v2826 = vadd.f32 %v2532, %v2756
      %v2827 = vadd.f32 %v2533, %v2761
      %v2828 = vadd.f32 %v2534, %v2764
      %v2829 = vadd.f32 %v2535, %v2769
      %v2830 = vadd.f32 %v2536, %v2772
      %v2831 = vadd.f32 %v2537, %v2777
      %v2832 = vadd.f32 %v2538, %v2780
      %v2833 = vadd.f32 %v2539, %v2785
      %v2834 = vadd.f32 %v2540, %v2788
      %v2835 = vadd.f32 %v2541, %v2793
      %v2836 = vadd.f32 %v2542, %v2796
      %v2837 = vadd.f32 %v2543, %v2801
      %v2838 = vadd.f32 %v2544, %v2804
      %v2839 = vld [vmem:[%s2250 + $0x9] sm:$0xff]
      %v2840 = vld [vmem:[%s2250 + $0x11] sm:$0xff]
      %v2841 = vld [vmem:[%s2250 + $0x29] sm:$0xff]
      %v2842 = vld [vmem:[%s2250 + $0x31] sm:$0xff]
      %v2843 = vld [vmem:[%s2250 + $0x49] sm:$0xff]
      %v2844 = vld [vmem:[%s2250 + $0x51] sm:$0xff]
      %v2845 = vld [vmem:[%s2250 + $0x69] sm:$0xff]
      %v2846 = vld [vmem:[%s2250 + $0x71] sm:$0xff]
      %v2847 = vld [vmem:[%s2250 + $0x89] sm:$0xff]
      %v2848 = vld [vmem:[%s2250 + $0x91] sm:$0xff]
      %v2849 = vld [vmem:[%s2250 + $0xa9] sm:$0xff]
      %v2850 = vld [vmem:[%s2250 + $0xb1] sm:$0xff]
      %v2851 = vld [vmem:[%s2250 + $0xc9] sm:$0xff]
      %v2852 = vld [vmem:[%s2250 + $0xd1] sm:$0xff]
      %v2853 = vld [vmem:[%s2250 + $0xe9] sm:$0xff]
      %v2854 = vld [vmem:[%s2250 + $0xf1] sm:$0xff]
      %v2855 = vld [vmem:[%s2250 + $0x109] sm:$0xff]
      %v2856 = vld [vmem:[%s2250 + $0x111] sm:$0xff]
      %v2857 = vld [vmem:[%s2250 + $0x129] sm:$0xff]
      %v2858 = vld [vmem:[%s2250 + $0x131] sm:$0xff]
      %v2859 = vld [vmem:[%s2250 + $0x149] sm:$0xff]
      %v2860 = vld [vmem:[%s2250 + $0x151] sm:$0xff]
      %v2861 = vld [vmem:[%s2250 + $0x169] sm:$0xff]
      %v2862 = vld [vmem:[%s2250 + $0x171] sm:$0xff]
      %v2863 = vld [vmem:[%s2250 + $0x189] sm:$0xff]
      %v2864 = vld [vmem:[%s2250 + $0x191] sm:$0xff]
      %v2865 = vld [vmem:[%s2250 + $0x1a9] sm:$0xff]
      %v2866 = vld [vmem:[%s2250 + $0x1b1] sm:$0xff]
      %v2867 = vld [vmem:[%s2250 + $0x1c9] sm:$0xff]
      %v2868 = vld [vmem:[%s2250 + $0x1d1] sm:$0xff]
      %v2869 = vld [vmem:[%s2250 + $0x1e9] sm:$0xff]
      %v2870 = vld [vmem:[%s2250 + $0x1f1] sm:$0xff]
      %v2871 = vpack.c.bf16 %v2840, %v2839
      %v2872 = vpack.c.bf16 %v2842, %v2841
      %v2873 = vpack.c.bf16 %v2844, %v2843
      %v2874 = vpack.c.bf16 %v2846, %v2845
      %v2875 = vpack.c.bf16 %v2848, %v2847
      %v2876 = vpack.c.bf16 %v2850, %v2849
      %v2877 = vpack.c.bf16 %v2852, %v2851
      %v2878 = vpack.c.bf16 %v2854, %v2853
      %v2879 = vpack.c.bf16 %v2856, %v2855
      %v2880 = vpack.c.bf16 %v2858, %v2857
      %v2881 = vpack.c.bf16 %v2860, %v2859
      %v2882 = vpack.c.bf16 %v2862, %v2861
      %v2883 = vpack.c.bf16 %v2864, %v2863
      %v2884 = vpack.c.bf16 %v2866, %v2865
      %v2885 = vpack.c.bf16 %v2868, %v2867
      %v2886 = vpack.c.bf16 %v2870, %v2869
      %s2887 = scalar_lea.vmem %s3, 16
      %v2888 = vld [vmem:[%s2887] sm:$0x3]
      %v2890 = vsel %vm444, %v2871, 0
      %v2893 = vsel %vm444, %v2872, 0
      %v2896 = vsel %vm444, %v2873, 0
      %v2899 = vsel %vm444, %v2874, 0
      %v2902 = vsel %vm444, %v2875, 0
      %v2905 = vsel %vm444, %v2876, 0
      %v2908 = vsel %vm444, %v2877, 0
      %v2911 = vsel %vm444, %v2878, 0
      %v2914 = vsel %vm444, %v2879, 0
      %v2917 = vsel %vm444, %v2880, 0
      %v2920 = vsel %vm444, %v2881, 0
      %v2923 = vsel %vm444, %v2882, 0
      %v2926 = vsel %vm444, %v2883, 0
      %v2929 = vsel %vm444, %v2884, 0
      %v2932 = vsel %vm444, %v2885, 0
      %v2935 = vsel %vm444, %v2886, 0
      %v2938 = vsel %vm697, %v2888, 0
      %2940 = vmatprep.subr.bf16.mxu0 0
      %2941 = vmatpush1.bf16.msra.mxu0 %v2938
      %2942 = vmatprep.subr.bf16.mxu0 0
      %2943 = vmatpush1.bf16.msra.mxu0 0
      %2944 = vmatprep.subr.bf16.mxu0 0
      %2945 = vmatpush1.bf16.msra.mxu0 0
      %2946 = vmatprep.subr.bf16.mxu0 0
      %2947 = vmatpush1.bf16.msra.mxu0 0
      %2948 = vmatprep.subr.bf16.mxu0 0
      %2949 = vmatpush1.bf16.msra.mxu0 0
      %2950 = vmatprep.subr.bf16.mxu0 0
      %2951 = vmatpush1.bf16.msra.mxu0 0
      %2952 = vmatprep.subr.bf16.mxu0 0
      %2953 = vmatpush1.bf16.msra.mxu0 0
      %2954 = vmatprep.subr.bf16.mxu0 0
      %2955 = vmatpush1.bf16.msra.mxu0 0
      %2956 = vmatprep.subr.bf16.mxu0 0
      %2957 = vmatpush1.bf16.msra.mxu0 0
      %2958 = vmatprep.subr.bf16.mxu0 0
      %2959 = vmatpush1.bf16.msra.mxu0 0
      %2960 = vmatprep.subr.bf16.mxu0 0
      %2961 = vmatpush1.bf16.msra.mxu0 0
      %2962 = vmatprep.subr.bf16.mxu0 0
      %2963 = vmatpush1.bf16.msra.mxu0 0
      %2964 = vmatprep.subr.bf16.mxu0 0
      %2965 = vmatpush1.bf16.msra.mxu0 0
      %2966 = vmatprep.subr.bf16.mxu0 0
      %2967 = vmatpush1.bf16.msra.mxu0 0
      %2968 = vmatprep.subr.bf16.mxu0 0
      %2969 = vmatpush1.bf16.msra.mxu0 0
      %2970 = vmatprep.subr.bf16.mxu0 0
      %2971 = vmatpush1.bf16.msra.mxu0 0
      %2972 = vmatprep.mubr.bf16.mxu0 0
      %2973 = vmatmul.mubr.bf16.gmra.mrb[0].mxu0 %v2890
      %v2974 = vpop.f32.mrb[0].mxu0
      %v2975 = vadd.f32 0.0, %v2974
      %v2976 = vpop.f32.mrb[0].mxu0
      %v2977 = vpop.f32.mrb[0].mxu0
      %v2978 = vadd.f32 0.0, %v2977
      %v2979 = vpop.f32.mrb[0].mxu0
      %2980 = vmatprep.mubr.bf16.mxu0 0
      %2981 = vmatmul.mubr.bf16.gmra.mrb[0].mxu0 %v2893
      %v2982 = vpop.f32.mrb[0].mxu0
      %v2983 = vadd.f32 0.0, %v2982
      %v2984 = vpop.f32.mrb[0].mxu0
      %v2985 = vpop.f32.mrb[0].mxu0
      %v2986 = vadd.f32 0.0, %v2985
      %v2987 = vpop.f32.mrb[0].mxu0
      %2988 = vmatprep.mubr.bf16.mxu0 0
      %2989 = vmatmul.mubr.bf16.gmra.mrb[0].mxu0 %v2896
      %v2990 = vpop.f32.mrb[0].mxu0
      %v2991 = vadd.f32 0.0, %v2990
      %v2992 = vpop.f32.mrb[0].mxu0
      %v2993 = vpop.f32.mrb[0].mxu0
      %v2994 = vadd.f32 0.0, %v2993
      %v2995 = vpop.f32.mrb[0].mxu0
      %2996 = vmatprep.mubr.bf16.mxu0 0
      %2997 = vmatmul.mubr.bf16.gmra.mrb[0].mxu0 %v2899
      %v2998 = vpop.f32.mrb[0].mxu0
      %v2999 = vadd.f32 0.0, %v2998
      %v3000 = vpop.f32.mrb[0].mxu0
      %v3001 = vpop.f32.mrb[0].mxu0
      %v3002 = vadd.f32 0.0, %v3001
      %v3003 = vpop.f32.mrb[0].mxu0
      %3004 = vmatprep.mubr.bf16.mxu0 0
      %3005 = vmatmul.mubr.bf16.gmra.mrb[0].mxu0 %v2902
      %v3006 = vpop.f32.mrb[0].mxu0
      %v3007 = vadd.f32 0.0, %v3006
      %v3008 = vpop.f32.mrb[0].mxu0
      %v3009 = vpop.f32.mrb[0].mxu0
      %v3010 = vadd.f32 0.0, %v3009
      %v3011 = vpop.f32.mrb[0].mxu0
      %3012 = vmatprep.mubr.bf16.mxu0 0
      %3013 = vmatmul.mubr.bf16.gmra.mrb[0].mxu0 %v2905
      %v3014 = vpop.f32.mrb[0].mxu0
      %v3015 = vadd.f32 0.0, %v3014
      %v3016 = vpop.f32.mrb[0].mxu0
      %v3017 = vpop.f32.mrb[0].mxu0
      %v3018 = vadd.f32 0.0, %v3017
      %v3019 = vpop.f32.mrb[0].mxu0
      %3020 = vmatprep.mubr.bf16.mxu0 0
      %3021 = vmatmul.mubr.bf16.gmra.mrb[0].mxu0 %v2908
      %v3022 = vpop.f32.mrb[0].mxu0
      %v3023 = vadd.f32 0.0, %v3022
      %v3024 = vpop.f32.mrb[0].mxu0
      %v3025 = vpop.f32.mrb[0].mxu0
      %v3026 = vadd.f32 0.0, %v3025
      %v3027 = vpop.f32.mrb[0].mxu0
      %3028 = vmatprep.mubr.bf16.mxu0 0
      %3029 = vmatmul.mubr.bf16.gmra.mrb[0].mxu0 %v2911
      %v3030 = vpop.f32.mrb[0].mxu0
      %v3031 = vadd.f32 0.0, %v3030
      %v3032 = vpop.f32.mrb[0].mxu0
      %v3033 = vpop.f32.mrb[0].mxu0
      %v3034 = vadd.f32 0.0, %v3033
      %v3035 = vpop.f32.mrb[0].mxu0
      %3036 = vmatprep.mubr.bf16.mxu0 0
      %3037 = vmatmul.mubr.bf16.gmra.mrb[0].mxu0 %v2914
      %v3038 = vpop.f32.mrb[0].mxu0
      %v3039 = vadd.f32 0.0, %v3038
      %v3040 = vpop.f32.mrb[0].mxu0
      %v3041 = vpop.f32.mrb[0].mxu0
      %v3042 = vadd.f32 0.0, %v3041
      %v3043 = vpop.f32.mrb[0].mxu0
      %3044 = vmatprep.mubr.bf16.mxu0 0
      %3045 = vmatmul.mubr.bf16.gmra.mrb[0].mxu0 %v2917
      %v3046 = vpop.f32.mrb[0].mxu0
      %v3047 = vadd.f32 0.0, %v3046
      %v3048 = vpop.f32.mrb[0].mxu0
      %v3049 = vpop.f32.mrb[0].mxu0
      %v3050 = vadd.f32 0.0, %v3049
      %v3051 = vpop.f32.mrb[0].mxu0
      %3052 = vmatprep.mubr.bf16.mxu0 0
      %3053 = vmatmul.mubr.bf16.gmra.mrb[0].mxu0 %v2920
      %v3054 = vpop.f32.mrb[0].mxu0
      %v3055 = vadd.f32 0.0, %v3054
      %v3056 = vpop.f32.mrb[0].mxu0
      %v3057 = vpop.f32.mrb[0].mxu0
      %v3058 = vadd.f32 0.0, %v3057
      %v3059 = vpop.f32.mrb[0].mxu0
      %3060 = vmatprep.mubr.bf16.mxu0 0
      %3061 = vmatmul.mubr.bf16.gmra.mrb[0].mxu0 %v2923
      %v3062 = vpop.f32.mrb[0].mxu0
      %v3063 = vadd.f32 0.0, %v3062
      %v3064 = vpop.f32.mrb[0].mxu0
      %v3065 = vpop.f32.mrb[0].mxu0
      %v3066 = vadd.f32 0.0, %v3065
      %v3067 = vpop.f32.mrb[0].mxu0
      %3068 = vmatprep.mubr.bf16.mxu0 0
      %3069 = vmatmul.mubr.bf16.gmra.mrb[0].mxu0 %v2926
      %v3070 = vpop.f32.mrb[0].mxu0
      %v3071 = vadd.f32 0.0, %v3070
      %v3072 = vpop.f32.mrb[0].mxu0
      %v3073 = vpop.f32.mrb[0].mxu0
      %v3074 = vadd.f32 0.0, %v3073
      %v3075 = vpop.f32.mrb[0].mxu0
      %3076 = vmatprep.mubr.bf16.mxu0 0
      %3077 = vmatmul.mubr.bf16.gmra.mrb[0].mxu0 %v2929
      %v3078 = vpop.f32.mrb[0].mxu0
      %v3079 = vadd.f32 0.0, %v3078
      %v3080 = vpop.f32.mrb[0].mxu0
      %v3081 = vpop.f32.mrb[0].mxu0
      %v3082 = vadd.f32 0.0, %v3081
      %v3083 = vpop.f32.mrb[0].mxu0
      %3084 = vmatprep.mubr.bf16.mxu0 0
      %3085 = vmatmul.mubr.bf16.gmra.mrb[0].mxu0 %v2932
      %v3086 = vpop.f32.mrb[0].mxu0
      %v3087 = vadd.f32 0.0, %v3086
      %v3088 = vpop.f32.mrb[0].mxu0
      %v3089 = vpop.f32.mrb[0].mxu0
      %v3090 = vadd.f32 0.0, %v3089
      %v3091 = vpop.f32.mrb[0].mxu0
      %3092 = vmatprep.mubr.bf16.mxu0 0
      %3093 = vmatmul.mubr.bf16.gmra.mrb[0].mxu0 %v2935
      %v3094 = vpop.f32.mrb[0].mxu0
      %v3095 = vadd.f32 0.0, %v3094
      %v3096 = vpop.f32.mrb[0].mxu0
      %v3097 = vpop.f32.mrb[0].mxu0
      %v3098 = vadd.f32 0.0, %v3097
      %v3099 = vpop.f32.mrb[0].mxu0
      %3100 = vdwg.mxu0
      %v3101 = vadd.f32 %v2807, %v2975
      %v3102 = vadd.f32 %v2808, %v2978
      %v3103 = vadd.f32 %v2809, %v2983
      %v3104 = vadd.f32 %v2810, %v2986
      %v3105 = vadd.f32 %v2811, %v2991
      %v3106 = vadd.f32 %v2812, %v2994
      %v3107 = vadd.f32 %v2813, %v2999
      %v3108 = vadd.f32 %v2814, %v3002
      %v3109 = vadd.f32 %v2815, %v3007
      %v3110 = vadd.f32 %v2816, %v3010
      %v3111 = vadd.f32 %v2817, %v3015
      %v3112 = vadd.f32 %v2818, %v3018
      %v3113 = vadd.f32 %v2819, %v3023
      %v3114 = vadd.f32 %v2820, %v3026
      %v3115 = vadd.f32 %v2821, %v3031
      %v3116 = vadd.f32 %v2822, %v3034
      %v3117 = vadd.f32 %v2823, %v3039
      %v3118 = vadd.f32 %v2824, %v3042
      %v3119 = vadd.f32 %v2825, %v3047
      %v3120 = vadd.f32 %v2826, %v3050
      %v3121 = vadd.f32 %v2827, %v3055
      %v3122 = vadd.f32 %v2828, %v3058
      %v3123 = vadd.f32 %v2829, %v3063
      %v3124 = vadd.f32 %v2830, %v3066
      %v3125 = vadd.f32 %v2831, %v3071
      %v3126 = vadd.f32 %v2832, %v3074
      %v3127 = vadd.f32 %v2833, %v3079
      %v3128 = vadd.f32 %v2834, %v3082
      %v3129 = vadd.f32 %v2835, %v3087
      %v3130 = vadd.f32 %v2836, %v3090
      %v3131 = vadd.f32 %v2837, %v3095
      %v3132 = vadd.f32 %v2838, %v3098
      %v3133 = vpack.c.bf16 %v3102, %v3101
      %v3134 = vpack.c.bf16 %v3104, %v3103
      %v3135 = vpack.c.bf16 %v3106, %v3105
      %v3136 = vpack.c.bf16 %v3108, %v3107
      %v3137 = vpack.c.bf16 %v3110, %v3109
      %v3138 = vpack.c.bf16 %v3112, %v3111
      %v3139 = vpack.c.bf16 %v3114, %v3113
      %v3140 = vpack.c.bf16 %v3116, %v3115
      %v3141 = vpack.c.bf16 %v3118, %v3117
      %v3142 = vpack.c.bf16 %v3120, %v3119
      %v3143 = vpack.c.bf16 %v3122, %v3121
      %v3144 = vpack.c.bf16 %v3124, %v3123
      %v3145 = vpack.c.bf16 %v3126, %v3125
      %v3146 = vpack.c.bf16 %v3128, %v3127
      %v3147 = vpack.c.bf16 %v3130, %v3129
      %v3148 = vpack.c.bf16 %v3132, %v3131
      %v3149 = vunpack.c.l.bf16 %v3133
      %v3150 = vunpack.c.h.bf16 %v3133
      %v3151 = vunpack.c.l.bf16 %v3134
      %v3152 = vunpack.c.h.bf16 %v3134
      %v3153 = vunpack.c.l.bf16 %v3135
      %v3154 = vunpack.c.h.bf16 %v3135
      %v3155 = vunpack.c.l.bf16 %v3136
      %v3156 = vunpack.c.h.bf16 %v3136
      %v3157 = vunpack.c.l.bf16 %v3137
      %v3158 = vunpack.c.h.bf16 %v3137
      %v3159 = vunpack.c.l.bf16 %v3138
      %v3160 = vunpack.c.h.bf16 %v3138
      %v3161 = vunpack.c.l.bf16 %v3139
      %v3162 = vunpack.c.h.bf16 %v3139
      %v3163 = vunpack.c.l.bf16 %v3140
      %v3164 = vunpack.c.h.bf16 %v3140
      %v3165 = vunpack.c.l.bf16 %v3141
      %v3166 = vunpack.c.h.bf16 %v3141
      %v3167 = vunpack.c.l.bf16 %v3142
      %v3168 = vunpack.c.h.bf16 %v3142
      %v3169 = vunpack.c.l.bf16 %v3143
      %v3170 = vunpack.c.h.bf16 %v3143
      %v3171 = vunpack.c.l.bf16 %v3144
      %v3172 = vunpack.c.h.bf16 %v3144
      %v3173 = vunpack.c.l.bf16 %v3145
      %v3174 = vunpack.c.h.bf16 %v3145
      %v3175 = vunpack.c.l.bf16 %v3146
      %v3176 = vunpack.c.h.bf16 %v3146
      %v3177 = vunpack.c.l.bf16 %v3147
      %v3178 = vunpack.c.h.bf16 %v3147
      %v3179 = vunpack.c.l.bf16 %v3148
      %v3180 = vunpack.c.h.bf16 %v3148
      %v3181 = vpack.c.bf16 %v3150, %v3149
      %v3182 = vpack.c.bf16 %v3152, %v3151
      %v3183 = vpack.c.bf16 %v3154, %v3153
      %v3184 = vpack.c.bf16 %v3156, %v3155
      %v3185 = vpack.c.bf16 %v3158, %v3157
      %v3186 = vpack.c.bf16 %v3160, %v3159
      %v3187 = vpack.c.bf16 %v3162, %v3161
      %v3188 = vpack.c.bf16 %v3164, %v3163
      %v3189 = vpack.c.bf16 %v3166, %v3165
      %v3190 = vpack.c.bf16 %v3168, %v3167
      %v3191 = vpack.c.bf16 %v3170, %v3169
      %v3192 = vpack.c.bf16 %v3172, %v3171
      %v3193 = vpack.c.bf16 %v3174, %v3173
      %v3194 = vpack.c.bf16 %v3176, %v3175
      %v3195 = vpack.c.bf16 %v3178, %v3177
      %v3196 = vpack.c.bf16 %v3180, %v3179
      %v3213 = vunpack.c.l.b16 %v3181
      %v3214 = vunpack.c.h.b16 %v3181
      %v3215 = vunpack.c.l.b16 %v3182
      %v3216 = vunpack.c.h.b16 %v3182
      %v3217 = vunpack.c.l.b16 %v3183
      %v3218 = vunpack.c.h.b16 %v3183
      %v3219 = vunpack.c.l.b16 %v3184
      %v3220 = vunpack.c.h.b16 %v3184
      %v3221 = vunpack.c.l.b16 %v3185
      %v3222 = vunpack.c.h.b16 %v3185
      %v3223 = vunpack.c.l.b16 %v3186
      %v3224 = vunpack.c.h.b16 %v3186
      %v3225 = vunpack.c.l.b16 %v3187
      %v3226 = vunpack.c.h.b16 %v3187
      %v3227 = vunpack.c.l.b16 %v3188
      %v3228 = vunpack.c.h.b16 %v3188
      %v3229 = vunpack.c.l.b16 %v3189
      %v3230 = vunpack.c.h.b16 %v3189
      %v3231 = vunpack.c.l.b16 %v3190
      %v3232 = vunpack.c.h.b16 %v3190
      %v3233 = vunpack.c.l.b16 %v3191
      %v3234 = vunpack.c.h.b16 %v3191
      %v3235 = vunpack.c.l.b16 %v3192
      %v3236 = vunpack.c.h.b16 %v3192
      %v3237 = vunpack.c.l.b16 %v3193
      %v3238 = vunpack.c.h.b16 %v3193
      %v3239 = vunpack.c.l.b16 %v3194
      %v3240 = vunpack.c.h.b16 %v3194
      %v3241 = vunpack.c.l.b16 %v3195
      %v3242 = vunpack.c.h.b16 %v3195
      %v3243 = vunpack.c.l.b16 %v3196
      %v3244 = vunpack.c.h.b16 %v3196
      %v3245 = vpack.c.b16 %v3213, %v3213
      %v3246 = vpack.c.b16 %v3214, %v3214
      %v3247 = vpack.c.b16 %v3215, %v3215
      %v3248 = vpack.c.b16 %v3216, %v3216
      %v3249 = vpack.c.b16 %v3217, %v3217
      %v3250 = vpack.c.b16 %v3218, %v3218
      %v3251 = vpack.c.b16 %v3219, %v3219
      %v3252 = vpack.c.b16 %v3220, %v3220
      %v3253 = vpack.c.b16 %v3221, %v3221
      %v3254 = vpack.c.b16 %v3222, %v3222
      %v3255 = vpack.c.b16 %v3223, %v3223
      %v3256 = vpack.c.b16 %v3224, %v3224
      %v3257 = vpack.c.b16 %v3225, %v3225
      %v3258 = vpack.c.b16 %v3226, %v3226
      %v3259 = vpack.c.b16 %v3227, %v3227
      %v3260 = vpack.c.b16 %v3228, %v3228
      %v3261 = vpack.c.b16 %v3229, %v3229
      %v3262 = vpack.c.b16 %v3230, %v3230
      %v3263 = vpack.c.b16 %v3231, %v3231
      %v3264 = vpack.c.b16 %v3232, %v3232
      %v3265 = vpack.c.b16 %v3233, %v3233
      %v3266 = vpack.c.b16 %v3234, %v3234
      %v3267 = vpack.c.b16 %v3235, %v3235
      %v3268 = vpack.c.b16 %v3236, %v3236
      %v3269 = vpack.c.b16 %v3237, %v3237
      %v3270 = vpack.c.b16 %v3238, %v3238
      %v3271 = vpack.c.b16 %v3239, %v3239
      %v3272 = vpack.c.b16 %v3240, %v3240
      %v3273 = vpack.c.b16 %v3241, %v3241
      %v3274 = vpack.c.b16 %v3242, %v3242
      %v3275 = vpack.c.b16 %v3243, %v3243
      %v3276 = vpack.c.b16 %v3244, %v3244
      %vm3309 = vcmask 27648
      %3310 = vst.msk [vmem:[%s262] sm:$0xf] %vm3309, %v3245
      %3311 = vst.msk [vmem:[%s262 + $0x4] sm:$0xf] %vm3309, %v3246
      %3312 = vst.msk [vmem:[%s262 + $0x8] sm:$0xf] %vm3309, %v3247
      %3313 = vst.msk [vmem:[%s262 + $0xc] sm:$0xf] %vm3309, %v3248
      %3314 = vst.msk [vmem:[%s262 + $0x10] sm:$0xf] %vm3309, %v3249
      %3315 = vst.msk [vmem:[%s262 + $0x14] sm:$0xf] %vm3309, %v3250
      %3316 = vst.msk [vmem:[%s262 + $0x18] sm:$0xf] %vm3309, %v3251
      %3317 = vst.msk [vmem:[%s262 + $0x1c] sm:$0xf] %vm3309, %v3252
      %3318 = vst.msk [vmem:[%s262 + $0x20] sm:$0xf] %vm3309, %v3253
      %3319 = vst.msk [vmem:[%s262 + $0x24] sm:$0xf] %vm3309, %v3254
      %3320 = vst.msk [vmem:[%s262 + $0x28] sm:$0xf] %vm3309, %v3255
      %3321 = vst.msk [vmem:[%s262 + $0x2c] sm:$0xf] %vm3309, %v3256
      %3322 = vst.msk [vmem:[%s262 + $0x30] sm:$0xf] %vm3309, %v3257
      %3323 = vst.msk [vmem:[%s262 + $0x34] sm:$0xf] %vm3309, %v3258
      %3324 = vst.msk [vmem:[%s262 + $0x38] sm:$0xf] %vm3309, %v3259
      %3325 = vst.msk [vmem:[%s262 + $0x3c] sm:$0xf] %vm3309, %v3260
      %3326 = vst.msk [vmem:[%s262 + $0x40] sm:$0xf] %vm3309, %v3261
      %3327 = vst.msk [vmem:[%s262 + $0x44] sm:$0xf] %vm3309, %v3262
      %3328 = vst.msk [vmem:[%s262 + $0x48] sm:$0xf] %vm3309, %v3263
      %3329 = vst.msk [vmem:[%s262 + $0x4c] sm:$0xf] %vm3309, %v3264
      %3330 = vst.msk [vmem:[%s262 + $0x50] sm:$0xf] %vm3309, %v3265
      %3331 = vst.msk [vmem:[%s262 + $0x54] sm:$0xf] %vm3309, %v3266
      %3332 = vst.msk [vmem:[%s262 + $0x58] sm:$0xf] %vm3309, %v3267
      %3333 = vst.msk [vmem:[%s262 + $0x5c] sm:$0xf] %vm3309, %v3268
      %3334 = vst.msk [vmem:[%s262 + $0x60] sm:$0xf] %vm3309, %v3269
      %3335 = vst.msk [vmem:[%s262 + $0x64] sm:$0xf] %vm3309, %v3270
      %3336 = vst.msk [vmem:[%s262 + $0x68] sm:$0xf] %vm3309, %v3271
      %3337 = vst.msk [vmem:[%s262 + $0x6c] sm:$0xf] %vm3309, %v3272
      %3338 = vst.msk [vmem:[%s262 + $0x70] sm:$0xf] %vm3309, %v3273
      %3339 = vst.msk [vmem:[%s262 + $0x74] sm:$0xf] %vm3309, %v3274
      %3340 = vst.msk [vmem:[%s262 + $0x78] sm:$0xf] %vm3309, %v3275
      %3341 = vst.msk [vmem:[%s262 + $0x7c] sm:$0xf] %vm3309, %v3276
      %v3342 = vsel %vm444, %v3149, 0.0
      %v3343 = vsel %vm444, %v3150, 0.0
      %v3344 = vadd.f32 %v3342, %v3343
      %v3345 = vsel %vm444, %v3151, 0.0
      %v3346 = vadd.f32 %v3344, %v3345
      %v3347 = vsel %vm444, %v3152, 0.0
      %v3348 = vadd.f32 %v3346, %v3347
      %v3349 = vsel %vm444, %v3153, 0.0
      %v3350 = vadd.f32 %v3348, %v3349
      %v3351 = vsel %vm444, %v3154, 0.0
      %v3352 = vadd.f32 %v3350, %v3351
      %v3353 = vsel %vm444, %v3155, 0.0
      %v3354 = vadd.f32 %v3352, %v3353
      %v3355 = vsel %vm444, %v3156, 0.0
      %v3356 = vadd.f32 %v3354, %v3355
      %v3357 = vsel %vm444, %v3157, 0.0
      %v3358 = vadd.f32 %v3356, %v3357
      %v3359 = vsel %vm444, %v3158, 0.0
      %v3360 = vadd.f32 %v3358, %v3359
      %v3361 = vsel %vm444, %v3159, 0.0
      %v3362 = vadd.f32 %v3360, %v3361
      %v3363 = vsel %vm444, %v3160, 0.0
      %v3364 = vadd.f32 %v3362, %v3363
      %v3365 = vsel %vm444, %v3161, 0.0
      %v3366 = vadd.f32 %v3364, %v3365
      %v3367 = vsel %vm444, %v3162, 0.0
      %v3368 = vadd.f32 %v3366, %v3367
      %v3369 = vsel %vm444, %v3163, 0.0
      %v3370 = vadd.f32 %v3368, %v3369
      %v3371 = vsel %vm444, %v3164, 0.0
      %v3372 = vadd.f32 %v3370, %v3371
      %v3373 = vsel %vm444, %v3165, 0.0
      %v3374 = vadd.f32 %v3372, %v3373
      %v3375 = vsel %vm444, %v3166, 0.0
      %v3376 = vadd.f32 %v3374, %v3375
      %v3377 = vsel %vm444, %v3167, 0.0
      %v3378 = vadd.f32 %v3376, %v3377
      %v3379 = vsel %vm444, %v3168, 0.0
      %v3380 = vadd.f32 %v3378, %v3379
      %v3381 = vsel %vm444, %v3169, 0.0
      %v3382 = vadd.f32 %v3380, %v3381
      %v3383 = vsel %vm444, %v3170, 0.0
      %v3384 = vadd.f32 %v3382, %v3383
      %v3385 = vsel %vm444, %v3171, 0.0
      %v3386 = vadd.f32 %v3384, %v3385
      %v3387 = vsel %vm444, %v3172, 0.0
      %v3388 = vadd.f32 %v3386, %v3387
      %v3389 = vsel %vm444, %v3173, 0.0
      %v3390 = vadd.f32 %v3388, %v3389
      %v3391 = vsel %vm444, %v3174, 0.0
      %v3392 = vadd.f32 %v3390, %v3391
      %v3393 = vsel %vm444, %v3175, 0.0
      %v3394 = vadd.f32 %v3392, %v3393
      %v3395 = vsel %vm444, %v3176, 0.0
      %v3396 = vadd.f32 %v3394, %v3395
      %v3397 = vsel %vm444, %v3177, 0.0
      %v3398 = vadd.f32 %v3396, %v3397
      %v3399 = vsel %vm444, %v3178, 0.0
      %v3400 = vadd.f32 %v3398, %v3399
      %v3401 = vsel %vm444, %v3179, 0.0
      %v3402 = vadd.f32 %v3400, %v3401
      %v3403 = vsel %vm444, %v3180, 0.0
      %v3404 = vadd.f32 %v3402, %v3403
      %v3405 = vrot.slane %v3404, 4
      %v3406 = vadd.f32 %v3404, %v3405
      %v3407 = vrot.slane %v3406, 2
      %v3408 = vadd.f32 %v3406, %v3407
      %v3409 = vrot.slane %v3408, 1
      %v3410 = vadd.f32 %v3408, %v3409
      %vm3411 = vcmask 24576
      %3412 = vst.msk [vmem:[%s265] sm:$0x1] %vm3411, %v3410
      %v3413 = vmul.f32 %v3149, %v3149
      %v3414 = vmul.f32 %v3150, %v3150
      %v3415 = vmul.f32 %v3151, %v3151
      %v3416 = vmul.f32 %v3152, %v3152
      %v3417 = vmul.f32 %v3153, %v3153
      %v3418 = vmul.f32 %v3154, %v3154
      %v3419 = vmul.f32 %v3155, %v3155
      %v3420 = vmul.f32 %v3156, %v3156
      %v3421 = vmul.f32 %v3157, %v3157
      %v3422 = vmul.f32 %v3158, %v3158
      %v3423 = vmul.f32 %v3159, %v3159
      %v3424 = vmul.f32 %v3160, %v3160
      %v3425 = vmul.f32 %v3161, %v3161
      %v3426 = vmul.f32 %v3162, %v3162
      %v3427 = vmul.f32 %v3163, %v3163
      %v3428 = vmul.f32 %v3164, %v3164
      %v3429 = vmul.f32 %v3165, %v3165
      %v3430 = vmul.f32 %v3166, %v3166
      %v3431 = vmul.f32 %v3167, %v3167
      %v3432 = vmul.f32 %v3168, %v3168
      %v3433 = vmul.f32 %v3169, %v3169
      %v3434 = vmul.f32 %v3170, %v3170
      %v3435 = vmul.f32 %v3171, %v3171
      %v3436 = vmul.f32 %v3172, %v3172
      %v3437 = vmul.f32 %v3173, %v3173
      %v3438 = vmul.f32 %v3174, %v3174
      %v3439 = vmul.f32 %v3175, %v3175
      %v3440 = vmul.f32 %v3176, %v3176
      %v3441 = vmul.f32 %v3177, %v3177
      %v3442 = vmul.f32 %v3178, %v3178
      %v3443 = vmul.f32 %v3179, %v3179
      %v3444 = vmul.f32 %v3180, %v3180
      %v3445 = vsel %vm444, %v3413, 0.0
      %v3446 = vsel %vm444, %v3414, 0.0
      %v3447 = vadd.f32 %v3445, %v3446
      %v3448 = vsel %vm444, %v3415, 0.0
      %v3449 = vadd.f32 %v3447, %v3448
      %v3450 = vsel %vm444, %v3416, 0.0
      %v3451 = vadd.f32 %v3449, %v3450
      %v3452 = vsel %vm444, %v3417, 0.0
      %v3453 = vadd.f32 %v3451, %v3452
      %v3454 = vsel %vm444, %v3418, 0.0
      %v3455 = vadd.f32 %v3453, %v3454
      %v3456 = vsel %vm444, %v3419, 0.0
      %v3457 = vadd.f32 %v3455, %v3456
      %v3458 = vsel %vm444, %v3420, 0.0
      %v3459 = vadd.f32 %v3457, %v3458
      %v3460 = vsel %vm444, %v3421, 0.0
      %v3461 = vadd.f32 %v3459, %v3460
      %v3462 = vsel %vm444, %v3422, 0.0
      %v3463 = vadd.f32 %v3461, %v3462
      %v3464 = vsel %vm444, %v3423, 0.0
      %v3465 = vadd.f32 %v3463, %v3464
      %v3466 = vsel %vm444, %v3424, 0.0
      %v3467 = vadd.f32 %v3465, %v3466
      %v3468 = vsel %vm444, %v3425, 0.0
      %v3469 = vadd.f32 %v3467, %v3468
      %v3470 = vsel %vm444, %v3426, 0.0
      %v3471 = vadd.f32 %v3469, %v3470
      %v3472 = vsel %vm444, %v3427, 0.0
      %v3473 = vadd.f32 %v3471, %v3472
      %v3474 = vsel %vm444, %v3428, 0.0
      %v3475 = vadd.f32 %v3473, %v3474
      %v3476 = vsel %vm444, %v3429, 0.0
      %v3477 = vadd.f32 %v3475, %v3476
      %v3478 = vsel %vm444, %v3430, 0.0
      %v3479 = vadd.f32 %v3477, %v3478
      %v3480 = vsel %vm444, %v3431, 0.0
      %v3481 = vadd.f32 %v3479, %v3480
      %v3482 = vsel %vm444, %v3432, 0.0
      %v3483 = vadd.f32 %v3481, %v3482
      %v3484 = vsel %vm444, %v3433, 0.0
      %v3485 = vadd.f32 %v3483, %v3484
      %v3486 = vsel %vm444, %v3434, 0.0
      %v3487 = vadd.f32 %v3485, %v3486
      %v3488 = vsel %vm444, %v3435, 0.0
      %v3489 = vadd.f32 %v3487, %v3488
      %v3490 = vsel %vm444, %v3436, 0.0
      %v3491 = vadd.f32 %v3489, %v3490
      %v3492 = vsel %vm444, %v3437, 0.0
      %v3493 = vadd.f32 %v3491, %v3492
      %v3494 = vsel %vm444, %v3438, 0.0
      %v3495 = vadd.f32 %v3493, %v3494
      %v3496 = vsel %vm444, %v3439, 0.0
      %v3497 = vadd.f32 %v3495, %v3496
      %v3498 = vsel %vm444, %v3440, 0.0
      %v3499 = vadd.f32 %v3497, %v3498
      %v3500 = vsel %vm444, %v3441, 0.0
      %v3501 = vadd.f32 %v3499, %v3500
      %v3502 = vsel %vm444, %v3442, 0.0
      %v3503 = vadd.f32 %v3501, %v3502
      %v3504 = vsel %vm444, %v3443, 0.0
      %v3505 = vadd.f32 %v3503, %v3504
      %v3506 = vsel %vm444, %v3444, 0.0
      %v3507 = vadd.f32 %v3505, %v3506
      %v3508 = vrot.slane %v3507, 4
      %v3509 = vadd.f32 %v3507, %v3508
      %v3510 = vrot.slane %v3509, 2
      %v3511 = vadd.f32 %v3509, %v3510
      %v3512 = vrot.slane %v3511, 1
      %v3513 = vadd.f32 %v3511, %v3512
      %3514 = vst.msk [vmem:[%s268] sm:$0x1] %vm3411, %v3513
      %p3515 = scmp.lt.s32.totalorder %s18, 1
      %s3516 = scalar_select %p3515, %s18, 1
      %s3517 = smul.addr %s3516, 32
      %s3518 = smul.addr %s3517, 4
      %s3519 = scalar_lea.vmem %s4, %s3518
      %p3520 = scmp.lt.s32.totalorder %s18, 1
      %s3521 = scalar_select %p3520, %s18, 1
      %s3522 = scalar_lea.vmem %s5, %s3521
      %p3523 = scmp.lt.s32.totalorder %s18, 1
      %s3524 = scalar_select %p3523, %s18, 1
      %s3525 = scalar_lea.vmem %s6, %s3524
      // Predicated region
      $region37: #{basic_block_forward_nhwc.4} parent=35 // pred_check
        %p3526 = pneg %p125
      $region38: #{basic_block_forward_nhwc.4} parent=35 // pred_check_branch
        %3528 = sbr.rel (%p3526) target = $region40
      $region39: #{basic_block_forward_nhwc.4} parent=35 // pred_region
        _
      $region40: #{basic_block_forward_nhwc.4} parent=35 // pred_fallthru
        _
      // Predicated region
      $region41: #{basic_block_forward_nhwc.4} parent=35 // pred_check
        %p3529 = pneg %p151
      $region42: #{basic_block_forward_nhwc.4} parent=35 // pred_check_branch
        %3531 = sbr.rel (%p3529) target = $region44
      $region43: #{basic_block_forward_nhwc.4} parent=35 // pred_region
        _
      $region44: #{basic_block_forward_nhwc.4} parent=35 // pred_fallthru
        _
      // Predicated region
      $region45: #{basic_block_forward_nhwc.4} parent=35 // pred_check
        %p3532 = pneg %p177
      $region46: #{basic_block_forward_nhwc.4} parent=35 // pred_check_branch
        %3534 = sbr.rel (%p3532) target = $region48
      $region47: #{basic_block_forward_nhwc.4} parent=35 // pred_region
        _
      $region48: #{basic_block_forward_nhwc.4} parent=35 // pred_fallthru
        _
    $region36: #{basic_block_forward_nhwc.4} parent=5 // pred_fallthru
      _
    %p3535 = scmp.le.s32.totalorder 2, %s13
    // Predicated region
    $region49: #{basic_block_forward_nhwc.4} parent=5 // pred_check
      %p3536 = pneg %p3535
    $region50: #{basic_block_forward_nhwc.4} parent=5 // pred_check_branch
      %3538 = sbr.rel (%p3536) target = $region52
    $region51: #{basic_block_forward_nhwc.4} parent=5 // pred_region
      %s3539 = ssub.s32 %s13, 2
      // Predicated region
      $region53: #{basic_block_forward_nhwc.4} parent=51 // pred_check
        %p3540 = pneg %p131
      $region54: #{basic_block_forward_nhwc.4} parent=51 // pred_check_branch
        %3542 = sbr.rel (%p3540) target = $region56
      $region55: #{basic_block_forward_nhwc.4} parent=51 // pred_region
        %p3543 = scmp.lt.s32.totalorder %s19, 1
        %s3544 = scalar_select %p3543, %s19, 1
        %s3545 = smul.addr %s3544, 32
        %s3546 = smul.addr %s3545, 4
        %s3547 = scalar_lea.vmem %s4, %s3546
      $region56: #{basic_block_forward_nhwc.4} parent=51 // pred_fallthru
        _
      // Predicated region
      $region57: #{basic_block_forward_nhwc.4} parent=51 // pred_check
        %p3548 = pneg %p157
      $region58: #{basic_block_forward_nhwc.4} parent=51 // pred_check_branch
        %3550 = sbr.rel (%p3548) target = $region60
      $region59: #{basic_block_forward_nhwc.4} parent=51 // pred_region
        %p3551 = scmp.lt.s32.totalorder %s19, 1
        %s3552 = scalar_select %p3551, %s19, 1
        %s3553 = scalar_lea.vmem %s5, %s3552
      $region60: #{basic_block_forward_nhwc.4} parent=51 // pred_fallthru
        _
      // Predicated region
      $region61: #{basic_block_forward_nhwc.4} parent=51 // pred_check
        %p3554 = pneg %p183
      $region62: #{basic_block_forward_nhwc.4} parent=51 // pred_check_branch
        %3556 = sbr.rel (%p3554) target = $region64
      $region63: #{basic_block_forward_nhwc.4} parent=51 // pred_region
        %p3557 = scmp.lt.s32.totalorder %s19, 1
        %s3558 = scalar_select %p3557, %s19, 1
        %s3559 = scalar_lea.vmem %s6, %s3558
      $region64: #{basic_block_forward_nhwc.4} parent=51 // pred_fallthru
        _
    $region52: #{basic_block_forward_nhwc.4} parent=5 // pred_fallthru
      _
  $region6: #{basic_block_forward_nhwc.4} parent=0 // loop_footer
    %s17 = sadd.s32 1, %s13
  $region7: #{basic_block_forward_nhwc.4} parent=0 // loop_footer_branch
    %12 = sbr.rel target = $region3
  $region8: #{basic_block_forward_nhwc.4} parent=0 // loop_exit
    _

</llo_original>
